<compile_context>
chip_gen: v5e
topology: v5e:2x2
jax: 0.10.0
libtpu: 0.0.40
codegen_flags: <defaults>
</compile_context>

<pallas_src>
import jax
import jax.numpy as jnp
from jax.experimental import pallas as pl
from jax.experimental.pallas import tpu as pltpu

_LANE = 128
_ROW_ALIGN = 16          # bf16 packs [16, 128] per vreg -> align row tiles to 16


def _round_up(x, m):
    return ((x + m - 1) // m) * m


def _vmem_limit_bytes(block_bytes):
    """Per-block footprint + headroom, capped below 75% of physical VMEM."""
    need = int(block_bytes) + (4 << 20)
    cap = 96 << 20                                   # fallback (v5e/v6e: 128 MiB phys)
    try:
        # 48 MiB on v7x (64 MiB physical), 96 MiB on v5e/v6e.
        cap = (pltpu.get_tpu_info().vmem_capacity_bytes * 3) // 4
    except Exception:
        pass
    return int(max(16 << 20, min(need, cap)))


def _tm_for(M, C):
    """Row-tile size: scale with channel width; guarantee >=2 grid steps for megacore."""
    if C <= 256:
        cap = 1024            # mem-bound: ~0.5-2 MiB bf16 activation per tile
    elif C <= 512:
        cap = 512
    else:
        cap = 256             # MXU-bound on v5e; bigger tiles buy nothing there
    if M < 2 * _ROW_ALIGN:
        return M              # tiny: one full block (block == full dim is always legal)
    if M <= 2 * cap:
        # split into two 16-aligned tiles so both v7x TCs get work and DMA pipelines
        return _round_up(pl.cdiv(M, 2), _ROW_ALIGN)
    return cap


# ----------------------------------------------------------------------------
# Pallas kernel: fused adapter  y = relu(x @ Wd + bd) @ Wu + bu + x
# Used for ConvAdapter (1x1 convs over NHWC rows) and Adapter (Linear).
# x / Wd / Wu are bf16 MXU operands; accumulation, bias, ReLU, residual are f32.
# ----------------------------------------------------------------------------
def _adapter_kernel(x_ref, wd_ref, bd_ref, wu_ref, bu_ref, o_ref):
    x = x_ref[...]                                   # bf16 (MXU operand)
    h = jnp.dot(x, wd_ref[...], preferred_element_type=jnp.float32) + bd_ref[...]
    h = jnp.maximum(h, 0.0)                          # ReLU (f32)
    y = jnp.dot(h.astype(wu_ref.dtype), wu_ref[...],
                preferred_element_type=jnp.float32) + bu_ref[...]
    # residual re-read/cast here (no f32 copy held live across both matmuls)
    o_ref[...] = (y + x_ref[...].astype(jnp.float32)).astype(o_ref.dtype)


def adapter_matmul(x2d, wd, bd, wu, bu):
    """Fused adapter on (M, C) rows; weights are (C, Crp) and (Crp, C) in bf16."""
    M, C = x2d.shape
    Crp = wd.shape[1]

    tm = _tm_for(M, C)
    grid = (pl.cdiv(M, tm),)

    itm = jnp.dtype(x2d.dtype).itemsize
    w_bytes = ((wd.size + wu.size) * jnp.dtype(wd.dtype).itemsize
               + (bd.size + bu.size) * jnp.dtype(bd.dtype).itemsize)
    # in+out activation tiles (double-buffered) + resident weights (double-
    # buffered by the auto pipeline) + f32 intermediates inside the kernel.
    block_bytes = 4 * tm * C * itm + 2 * w_bytes + tm * (C + Crp) * 4
    cost = pl.CostEstimate(
        flops=int(4 * M * C * Crp),                  # two matmuls
        transcendentals=0,
        bytes_accessed=int(2 * M * C * itm + w_bytes),
    )

    return pl.pallas_call(
        _adapter_kernel,
        out_shape=jax.ShapeDtypeStruct((M, C), x2d.dtype),
        grid_spec=pltpu.PrefetchScalarGridSpec(
            num_scalar_prefetch=0,
            grid=grid,
            in_specs=[
                pl.BlockSpec((tm, C), lambda i: (i, 0)),    # activations (row-tiled)
                pl.BlockSpec((C, Crp), lambda i: (0, 0)),   # down-proj weight (resident)
                pl.BlockSpec((1, Crp), lambda i: (0, 0)),   # down-proj bias (f32)
                pl.BlockSpec((Crp, C), lambda i: (0, 0)),   # up-proj weight (resident)
                pl.BlockSpec((1, C), lambda i: (0, 0)),     # up-proj bias (f32)
            ],
            out_specs=pl.BlockSpec((tm, C), lambda i: (i, 0)),
        ),
        compiler_params=pltpu.CompilerParams(
            dimension_semantics=("parallel",),
            vmem_limit_bytes=_vmem_limit_bytes(block_bytes),
        ),
        cost_estimate=cost,
    )(x2d, wd, bd, wu, bu)


def conv_adapter(x_nhwc, p):
    """ConvAdapter: 1x1 conv == per-pixel matmul over channels."""
    N, H, W, C = x_nhwc.shape
    y = adapter_matmul(x_nhwc.reshape(N * H * W, C), p["wd"], p["bd"], p["wu"], p["bu"])
    return y.reshape(N, H, W, C)


# ----------------------------------------------------------------------------
# Fused tail: adapter4 (ConvAdapter 2048) + attnpool stand-in + adapter5
# (Adapter 1024) in a single pallas_call, gridded over the batch axis so both
# weight sets stay resident while per-block f32 intermediates stay bounded.
# ----------------------------------------------------------------------------
def _tail_kernel(x_ref, wd4_ref, bd4_ref, wu4_ref, bu4_ref,
                 wd5_ref, bd5_ref, wu5_ref, bu5_ref, o_ref):
    tb, HW, C4 = x_ref.shape
    C5 = o_ref.shape[-1]
    x = x_ref[...].reshape(tb * HW, C4)              # bf16 rows

    # adapter4 (1x1-conv adapter as a per-pixel matmul)
    h = jnp.dot(x, wd4_ref[...], preferred_element_type=jnp.float32) + bd4_ref[...]
    h = jnp.maximum(h, 0.0)
    y4 = jnp.dot(h.astype(wu4_ref.dtype), wu4_ref[...],
                 preferred_element_type=jnp.float32) + bu4_ref[...]
    y4 = y4 + x.astype(jnp.float32)                  # skip connection (cast at use)

    # attnpool stand-in: spatial mean, then 2-group channel mean (2048 -> 1024)
    # TODO(synk): real CLIP RN50 attnpool is multi-head attention pooling with
    # pretrained weights; cannot be reproduced without the checkpoint.
    pooled = y4.reshape(tb, HW, C4).mean(axis=1)     # (tb, C4) f32
    g = 0.5 * (pooled[:, :C5] + pooled[:, C5:])      # (tb, C5) f32

    # adapter5 (Linear down/up + ReLU + skip)
    h5 = jnp.dot(g.astype(wd5_ref.dtype), wd5_ref[...],
                 preferred_element_type=jnp.float32) + bd5_ref[...]
    h5 = jnp.maximum(h5, 0.0)
    y5 = jnp.dot(h5.astype(wu5_ref.dtype), wu5_ref[...],
                 preferred_element_type=jnp.float32) + bu5_ref[...] + g
    o_ref[...] = y5.reshape(tb, 1, C5).astype(o_ref.dtype)


def fused_tail(x_nhwc, p4, p5):
    N, H, W, C4 = x_nhwc.shape
    C5 = p5["wu"].shape[1]
    assert C4 == 2 * C5, "attnpool stand-in folds C4 -> C4/2 via a 2-group mean"
    HW = H * W
    x = x_nhwc.reshape(N, HW, C4)

    # ~256 rows of C4 activation per block; guarantee >=2 grid steps when N > 1
    # so both v7x TensorCores get work and the activation DMA pipelines.
    tb = min(N, max(1, 256 // max(HW, 1)))
    if N > 1:
        tb = min(tb, pl.cdiv(N, 2))
    grid = (pl.cdiv(N, tb),)

    itm = jnp.dtype(x.dtype).itemsize
    w_bytes = sum(int(p[k].size) * jnp.dtype(p[k].dtype).itemsize
                  for p in (p4, p5) for k in ("wd", "bd", "wu", "bu"))
    hid4 = p4["wd"].shape[1]
    hid5 = p5["wd"].shape[1]
    block_bytes = (2 * (tb * HW * C4 * itm + tb * C5 * 4)   # in/out blocks x2 buffers
                   + 2 * w_bytes                             # resident weights x2 buffers
                   + 2 * tb * HW * (C4 + hid4) * 4)          # f32 intermediates
    cost = pl.CostEstimate(
        flops=int(4 * N * HW * C4 * hid4 + 4 * N * C5 * hid5),
        transcendentals=0,
        bytes_accessed=int(N * HW * C4 * itm + N * C5 * 4 + w_bytes),
    )

    out = pl.pallas_call(
        _tail_kernel,
        out_shape=jax.ShapeDtypeStruct((N, 1, C5), jnp.float32),
        grid_spec=pltpu.PrefetchScalarGridSpec(
            num_scalar_prefetch=0,
            grid=grid,
            in_specs=[
                pl.BlockSpec((tb, HW, C4), lambda b: (b, 0, 0)),       # activations
                pl.BlockSpec(p4["wd"].shape, lambda b: (0, 0)),
                pl.BlockSpec(p4["bd"].shape, lambda b: (0, 0)),
                pl.BlockSpec(p4["wu"].shape, lambda b: (0, 0)),
                pl.BlockSpec(p4["bu"].shape, lambda b: (0, 0)),
                pl.BlockSpec(p5["wd"].shape, lambda b: (0, 0)),
                pl.BlockSpec(p5["bd"].shape, lambda b: (0, 0)),
                pl.BlockSpec(p5["wu"].shape, lambda b: (0, 0)),
                pl.BlockSpec(p5["bu"].shape, lambda b: (0, 0)),
            ],
            out_specs=pl.BlockSpec((tb, 1, C5), lambda b: (b, 0, 0)),
        ),
        compiler_params=pltpu.CompilerParams(
            dimension_semantics=("parallel",),
            vmem_limit_bytes=_vmem_limit_bytes(block_bytes),
        ),
        cost_estimate=cost,
    )(x, p4["wd"], p4["bd"], p4["wu"], p4["bu"],
      p5["wd"], p5["bd"], p5["wu"], p5["bu"])
    return out.reshape(N, C5)


# ----------------------------------------------------------------------------
# Parameter init (PyTorch shapes) + perf-only preparation (bf16 + lane padding).
# ----------------------------------------------------------------------------
def init_adapter_params(key, dim, reduction=4, dtype=jnp.float32):
    hid = dim // reduction
    k1, k2, k3, k4 = jax.random.split(key, 4)
    s_d = 1.0 / (dim ** 0.5)
    s_u = 1.0 / (hid ** 0.5)
    return dict(
        wd=jax.random.uniform(k1, (dim, hid), dtype, -s_d, s_d),
        bd=jax.random.uniform(k2, (1, hid), dtype, -s_d, s_d),
        wu=jax.random.uniform(k3, (hid, dim), dtype, -s_u, s_u),
        bu=jax.random.uniform(k4, (1, dim), dtype, -s_u, s_u),
    )


def prepare_adapter_params(p, compute_dtype=jnp.bfloat16):
    """Cast weights to bf16 (MXU-native), keep biases f32, zero-pad the hidden
    dim up to a multiple of 128 lanes.  Zero padding leaves the math unchanged:
    relu(x@0 + 0) == 0 and zero Wu rows contribute nothing."""
    _, hid = p["wd"].shape
    hid_p = _round_up(hid, _LANE)
    wd = p["wd"].astype(compute_dtype)
    wu = p["wu"].astype(compute_dtype)
    bd = p["bd"].astype(jnp.float32)
    bu = p["bu"].astype(jnp.float32)
    if hid_p != hid:
        wd = jnp.pad(wd, ((0, 0), (0, hid_p - hid)))
        bd = jnp.pad(bd, ((0, 0), (0, hid_p - hid)))
        wu = jnp.pad(wu, ((0, hid_p - hid), (0, 0)))
    return dict(wd=wd, bd=bd, wu=wu, bu=bu)


# ----------------------------------------------------------------------------
# Backbone stand-ins.
# TODO(synk): origin_model = clip.load('RN50').visual (pretrained ModifiedResNet
# stem / layer1-4 / attnpool) cannot be reproduced without its checkpoint; the
# functions below are deterministic shape/dataflow stand-ins only.
# ----------------------------------------------------------------------------
def _stem_layer1_stub(x_nhwc, out_c, out_hw):
    N, H, W, C = x_nhwc.shape
    f = H // out_hw
    x = x_nhwc.reshape(N, out_hw, f, out_hw, f, C).mean(axis=(2, 4))
    reps = -(-out_c // C)
    return jnp.tile(x, (1, 1, 1, reps))[..., :out_c]


def _stage_stub(x_nhwc):
    # RN50 stage transition stand-in: halve spatial, double channels
    N, H, W, C = x_nhwc.shape
    x = x_nhwc.reshape(N, H // 2, 2, W // 2, 2, C).mean(axis=(2, 4))
    return jnp.concatenate([x, 0.5 * x], axis=-1)


# ----------------------------------------------------------------------------
# Full forward (mirrors AdapterCLIPRN50.forward).
# ----------------------------------------------------------------------------
def adapter_clip_rn50_forward(x_nchw, params):
    x = jnp.transpose(x_nchw, (0, 2, 3, 1)).astype(jnp.bfloat16)  # NCHW -> NHWC, bf16
    x = _stem_layer1_stub(x, 256, 8)            # stem + layer1 stand-in -> (N,8,8,256)
    x = conv_adapter(x, params["adapter1"])     # ConvAdapter(256)   [Pallas]
    x = _stage_stub(x)                          # layer2 stand-in    -> (N,4,4,512)
    x = conv_adapter(x, params["adapter2"])     # ConvAdapter(512)   [Pallas]
    x = _stage_stub(x)                          # layer3 stand-in    -> (N,2,2,1024)
    x = conv_adapter(x, params["adapter3"])     # ConvAdapter(1024)  [Pallas]
    x = _stage_stub(x)                          # layer4 stand-in    -> (N,1,1,2048)
    # adapter4 + attnpool stand-in + adapter5 fused into a single Pallas call
    x = fused_tail(x, params["adapter4"], params["adapter5"])      # -> (N,1024) f32
    return x


if __name__ == "__main__":
    key = jax.random.PRNGKey(0)
    kx, k1, k2, k3, k4, k5 = jax.random.split(key, 6)

    # small image input (batch=2, RGB, 32x32), consistent with the NCHW forward
    x = jax.random.normal(kx, (2, 3, 32, 32), jnp.float32)

    raw = {
        "adapter1": init_adapter_params(k1, 256),
        "adapter2": init_adapter_params(k2, 512),
        "adapter3": init_adapter_params(k3, 1024),
        "adapter4": init_adapter_params(k4, 2048),
        "adapter5": init_adapter_params(k5, 1024),
    }
    # one-time perf transform (bf16 cast + hidden-dim lane padding), outside jit
    params = {name: prepare_adapter_params(p) for name, p in raw.items()}

    out = jax.jit(adapter_clip_rn50_forward)(x, params)
    out = jax.block_until_ready(out)
    assert out.shape == (2, 1024), out.shape
    assert bool(jnp.all(jnp.isfinite(out)))
    print("KERNEL_OK")
</pallas_src>

<mosaic_0001>
module attributes {stable_mosaic.version = 11 : i64} {
  func.func @_adapter_kernel(%arg0: i32, %arg1: memref<64x256xbf16, #tpu.memory_space<vmem>>, %arg2: memref<256x128xbf16, #tpu.memory_space<vmem>>, %arg3: memref<1x128xf32, #tpu.memory_space<vmem>>, %arg4: memref<128x256xbf16, #tpu.memory_space<vmem>>, %arg5: memref<1x256xf32, #tpu.memory_space<vmem>>, %arg6: memref<64x256xbf16, #tpu.memory_space<vmem>>) attributes {dimension_semantics = [#tpu.dimension_semantics<parallel>], iteration_bounds = array<i64: 2>, scalar_prefetch = 0 : i64, scratch_operands = 0 : i64, tpu.core_type = #tpu.core_type<tc>, window_params = [{transform_indices = @transform_0, window_bounds = array<i64: 64, 256>}, {pipeline_mode = #tpu.pipeline_mode<synchronous>, transform_indices = @transform_1, window_bounds = array<i64: 256, 128>}, {pipeline_mode = #tpu.pipeline_mode<synchronous>, transform_indices = @transform_2, window_bounds = array<i64: 1, 128>}, {pipeline_mode = #tpu.pipeline_mode<synchronous>, transform_indices = @transform_3, window_bounds = array<i64: 128, 256>}, {pipeline_mode = #tpu.pipeline_mode<synchronous>, transform_indices = @transform_4, window_bounds = array<i64: 1, 256>}, {transform_indices = @transform_5, window_bounds = array<i64: 64, 256>}]} {
    %c0 = arith.constant 0 : index
    %c0_0 = arith.constant 0 : index
    %0 = vector.load %arg1[%c0, %c0_0] : memref<64x256xbf16, #tpu.memory_space<vmem>>, vector<64x256xbf16>
    %c0_1 = arith.constant 0 : index
    %c0_2 = arith.constant 0 : index
    %1 = vector.load %arg2[%c0_1, %c0_2] : memref<256x128xbf16, #tpu.memory_space<vmem>>, vector<256x128xbf16>
    %cst = arith.constant dense<0.000000e+00> : vector<64x128xf32>
    %2 = tpu.matmul %0, %1, %cst {dimension_numbers = #tpu.dot_dimension_numbers<[1], [0], [0], [1], [0, 0, 1, 1], [], []>} : vector<64x256xbf16>, vector<256x128xbf16>, vector<64x128xf32> -> vector<64x128xf32>
    %c0_3 = arith.constant 0 : index
    %c0_4 = arith.constant 0 : index
    %3 = vector.load %arg3[%c0_3, %c0_4] : memref<1x128xf32, #tpu.memory_space<vmem>>, vector<1x128xf32>
    %4 = vector.broadcast %3 : vector<1x128xf32> to vector<64x128xf32>
    %5 = arith.addf %2, %4 : vector<64x128xf32>
    %cst_5 = arith.constant 0.000000e+00 : f32
    %6 = vector.broadcast %cst_5 : f32 to vector<64x128xf32>
    %7 = arith.maximumf %5, %6 : vector<64x128xf32>
    %8 = arith.truncf %7 : vector<64x128xf32> to vector<64x128xbf16>
    %c0_6 = arith.constant 0 : index
    %c0_7 = arith.constant 0 : index
    %9 = vector.load %arg4[%c0_6, %c0_7] : memref<128x256xbf16, #tpu.memory_space<vmem>>, vector<128x256xbf16>
    %cst_8 = arith.constant dense<0.000000e+00> : vector<64x256xf32>
    %10 = tpu.matmul %8, %9, %cst_8 {dimension_numbers = #tpu.dot_dimension_numbers<[1], [0], [0], [1], [0, 0, 1, 1], [], []>} : vector<64x128xbf16>, vector<128x256xbf16>, vector<64x256xf32> -> vector<64x256xf32>
    %c0_9 = arith.constant 0 : index
    %c0_10 = arith.constant 0 : index
    %11 = vector.load %arg5[%c0_9, %c0_10] : memref<1x256xf32, #tpu.memory_space<vmem>>, vector<1x256xf32>
    %12 = vector.broadcast %11 : vector<1x256xf32> to vector<64x256xf32>
    %13 = arith.addf %10, %12 : vector<64x256xf32>
    %c0_11 = arith.constant 0 : index
    %c0_12 = arith.constant 0 : index
    %14 = vector.load %arg1[%c0_11, %c0_12] : memref<64x256xbf16, #tpu.memory_space<vmem>>, vector<64x256xbf16>
    %15 = arith.extf %14 : vector<64x256xbf16> to vector<64x256xf32>
    %16 = arith.addf %13, %15 : vector<64x256xf32>
    %17 = arith.truncf %16 : vector<64x256xf32> to vector<64x256xbf16>
    %c0_13 = arith.constant 0 : index
    %c0_14 = arith.constant 0 : index
    %18 = vector.load %arg6[%c0_13, %c0_14] : memref<64x256xbf16, #tpu.memory_space<vmem>>, vector<64x256xbf16>
    tpu.vector_store %arg6[%c0_13, %c0_14], %17 {strides = array<i32>} : memref<64x256xbf16, #tpu.memory_space<vmem>>, vector<64x256xbf16>,
    return
  }
  func.func @transform_0(%arg0: i32) -> (i32, i32) {
    %c0_i32 = arith.constant 0 : i32
    %c0_i32_0 = arith.constant 0 : i32
    return %arg0, %c0_i32 : i32, i32
  }
  func.func @transform_1(%arg0: i32) -> (i32, i32) {
    %c0_i32 = arith.constant 0 : i32
    %c0_i32_0 = arith.constant 0 : i32
    %c0_i32_1 = arith.constant 0 : i32
    return %c0_i32, %c0_i32_0 : i32, i32
  }
  func.func @transform_2(%arg0: i32) -> (i32, i32) {
    %c0_i32 = arith.constant 0 : i32
    %c0_i32_0 = arith.constant 0 : i32
    %c0_i32_1 = arith.constant 0 : i32
    return %c0_i32, %c0_i32_0 : i32, i32
  }
  func.func @transform_3(%arg0: i32) -> (i32, i32) {
    %c0_i32 = arith.constant 0 : i32
    %c0_i32_0 = arith.constant 0 : i32
    %c0_i32_1 = arith.constant 0 : i32
    return %c0_i32, %c0_i32_0 : i32, i32
  }
  func.func @transform_4(%arg0: i32) -> (i32, i32) {
    %c0_i32 = arith.constant 0 : i32
    %c0_i32_0 = arith.constant 0 : i32
    %c0_i32_1 = arith.constant 0 : i32
    return %c0_i32, %c0_i32_0 : i32, i32
  }
  func.func @transform_5(%arg0: i32) -> (i32, i32) {
    %c0_i32 = arith.constant 0 : i32
    %c0_i32_0 = arith.constant 0 : i32
    return %arg0, %c0_i32 : i32, i32
  }
}

module attributes {stable_mosaic.version = 11 : i64} {
  func.func @_adapter_kernel(%arg0: i32, %arg1: memref<16x512xbf16, #tpu.memory_space<vmem>>, %arg2: memref<512x128xbf16, #tpu.memory_space<vmem>>, %arg3: memref<1x128xf32, #tpu.memory_space<vmem>>, %arg4: memref<128x512xbf16, #tpu.memory_space<vmem>>, %arg5: memref<1x512xf32, #tpu.memory_space<vmem>>, %arg6: memref<16x512xbf16, #tpu.memory_space<vmem>>) attributes {dimension_semantics = [#tpu.dimension_semantics<parallel>], iteration_bounds = array<i64: 2>, scalar_prefetch = 0 : i64, scratch_operands = 0 : i64, tpu.core_type = #tpu.core_type<tc>, window_params = [{transform_indices = @transform_0, window_bounds = array<i64: 16, 512>}, {pipeline_mode = #tpu.pipeline_mode<synchronous>, transform_indices = @transform_1, window_bounds = array<i64: 512, 128>}, {pipeline_mode = #tpu.pipeline_mode<synchronous>, transform_indices = @transform_2, window_bounds = array<i64: 1, 128>}, {pipeline_mode = #tpu.pipeline_mode<synchronous>, transform_indices = @transform_3, window_bounds = array<i64: 128, 512>}, {pipeline_mode = #tpu.pipeline_mode<synchronous>, transform_indices = @transform_4, window_bounds = array<i64: 1, 512>}, {transform_indices = @transform_5, window_bounds = array<i64: 16, 512>}]} {
    %c0 = arith.constant 0 : index
    %c0_0 = arith.constant 0 : index
    %0 = vector.load %arg1[%c0, %c0_0] : memref<16x512xbf16, #tpu.memory_space<vmem>>, vector<16x512xbf16>
    %c0_1 = arith.constant 0 : index
    %c0_2 = arith.constant 0 : index
    %1 = vector.load %arg2[%c0_1, %c0_2] : memref<512x128xbf16, #tpu.memory_space<vmem>>, vector<512x128xbf16>
    %cst = arith.constant dense<0.000000e+00> : vector<16x128xf32>
    %2 = tpu.matmul %0, %1, %cst {dimension_numbers = #tpu.dot_dimension_numbers<[1], [0], [0], [1], [0, 0, 1, 1], [], []>} : vector<16x512xbf16>, vector<512x128xbf16>, vector<16x128xf32> -> vector<16x128xf32>
    %c0_3 = arith.constant 0 : index
    %c0_4 = arith.constant 0 : index
    %3 = vector.load %arg3[%c0_3, %c0_4] : memref<1x128xf32, #tpu.memory_space<vmem>>, vector<1x128xf32>
    %4 = vector.broadcast %3 : vector<1x128xf32> to vector<16x128xf32>
    %5 = arith.addf %2, %4 : vector<16x128xf32>
    %cst_5 = arith.constant 0.000000e+00 : f32
    %6 = vector.broadcast %cst_5 : f32 to vector<16x128xf32>
    %7 = arith.maximumf %5, %6 : vector<16x128xf32>
    %8 = arith.truncf %7 : vector<16x128xf32> to vector<16x128xbf16>
    %c0_6 = arith.constant 0 : index
    %c0_7 = arith.constant 0 : index
    %9 = vector.load %arg4[%c0_6, %c0_7] : memref<128x512xbf16, #tpu.memory_space<vmem>>, vector<128x512xbf16>
    %cst_8 = arith.constant dense<0.000000e+00> : vector<16x512xf32>
    %10 = tpu.matmul %8, %9, %cst_8 {dimension_numbers = #tpu.dot_dimension_numbers<[1], [0], [0], [1], [0, 0, 1, 1], [], []>} : vector<16x128xbf16>, vector<128x512xbf16>, vector<16x512xf32> -> vector<16x512xf32>
    %c0_9 = arith.constant 0 : index
    %c0_10 = arith.constant 0 : index
    %11 = vector.load %arg5[%c0_9, %c0_10] : memref<1x512xf32, #tpu.memory_space<vmem>>, vector<1x512xf32>
    %12 = vector.broadcast %11 : vector<1x512xf32> to vector<16x512xf32>
    %13 = arith.addf %10, %12 : vector<16x512xf32>
    %c0_11 = arith.constant 0 : index
    %c0_12 = arith.constant 0 : index
    %14 = vector.load %arg1[%c0_11, %c0_12] : memref<16x512xbf16, #tpu.memory_space<vmem>>, vector<16x512xbf16>
    %15 = arith.extf %14 : vector<16x512xbf16> to vector<16x512xf32>
    %16 = arith.addf %13, %15 : vector<16x512xf32>
    %17 = arith.truncf %16 : vector<16x512xf32> to vector<16x512xbf16>
    %c0_13 = arith.constant 0 : index
    %c0_14 = arith.constant 0 : index
    %18 = vector.load %arg6[%c0_13, %c0_14] : memref<16x512xbf16, #tpu.memory_space<vmem>>, vector<16x512xbf16>
    tpu.vector_store %arg6[%c0_13, %c0_14], %17 {strides = array<i32>} : memref<16x512xbf16, #tpu.memory_space<vmem>>, vector<16x512xbf16>,
    return
  }
  func.func @transform_0(%arg0: i32) -> (i32, i32) {
    %c0_i32 = arith.constant 0 : i32
    %c0_i32_0 = arith.constant 0 : i32
    return %arg0, %c0_i32 : i32, i32
  }
  func.func @transform_1(%arg0: i32) -> (i32, i32) {
    %c0_i32 = arith.constant 0 : i32
    %c0_i32_0 = arith.constant 0 : i32
    %c0_i32_1 = arith.constant 0 : i32
    return %c0_i32, %c0_i32_0 : i32, i32
  }
  func.func @transform_2(%arg0: i32) -> (i32, i32) {
    %c0_i32 = arith.constant 0 : i32
    %c0_i32_0 = arith.constant 0 : i32
    %c0_i32_1 = arith.constant 0 : i32
    return %c0_i32, %c0_i32_0 : i32, i32
  }
  func.func @transform_3(%arg0: i32) -> (i32, i32) {
    %c0_i32 = arith.constant 0 : i32
    %c0_i32_0 = arith.constant 0 : i32
    %c0_i32_1 = arith.constant 0 : i32
    return %c0_i32, %c0_i32_0 : i32, i32
  }
  func.func @transform_4(%arg0: i32) -> (i32, i32) {
    %c0_i32 = arith.constant 0 : i32
    %c0_i32_0 = arith.constant 0 : i32
    %c0_i32_1 = arith.constant 0 : i32
    return %c0_i32, %c0_i32_0 : i32, i32
  }
  func.func @transform_5(%arg0: i32) -> (i32, i32) {
    %c0_i32 = arith.constant 0 : i32
    %c0_i32_0 = arith.constant 0 : i32
    return %arg0, %c0_i32 : i32, i32
  }
}

module attributes {stable_mosaic.version = 11 : i64} {
  func.func @_adapter_kernel(%arg0: i32, %arg1: memref<8x1024xbf16, #tpu.memory_space<vmem>>, %arg2: memref<1024x256xbf16, #tpu.memory_space<vmem>>, %arg3: memref<1x256xf32, #tpu.memory_space<vmem>>, %arg4: memref<256x1024xbf16, #tpu.memory_space<vmem>>, %arg5: memref<1x1024xf32, #tpu.memory_space<vmem>>, %arg6: memref<8x1024xbf16, #tpu.memory_space<vmem>>) attributes {dimension_semantics = [#tpu.dimension_semantics<parallel>], iteration_bounds = array<i64: 1>, scalar_prefetch = 0 : i64, scratch_operands = 0 : i64, tpu.core_type = #tpu.core_type<tc>, window_params = [{transform_indices = @transform_0, window_bounds = array<i64: 8, 1024>}, {pipeline_mode = #tpu.pipeline_mode<synchronous>, transform_indices = @transform_1, window_bounds = array<i64: 1024, 256>}, {pipeline_mode = #tpu.pipeline_mode<synchronous>, transform_indices = @transform_2, window_bounds = array<i64: 1, 256>}, {pipeline_mode = #tpu.pipeline_mode<synchronous>, transform_indices = @transform_3, window_bounds = array<i64: 256, 1024>}, {pipeline_mode = #tpu.pipeline_mode<synchronous>, transform_indices = @transform_4, window_bounds = array<i64: 1, 1024>}, {transform_indices = @transform_5, window_bounds = array<i64: 8, 1024>}]} {
    %c0 = arith.constant 0 : index
    %c0_0 = arith.constant 0 : index
    %0 = vector.load %arg1[%c0, %c0_0] : memref<8x1024xbf16, #tpu.memory_space<vmem>>, vector<8x1024xbf16>
    %c0_1 = arith.constant 0 : index
    %c0_2 = arith.constant 0 : index
    %1 = vector.load %arg2[%c0_1, %c0_2] : memref<1024x256xbf16, #tpu.memory_space<vmem>>, vector<1024x256xbf16>
    %cst = arith.constant dense<0.000000e+00> : vector<8x256xf32>
    %2 = tpu.matmul %0, %1, %cst {dimension_numbers = #tpu.dot_dimension_numbers<[1], [0], [0], [1], [0, 0, 1, 1], [], []>} : vector<8x1024xbf16>, vector<1024x256xbf16>, vector<8x256xf32> -> vector<8x256xf32>
    %c0_3 = arith.constant 0 : index
    %c0_4 = arith.constant 0 : index
    %3 = vector.load %arg3[%c0_3, %c0_4] : memref<1x256xf32, #tpu.memory_space<vmem>>, vector<1x256xf32>
    %4 = vector.broadcast %3 : vector<1x256xf32> to vector<8x256xf32>
    %5 = arith.addf %2, %4 : vector<8x256xf32>
    %cst_5 = arith.constant 0.000000e+00 : f32
    %6 = vector.broadcast %cst_5 : f32 to vector<8x256xf32>
    %7 = arith.maximumf %5, %6 : vector<8x256xf32>
    %8 = arith.truncf %7 : vector<8x256xf32> to vector<8x256xbf16>
    %c0_6 = arith.constant 0 : index
    %c0_7 = arith.constant 0 : index
    %9 = vector.load %arg4[%c0_6, %c0_7] : memref<256x1024xbf16, #tpu.memory_space<vmem>>, vector<256x1024xbf16>
    %cst_8 = arith.constant dense<0.000000e+00> : vector<8x1024xf32>
    %10 = tpu.matmul %8, %9, %cst_8 {dimension_numbers = #tpu.dot_dimension_numbers<[1], [0], [0], [1], [0, 0, 1, 1], [], []>} : vector<8x256xbf16>, vector<256x1024xbf16>, vector<8x1024xf32> -> vector<8x1024xf32>
    %c0_9 = arith.constant 0 : index
    %c0_10 = arith.constant 0 : index
    %11 = vector.load %arg5[%c0_9, %c0_10] : memref<1x1024xf32, #tpu.memory_space<vmem>>, vector<1x1024xf32>
    %12 = vector.broadcast %11 : vector<1x1024xf32> to vector<8x1024xf32>
    %13 = arith.addf %10, %12 : vector<8x1024xf32>
    %c0_11 = arith.constant 0 : index
    %c0_12 = arith.constant 0 : index
    %14 = vector.load %arg1[%c0_11, %c0_12] : memref<8x1024xbf16, #tpu.memory_space<vmem>>, vector<8x1024xbf16>
    %15 = arith.extf %14 : vector<8x1024xbf16> to vector<8x1024xf32>
    %16 = arith.addf %13, %15 : vector<8x1024xf32>
    %17 = arith.truncf %16 : vector<8x1024xf32> to vector<8x1024xbf16>
    %c0_13 = arith.constant 0 : index
    %c0_14 = arith.constant 0 : index
    %18 = vector.load %arg6[%c0_13, %c0_14] : memref<8x1024xbf16, #tpu.memory_space<vmem>>, vector<8x1024xbf16>
    tpu.vector_store %arg6[%c0_13, %c0_14], %17 {strides = array<i32>} : memref<8x1024xbf16, #tpu.memory_space<vmem>>, vector<8x1024xbf16>,
    return
  }
  func.func @transform_0(%arg0: i32) -> (i32, i32) {
    %c0_i32 = arith.constant 0 : i32
    %c0_i32_0 = arith.constant 0 : i32
    return %arg0, %c0_i32 : i32, i32
  }
  func.func @transform_1(%arg0: i32) -> (i32, i32) {
    %c0_i32 = arith.constant 0 : i32
    %c0_i32_0 = arith.constant 0 : i32
    %c0_i32_1 = arith.constant 0 : i32
    return %c0_i32, %c0_i32_0 : i32, i32
  }
  func.func @transform_2(%arg0: i32) -> (i32, i32) {
    %c0_i32 = arith.constant 0 : i32
    %c0_i32_0 = arith.constant 0 : i32
    %c0_i32_1 = arith.constant 0 : i32
    return %c0_i32, %c0_i32_0 : i32, i32
  }
  func.func @transform_3(%arg0: i32) -> (i32, i32) {
    %c0_i32 = arith.constant 0 : i32
    %c0_i32_0 = arith.constant 0 : i32
    %c0_i32_1 = arith.constant 0 : i32
    return %c0_i32, %c0_i32_0 : i32, i32
  }
  func.func @transform_4(%arg0: i32) -> (i32, i32) {
    %c0_i32 = arith.constant 0 : i32
    %c0_i32_0 = arith.constant 0 : i32
    %c0_i32_1 = arith.constant 0 : i32
    return %c0_i32, %c0_i32_0 : i32, i32
  }
  func.func @transform_5(%arg0: i32) -> (i32, i32) {
    %c0_i32 = arith.constant 0 : i32
    %c0_i32_0 = arith.constant 0 : i32
    return %arg0, %c0_i32 : i32, i32
  }
}

module attributes {stable_mosaic.version = 11 : i64} {
  func.func @_tail_kernel(%arg0: i32, %arg1: memref<1x1x2048xbf16, #tpu.memory_space<vmem>>, %arg2: memref<2048x512xbf16, #tpu.memory_space<vmem>>, %arg3: memref<1x512xf32, #tpu.memory_space<vmem>>, %arg4: memref<512x2048xbf16, #tpu.memory_space<vmem>>, %arg5: memref<1x2048xf32, #tpu.memory_space<vmem>>, %arg6: memref<1024x256xbf16, #tpu.memory_space<vmem>>, %arg7: memref<1x256xf32, #tpu.memory_space<vmem>>, %arg8: memref<256x1024xbf16, #tpu.memory_space<vmem>>, %arg9: memref<1x1024xf32, #tpu.memory_space<vmem>>, %arg10: memref<1x1x1024xf32, #tpu.memory_space<vmem>>) attributes {dimension_semantics = [#tpu.dimension_semantics<parallel>], iteration_bounds = array<i64: 2>, scalar_prefetch = 0 : i64, scratch_operands = 0 : i64, tpu.core_type = #tpu.core_type<tc>, window_params = [{transform_indices = @transform_0, window_bounds = array<i64: 1, 1, 2048>}, {pipeline_mode = #tpu.pipeline_mode<synchronous>, transform_indices = @transform_1, window_bounds = array<i64: 2048, 512>}, {pipeline_mode = #tpu.pipeline_mode<synchronous>, transform_indices = @transform_2, window_bounds = array<i64: 1, 512>}, {pipeline_mode = #tpu.pipeline_mode<synchronous>, transform_indices = @transform_3, window_bounds = array<i64: 512, 2048>}, {pipeline_mode = #tpu.pipeline_mode<synchronous>, transform_indices = @transform_4, window_bounds = array<i64: 1, 2048>}, {pipeline_mode = #tpu.pipeline_mode<synchronous>, transform_indices = @transform_5, window_bounds = array<i64: 1024, 256>}, {pipeline_mode = #tpu.pipeline_mode<synchronous>, transform_indices = @transform_6, window_bounds = array<i64: 1, 256>}, {pipeline_mode = #tpu.pipeline_mode<synchronous>, transform_indices = @transform_7, window_bounds = array<i64: 256, 1024>}, {pipeline_mode = #tpu.pipeline_mode<synchronous>, transform_indices = @transform_8, window_bounds = array<i64: 1, 1024>}, {transform_indices = @transform_9, window_bounds = array<i64: 1, 1, 1024>}]} {
    %c0 = arith.constant 0 : index
    %c0_0 = arith.constant 0 : index
    %c0_1 = arith.constant 0 : index
    %0 = vector.load %arg1[%c0, %c0_0, %c0_1] : memref<1x1x2048xbf16, #tpu.memory_space<vmem>>, vector<1x1x2048xbf16>
    %1 = vector.shape_cast %0 : vector<1x1x2048xbf16> to vector<1x2048xbf16>
    %c0_2 = arith.constant 0 : index
    %c0_3 = arith.constant 0 : index
    %2 = vector.load %arg2[%c0_2, %c0_3] : memref<2048x512xbf16, #tpu.memory_space<vmem>>, vector<2048x512xbf16>
    %cst = arith.constant dense<0.000000e+00> : vector<1x512xf32>
    %3 = tpu.matmul %1, %2, %cst {dimension_numbers = #tpu.dot_dimension_numbers<[1], [0], [0], [1], [0, 0, 1, 1], [], []>} : vector<1x2048xbf16>, vector<2048x512xbf16>, vector<1x512xf32> -> vector<1x512xf32>
    %c0_4 = arith.constant 0 : index
    %c0_5 = arith.constant 0 : index
    %4 = vector.load %arg3[%c0_4, %c0_5] : memref<1x512xf32, #tpu.memory_space<vmem>>, vector<1x512xf32>
    %5 = arith.addf %3, %4 : vector<1x512xf32>
    %cst_6 = arith.constant 0.000000e+00 : f32
    %6 = vector.broadcast %cst_6 : f32 to vector<1x512xf32>
    %7 = arith.maximumf %5, %6 : vector<1x512xf32>
    %8 = arith.truncf %7 : vector<1x512xf32> to vector<1x512xbf16>
    %c0_7 = arith.constant 0 : index
    %c0_8 = arith.constant 0 : index
    %9 = vector.load %arg4[%c0_7, %c0_8] : memref<512x2048xbf16, #tpu.memory_space<vmem>>, vector<512x2048xbf16>
    %cst_9 = arith.constant dense<0.000000e+00> : vector<1x2048xf32>
    %10 = tpu.matmul %8, %9, %cst_9 {dimension_numbers = #tpu.dot_dimension_numbers<[1], [0], [0], [1], [0, 0, 1, 1], [], []>} : vector<1x512xbf16>, vector<512x2048xbf16>, vector<1x2048xf32> -> vector<1x2048xf32>
    %c0_10 = arith.constant 0 : index
    %c0_11 = arith.constant 0 : index
    %11 = vector.load %arg5[%c0_10, %c0_11] : memref<1x2048xf32, #tpu.memory_space<vmem>>, vector<1x2048xf32>
    %12 = arith.addf %10, %11 : vector<1x2048xf32>
    %13 = arith.extf %1 : vector<1x2048xbf16> to vector<1x2048xf32>
    %14 = arith.addf %12, %13 : vector<1x2048xf32>
    %15 = vector.shape_cast %14 : vector<1x2048xf32> to vector<1x1x2048xf32>
    %cst_12 = arith.constant dense<0.000000e+00> : vector<1x2048xf32>
    %16 = vector.multi_reduction <add>, %15, %cst_12 [1] : vector<1x1x2048xf32> to vector<1x2048xf32>
    %cst_13 = arith.constant 1.000000e+00 : f32
    %17 = vector.broadcast %cst_13 : f32 to vector<1x2048xf32>
    %18 = arith.divf %16, %17 : vector<1x2048xf32>
    %19 = vector.extract_strided_slice %18 {offsets = [0, 0], sizes = [1, 1024], strides = [1, 1]} : vector<1x2048xf32> to vector<1x1024xf32>
    %20 = vector.extract_strided_slice %18 {offsets = [0, 1024], sizes = [1, 1024], strides = [1, 1]} : vector<1x2048xf32> to vector<1x1024xf32>
    %21 = arith.addf %19, %20 : vector<1x1024xf32>
    %cst_14 = arith.constant 5.000000e-01 : f32
    %22 = vector.broadcast %cst_14 : f32 to vector<1x1024xf32>
    %23 = arith.mulf %22, %21 : vector<1x1024xf32>
    %24 = arith.truncf %23 : vector<1x1024xf32> to vector<1x1024xbf16>
    %c0_15 = arith.constant 0 : index
    %c0_16 = arith.constant 0 : index
    %25 = vector.load %arg6[%c0_15, %c0_16] : memref<1024x256xbf16, #tpu.memory_space<vmem>>, vector<1024x256xbf16>
    %cst_17 = arith.constant dense<0.000000e+00> : vector<1x256xf32>
    %26 = tpu.matmul %24, %25, %cst_17 {dimension_numbers = #tpu.dot_dimension_numbers<[1], [0], [0], [1], [0, 0, 1, 1], [], []>} : vector<1x1024xbf16>, vector<1024x256xbf16>, vector<1x256xf32> -> vector<1x256xf32>
    %c0_18 = arith.constant 0 : index
    %c0_19 = arith.constant 0 : index
    %27 = vector.load %arg7[%c0_18, %c0_19] : memref<1x256xf32, #tpu.memory_space<vmem>>, vector<1x256xf32>
    %28 = arith.addf %26, %27 : vector<1x256xf32>
    %cst_20 = arith.constant 0.000000e+00 : f32
    %29 = vector.broadcast %cst_20 : f32 to vector<1x256xf32>
    %30 = arith.maximumf %28, %29 : vector<1x256xf32>
    %31 = arith.truncf %30 : vector<1x256xf32> to vector<1x256xbf16>
    %c0_21 = arith.constant 0 : index
    %c0_22 = arith.constant 0 : index
    %32 = vector.load %arg8[%c0_21, %c0_22] : memref<256x1024xbf16, #tpu.memory_space<vmem>>, vector<256x1024xbf16>
    %cst_23 = arith.constant dense<0.000000e+00> : vector<1x1024xf32>
    %33 = tpu.matmul %31, %32, %cst_23 {dimension_numbers = #tpu.dot_dimension_numbers<[1], [0], [0], [1], [0, 0, 1, 1], [], []>} : vector<1x256xbf16>, vector<256x1024xbf16>, vector<1x1024xf32> -> vector<1x1024xf32>
    %c0_24 = arith.constant 0 : index
    %c0_25 = arith.constant 0 : index
    %34 = vector.load %arg9[%c0_24, %c0_25] : memref<1x1024xf32, #tpu.memory_space<vmem>>, vector<1x1024xf32>
    %35 = arith.addf %33, %34 : vector<1x1024xf32>
    %36 = arith.addf %35, %23 : vector<1x1024xf32>
    %37 = vector.shape_cast %36 : vector<1x1024xf32> to vector<1x1x1024xf32>
    %c0_26 = arith.constant 0 : index
    %c0_27 = arith.constant 0 : index
    %c0_28 = arith.constant 0 : index
    %38 = vector.load %arg10[%c0_26, %c0_27, %c0_28] : memref<1x1x1024xf32, #tpu.memory_space<vmem>>, vector<1x1x1024xf32>
    tpu.vector_store %arg10[%c0_26, %c0_27, %c0_28], %37 {strides = array<i32>} : memref<1x1x1024xf32, #tpu.memory_space<vmem>>, vector<1x1x1024xf32>,
    return
  }
  func.func @transform_0(%arg0: i32) -> (i32, i32, i32) {
    %c0_i32 = arith.constant 0 : i32
    %c0_i32_0 = arith.constant 0 : i32
    %c0_i32_1 = arith.constant 0 : i32
    return %arg0, %c0_i32, %c0_i32_0 : i32, i32, i32
  }
  func.func @transform_1(%arg0: i32) -> (i32, i32) {
    %c0_i32 = arith.constant 0 : i32
    %c0_i32_0 = arith.constant 0 : i32
    %c0_i32_1 = arith.constant 0 : i32
    return %c0_i32, %c0_i32_0 : i32, i32
  }
  func.func @transform_2(%arg0: i32) -> (i32, i32) {
    %c0_i32 = arith.constant 0 : i32
    %c0_i32_0 = arith.constant 0 : i32
    %c0_i32_1 = arith.constant 0 : i32
    return %c0_i32, %c0_i32_0 : i32, i32
  }
  func.func @transform_3(%arg0: i32) -> (i32, i32) {
    %c0_i32 = arith.constant 0 : i32
    %c0_i32_0 = arith.constant 0 : i32
    %c0_i32_1 = arith.constant 0 : i32
    return %c0_i32, %c0_i32_0 : i32, i32
  }
  func.func @transform_4(%arg0: i32) -> (i32, i32) {
    %c0_i32 = arith.constant 0 : i32
    %c0_i32_0 = arith.constant 0 : i32
    %c0_i32_1 = arith.constant 0 : i32
    return %c0_i32, %c0_i32_0 : i32, i32
  }
  func.func @transform_5(%arg0: i32) -> (i32, i32) {
    %c0_i32 = arith.constant 0 : i32
    %c0_i32_0 = arith.constant 0 : i32
    %c0_i32_1 = arith.constant 0 : i32
    return %c0_i32, %c0_i32_0 : i32, i32
  }
  func.func @transform_6(%arg0: i32) -> (i32, i32) {
    %c0_i32 = arith.constant 0 : i32
    %c0_i32_0 = arith.constant 0 : i32
    %c0_i32_1 = arith.constant 0 : i32
    return %c0_i32, %c0_i32_0 : i32, i32
  }
  func.func @transform_7(%arg0: i32) -> (i32, i32) {
    %c0_i32 = arith.constant 0 : i32
    %c0_i32_0 = arith.constant 0 : i32
    %c0_i32_1 = arith.constant 0 : i32
    return %c0_i32, %c0_i32_0 : i32, i32
  }
  func.func @transform_8(%arg0: i32) -> (i32, i32) {
    %c0_i32 = arith.constant 0 : i32
    %c0_i32_0 = arith.constant 0 : i32
    %c0_i32_1 = arith.constant 0 : i32
    return %c0_i32, %c0_i32_0 : i32, i32
  }
  func.func @transform_9(%arg0: i32) -> (i32, i32, i32) {
    %c0_i32 = arith.constant 0 : i32
    %c0_i32_0 = arith.constant 0 : i32
    %c0_i32_1 = arith.constant 0 : i32
    return %arg0, %c0_i32, %c0_i32_0 : i32, i32, i32
  }
}

</mosaic_0001>

<llo_original>
// kernel: adapter_clip_rn50_forward.4
$region0: #{adapter_clip_rn50_forward.4}
  #allocation0 [shape = 'u32[]', space=smem, size = 0x4, offset = 0x4, fixed_abs, tag = 'smem constant byte address 0x4 - core index']
  #allocation1 [shape = 'u32[72,128]{1,0:T(1,128)}', space=vmem, size = 0x9000, scoped, tag = 'internal scratch']
  %s0 = inlined_call_operand.vmem [shape: bf16[128,256], index: 0, kind: input, shape index: {}]
  %s1 = inlined_call_operand.vmem [shape: bf16[256,128], index: 1, kind: input, shape index: {}]
  %s2 = inlined_call_operand.vmem [shape: f32[1,128], index: 2, kind: input, shape index: {}]
  %s3 = inlined_call_operand.vmem [shape: bf16[128,256], index: 3, kind: input, shape index: {}]
  %s4 = inlined_call_operand.vmem [shape: f32[1,256], index: 4, kind: input, shape index: {}]
  %s5 = inlined_call_operand.vmem [shape: bf16[128,256], index: 5, kind: output, shape index: {}]
  %s6 = sld [smem:[#allocation0]]
  $region53: #{adapter_clip_rn50_forward.4} parent=0
    _
  %s8 = ssub.s32 1, %s6
  %s9 = scalar_select 0, %s8, %s6
  loop: start=0, step=1, limit=4
  $region2: #{adapter_clip_rn50_forward.4} parent=0 // loop_pre_header
    _
  $region3: #{adapter_clip_rn50_forward.4} parent=0 // loop_header
    %s11 = sphi 0, %s15
    %p12 = scmp.ge.s32.totalorder %s11, 4
    %s21 = sphi 0, %s23
    %s24 = sphi 0, %s21
    %s25 = sphi 0, %s24
    %s41 = sphi 0, %s25
    %s45 = sphi 0, %s45
    %s47 = sphi 0, %s45
    %s48 = sphi 0, %s47
    %s62 = sphi 0, %s48
    %s66 = sphi 0, %s66
    %s68 = sphi 0, %s66
    %s69 = sphi 0, %s68
    %s83 = sphi 0, %s69
    %s87 = sphi 0, %s87
    %s89 = sphi 0, %s87
    %s90 = sphi 0, %s89
    %s104 = sphi 0, %s90
    %s108 = sphi 0, %s108
    %s110 = sphi 0, %s108
    %s111 = sphi 0, %s110
    %s125 = sphi 0, %s111
    %s131 = sphi 0, %s133
    %s134 = sphi 0, %s131
    %s135 = sphi 0, %s134
    %s151 = sphi 0, %s135
  $region4: #{adapter_clip_rn50_forward.4} parent=0 // loop_header_branch
    %14 = sbr.rel (%p12) target = $region8
  $region5: #{adapter_clip_rn50_forward.4} parent=0 // loop_body
    %s16 = ssub.s32 %s11, 1
    %s17 = ssub.s32 %s11, 2
    %s18 = sadd.s32 %s11, 1
    %s19 = ssub.s32 %s11, %s18
    %p20 = scmp.eq.s32.totalorder %s19, 0
    %s22 = sadd.s32 %s21, 1
    %s23 = scalar_select %p20, %s21, %s22
    %p26 = pneg %p20
    %p27 = scmp.eq.s32.totalorder %s11, 1
    %p28 = por %p26, %p27
    %p29 = scmp.ne.s32.totalorder %s21, %s24
    %p30 = scmp.eq.s32.totalorder %s11, 0
    %p31 = por %p29, %p30
    %p32 = scmp.ne.s32.totalorder %s21, %s24
    %p33 = scmp.eq.s32.totalorder %s16, 1
    %p34 = por %p32, %p33
    %p35 = scmp.ne.s32.totalorder %s24, %s25
    %p36 = scmp.eq.s32.totalorder %s16, 0
    %p37 = por %p35, %p36
    %p38 = scmp.ne.s32.totalorder %s24, %s25
    %p39 = scmp.eq.s32.totalorder %s17, 1
    %p40 = por %p38, %p39
    %p42 = scmp.ne.s32.totalorder %s25, %s41
    %p43 = scmp.eq.s32.totalorder %s17, 0
    %p44 = por %p42, %p43
    %s46 = sadd.s32 %s45, 1
    %p49 = scmp.eq.s32.totalorder %s11, 1
    %p50 = scmp.ne.s32.totalorder %s45, %s47
    %p51 = scmp.eq.s32.totalorder %s11, 0
    %p52 = por %p50, %p51
    %p53 = scmp.ne.s32.totalorder %s45, %s47
    %p54 = scmp.eq.s32.totalorder %s16, 1
    %p55 = por %p53, %p54
    %p56 = scmp.ne.s32.totalorder %s47, %s48
    %p57 = scmp.eq.s32.totalorder %s16, 0
    %p58 = por %p56, %p57
    %p59 = scmp.ne.s32.totalorder %s47, %s48
    %p60 = scmp.eq.s32.totalorder %s17, 1
    %p61 = por %p59, %p60
    %p63 = scmp.ne.s32.totalorder %s48, %s62
    %p64 = scmp.eq.s32.totalorder %s17, 0
    %p65 = por %p63, %p64
    %s67 = sadd.s32 %s66, 1
    %p70 = scmp.eq.s32.totalorder %s11, 1
    %p71 = scmp.ne.s32.totalorder %s66, %s68
    %p72 = scmp.eq.s32.totalorder %s11, 0
    %p73 = por %p71, %p72
    %p74 = scmp.ne.s32.totalorder %s66, %s68
    %p75 = scmp.eq.s32.totalorder %s16, 1
    %p76 = por %p74, %p75
    %p77 = scmp.ne.s32.totalorder %s68, %s69
    %p78 = scmp.eq.s32.totalorder %s16, 0
    %p79 = por %p77, %p78
    %p80 = scmp.ne.s32.totalorder %s68, %s69
    %p81 = scmp.eq.s32.totalorder %s17, 1
    %p82 = por %p80, %p81
    %p84 = scmp.ne.s32.totalorder %s69, %s83
    %p85 = scmp.eq.s32.totalorder %s17, 0
    %p86 = por %p84, %p85
    %s88 = sadd.s32 %s87, 1
    %p91 = scmp.eq.s32.totalorder %s11, 1
    %p92 = scmp.ne.s32.totalorder %s87, %s89
    %p93 = scmp.eq.s32.totalorder %s11, 0
    %p94 = por %p92, %p93
    %p95 = scmp.ne.s32.totalorder %s87, %s89
    %p96 = scmp.eq.s32.totalorder %s16, 1
    %p97 = por %p95, %p96
    %p98 = scmp.ne.s32.totalorder %s89, %s90
    %p99 = scmp.eq.s32.totalorder %s16, 0
    %p100 = por %p98, %p99
    %p101 = scmp.ne.s32.totalorder %s89, %s90
    %p102 = scmp.eq.s32.totalorder %s17, 1
    %p103 = por %p101, %p102
    %p105 = scmp.ne.s32.totalorder %s90, %s104
    %p106 = scmp.eq.s32.totalorder %s17, 0
    %p107 = por %p105, %p106
    %s109 = sadd.s32 %s108, 1
    %p112 = scmp.eq.s32.totalorder %s11, 1
    %p113 = scmp.ne.s32.totalorder %s108, %s110
    %p114 = scmp.eq.s32.totalorder %s11, 0
    %p115 = por %p113, %p114
    %p116 = scmp.ne.s32.totalorder %s108, %s110
    %p117 = scmp.eq.s32.totalorder %s16, 1
    %p118 = por %p116, %p117
    %p119 = scmp.ne.s32.totalorder %s110, %s111
    %p120 = scmp.eq.s32.totalorder %s16, 0
    %p121 = por %p119, %p120
    %p122 = scmp.ne.s32.totalorder %s110, %s111
    %p123 = scmp.eq.s32.totalorder %s17, 1
    %p124 = por %p122, %p123
    %p126 = scmp.ne.s32.totalorder %s111, %s125
    %p127 = scmp.eq.s32.totalorder %s17, 0
    %p128 = por %p126, %p127
    %s129 = ssub.s32 %s11, %s18
    %p130 = scmp.eq.s32.totalorder %s129, 0
    %s132 = sadd.s32 %s131, 1
    %s133 = scalar_select %p130, %s131, %s132
    %p136 = pneg %p130
    %p137 = scmp.eq.s32.totalorder %s11, 1
    %p138 = por %p136, %p137
    %p139 = scmp.ne.s32.totalorder %s131, %s134
    %p140 = scmp.eq.s32.totalorder %s11, 0
    %p141 = por %p139, %p140
    %p142 = scmp.ne.s32.totalorder %s131, %s134
    %p143 = scmp.eq.s32.totalorder %s16, 1
    %p144 = por %p142, %p143
    %p145 = scmp.ne.s32.totalorder %s134, %s135
    %p146 = scmp.eq.s32.totalorder %s16, 0
    %p147 = por %p145, %p146
    %p148 = scmp.ne.s32.totalorder %s134, %s135
    %p149 = scmp.eq.s32.totalorder %s17, 1
    %p150 = por %p148, %p149
    %p152 = scmp.ne.s32.totalorder %s135, %s151
    %p153 = scmp.eq.s32.totalorder %s17, 0
    %p154 = por %p152, %p153
    %p155 = scmp.le.s32.totalorder 1, %s11
    %p156 = scmp.lt.s32.totalorder %s11, 3
    %p157 = pnand %p155, %p156
    %p158 = pneg %p157
    // Predicated region
    $region9: #{adapter_clip_rn50_forward.4} parent=5 // pred_check
      _
    $region10: #{adapter_clip_rn50_forward.4} parent=5 // pred_check_branch
      %160 = sbr.rel (%p157) target = $region12
    $region11: #{adapter_clip_rn50_forward.4} parent=5 // pred_region
      %s161 = ssub.s32 %s11, 1
      // Predicated region
      $region13: #{adapter_clip_rn50_forward.4} parent=11 // pred_check
        %p162 = pneg %p58
      $region14: #{adapter_clip_rn50_forward.4} parent=11 // pred_check_branch
        %164 = sbr.rel (%p162) target = $region16
      $region15: #{adapter_clip_rn50_forward.4} parent=11 // pred_region
        _
      $region16: #{adapter_clip_rn50_forward.4} parent=11 // pred_fallthru
        _
      // Predicated region
      $region17: #{adapter_clip_rn50_forward.4} parent=11 // pred_check
        %p165 = pneg %p79
      $region18: #{adapter_clip_rn50_forward.4} parent=11 // pred_check_branch
        %167 = sbr.rel (%p165) target = $region20
      $region19: #{adapter_clip_rn50_forward.4} parent=11 // pred_region
        _
      $region20: #{adapter_clip_rn50_forward.4} parent=11 // pred_fallthru
        _
      // Predicated region
      $region21: #{adapter_clip_rn50_forward.4} parent=11 // pred_check
        %p168 = pneg %p100
      $region22: #{adapter_clip_rn50_forward.4} parent=11 // pred_check_branch
        %170 = sbr.rel (%p168) target = $region24
      $region23: #{adapter_clip_rn50_forward.4} parent=11 // pred_region
        _
      $region24: #{adapter_clip_rn50_forward.4} parent=11 // pred_fallthru
        _
      // Predicated region
      $region25: #{adapter_clip_rn50_forward.4} parent=11 // pred_check
        %p171 = pneg %p121
      $region26: #{adapter_clip_rn50_forward.4} parent=11 // pred_check_branch
        %173 = sbr.rel (%p171) target = $region28
      $region27: #{adapter_clip_rn50_forward.4} parent=11 // pred_region
        _
      $region28: #{adapter_clip_rn50_forward.4} parent=11 // pred_fallthru
        _
    $region12: #{adapter_clip_rn50_forward.4} parent=5 // pred_fallthru
      _
    %p174 = scmp.lt.s32.totalorder %s11, 2
    // Predicated region
    $region29: #{adapter_clip_rn50_forward.4} parent=5 // pred_check
      %p175 = pneg %p174
    $region30: #{adapter_clip_rn50_forward.4} parent=5 // pred_check_branch
      %177 = sbr.rel (%p175) target = $region32
    $region31: #{adapter_clip_rn50_forward.4} parent=5 // pred_region
      // Predicated region
      $region33: #{adapter_clip_rn50_forward.4} parent=31 // pred_check
        %p178 = pneg %p31
      $region34: #{adapter_clip_rn50_forward.4} parent=31 // pred_check_branch
        %180 = sbr.rel (%p178) target = $region36
      $region35: #{adapter_clip_rn50_forward.4} parent=31 // pred_region
        %s181 = smul.u32 8, %s11
        %p182 = scmp.lt.s32.totalorder %s181, 15
        %s183 = scalar_select %p182, %s181, 15
        %s184 = smul.addr %s183, 2
        %s185 = smul.addr %s184, 4
        %s186 = scalar_lea.vmem %s0, %s185
        %s187 = smul.u32 8, %s11
      $region36: #{adapter_clip_rn50_forward.4} parent=31 // pred_fallthru
        _
    $region32: #{adapter_clip_rn50_forward.4} parent=5 // pred_fallthru
      _
    %p188 = scmp.le.s32.totalorder 1, %s11
    %p189 = scmp.lt.s32.totalorder %s11, 3
    %p190 = pnand %p188, %p189
    %p191 = pneg %p190
    // Predicated region
    $region37: #{adapter_clip_rn50_forward.4} parent=5 // pred_check
      _
    $region38: #{adapter_clip_rn50_forward.4} parent=5 // pred_check_branch
      %193 = sbr.rel (%p190) target = $region40
    $region39: #{adapter_clip_rn50_forward.4} parent=5 // pred_region
      %s194 = ssub.s32 %s11, 1
      %s195 = smul.u32 8, %s16
      %p196 = scmp.lt.s32.totalorder %s195, 15
      %s197 = scalar_select %p196, %s195, 15
      %s198 = smul.addr %s197, 2
      %s199 = smul.addr %s198, 4
      %s200 = scalar_lea.vmem %s0, %s199
      %p201 = pneg %p37
      %p202 = pneg %p34
      %p203 = pneg %p58
      %p204 = pneg %p55
      %p205 = pneg %p79
      %p206 = pneg %p76
      %p207 = pneg %p100
      %p208 = pneg %p97
      %p209 = pneg %p121
      %p210 = pneg %p118
      %p211 = pneg %p147
      %p212 = pneg %p144
      %s213 = smul.u32 8, %s16
      %p214 = scmp.lt.s32.totalorder %s213, 15
      %s215 = scalar_select %p214, %s213, 15
      %s216 = smul.addr %s215, 2
      %s217 = smul.addr %s216, 4
      %s218 = scalar_lea.vmem %s5, %s217
      %s219 = smul.u32 8, %s16
      %p220 = scmp.lt.s32.totalorder %s219, 15
      %s221 = scalar_select %p220, %s219, 15
      %s222 = smul.addr %s221, 2
      %s223 = smul.addr %s222, 4
      %s224 = scalar_lea.vmem %s0, %s223
      %s225 = smul.u32 8, %s16
      %s226 = smul.u32 8, %s16
      %p227 = scmp.lt.s32.totalorder %s226, 15
      %s228 = scalar_select %p227, %s226, 15
      %s229 = smul.addr %s228, 2
      %s230 = smul.addr %s229, 4
      %s231 = scalar_lea.vmem %s5, %s230
      %s232 = smul.u32 8, %s16
      %v233 = vld [vmem:[%s224] sm:$0xff]
      %v234 = vld [vmem:[%s224 + $0x8] sm:$0xff]
      %v235 = vld [vmem:[%s224 + $0x10] sm:$0xff]
      %v236 = vld [vmem:[%s224 + $0x18] sm:$0xff]
      %v237 = vld [vmem:[%s224 + $0x20] sm:$0xff]
      %v238 = vld [vmem:[%s224 + $0x28] sm:$0xff]
      %v239 = vld [vmem:[%s224 + $0x30] sm:$0xff]
      %v240 = vld [vmem:[%s224 + $0x38] sm:$0xff]
      %v241 = vld [vmem:[%s1] sm:$0xf]
      %v242 = vld [vmem:[%s1 + $0x4] sm:$0xf]
      %v243 = vld [vmem:[%s1 + $0x8] sm:$0xf]
      %v244 = vld [vmem:[%s1 + $0xc] sm:$0xf]
      %v245 = vld [vmem:[%s1 + $0x10] sm:$0xf]
      %v246 = vld [vmem:[%s1 + $0x14] sm:$0xf]
      %v247 = vld [vmem:[%s1 + $0x18] sm:$0xf]
      %v248 = vld [vmem:[%s1 + $0x1c] sm:$0xf]
      %v249 = vld [vmem:[%s1 + $0x20] sm:$0xf]
      %v250 = vld [vmem:[%s1 + $0x24] sm:$0xf]
      %v251 = vld [vmem:[%s1 + $0x28] sm:$0xf]
      %v252 = vld [vmem:[%s1 + $0x2c] sm:$0xf]
      %v253 = vld [vmem:[%s1 + $0x30] sm:$0xf]
      %v254 = vld [vmem:[%s1 + $0x34] sm:$0xf]
      %v255 = vld [vmem:[%s1 + $0x38] sm:$0xf]
      %v256 = vld [vmem:[%s1 + $0x3c] sm:$0xf]
      %v257 = vld [vmem:[%s1 + $0x40] sm:$0xf]
      %v258 = vld [vmem:[%s1 + $0x44] sm:$0xf]
      %v259 = vld [vmem:[%s1 + $0x48] sm:$0xf]
      %v260 = vld [vmem:[%s1 + $0x4c] sm:$0xf]
      %v261 = vld [vmem:[%s1 + $0x50] sm:$0xf]
      %v262 = vld [vmem:[%s1 + $0x54] sm:$0xf]
      %v263 = vld [vmem:[%s1 + $0x58] sm:$0xf]
      %v264 = vld [vmem:[%s1 + $0x5c] sm:$0xf]
      %v265 = vld [vmem:[%s1 + $0x60] sm:$0xf]
      %v266 = vld [vmem:[%s1 + $0x64] sm:$0xf]
      %v267 = vld [vmem:[%s1 + $0x68] sm:$0xf]
      %v268 = vld [vmem:[%s1 + $0x6c] sm:$0xf]
      %v269 = vld [vmem:[%s1 + $0x70] sm:$0xf]
      %v270 = vld [vmem:[%s1 + $0x74] sm:$0xf]
      %v271 = vld [vmem:[%s1 + $0x78] sm:$0xf]
      %v272 = vld [vmem:[%s1 + $0x7c] sm:$0xf]
      %v273 = vld [vmem:[%s2] sm:$0x1]
      %v275 = vperm.slane %v273, 0
      %v285 = vunpack.c.l.b16 %v233
      %v286 = vunpack.c.h.b16 %v233
      %v287 = vunpack.c.l.b16 %v234
      %v288 = vunpack.c.h.b16 %v234
      %v289 = vunpack.c.l.b16 %v235
      %v290 = vunpack.c.h.b16 %v235
      %v291 = vunpack.c.l.b16 %v236
      %v292 = vunpack.c.h.b16 %v236
      %v293 = vunpack.c.l.b16 %v237
      %v294 = vunpack.c.h.b16 %v237
      %v295 = vunpack.c.l.b16 %v238
      %v296 = vunpack.c.h.b16 %v238
      %v297 = vunpack.c.l.b16 %v239
      %v298 = vunpack.c.h.b16 %v239
      %v299 = vunpack.c.l.b16 %v240
      %v300 = vunpack.c.h.b16 %v240
      %v301 = vpack.c.b16 %v287, %v285
      %v302 = vpack.c.b16 %v288, %v286
      %v303 = vpack.c.b16 %v291, %v289
      %v304 = vpack.c.b16 %v292, %v290
      %v305 = vpack.c.b16 %v295, %v293
      %v306 = vpack.c.b16 %v296, %v294
      %v307 = vpack.c.b16 %v299, %v297
      %v308 = vpack.c.b16 %v300, %v298
      %v349 = vunpack.c.l.b16 %v241
      %v350 = vunpack.c.l.b16 %v242
      %v351 = vunpack.c.l.b16 %v243
      %v352 = vunpack.c.l.b16 %v244
      %v353 = vunpack.c.l.b16 %v245
      %v354 = vunpack.c.l.b16 %v246
      %v355 = vunpack.c.l.b16 %v247
      %v356 = vunpack.c.l.b16 %v248
      %v357 = vunpack.c.l.b16 %v249
      %v358 = vunpack.c.l.b16 %v250
      %v359 = vunpack.c.l.b16 %v251
      %v360 = vunpack.c.l.b16 %v252
      %v361 = vunpack.c.l.b16 %v253
      %v362 = vunpack.c.l.b16 %v254
      %v363 = vunpack.c.l.b16 %v255
      %v364 = vunpack.c.l.b16 %v256
      %v365 = vunpack.c.l.b16 %v257
      %v366 = vunpack.c.l.b16 %v258
      %v367 = vunpack.c.l.b16 %v259
      %v368 = vunpack.c.l.b16 %v260
      %v369 = vunpack.c.l.b16 %v261
      %v370 = vunpack.c.l.b16 %v262
      %v371 = vunpack.c.l.b16 %v263
      %v372 = vunpack.c.l.b16 %v264
      %v373 = vunpack.c.l.b16 %v265
      %v374 = vunpack.c.l.b16 %v266
      %v375 = vunpack.c.l.b16 %v267
      %v376 = vunpack.c.l.b16 %v268
      %v377 = vunpack.c.l.b16 %v269
      %v378 = vunpack.c.l.b16 %v270
      %v379 = vunpack.c.l.b16 %v271
      %v380 = vunpack.c.l.b16 %v272
      %v381 = vpack.c.b16 %v350, %v349
      %v382 = vpack.c.b16 %v352, %v351
      %v383 = vpack.c.b16 %v354, %v353
      %v384 = vpack.c.b16 %v356, %v355
      %v385 = vpack.c.b16 %v358, %v357
      %v386 = vpack.c.b16 %v360, %v359
      %v387 = vpack.c.b16 %v362, %v361
      %v388 = vpack.c.b16 %v364, %v363
      %v389 = vpack.c.b16 %v366, %v365
      %v390 = vpack.c.b16 %v368, %v367
      %v391 = vpack.c.b16 %v370, %v369
      %v392 = vpack.c.b16 %v372, %v371
      %v393 = vpack.c.b16 %v374, %v373
      %v394 = vpack.c.b16 %v376, %v375
      %v395 = vpack.c.b16 %v378, %v377
      %v396 = vpack.c.b16 %v380, %v379
      %413 = vmatpush.bf16.msra.mxu0 %v388
      %414 = vmatpush.bf16.msra.mxu0 %v387
      %415 = vmatpush.bf16.msra.mxu0 %v386
      %416 = vmatpush.bf16.msra.mxu0 %v385
      %417 = vmatpush.bf16.msra.mxu0 %v384
      %418 = vmatpush.bf16.msra.mxu0 %v383
      %419 = vmatpush.bf16.msra.mxu0 %v382
      %420 = vmatpush.bf16.msra.mxu0 %v381
      %421 = vmatmul.bf16.gmra.mxu0 %v301
      %v422 = vpop.f32.mrf.mxu0
      %v423 = vadd.f32 %v275, %v422
      %v424 = vpop.f32.mrf.mxu0
      %v425 = vadd.f32 %v275, %v424
      %426 = vmatmul.bf16.gmra.mxu0 %v303
      %v427 = vpop.f32.mrf.mxu0
      %v428 = vadd.f32 %v275, %v427
      %v429 = vpop.f32.mrf.mxu0
      %v430 = vadd.f32 %v275, %v429
      %431 = vmatmul.bf16.gmra.mxu0 %v305
      %v432 = vpop.f32.mrf.mxu0
      %v433 = vadd.f32 %v275, %v432
      %v434 = vpop.f32.mrf.mxu0
      %v435 = vadd.f32 %v275, %v434
      %436 = vmatmul.bf16.gmra.mxu0 %v307
      %v437 = vpop.f32.mrf.mxu0
      %v438 = vadd.f32 %v275, %v437
      %v439 = vpop.f32.mrf.mxu0
      %v440 = vadd.f32 %v275, %v439
      %441 = vdwg.mxu0
      %442 = vmatpush.bf16.msra.mxu0 %v396
      %443 = vmatpush.bf16.msra.mxu0 %v395
      %444 = vmatpush.bf16.msra.mxu0 %v394
      %445 = vmatpush.bf16.msra.mxu0 %v393
      %446 = vmatpush.bf16.msra.mxu0 %v392
      %447 = vmatpush.bf16.msra.mxu0 %v391
      %448 = vmatpush.bf16.msra.mxu0 %v390
      %449 = vmatpush.bf16.msra.mxu0 %v389
      %450 = vmatmul.bf16.gmra.mxu0 %v302
      %v451 = vpop.f32.mrf.mxu0
      %v452 = vadd.f32 %v423, %v451
      %v453 = vpop.f32.mrf.mxu0
      %v454 = vadd.f32 %v425, %v453
      %455 = vmatmul.bf16.gmra.mxu0 %v304
      %v456 = vpop.f32.mrf.mxu0
      %v457 = vadd.f32 %v428, %v456
      %v458 = vpop.f32.mrf.mxu0
      %v459 = vadd.f32 %v430, %v458
      %460 = vmatmul.bf16.gmra.mxu0 %v306
      %v461 = vpop.f32.mrf.mxu0
      %v462 = vadd.f32 %v433, %v461
      %v463 = vpop.f32.mrf.mxu0
      %v464 = vadd.f32 %v435, %v463
      %465 = vmatmul.bf16.gmra.mxu0 %v308
      %v466 = vpop.f32.mrf.mxu0
      %v467 = vadd.f32 %v438, %v466
      %v468 = vpop.f32.mrf.mxu0
      %v469 = vadd.f32 %v440, %v468
      %470 = vdwg.mxu0
      %v471 = vmax.f32 %v452, 0.0
      %v472 = vmax.f32 %v454, 0.0
      %v473 = vmax.f32 %v457, 0.0
      %v474 = vmax.f32 %v459, 0.0
      %v475 = vmax.f32 %v462, 0.0
      %v476 = vmax.f32 %v464, 0.0
      %v477 = vmax.f32 %v467, 0.0
      %v478 = vmax.f32 %v469, 0.0
      %v479 = vpack.c.bf16 %v472, %v471
      %v480 = vpack.c.bf16 %v474, %v473
      %v481 = vpack.c.bf16 %v476, %v475
      %v482 = vpack.c.bf16 %v478, %v477
      %v483 = vld [vmem:[%s3] sm:$0xff]
      %v484 = vld [vmem:[%s3 + $0x8] sm:$0xff]
      %v485 = vld [vmem:[%s3 + $0x10] sm:$0xff]
      %v486 = vld [vmem:[%s3 + $0x18] sm:$0xff]
      %v487 = vld [vmem:[%s3 + $0x20] sm:$0xff]
      %v488 = vld [vmem:[%s3 + $0x28] sm:$0xff]
      %v489 = vld [vmem:[%s3 + $0x30] sm:$0xff]
      %v490 = vld [vmem:[%s3 + $0x38] sm:$0xff]
      %v491 = vld [vmem:[%s3 + $0x40] sm:$0xff]
      %v492 = vld [vmem:[%s3 + $0x48] sm:$0xff]
      %v493 = vld [vmem:[%s3 + $0x50] sm:$0xff]
      %v494 = vld [vmem:[%s3 + $0x58] sm:$0xff]
      %v495 = vld [vmem:[%s3 + $0x60] sm:$0xff]
      %v496 = vld [vmem:[%s3 + $0x68] sm:$0xff]
      %v497 = vld [vmem:[%s3 + $0x70] sm:$0xff]
      %v498 = vld [vmem:[%s3 + $0x78] sm:$0xff]
      %v499 = vld [vmem:[%s4] sm:$0x3]
      %v501 = vperm.slane %v499, 0
      %v502 = vperm.slane %v499, 1
      %v521 = vunpack.c.l.b16 %v483
      %v522 = vunpack.c.h.b16 %v483
      %v523 = vunpack.c.l.b16 %v484
      %v524 = vunpack.c.h.b16 %v484
      %v525 = vunpack.c.l.b16 %v485
      %v526 = vunpack.c.h.b16 %v485
      %v527 = vunpack.c.l.b16 %v486
      %v528 = vunpack.c.h.b16 %v486
      %v529 = vunpack.c.l.b16 %v487
      %v530 = vunpack.c.h.b16 %v487
      %v531 = vunpack.c.l.b16 %v488
      %v532 = vunpack.c.h.b16 %v488
      %v533 = vunpack.c.l.b16 %v489
      %v534 = vunpack.c.h.b16 %v489
      %v535 = vunpack.c.l.b16 %v490
      %v536 = vunpack.c.h.b16 %v490
      %v537 = vunpack.c.l.b16 %v491
      %v538 = vunpack.c.h.b16 %v491
      %v539 = vunpack.c.l.b16 %v492
      %v540 = vunpack.c.h.b16 %v492
      %v541 = vunpack.c.l.b16 %v493
      %v542 = vunpack.c.h.b16 %v493
      %v543 = vunpack.c.l.b16 %v494
      %v544 = vunpack.c.h.b16 %v494
      %v545 = vunpack.c.l.b16 %v495
      %v546 = vunpack.c.h.b16 %v495
      %v547 = vunpack.c.l.b16 %v496
      %v548 = vunpack.c.h.b16 %v496
      %v549 = vunpack.c.l.b16 %v497
      %v550 = vunpack.c.h.b16 %v497
      %v551 = vunpack.c.l.b16 %v498
      %v552 = vunpack.c.h.b16 %v498
      %v553 = vpack.c.b16 %v523, %v521
      %v554 = vpack.c.b16 %v524, %v522
      %v555 = vpack.c.b16 %v527, %v525
      %v556 = vpack.c.b16 %v528, %v526
      %v557 = vpack.c.b16 %v531, %v529
      %v558 = vpack.c.b16 %v532, %v530
      %v559 = vpack.c.b16 %v535, %v533
      %v560 = vpack.c.b16 %v536, %v534
      %v561 = vpack.c.b16 %v539, %v537
      %v562 = vpack.c.b16 %v540, %v538
      %v563 = vpack.c.b16 %v543, %v541
      %v564 = vpack.c.b16 %v544, %v542
      %v565 = vpack.c.b16 %v547, %v545
      %v566 = vpack.c.b16 %v548, %v546
      %v567 = vpack.c.b16 %v551, %v549
      %v568 = vpack.c.b16 %v552, %v550
      %585 = vmatpush.bf16.msra.mxu0 %v567
      %586 = vmatpush.bf16.msra.mxu0 %v565
      %587 = vmatpush.bf16.msra.mxu0 %v563
      %588 = vmatpush.bf16.msra.mxu0 %v561
      %589 = vmatpush.bf16.msra.mxu0 %v559
      %590 = vmatpush.bf16.msra.mxu0 %v557
      %591 = vmatpush.bf16.msra.mxu0 %v555
      %592 = vmatpush.bf16.msra.mxu0 %v553
      %593 = vmatmul.bf16.gmra.mxu0 %v479
      %v594 = vpop.f32.mrf.mxu0
      %v595 = vadd.f32 %v501, %v594
      %v596 = vpop.f32.mrf.mxu0
      %v597 = vadd.f32 %v501, %v596
      %598 = vmatmul.bf16.gmra.mxu0 %v480
      %v599 = vpop.f32.mrf.mxu0
      %v600 = vadd.f32 %v501, %v599
      %v601 = vpop.f32.mrf.mxu0
      %v602 = vadd.f32 %v501, %v601
      %603 = vmatmul.bf16.gmra.mxu0 %v481
      %v604 = vpop.f32.mrf.mxu0
      %v605 = vadd.f32 %v501, %v604
      %v606 = vpop.f32.mrf.mxu0
      %v607 = vadd.f32 %v501, %v606
      %608 = vmatmul.bf16.gmra.mxu0 %v482
      %v609 = vpop.f32.mrf.mxu0
      %v610 = vadd.f32 %v501, %v609
      %v611 = vpop.f32.mrf.mxu0
      %v612 = vadd.f32 %v501, %v611
      %613 = vdwg.mxu0
      %614 = vmatpush.bf16.msra.mxu0 %v568
      %615 = vmatpush.bf16.msra.mxu0 %v566
      %616 = vmatpush.bf16.msra.mxu0 %v564
      %617 = vmatpush.bf16.msra.mxu0 %v562
      %618 = vmatpush.bf16.msra.mxu0 %v560
      %619 = vmatpush.bf16.msra.mxu0 %v558
      %620 = vmatpush.bf16.msra.mxu0 %v556
      %621 = vmatpush.bf16.msra.mxu0 %v554
      %622 = vmatmul.bf16.gmra.mxu0 %v479
      %v623 = vpop.f32.mrf.mxu0
      %v624 = vadd.f32 %v502, %v623
      %v625 = vpop.f32.mrf.mxu0
      %v626 = vadd.f32 %v502, %v625
      %627 = vmatmul.bf16.gmra.mxu0 %v480
      %v628 = vpop.f32.mrf.mxu0
      %v629 = vadd.f32 %v502, %v628
      %v630 = vpop.f32.mrf.mxu0
      %v631 = vadd.f32 %v502, %v630
      %632 = vmatmul.bf16.gmra.mxu0 %v481
      %v633 = vpop.f32.mrf.mxu0
      %v634 = vadd.f32 %v502, %v633
      %v635 = vpop.f32.mrf.mxu0
      %v636 = vadd.f32 %v502, %v635
      %637 = vmatmul.bf16.gmra.mxu0 %v482
      %v638 = vpop.f32.mrf.mxu0
      %v639 = vadd.f32 %v502, %v638
      %v640 = vpop.f32.mrf.mxu0
      %v641 = vadd.f32 %v502, %v640
      %642 = vdwg.mxu0
      %v643 = vunpack.c.l.bf16 %v233
      %v644 = vunpack.c.h.bf16 %v233
      %v645 = vunpack.c.l.bf16 %v234
      %v646 = vunpack.c.h.bf16 %v234
      %v647 = vunpack.c.l.bf16 %v235
      %v648 = vunpack.c.h.bf16 %v235
      %v649 = vunpack.c.l.bf16 %v236
      %v650 = vunpack.c.h.bf16 %v236
      %v651 = vunpack.c.l.bf16 %v237
      %v652 = vunpack.c.h.bf16 %v237
      %v653 = vunpack.c.l.bf16 %v238
      %v654 = vunpack.c.h.bf16 %v238
      %v655 = vunpack.c.l.bf16 %v239
      %v656 = vunpack.c.h.bf16 %v239
      %v657 = vunpack.c.l.bf16 %v240
      %v658 = vunpack.c.h.bf16 %v240
      %v659 = vadd.f32 %v595, %v643
      %v660 = vadd.f32 %v624, %v644
      %v661 = vadd.f32 %v597, %v645
      %v662 = vadd.f32 %v626, %v646
      %v663 = vadd.f32 %v600, %v647
      %v664 = vadd.f32 %v629, %v648
      %v665 = vadd.f32 %v602, %v649
      %v666 = vadd.f32 %v631, %v650
      %v667 = vadd.f32 %v605, %v651
      %v668 = vadd.f32 %v634, %v652
      %v669 = vadd.f32 %v607, %v653
      %v670 = vadd.f32 %v636, %v654
      %v671 = vadd.f32 %v610, %v655
      %v672 = vadd.f32 %v639, %v656
      %v673 = vadd.f32 %v612, %v657
      %v674 = vadd.f32 %v641, %v658
      %v675 = vpack.c.bf16 %v660, %v659
      %v676 = vpack.c.bf16 %v662, %v661
      %v677 = vpack.c.bf16 %v664, %v663
      %v678 = vpack.c.bf16 %v666, %v665
      %v679 = vpack.c.bf16 %v668, %v667
      %v680 = vpack.c.bf16 %v670, %v669
      %v681 = vpack.c.bf16 %v672, %v671
      %v682 = vpack.c.bf16 %v674, %v673
      %683 = vst [vmem:[%s231] sm:$0xff] %v675
      %684 = vst [vmem:[%s231 + $0x8] sm:$0xff] %v676
      %685 = vst [vmem:[%s231 + $0x10] sm:$0xff] %v677
      %686 = vst [vmem:[%s231 + $0x18] sm:$0xff] %v678
      %687 = vst [vmem:[%s231 + $0x20] sm:$0xff] %v679
      %688 = vst [vmem:[%s231 + $0x28] sm:$0xff] %v680
      %689 = vst [vmem:[%s231 + $0x30] sm:$0xff] %v681
      %690 = vst [vmem:[%s231 + $0x38] sm:$0xff] %v682
      %s691 = smul.u32 8, %s16
      %p692 = scmp.lt.s32.totalorder %s691, 15
      %s693 = scalar_select %p692, %s691, 15
      %s694 = smul.addr %s693, 2
      %s695 = smul.addr %s694, 4
      %s696 = scalar_lea.vmem %s5, %s695
      // Predicated region
      $region41: #{adapter_clip_rn50_forward.4} parent=39 // pred_check
        %p697 = pneg %p144
      $region42: #{adapter_clip_rn50_forward.4} parent=39 // pred_check_branch
        %699 = sbr.rel (%p697) target = $region44
      $region43: #{adapter_clip_rn50_forward.4} parent=39 // pred_region
        %s700 = smul.u32 8, %s16
      $region44: #{adapter_clip_rn50_forward.4} parent=39 // pred_fallthru
        _
    $region40: #{adapter_clip_rn50_forward.4} parent=5 // pred_fallthru
      _
    %p701 = scmp.le.s32.totalorder 2, %s11
    // Predicated region
    $region45: #{adapter_clip_rn50_forward.4} parent=5 // pred_check
      %p702 = pneg %p701
    $region46: #{adapter_clip_rn50_forward.4} parent=5 // pred_check_branch
      %704 = sbr.rel (%p702) target = $region48
    $region47: #{adapter_clip_rn50_forward.4} parent=5 // pred_region
      %s705 = ssub.s32 %s11, 2
      // Predicated region
      $region49: #{adapter_clip_rn50_forward.4} parent=47 // pred_check
        %p706 = pneg %p150
      $region50: #{adapter_clip_rn50_forward.4} parent=47 // pred_check_branch
        %708 = sbr.rel (%p706) target = $region52
      $region51: #{adapter_clip_rn50_forward.4} parent=47 // pred_region
        %s709 = smul.u32 8, %s17
        %p710 = scmp.lt.s32.totalorder %s709, 15
        %s711 = scalar_select %p710, %s709, 15
        %s712 = smul.addr %s711, 2
        %s713 = smul.addr %s712, 4
        %s714 = scalar_lea.vmem %s5, %s713
      $region52: #{adapter_clip_rn50_forward.4} parent=47 // pred_fallthru
        _
    $region48: #{adapter_clip_rn50_forward.4} parent=5 // pred_fallthru
      _
  $region6: #{adapter_clip_rn50_forward.4} parent=0 // loop_footer
    %s15 = sadd.s32 1, %s11
  $region7: #{adapter_clip_rn50_forward.4} parent=0 // loop_footer_branch
    %10 = sbr.rel target = $region3
  $region8: #{adapter_clip_rn50_forward.4} parent=0 // loop_exit
    _

// kernel: adapter_clip_rn50_forward.5
$region0: #{adapter_clip_rn50_forward.5}
  #allocation0 [shape = 'u32[]', space=smem, size = 0x4, offset = 0x4, fixed_abs, tag = 'smem constant byte address 0x4 - core index']
  #allocation1 [shape = 'u32[72,128]{1,0:T(1,128)}', space=vmem, size = 0x9000, scoped, tag = 'internal scratch']
  %s0 = inlined_call_operand.vmem [shape: bf16[32,512], index: 0, kind: input, shape index: {}]
  %s1 = inlined_call_operand.vmem [shape: bf16[512,128], index: 1, kind: input, shape index: {}]
  %s2 = inlined_call_operand.vmem [shape: f32[1,128], index: 2, kind: input, shape index: {}]
  %s3 = inlined_call_operand.vmem [shape: bf16[128,512], index: 3, kind: input, shape index: {}]
  %s4 = inlined_call_operand.vmem [shape: f32[1,512], index: 4, kind: input, shape index: {}]
  %s5 = inlined_call_operand.vmem [shape: bf16[32,512], index: 5, kind: output, shape index: {}]
  %s6 = sld [smem:[#allocation0]]
  $region53: #{adapter_clip_rn50_forward.5} parent=0
    _
  %s8 = ssub.s32 1, %s6
  %s9 = scalar_select 0, %s8, %s6
  loop: start=0, step=1, limit=4
  $region2: #{adapter_clip_rn50_forward.5} parent=0 // loop_pre_header
    _
  $region3: #{adapter_clip_rn50_forward.5} parent=0 // loop_header
    %s11 = sphi 0, %s15
    %p12 = scmp.ge.s32.totalorder %s11, 4
    %s21 = sphi 0, %s23
    %s24 = sphi 0, %s21
    %s25 = sphi 0, %s24
    %s41 = sphi 0, %s25
    %s45 = sphi 0, %s45
    %s47 = sphi 0, %s45
    %s48 = sphi 0, %s47
    %s62 = sphi 0, %s48
    %s66 = sphi 0, %s66
    %s68 = sphi 0, %s66
    %s69 = sphi 0, %s68
    %s83 = sphi 0, %s69
    %s87 = sphi 0, %s87
    %s89 = sphi 0, %s87
    %s90 = sphi 0, %s89
    %s104 = sphi 0, %s90
    %s108 = sphi 0, %s108
    %s110 = sphi 0, %s108
    %s111 = sphi 0, %s110
    %s125 = sphi 0, %s111
    %s131 = sphi 0, %s133
    %s134 = sphi 0, %s131
    %s135 = sphi 0, %s134
    %s151 = sphi 0, %s135
  $region4: #{adapter_clip_rn50_forward.5} parent=0 // loop_header_branch
    %14 = sbr.rel (%p12) target = $region8
  $region5: #{adapter_clip_rn50_forward.5} parent=0 // loop_body
    %s16 = ssub.s32 %s11, 1
    %s17 = ssub.s32 %s11, 2
    %s18 = sadd.s32 %s11, 1
    %s19 = ssub.s32 %s11, %s18
    %p20 = scmp.eq.s32.totalorder %s19, 0
    %s22 = sadd.s32 %s21, 1
    %s23 = scalar_select %p20, %s21, %s22
    %p26 = pneg %p20
    %p27 = scmp.eq.s32.totalorder %s11, 1
    %p28 = por %p26, %p27
    %p29 = scmp.ne.s32.totalorder %s21, %s24
    %p30 = scmp.eq.s32.totalorder %s11, 0
    %p31 = por %p29, %p30
    %p32 = scmp.ne.s32.totalorder %s21, %s24
    %p33 = scmp.eq.s32.totalorder %s16, 1
    %p34 = por %p32, %p33
    %p35 = scmp.ne.s32.totalorder %s24, %s25
    %p36 = scmp.eq.s32.totalorder %s16, 0
    %p37 = por %p35, %p36
    %p38 = scmp.ne.s32.totalorder %s24, %s25
    %p39 = scmp.eq.s32.totalorder %s17, 1
    %p40 = por %p38, %p39
    %p42 = scmp.ne.s32.totalorder %s25, %s41
    %p43 = scmp.eq.s32.totalorder %s17, 0
    %p44 = por %p42, %p43
    %s46 = sadd.s32 %s45, 1
    %p49 = scmp.eq.s32.totalorder %s11, 1
    %p50 = scmp.ne.s32.totalorder %s45, %s47
    %p51 = scmp.eq.s32.totalorder %s11, 0
    %p52 = por %p50, %p51
    %p53 = scmp.ne.s32.totalorder %s45, %s47
    %p54 = scmp.eq.s32.totalorder %s16, 1
    %p55 = por %p53, %p54
    %p56 = scmp.ne.s32.totalorder %s47, %s48
    %p57 = scmp.eq.s32.totalorder %s16, 0
    %p58 = por %p56, %p57
    %p59 = scmp.ne.s32.totalorder %s47, %s48
    %p60 = scmp.eq.s32.totalorder %s17, 1
    %p61 = por %p59, %p60
    %p63 = scmp.ne.s32.totalorder %s48, %s62
    %p64 = scmp.eq.s32.totalorder %s17, 0
    %p65 = por %p63, %p64
    %s67 = sadd.s32 %s66, 1
    %p70 = scmp.eq.s32.totalorder %s11, 1
    %p71 = scmp.ne.s32.totalorder %s66, %s68
    %p72 = scmp.eq.s32.totalorder %s11, 0
    %p73 = por %p71, %p72
    %p74 = scmp.ne.s32.totalorder %s66, %s68
    %p75 = scmp.eq.s32.totalorder %s16, 1
    %p76 = por %p74, %p75
    %p77 = scmp.ne.s32.totalorder %s68, %s69
    %p78 = scmp.eq.s32.totalorder %s16, 0
    %p79 = por %p77, %p78
    %p80 = scmp.ne.s32.totalorder %s68, %s69
    %p81 = scmp.eq.s32.totalorder %s17, 1
    %p82 = por %p80, %p81
    %p84 = scmp.ne.s32.totalorder %s69, %s83
    %p85 = scmp.eq.s32.totalorder %s17, 0
    %p86 = por %p84, %p85
    %s88 = sadd.s32 %s87, 1
    %p91 = scmp.eq.s32.totalorder %s11, 1
    %p92 = scmp.ne.s32.totalorder %s87, %s89
    %p93 = scmp.eq.s32.totalorder %s11, 0
    %p94 = por %p92, %p93
    %p95 = scmp.ne.s32.totalorder %s87, %s89
    %p96 = scmp.eq.s32.totalorder %s16, 1
    %p97 = por %p95, %p96
    %p98 = scmp.ne.s32.totalorder %s89, %s90
    %p99 = scmp.eq.s32.totalorder %s16, 0
    %p100 = por %p98, %p99
    %p101 = scmp.ne.s32.totalorder %s89, %s90
    %p102 = scmp.eq.s32.totalorder %s17, 1
    %p103 = por %p101, %p102
    %p105 = scmp.ne.s32.totalorder %s90, %s104
    %p106 = scmp.eq.s32.totalorder %s17, 0
    %p107 = por %p105, %p106
    %s109 = sadd.s32 %s108, 1
    %p112 = scmp.eq.s32.totalorder %s11, 1
    %p113 = scmp.ne.s32.totalorder %s108, %s110
    %p114 = scmp.eq.s32.totalorder %s11, 0
    %p115 = por %p113, %p114
    %p116 = scmp.ne.s32.totalorder %s108, %s110
    %p117 = scmp.eq.s32.totalorder %s16, 1
    %p118 = por %p116, %p117
    %p119 = scmp.ne.s32.totalorder %s110, %s111
    %p120 = scmp.eq.s32.totalorder %s16, 0
    %p121 = por %p119, %p120
    %p122 = scmp.ne.s32.totalorder %s110, %s111
    %p123 = scmp.eq.s32.totalorder %s17, 1
    %p124 = por %p122, %p123
    %p126 = scmp.ne.s32.totalorder %s111, %s125
    %p127 = scmp.eq.s32.totalorder %s17, 0
    %p128 = por %p126, %p127
    %s129 = ssub.s32 %s11, %s18
    %p130 = scmp.eq.s32.totalorder %s129, 0
    %s132 = sadd.s32 %s131, 1
    %s133 = scalar_select %p130, %s131, %s132
    %p136 = pneg %p130
    %p137 = scmp.eq.s32.totalorder %s11, 1
    %p138 = por %p136, %p137
    %p139 = scmp.ne.s32.totalorder %s131, %s134
    %p140 = scmp.eq.s32.totalorder %s11, 0
    %p141 = por %p139, %p140
    %p142 = scmp.ne.s32.totalorder %s131, %s134
    %p143 = scmp.eq.s32.totalorder %s16, 1
    %p144 = por %p142, %p143
    %p145 = scmp.ne.s32.totalorder %s134, %s135
    %p146 = scmp.eq.s32.totalorder %s16, 0
    %p147 = por %p145, %p146
    %p148 = scmp.ne.s32.totalorder %s134, %s135
    %p149 = scmp.eq.s32.totalorder %s17, 1
    %p150 = por %p148, %p149
    %p152 = scmp.ne.s32.totalorder %s135, %s151
    %p153 = scmp.eq.s32.totalorder %s17, 0
    %p154 = por %p152, %p153
    %p155 = scmp.le.s32.totalorder 1, %s11
    %p156 = scmp.lt.s32.totalorder %s11, 3
    %p157 = pnand %p155, %p156
    %p158 = pneg %p157
    // Predicated region
    $region9: #{adapter_clip_rn50_forward.5} parent=5 // pred_check
      _
    $region10: #{adapter_clip_rn50_forward.5} parent=5 // pred_check_branch
      %160 = sbr.rel (%p157) target = $region12
    $region11: #{adapter_clip_rn50_forward.5} parent=5 // pred_region
      %s161 = ssub.s32 %s11, 1
      // Predicated region
      $region13: #{adapter_clip_rn50_forward.5} parent=11 // pred_check
        %p162 = pneg %p58
      $region14: #{adapter_clip_rn50_forward.5} parent=11 // pred_check_branch
        %164 = sbr.rel (%p162) target = $region16
      $region15: #{adapter_clip_rn50_forward.5} parent=11 // pred_region
        _
      $region16: #{adapter_clip_rn50_forward.5} parent=11 // pred_fallthru
        _
      // Predicated region
      $region17: #{adapter_clip_rn50_forward.5} parent=11 // pred_check
        %p165 = pneg %p79
      $region18: #{adapter_clip_rn50_forward.5} parent=11 // pred_check_branch
        %167 = sbr.rel (%p165) target = $region20
      $region19: #{adapter_clip_rn50_forward.5} parent=11 // pred_region
        _
      $region20: #{adapter_clip_rn50_forward.5} parent=11 // pred_fallthru
        _
      // Predicated region
      $region21: #{adapter_clip_rn50_forward.5} parent=11 // pred_check
        %p168 = pneg %p100
      $region22: #{adapter_clip_rn50_forward.5} parent=11 // pred_check_branch
        %170 = sbr.rel (%p168) target = $region24
      $region23: #{adapter_clip_rn50_forward.5} parent=11 // pred_region
        _
      $region24: #{adapter_clip_rn50_forward.5} parent=11 // pred_fallthru
        _
      // Predicated region
      $region25: #{adapter_clip_rn50_forward.5} parent=11 // pred_check
        %p171 = pneg %p121
      $region26: #{adapter_clip_rn50_forward.5} parent=11 // pred_check_branch
        %173 = sbr.rel (%p171) target = $region28
      $region27: #{adapter_clip_rn50_forward.5} parent=11 // pred_region
        _
      $region28: #{adapter_clip_rn50_forward.5} parent=11 // pred_fallthru
        _
    $region12: #{adapter_clip_rn50_forward.5} parent=5 // pred_fallthru
      _
    %p174 = scmp.lt.s32.totalorder %s11, 2
    // Predicated region
    $region29: #{adapter_clip_rn50_forward.5} parent=5 // pred_check
      %p175 = pneg %p174
    $region30: #{adapter_clip_rn50_forward.5} parent=5 // pred_check_branch
      %177 = sbr.rel (%p175) target = $region32
    $region31: #{adapter_clip_rn50_forward.5} parent=5 // pred_region
      // Predicated region
      $region33: #{adapter_clip_rn50_forward.5} parent=31 // pred_check
        %p178 = pneg %p31
      $region34: #{adapter_clip_rn50_forward.5} parent=31 // pred_check_branch
        %180 = sbr.rel (%p178) target = $region36
      $region35: #{adapter_clip_rn50_forward.5} parent=31 // pred_region
        %s181 = smul.u32 2, %s11
        %p182 = scmp.lt.s32.totalorder %s181, 3
        %s183 = scalar_select %p182, %s181, 3
        %s184 = smul.addr %s183, 4
        %s185 = smul.addr %s184, 4
        %s186 = scalar_lea.vmem %s0, %s185
        %s187 = smul.u32 2, %s11
      $region36: #{adapter_clip_rn50_forward.5} parent=31 // pred_fallthru
        _
    $region32: #{adapter_clip_rn50_forward.5} parent=5 // pred_fallthru
      _
    %p188 = scmp.le.s32.totalorder 1, %s11
    %p189 = scmp.lt.s32.totalorder %s11, 3
    %p190 = pnand %p188, %p189
    %p191 = pneg %p190
    // Predicated region
    $region37: #{adapter_clip_rn50_forward.5} parent=5 // pred_check
      _
    $region38: #{adapter_clip_rn50_forward.5} parent=5 // pred_check_branch
      %193 = sbr.rel (%p190) target = $region40
    $region39: #{adapter_clip_rn50_forward.5} parent=5 // pred_region
      %s194 = ssub.s32 %s11, 1
      %s195 = smul.u32 2, %s16
      %p196 = scmp.lt.s32.totalorder %s195, 3
      %s197 = scalar_select %p196, %s195, 3
      %s198 = smul.addr %s197, 4
      %s199 = smul.addr %s198, 4
      %s200 = scalar_lea.vmem %s0, %s199
      %p201 = pneg %p37
      %p202 = pneg %p34
      %p203 = pneg %p58
      %p204 = pneg %p55
      %p205 = pneg %p79
      %p206 = pneg %p76
      %p207 = pneg %p100
      %p208 = pneg %p97
      %p209 = pneg %p121
      %p210 = pneg %p118
      %p211 = pneg %p147
      %p212 = pneg %p144
      %s213 = smul.u32 2, %s16
      %p214 = scmp.lt.s32.totalorder %s213, 3
      %s215 = scalar_select %p214, %s213, 3
      %s216 = smul.addr %s215, 4
      %s217 = smul.addr %s216, 4
      %s218 = scalar_lea.vmem %s5, %s217
      %s219 = smul.u32 2, %s16
      %p220 = scmp.lt.s32.totalorder %s219, 3
      %s221 = scalar_select %p220, %s219, 3
      %s222 = smul.addr %s221, 4
      %s223 = smul.addr %s222, 4
      %s224 = scalar_lea.vmem %s0, %s223
      %s225 = smul.u32 2, %s16
      %s226 = smul.u32 2, %s16
      %p227 = scmp.lt.s32.totalorder %s226, 3
      %s228 = scalar_select %p227, %s226, 3
      %s229 = smul.addr %s228, 4
      %s230 = smul.addr %s229, 4
      %s231 = scalar_lea.vmem %s5, %s230
      %s232 = smul.u32 2, %s16
      %v233 = vld [vmem:[%s224] sm:$0xff]
      %v234 = vld [vmem:[%s224 + $0x8] sm:$0xff]
      %v235 = vld [vmem:[%s224 + $0x10] sm:$0xff]
      %v236 = vld [vmem:[%s224 + $0x18] sm:$0xff]
      %v237 = vld [vmem:[%s1] sm:$0xf]
      %v238 = vld [vmem:[%s1 + $0x4] sm:$0xf]
      %v239 = vld [vmem:[%s1 + $0x8] sm:$0xf]
      %v240 = vld [vmem:[%s1 + $0xc] sm:$0xf]
      %v241 = vld [vmem:[%s1 + $0x10] sm:$0xf]
      %v242 = vld [vmem:[%s1 + $0x14] sm:$0xf]
      %v243 = vld [vmem:[%s1 + $0x18] sm:$0xf]
      %v244 = vld [vmem:[%s1 + $0x1c] sm:$0xf]
      %v245 = vld [vmem:[%s1 + $0x20] sm:$0xf]
      %v246 = vld [vmem:[%s1 + $0x24] sm:$0xf]
      %v247 = vld [vmem:[%s1 + $0x28] sm:$0xf]
      %v248 = vld [vmem:[%s1 + $0x2c] sm:$0xf]
      %v249 = vld [vmem:[%s1 + $0x30] sm:$0xf]
      %v250 = vld [vmem:[%s1 + $0x34] sm:$0xf]
      %v251 = vld [vmem:[%s1 + $0x38] sm:$0xf]
      %v252 = vld [vmem:[%s1 + $0x3c] sm:$0xf]
      %v253 = vld [vmem:[%s1 + $0x40] sm:$0xf]
      %v254 = vld [vmem:[%s1 + $0x44] sm:$0xf]
      %v255 = vld [vmem:[%s1 + $0x48] sm:$0xf]
      %v256 = vld [vmem:[%s1 + $0x4c] sm:$0xf]
      %v257 = vld [vmem:[%s1 + $0x50] sm:$0xf]
      %v258 = vld [vmem:[%s1 + $0x54] sm:$0xf]
      %v259 = vld [vmem:[%s1 + $0x58] sm:$0xf]
      %v260 = vld [vmem:[%s1 + $0x5c] sm:$0xf]
      %v261 = vld [vmem:[%s1 + $0x60] sm:$0xf]
      %v262 = vld [vmem:[%s1 + $0x64] sm:$0xf]
      %v263 = vld [vmem:[%s1 + $0x68] sm:$0xf]
      %v264 = vld [vmem:[%s1 + $0x6c] sm:$0xf]
      %v265 = vld [vmem:[%s1 + $0x70] sm:$0xf]
      %v266 = vld [vmem:[%s1 + $0x74] sm:$0xf]
      %v267 = vld [vmem:[%s1 + $0x78] sm:$0xf]
      %v268 = vld [vmem:[%s1 + $0x7c] sm:$0xf]
      %v269 = vld [vmem:[%s1 + $0x80] sm:$0xf]
      %v270 = vld [vmem:[%s1 + $0x84] sm:$0xf]
      %v271 = vld [vmem:[%s1 + $0x88] sm:$0xf]
      %v272 = vld [vmem:[%s1 + $0x8c] sm:$0xf]
      %v273 = vld [vmem:[%s1 + $0x90] sm:$0xf]
      %v274 = vld [vmem:[%s1 + $0x94] sm:$0xf]
      %v275 = vld [vmem:[%s1 + $0x98] sm:$0xf]
      %v276 = vld [vmem:[%s1 + $0x9c] sm:$0xf]
      %v277 = vld [vmem:[%s1 + $0xa0] sm:$0xf]
      %v278 = vld [vmem:[%s1 + $0xa4] sm:$0xf]
      %v279 = vld [vmem:[%s1 + $0xa8] sm:$0xf]
      %v280 = vld [vmem:[%s1 + $0xac] sm:$0xf]
      %v281 = vld [vmem:[%s1 + $0xb0] sm:$0xf]
      %v282 = vld [vmem:[%s1 + $0xb4] sm:$0xf]
      %v283 = vld [vmem:[%s1 + $0xb8] sm:$0xf]
      %v284 = vld [vmem:[%s1 + $0xbc] sm:$0xf]
      %v285 = vld [vmem:[%s1 + $0xc0] sm:$0xf]
      %v286 = vld [vmem:[%s1 + $0xc4] sm:$0xf]
      %v287 = vld [vmem:[%s1 + $0xc8] sm:$0xf]
      %v288 = vld [vmem:[%s1 + $0xcc] sm:$0xf]
      %v289 = vld [vmem:[%s1 + $0xd0] sm:$0xf]
      %v290 = vld [vmem:[%s1 + $0xd4] sm:$0xf]
      %v291 = vld [vmem:[%s1 + $0xd8] sm:$0xf]
      %v292 = vld [vmem:[%s1 + $0xdc] sm:$0xf]
      %v293 = vld [vmem:[%s1 + $0xe0] sm:$0xf]
      %v294 = vld [vmem:[%s1 + $0xe4] sm:$0xf]
      %v295 = vld [vmem:[%s1 + $0xe8] sm:$0xf]
      %v296 = vld [vmem:[%s1 + $0xec] sm:$0xf]
      %v297 = vld [vmem:[%s1 + $0xf0] sm:$0xf]
      %v298 = vld [vmem:[%s1 + $0xf4] sm:$0xf]
      %v299 = vld [vmem:[%s1 + $0xf8] sm:$0xf]
      %v300 = vld [vmem:[%s1 + $0xfc] sm:$0xf]
      %v301 = vld [vmem:[%s2] sm:$0x1]
      %v303 = vperm.slane %v301, 0
      %v309 = vunpack.c.l.b16 %v233
      %v310 = vunpack.c.h.b16 %v233
      %v311 = vunpack.c.l.b16 %v234
      %v312 = vunpack.c.h.b16 %v234
      %v313 = vunpack.c.l.b16 %v235
      %v314 = vunpack.c.h.b16 %v235
      %v315 = vunpack.c.l.b16 %v236
      %v316 = vunpack.c.h.b16 %v236
      %v317 = vpack.c.b16 %v313, %v309
      %v318 = vpack.c.b16 %v314, %v310
      %v319 = vpack.c.b16 %v315, %v311
      %v320 = vpack.c.b16 %v316, %v312
      %v389 = vunpack.c.l.b16 %v237
      %v390 = vunpack.c.l.b16 %v238
      %v391 = vunpack.c.l.b16 %v239
      %v392 = vunpack.c.l.b16 %v240
      %v393 = vunpack.c.l.b16 %v241
      %v394 = vunpack.c.l.b16 %v242
      %v395 = vunpack.c.l.b16 %v243
      %v396 = vunpack.c.l.b16 %v244
      %v397 = vunpack.c.l.b16 %v245
      %v398 = vunpack.c.l.b16 %v246
      %v399 = vunpack.c.l.b16 %v247
      %v400 = vunpack.c.l.b16 %v248
      %v401 = vunpack.c.l.b16 %v249
      %v402 = vunpack.c.l.b16 %v250
      %v403 = vunpack.c.l.b16 %v251
      %v404 = vunpack.c.l.b16 %v252
      %v405 = vunpack.c.l.b16 %v253
      %v406 = vunpack.c.l.b16 %v254
      %v407 = vunpack.c.l.b16 %v255
      %v408 = vunpack.c.l.b16 %v256
      %v409 = vunpack.c.l.b16 %v257
      %v410 = vunpack.c.l.b16 %v258
      %v411 = vunpack.c.l.b16 %v259
      %v412 = vunpack.c.l.b16 %v260
      %v413 = vunpack.c.l.b16 %v261
      %v414 = vunpack.c.l.b16 %v262
      %v415 = vunpack.c.l.b16 %v263
      %v416 = vunpack.c.l.b16 %v264
      %v417 = vunpack.c.l.b16 %v265
      %v418 = vunpack.c.l.b16 %v266
      %v419 = vunpack.c.l.b16 %v267
      %v420 = vunpack.c.l.b16 %v268
      %v421 = vunpack.c.l.b16 %v269
      %v422 = vunpack.c.l.b16 %v270
      %v423 = vunpack.c.l.b16 %v271
      %v424 = vunpack.c.l.b16 %v272
      %v425 = vunpack.c.l.b16 %v273
      %v426 = vunpack.c.l.b16 %v274
      %v427 = vunpack.c.l.b16 %v275
      %v428 = vunpack.c.l.b16 %v276
      %v429 = vunpack.c.l.b16 %v277
      %v430 = vunpack.c.l.b16 %v278
      %v431 = vunpack.c.l.b16 %v279
      %v432 = vunpack.c.l.b16 %v280
      %v433 = vunpack.c.l.b16 %v281
      %v434 = vunpack.c.l.b16 %v282
      %v435 = vunpack.c.l.b16 %v283
      %v436 = vunpack.c.l.b16 %v284
      %v437 = vunpack.c.l.b16 %v285
      %v438 = vunpack.c.l.b16 %v286
      %v439 = vunpack.c.l.b16 %v287
      %v440 = vunpack.c.l.b16 %v288
      %v441 = vunpack.c.l.b16 %v289
      %v442 = vunpack.c.l.b16 %v290
      %v443 = vunpack.c.l.b16 %v291
      %v444 = vunpack.c.l.b16 %v292
      %v445 = vunpack.c.l.b16 %v293
      %v446 = vunpack.c.l.b16 %v294
      %v447 = vunpack.c.l.b16 %v295
      %v448 = vunpack.c.l.b16 %v296
      %v449 = vunpack.c.l.b16 %v297
      %v450 = vunpack.c.l.b16 %v298
      %v451 = vunpack.c.l.b16 %v299
      %v452 = vunpack.c.l.b16 %v300
      %v453 = vpack.c.b16 %v390, %v389
      %v454 = vpack.c.b16 %v392, %v391
      %v455 = vpack.c.b16 %v394, %v393
      %v456 = vpack.c.b16 %v396, %v395
      %v457 = vpack.c.b16 %v398, %v397
      %v458 = vpack.c.b16 %v400, %v399
      %v459 = vpack.c.b16 %v402, %v401
      %v460 = vpack.c.b16 %v404, %v403
      %v461 = vpack.c.b16 %v406, %v405
      %v462 = vpack.c.b16 %v408, %v407
      %v463 = vpack.c.b16 %v410, %v409
      %v464 = vpack.c.b16 %v412, %v411
      %v465 = vpack.c.b16 %v414, %v413
      %v466 = vpack.c.b16 %v416, %v415
      %v467 = vpack.c.b16 %v418, %v417
      %v468 = vpack.c.b16 %v420, %v419
      %v469 = vpack.c.b16 %v422, %v421
      %v470 = vpack.c.b16 %v424, %v423
      %v471 = vpack.c.b16 %v426, %v425
      %v472 = vpack.c.b16 %v428, %v427
      %v473 = vpack.c.b16 %v430, %v429
      %v474 = vpack.c.b16 %v432, %v431
      %v475 = vpack.c.b16 %v434, %v433
      %v476 = vpack.c.b16 %v436, %v435
      %v477 = vpack.c.b16 %v438, %v437
      %v478 = vpack.c.b16 %v440, %v439
      %v479 = vpack.c.b16 %v442, %v441
      %v480 = vpack.c.b16 %v444, %v443
      %v481 = vpack.c.b16 %v446, %v445
      %v482 = vpack.c.b16 %v448, %v447
      %v483 = vpack.c.b16 %v450, %v449
      %v484 = vpack.c.b16 %v452, %v451
      %517 = vmatpush.bf16.msra.mxu0 %v460
      %518 = vmatpush.bf16.msra.mxu0 %v459
      %519 = vmatpush.bf16.msra.mxu0 %v458
      %520 = vmatpush.bf16.msra.mxu0 %v457
      %521 = vmatpush.bf16.msra.mxu0 %v456
      %522 = vmatpush.bf16.msra.mxu0 %v455
      %523 = vmatpush.bf16.msra.mxu0 %v454
      %524 = vmatpush.bf16.msra.mxu0 %v453
      %525 = vmatmul.bf16.gmra.mxu0 %v317
      %v526 = vpop.f32.mrf.mxu0
      %v527 = vadd.f32 %v303, %v526
      %v528 = vpop.f32.mrf.mxu0
      %v529 = vadd.f32 %v303, %v528
      %530 = vdwg.mxu0
      %531 = vmatpush.bf16.msra.mxu0 %v468
      %532 = vmatpush.bf16.msra.mxu0 %v467
      %533 = vmatpush.bf16.msra.mxu0 %v466
      %534 = vmatpush.bf16.msra.mxu0 %v465
      %535 = vmatpush.bf16.msra.mxu0 %v464
      %536 = vmatpush.bf16.msra.mxu0 %v463
      %537 = vmatpush.bf16.msra.mxu0 %v462
      %538 = vmatpush.bf16.msra.mxu0 %v461
      %539 = vmatmul.bf16.gmra.mxu0 %v318
      %v540 = vpop.f32.mrf.mxu0
      %v541 = vadd.f32 %v527, %v540
      %v542 = vpop.f32.mrf.mxu0
      %v543 = vadd.f32 %v529, %v542
      %544 = vdwg.mxu0
      %545 = vmatpush.bf16.msra.mxu0 %v476
      %546 = vmatpush.bf16.msra.mxu0 %v475
      %547 = vmatpush.bf16.msra.mxu0 %v474
      %548 = vmatpush.bf16.msra.mxu0 %v473
      %549 = vmatpush.bf16.msra.mxu0 %v472
      %550 = vmatpush.bf16.msra.mxu0 %v471
      %551 = vmatpush.bf16.msra.mxu0 %v470
      %552 = vmatpush.bf16.msra.mxu0 %v469
      %553 = vmatmul.bf16.gmra.mxu0 %v319
      %v554 = vpop.f32.mrf.mxu0
      %v555 = vadd.f32 %v541, %v554
      %v556 = vpop.f32.mrf.mxu0
      %v557 = vadd.f32 %v543, %v556
      %558 = vdwg.mxu0
      %559 = vmatpush.bf16.msra.mxu0 %v484
      %560 = vmatpush.bf16.msra.mxu0 %v483
      %561 = vmatpush.bf16.msra.mxu0 %v482
      %562 = vmatpush.bf16.msra.mxu0 %v481
      %563 = vmatpush.bf16.msra.mxu0 %v480
      %564 = vmatpush.bf16.msra.mxu0 %v479
      %565 = vmatpush.bf16.msra.mxu0 %v478
      %566 = vmatpush.bf16.msra.mxu0 %v477
      %567 = vmatmul.bf16.gmra.mxu0 %v320
      %v568 = vpop.f32.mrf.mxu0
      %v569 = vadd.f32 %v555, %v568
      %v570 = vpop.f32.mrf.mxu0
      %v571 = vadd.f32 %v557, %v570
      %572 = vdwg.mxu0
      %v573 = vmax.f32 %v569, 0.0
      %v574 = vmax.f32 %v571, 0.0
      %v575 = vpack.c.bf16 %v574, %v573
      %v576 = vld [vmem:[%s3] sm:$0xff]
      %v577 = vld [vmem:[%s3 + $0x8] sm:$0xff]
      %v578 = vld [vmem:[%s3 + $0x10] sm:$0xff]
      %v579 = vld [vmem:[%s3 + $0x18] sm:$0xff]
      %v580 = vld [vmem:[%s3 + $0x20] sm:$0xff]
      %v581 = vld [vmem:[%s3 + $0x28] sm:$0xff]
      %v582 = vld [vmem:[%s3 + $0x30] sm:$0xff]
      %v583 = vld [vmem:[%s3 + $0x38] sm:$0xff]
      %v584 = vld [vmem:[%s3 + $0x40] sm:$0xff]
      %v585 = vld [vmem:[%s3 + $0x48] sm:$0xff]
      %v586 = vld [vmem:[%s3 + $0x50] sm:$0xff]
      %v587 = vld [vmem:[%s3 + $0x58] sm:$0xff]
      %v588 = vld [vmem:[%s3 + $0x60] sm:$0xff]
      %v589 = vld [vmem:[%s3 + $0x68] sm:$0xff]
      %v590 = vld [vmem:[%s3 + $0x70] sm:$0xff]
      %v591 = vld [vmem:[%s3 + $0x78] sm:$0xff]
      %v592 = vld [vmem:[%s3 + $0x80] sm:$0xff]
      %v593 = vld [vmem:[%s3 + $0x88] sm:$0xff]
      %v594 = vld [vmem:[%s3 + $0x90] sm:$0xff]
      %v595 = vld [vmem:[%s3 + $0x98] sm:$0xff]
      %v596 = vld [vmem:[%s3 + $0xa0] sm:$0xff]
      %v597 = vld [vmem:[%s3 + $0xa8] sm:$0xff]
      %v598 = vld [vmem:[%s3 + $0xb0] sm:$0xff]
      %v599 = vld [vmem:[%s3 + $0xb8] sm:$0xff]
      %v600 = vld [vmem:[%s3 + $0xc0] sm:$0xff]
      %v601 = vld [vmem:[%s3 + $0xc8] sm:$0xff]
      %v602 = vld [vmem:[%s3 + $0xd0] sm:$0xff]
      %v603 = vld [vmem:[%s3 + $0xd8] sm:$0xff]
      %v604 = vld [vmem:[%s3 + $0xe0] sm:$0xff]
      %v605 = vld [vmem:[%s3 + $0xe8] sm:$0xff]
      %v606 = vld [vmem:[%s3 + $0xf0] sm:$0xff]
      %v607 = vld [vmem:[%s3 + $0xf8] sm:$0xff]
      %v608 = vld [vmem:[%s4] sm:$0xf]
      %v610 = vperm.slane %v608, 0
      %v611 = vperm.slane %v608, 1
      %v612 = vperm.slane %v608, 2
      %v613 = vperm.slane %v608, 3
      %v650 = vunpack.c.l.b16 %v576
      %v651 = vunpack.c.h.b16 %v576
      %v652 = vunpack.c.l.b16 %v577
      %v653 = vunpack.c.h.b16 %v577
      %v654 = vunpack.c.l.b16 %v578
      %v655 = vunpack.c.h.b16 %v578
      %v656 = vunpack.c.l.b16 %v579
      %v657 = vunpack.c.h.b16 %v579
      %v658 = vunpack.c.l.b16 %v580
      %v659 = vunpack.c.h.b16 %v580
      %v660 = vunpack.c.l.b16 %v581
      %v661 = vunpack.c.h.b16 %v581
      %v662 = vunpack.c.l.b16 %v582
      %v663 = vunpack.c.h.b16 %v582
      %v664 = vunpack.c.l.b16 %v583
      %v665 = vunpack.c.h.b16 %v583
      %v666 = vunpack.c.l.b16 %v584
      %v667 = vunpack.c.h.b16 %v584
      %v668 = vunpack.c.l.b16 %v585
      %v669 = vunpack.c.h.b16 %v585
      %v670 = vunpack.c.l.b16 %v586
      %v671 = vunpack.c.h.b16 %v586
      %v672 = vunpack.c.l.b16 %v587
      %v673 = vunpack.c.h.b16 %v587
      %v674 = vunpack.c.l.b16 %v588
      %v675 = vunpack.c.h.b16 %v588
      %v676 = vunpack.c.l.b16 %v589
      %v677 = vunpack.c.h.b16 %v589
      %v678 = vunpack.c.l.b16 %v590
      %v679 = vunpack.c.h.b16 %v590
      %v680 = vunpack.c.l.b16 %v591
      %v681 = vunpack.c.h.b16 %v591
      %v682 = vunpack.c.l.b16 %v592
      %v683 = vunpack.c.h.b16 %v592
      %v684 = vunpack.c.l.b16 %v593
      %v685 = vunpack.c.h.b16 %v593
      %v686 = vunpack.c.l.b16 %v594
      %v687 = vunpack.c.h.b16 %v594
      %v688 = vunpack.c.l.b16 %v595
      %v689 = vunpack.c.h.b16 %v595
      %v690 = vunpack.c.l.b16 %v596
      %v691 = vunpack.c.h.b16 %v596
      %v692 = vunpack.c.l.b16 %v597
      %v693 = vunpack.c.h.b16 %v597
      %v694 = vunpack.c.l.b16 %v598
      %v695 = vunpack.c.h.b16 %v598
      %v696 = vunpack.c.l.b16 %v599
      %v697 = vunpack.c.h.b16 %v599
      %v698 = vunpack.c.l.b16 %v600
      %v699 = vunpack.c.h.b16 %v600
      %v700 = vunpack.c.l.b16 %v601
      %v701 = vunpack.c.h.b16 %v601
      %v702 = vunpack.c.l.b16 %v602
      %v703 = vunpack.c.h.b16 %v602
      %v704 = vunpack.c.l.b16 %v603
      %v705 = vunpack.c.h.b16 %v603
      %v706 = vunpack.c.l.b16 %v604
      %v707 = vunpack.c.h.b16 %v604
      %v708 = vunpack.c.l.b16 %v605
      %v709 = vunpack.c.h.b16 %v605
      %v710 = vunpack.c.l.b16 %v606
      %v711 = vunpack.c.h.b16 %v606
      %v712 = vunpack.c.l.b16 %v607
      %v713 = vunpack.c.h.b16 %v607
      %v714 = vpack.c.b16 %v654, %v650
      %v715 = vpack.c.b16 %v655, %v651
      %v716 = vpack.c.b16 %v656, %v652
      %v717 = vpack.c.b16 %v657, %v653
      %v718 = vpack.c.b16 %v662, %v658
      %v719 = vpack.c.b16 %v663, %v659
      %v720 = vpack.c.b16 %v664, %v660
      %v721 = vpack.c.b16 %v665, %v661
      %v722 = vpack.c.b16 %v670, %v666
      %v723 = vpack.c.b16 %v671, %v667
      %v724 = vpack.c.b16 %v672, %v668
      %v725 = vpack.c.b16 %v673, %v669
      %v726 = vpack.c.b16 %v678, %v674
      %v727 = vpack.c.b16 %v679, %v675
      %v728 = vpack.c.b16 %v680, %v676
      %v729 = vpack.c.b16 %v681, %v677
      %v730 = vpack.c.b16 %v686, %v682
      %v731 = vpack.c.b16 %v687, %v683
      %v732 = vpack.c.b16 %v688, %v684
      %v733 = vpack.c.b16 %v689, %v685
      %v734 = vpack.c.b16 %v694, %v690
      %v735 = vpack.c.b16 %v695, %v691
      %v736 = vpack.c.b16 %v696, %v692
      %v737 = vpack.c.b16 %v697, %v693
      %v738 = vpack.c.b16 %v702, %v698
      %v739 = vpack.c.b16 %v703, %v699
      %v740 = vpack.c.b16 %v704, %v700
      %v741 = vpack.c.b16 %v705, %v701
      %v742 = vpack.c.b16 %v710, %v706
      %v743 = vpack.c.b16 %v711, %v707
      %v744 = vpack.c.b16 %v712, %v708
      %v745 = vpack.c.b16 %v713, %v709
      %778 = vmatpush.bf16.msra.mxu0 %v742
      %779 = vmatpush.bf16.msra.mxu0 %v738
      %780 = vmatpush.bf16.msra.mxu0 %v734
      %781 = vmatpush.bf16.msra.mxu0 %v730
      %782 = vmatpush.bf16.msra.mxu0 %v726
      %783 = vmatpush.bf16.msra.mxu0 %v722
      %784 = vmatpush.bf16.msra.mxu0 %v718
      %785 = vmatpush.bf16.msra.mxu0 %v714
      %786 = vmatmul.bf16.gmra.mxu0 %v575
      %v787 = vpop.f32.mrf.mxu0
      %v788 = vadd.f32 %v610, %v787
      %v789 = vpop.f32.mrf.mxu0
      %v790 = vadd.f32 %v610, %v789
      %791 = vdwg.mxu0
      %792 = vmatpush.bf16.msra.mxu0 %v743
      %793 = vmatpush.bf16.msra.mxu0 %v739
      %794 = vmatpush.bf16.msra.mxu0 %v735
      %795 = vmatpush.bf16.msra.mxu0 %v731
      %796 = vmatpush.bf16.msra.mxu0 %v727
      %797 = vmatpush.bf16.msra.mxu0 %v723
      %798 = vmatpush.bf16.msra.mxu0 %v719
      %799 = vmatpush.bf16.msra.mxu0 %v715
      %800 = vmatmul.bf16.gmra.mxu0 %v575
      %v801 = vpop.f32.mrf.mxu0
      %v802 = vadd.f32 %v611, %v801
      %v803 = vpop.f32.mrf.mxu0
      %v804 = vadd.f32 %v611, %v803
      %805 = vdwg.mxu0
      %806 = vmatpush.bf16.msra.mxu0 %v744
      %807 = vmatpush.bf16.msra.mxu0 %v740
      %808 = vmatpush.bf16.msra.mxu0 %v736
      %809 = vmatpush.bf16.msra.mxu0 %v732
      %810 = vmatpush.bf16.msra.mxu0 %v728
      %811 = vmatpush.bf16.msra.mxu0 %v724
      %812 = vmatpush.bf16.msra.mxu0 %v720
      %813 = vmatpush.bf16.msra.mxu0 %v716
      %814 = vmatmul.bf16.gmra.mxu0 %v575
      %v815 = vpop.f32.mrf.mxu0
      %v816 = vadd.f32 %v612, %v815
      %v817 = vpop.f32.mrf.mxu0
      %v818 = vadd.f32 %v612, %v817
      %819 = vdwg.mxu0
      %820 = vmatpush.bf16.msra.mxu0 %v745
      %821 = vmatpush.bf16.msra.mxu0 %v741
      %822 = vmatpush.bf16.msra.mxu0 %v737
      %823 = vmatpush.bf16.msra.mxu0 %v733
      %824 = vmatpush.bf16.msra.mxu0 %v729
      %825 = vmatpush.bf16.msra.mxu0 %v725
      %826 = vmatpush.bf16.msra.mxu0 %v721
      %827 = vmatpush.bf16.msra.mxu0 %v717
      %828 = vmatmul.bf16.gmra.mxu0 %v575
      %v829 = vpop.f32.mrf.mxu0
      %v830 = vadd.f32 %v613, %v829
      %v831 = vpop.f32.mrf.mxu0
      %v832 = vadd.f32 %v613, %v831
      %833 = vdwg.mxu0
      %v834 = vunpack.c.l.bf16 %v233
      %v835 = vunpack.c.h.bf16 %v233
      %v836 = vunpack.c.l.bf16 %v234
      %v837 = vunpack.c.h.bf16 %v234
      %v838 = vunpack.c.l.bf16 %v235
      %v839 = vunpack.c.h.bf16 %v235
      %v840 = vunpack.c.l.bf16 %v236
      %v841 = vunpack.c.h.bf16 %v236
      %v842 = vadd.f32 %v788, %v834
      %v843 = vadd.f32 %v802, %v835
      %v844 = vadd.f32 %v816, %v836
      %v845 = vadd.f32 %v830, %v837
      %v846 = vadd.f32 %v790, %v838
      %v847 = vadd.f32 %v804, %v839
      %v848 = vadd.f32 %v818, %v840
      %v849 = vadd.f32 %v832, %v841
      %v850 = vpack.c.bf16 %v843, %v842
      %v851 = vpack.c.bf16 %v845, %v844
      %v852 = vpack.c.bf16 %v847, %v846
      %v853 = vpack.c.bf16 %v849, %v848
      %854 = vst [vmem:[%s231] sm:$0xff] %v850
      %855 = vst [vmem:[%s231 + $0x8] sm:$0xff] %v851
      %856 = vst [vmem:[%s231 + $0x10] sm:$0xff] %v852
      %857 = vst [vmem:[%s231 + $0x18] sm:$0xff] %v853
      %s858 = smul.u32 2, %s16
      %p859 = scmp.lt.s32.totalorder %s858, 3
      %s860 = scalar_select %p859, %s858, 3
      %s861 = smul.addr %s860, 4
      %s862 = smul.addr %s861, 4
      %s863 = scalar_lea.vmem %s5, %s862
      // Predicated region
      $region41: #{adapter_clip_rn50_forward.5} parent=39 // pred_check
        %p864 = pneg %p144
      $region42: #{adapter_clip_rn50_forward.5} parent=39 // pred_check_branch
        %866 = sbr.rel (%p864) target = $region44
      $region43: #{adapter_clip_rn50_forward.5} parent=39 // pred_region
        %s867 = smul.u32 2, %s16
      $region44: #{adapter_clip_rn50_forward.5} parent=39 // pred_fallthru
        _
    $region40: #{adapter_clip_rn50_forward.5} parent=5 // pred_fallthru
      _
    %p868 = scmp.le.s32.totalorder 2, %s11
    // Predicated region
    $region45: #{adapter_clip_rn50_forward.5} parent=5 // pred_check
      %p869 = pneg %p868
    $region46: #{adapter_clip_rn50_forward.5} parent=5 // pred_check_branch
      %871 = sbr.rel (%p869) target = $region48
    $region47: #{adapter_clip_rn50_forward.5} parent=5 // pred_region
      %s872 = ssub.s32 %s11, 2
      // Predicated region
      $region49: #{adapter_clip_rn50_forward.5} parent=47 // pred_check
        %p873 = pneg %p150
      $region50: #{adapter_clip_rn50_forward.5} parent=47 // pred_check_branch
        %875 = sbr.rel (%p873) target = $region52
      $region51: #{adapter_clip_rn50_forward.5} parent=47 // pred_region
        %s876 = smul.u32 2, %s17
        %p877 = scmp.lt.s32.totalorder %s876, 3
        %s878 = scalar_select %p877, %s876, 3
        %s879 = smul.addr %s878, 4
        %s880 = smul.addr %s879, 4
        %s881 = scalar_lea.vmem %s5, %s880
      $region52: #{adapter_clip_rn50_forward.5} parent=47 // pred_fallthru
        _
    $region48: #{adapter_clip_rn50_forward.5} parent=5 // pred_fallthru
      _
  $region6: #{adapter_clip_rn50_forward.5} parent=0 // loop_footer
    %s15 = sadd.s32 1, %s11
  $region7: #{adapter_clip_rn50_forward.5} parent=0 // loop_footer_branch
    %10 = sbr.rel target = $region3
  $region8: #{adapter_clip_rn50_forward.5} parent=0 // loop_exit
    _

// kernel: adapter_clip_rn50_forward.6
$region0: #{adapter_clip_rn50_forward.6}
  #allocation0 [shape = 'u32[]', space=smem, size = 0x4, offset = 0x4, fixed_abs, tag = 'smem constant byte address 0x4 - core index']
  #allocation1 [shape = 'u32[72,128]{1,0:T(1,128)}', space=vmem, size = 0x9000, scoped, tag = 'internal scratch']
  %s0 = inlined_call_operand.vmem [shape: bf16[8,1024], index: 0, kind: input, shape index: {}]
  %s1 = inlined_call_operand.vmem [shape: bf16[1024,256], index: 1, kind: input, shape index: {}]
  %s2 = inlined_call_operand.vmem [shape: f32[1,256], index: 2, kind: input, shape index: {}]
  %s3 = inlined_call_operand.vmem [shape: bf16[256,1024], index: 3, kind: input, shape index: {}]
  %s4 = inlined_call_operand.vmem [shape: f32[1,1024], index: 4, kind: input, shape index: {}]
  %s5 = inlined_call_operand.vmem [shape: bf16[8,1024], index: 5, kind: output, shape index: {}]
  %s6 = sld [smem:[#allocation0]]
  $region30: #{adapter_clip_rn50_forward.6} parent=0
    _
  %s8 = ssub.s32 1, %s6
  %s9 = scalar_select 0, %s8, %s6
  // Predicated region
  $region2: #{adapter_clip_rn50_forward.6} parent=0 // pred_check
    _
  $region3: #{adapter_clip_rn50_forward.6} parent=0 // pred_check_branch
    %11 = sbr.rel (0) target = $region5
  $region4: #{adapter_clip_rn50_forward.6} parent=0 // pred_region
    _
  $region5: #{adapter_clip_rn50_forward.6} parent=0 // pred_fallthru
    _
  // Predicated region
  $region6: #{adapter_clip_rn50_forward.6} parent=0 // pred_check
    _
  $region7: #{adapter_clip_rn50_forward.6} parent=0 // pred_check_branch
    %13 = sbr.rel (0) target = $region9
  $region8: #{adapter_clip_rn50_forward.6} parent=0 // pred_region
    _
  $region9: #{adapter_clip_rn50_forward.6} parent=0 // pred_fallthru
    _
  // Predicated region
  $region10: #{adapter_clip_rn50_forward.6} parent=0 // pred_check
    _
  $region11: #{adapter_clip_rn50_forward.6} parent=0 // pred_check_branch
    %15 = sbr.rel (0) target = $region13
  $region12: #{adapter_clip_rn50_forward.6} parent=0 // pred_region
    _
  $region13: #{adapter_clip_rn50_forward.6} parent=0 // pred_fallthru
    _
  // Predicated region
  $region14: #{adapter_clip_rn50_forward.6} parent=0 // pred_check
    _
  $region15: #{adapter_clip_rn50_forward.6} parent=0 // pred_check_branch
    %17 = sbr.rel (0) target = $region17
  $region16: #{adapter_clip_rn50_forward.6} parent=0 // pred_region
    _
  $region17: #{adapter_clip_rn50_forward.6} parent=0 // pred_fallthru
    _
  // Predicated region
  $region18: #{adapter_clip_rn50_forward.6} parent=0 // pred_check
    _
  $region19: #{adapter_clip_rn50_forward.6} parent=0 // pred_check_branch
    %19 = sbr.rel (0) target = $region21
  $region20: #{adapter_clip_rn50_forward.6} parent=0 // pred_region
    _
  $region21: #{adapter_clip_rn50_forward.6} parent=0 // pred_fallthru
    _
  %v20 = vld [vmem:[%s0] sm:$0xff]
  %v21 = vld [vmem:[%s0 + $0x8] sm:$0xff]
  %v22 = vld [vmem:[%s0 + $0x10] sm:$0xff]
  %v23 = vld [vmem:[%s0 + $0x18] sm:$0xff]
  %v24 = vld [vmem:[%s1] sm:$0xff]
  %v25 = vld [vmem:[%s1 + $0x8] sm:$0xff]
  %v26 = vld [vmem:[%s1 + $0x10] sm:$0xff]
  %v27 = vld [vmem:[%s1 + $0x18] sm:$0xff]
  %v28 = vld [vmem:[%s1 + $0x20] sm:$0xff]
  %v29 = vld [vmem:[%s1 + $0x28] sm:$0xff]
  %v30 = vld [vmem:[%s1 + $0x30] sm:$0xff]
  %v31 = vld [vmem:[%s1 + $0x38] sm:$0xff]
  %v32 = vld [vmem:[%s1 + $0x40] sm:$0xff]
  %v33 = vld [vmem:[%s1 + $0x48] sm:$0xff]
  %v34 = vld [vmem:[%s1 + $0x50] sm:$0xff]
  %v35 = vld [vmem:[%s1 + $0x58] sm:$0xff]
  %v36 = vld [vmem:[%s1 + $0x60] sm:$0xff]
  %v37 = vld [vmem:[%s1 + $0x68] sm:$0xff]
  %v38 = vld [vmem:[%s1 + $0x70] sm:$0xff]
  %v39 = vld [vmem:[%s1 + $0x78] sm:$0xff]
  %v40 = vld [vmem:[%s1 + $0x80] sm:$0xff]
  %v41 = vld [vmem:[%s1 + $0x88] sm:$0xff]
  %v42 = vld [vmem:[%s1 + $0x90] sm:$0xff]
  %v43 = vld [vmem:[%s1 + $0x98] sm:$0xff]
  %v44 = vld [vmem:[%s1 + $0xa0] sm:$0xff]
  %v45 = vld [vmem:[%s1 + $0xa8] sm:$0xff]
  %v46 = vld [vmem:[%s1 + $0xb0] sm:$0xff]
  %v47 = vld [vmem:[%s1 + $0xb8] sm:$0xff]
  %v48 = vld [vmem:[%s1 + $0xc0] sm:$0xff]
  %v49 = vld [vmem:[%s1 + $0xc8] sm:$0xff]
  %v50 = vld [vmem:[%s1 + $0xd0] sm:$0xff]
  %v51 = vld [vmem:[%s1 + $0xd8] sm:$0xff]
  %v52 = vld [vmem:[%s1 + $0xe0] sm:$0xff]
  %v53 = vld [vmem:[%s1 + $0xe8] sm:$0xff]
  %v54 = vld [vmem:[%s1 + $0xf0] sm:$0xff]
  %v55 = vld [vmem:[%s1 + $0xf8] sm:$0xff]
  %v56 = vld [vmem:[%s1 + $0x100] sm:$0xff]
  %v57 = vld [vmem:[%s1 + $0x108] sm:$0xff]
  %v58 = vld [vmem:[%s1 + $0x110] sm:$0xff]
  %v59 = vld [vmem:[%s1 + $0x118] sm:$0xff]
  %v60 = vld [vmem:[%s1 + $0x120] sm:$0xff]
  %v61 = vld [vmem:[%s1 + $0x128] sm:$0xff]
  %v62 = vld [vmem:[%s1 + $0x130] sm:$0xff]
  %v63 = vld [vmem:[%s1 + $0x138] sm:$0xff]
  %v64 = vld [vmem:[%s1 + $0x140] sm:$0xff]
  %v65 = vld [vmem:[%s1 + $0x148] sm:$0xff]
  %v66 = vld [vmem:[%s1 + $0x150] sm:$0xff]
  %v67 = vld [vmem:[%s1 + $0x158] sm:$0xff]
  %v68 = vld [vmem:[%s1 + $0x160] sm:$0xff]
  %v69 = vld [vmem:[%s1 + $0x168] sm:$0xff]
  %v70 = vld [vmem:[%s1 + $0x170] sm:$0xff]
  %v71 = vld [vmem:[%s1 + $0x178] sm:$0xff]
  %v72 = vld [vmem:[%s1 + $0x180] sm:$0xff]
  %v73 = vld [vmem:[%s1 + $0x188] sm:$0xff]
  %v74 = vld [vmem:[%s1 + $0x190] sm:$0xff]
  %v75 = vld [vmem:[%s1 + $0x198] sm:$0xff]
  %v76 = vld [vmem:[%s1 + $0x1a0] sm:$0xff]
  %v77 = vld [vmem:[%s1 + $0x1a8] sm:$0xff]
  %v78 = vld [vmem:[%s1 + $0x1b0] sm:$0xff]
  %v79 = vld [vmem:[%s1 + $0x1b8] sm:$0xff]
  %v80 = vld [vmem:[%s1 + $0x1c0] sm:$0xff]
  %v81 = vld [vmem:[%s1 + $0x1c8] sm:$0xff]
  %v82 = vld [vmem:[%s1 + $0x1d0] sm:$0xff]
  %v83 = vld [vmem:[%s1 + $0x1d8] sm:$0xff]
  %v84 = vld [vmem:[%s1 + $0x1e0] sm:$0xff]
  %v85 = vld [vmem:[%s1 + $0x1e8] sm:$0xff]
  %v86 = vld [vmem:[%s1 + $0x1f0] sm:$0xff]
  %v87 = vld [vmem:[%s1 + $0x1f8] sm:$0xff]
  %v88 = vld [vmem:[%s1 + $0x200] sm:$0xff]
  %v89 = vld [vmem:[%s1 + $0x208] sm:$0xff]
  %v90 = vld [vmem:[%s1 + $0x210] sm:$0xff]
  %v91 = vld [vmem:[%s1 + $0x218] sm:$0xff]
  %v92 = vld [vmem:[%s1 + $0x220] sm:$0xff]
  %v93 = vld [vmem:[%s1 + $0x228] sm:$0xff]
  %v94 = vld [vmem:[%s1 + $0x230] sm:$0xff]
  %v95 = vld [vmem:[%s1 + $0x238] sm:$0xff]
  %v96 = vld [vmem:[%s1 + $0x240] sm:$0xff]
  %v97 = vld [vmem:[%s1 + $0x248] sm:$0xff]
  %v98 = vld [vmem:[%s1 + $0x250] sm:$0xff]
  %v99 = vld [vmem:[%s1 + $0x258] sm:$0xff]
  %v100 = vld [vmem:[%s1 + $0x260] sm:$0xff]
  %v101 = vld [vmem:[%s1 + $0x268] sm:$0xff]
  %v102 = vld [vmem:[%s1 + $0x270] sm:$0xff]
  %v103 = vld [vmem:[%s1 + $0x278] sm:$0xff]
  %v104 = vld [vmem:[%s1 + $0x280] sm:$0xff]
  %v105 = vld [vmem:[%s1 + $0x288] sm:$0xff]
  %v106 = vld [vmem:[%s1 + $0x290] sm:$0xff]
  %v107 = vld [vmem:[%s1 + $0x298] sm:$0xff]
  %v108 = vld [vmem:[%s1 + $0x2a0] sm:$0xff]
  %v109 = vld [vmem:[%s1 + $0x2a8] sm:$0xff]
  %v110 = vld [vmem:[%s1 + $0x2b0] sm:$0xff]
  %v111 = vld [vmem:[%s1 + $0x2b8] sm:$0xff]
  %v112 = vld [vmem:[%s1 + $0x2c0] sm:$0xff]
  %v113 = vld [vmem:[%s1 + $0x2c8] sm:$0xff]
  %v114 = vld [vmem:[%s1 + $0x2d0] sm:$0xff]
  %v115 = vld [vmem:[%s1 + $0x2d8] sm:$0xff]
  %v116 = vld [vmem:[%s1 + $0x2e0] sm:$0xff]
  %v117 = vld [vmem:[%s1 + $0x2e8] sm:$0xff]
  %v118 = vld [vmem:[%s1 + $0x2f0] sm:$0xff]
  %v119 = vld [vmem:[%s1 + $0x2f8] sm:$0xff]
  %v120 = vld [vmem:[%s1 + $0x300] sm:$0xff]
  %v121 = vld [vmem:[%s1 + $0x308] sm:$0xff]
  %v122 = vld [vmem:[%s1 + $0x310] sm:$0xff]
  %v123 = vld [vmem:[%s1 + $0x318] sm:$0xff]
  %v124 = vld [vmem:[%s1 + $0x320] sm:$0xff]
  %v125 = vld [vmem:[%s1 + $0x328] sm:$0xff]
  %v126 = vld [vmem:[%s1 + $0x330] sm:$0xff]
  %v127 = vld [vmem:[%s1 + $0x338] sm:$0xff]
  %v128 = vld [vmem:[%s1 + $0x340] sm:$0xff]
  %v129 = vld [vmem:[%s1 + $0x348] sm:$0xff]
  %v130 = vld [vmem:[%s1 + $0x350] sm:$0xff]
  %v131 = vld [vmem:[%s1 + $0x358] sm:$0xff]
  %v132 = vld [vmem:[%s1 + $0x360] sm:$0xff]
  %v133 = vld [vmem:[%s1 + $0x368] sm:$0xff]
  %v134 = vld [vmem:[%s1 + $0x370] sm:$0xff]
  %v135 = vld [vmem:[%s1 + $0x378] sm:$0xff]
  %v136 = vld [vmem:[%s1 + $0x380] sm:$0xff]
  %v137 = vld [vmem:[%s1 + $0x388] sm:$0xff]
  %v138 = vld [vmem:[%s1 + $0x390] sm:$0xff]
  %v139 = vld [vmem:[%s1 + $0x398] sm:$0xff]
  %v140 = vld [vmem:[%s1 + $0x3a0] sm:$0xff]
  %v141 = vld [vmem:[%s1 + $0x3a8] sm:$0xff]
  %v142 = vld [vmem:[%s1 + $0x3b0] sm:$0xff]
  %v143 = vld [vmem:[%s1 + $0x3b8] sm:$0xff]
  %v144 = vld [vmem:[%s1 + $0x3c0] sm:$0xff]
  %v145 = vld [vmem:[%s1 + $0x3c8] sm:$0xff]
  %v146 = vld [vmem:[%s1 + $0x3d0] sm:$0xff]
  %v147 = vld [vmem:[%s1 + $0x3d8] sm:$0xff]
  %v148 = vld [vmem:[%s1 + $0x3e0] sm:$0xff]
  %v149 = vld [vmem:[%s1 + $0x3e8] sm:$0xff]
  %v150 = vld [vmem:[%s1 + $0x3f0] sm:$0xff]
  %v151 = vld [vmem:[%s1 + $0x3f8] sm:$0xff]
  %v152 = vld [vmem:[%s2] sm:$0x3]
  %v154 = vperm.slane %v152, 0
  %v155 = vperm.slane %v152, 1
  %v162 = vunpack.c.l.b16 %v20
  %v163 = vunpack.c.h.b16 %v20
  %v164 = vunpack.c.l.b16 %v21
  %v165 = vunpack.c.h.b16 %v21
  %v166 = vunpack.c.l.b16 %v22
  %v167 = vunpack.c.h.b16 %v22
  %v168 = vunpack.c.l.b16 %v23
  %v169 = vunpack.c.h.b16 %v23
  %v170 = vpack.c.b16 %v162, %v162
  %v171 = vpack.c.b16 %v163, %v163
  %v172 = vpack.c.b16 %v164, %v164
  %v173 = vpack.c.b16 %v165, %v165
  %v174 = vpack.c.b16 %v166, %v166
  %v175 = vpack.c.b16 %v167, %v167
  %v176 = vpack.c.b16 %v168, %v168
  %v177 = vpack.c.b16 %v169, %v169
  %v314 = vunpack.c.l.b16 %v24
  %v315 = vunpack.c.h.b16 %v24
  %v316 = vunpack.c.l.b16 %v25
  %v317 = vunpack.c.h.b16 %v25
  %v318 = vunpack.c.l.b16 %v26
  %v319 = vunpack.c.h.b16 %v26
  %v320 = vunpack.c.l.b16 %v27
  %v321 = vunpack.c.h.b16 %v27
  %v322 = vunpack.c.l.b16 %v28
  %v323 = vunpack.c.h.b16 %v28
  %v324 = vunpack.c.l.b16 %v29
  %v325 = vunpack.c.h.b16 %v29
  %v326 = vunpack.c.l.b16 %v30
  %v327 = vunpack.c.h.b16 %v30
  %v328 = vunpack.c.l.b16 %v31
  %v329 = vunpack.c.h.b16 %v31
  %v330 = vunpack.c.l.b16 %v32
  %v331 = vunpack.c.h.b16 %v32
  %v332 = vunpack.c.l.b16 %v33
  %v333 = vunpack.c.h.b16 %v33
  %v334 = vunpack.c.l.b16 %v34
  %v335 = vunpack.c.h.b16 %v34
  %v336 = vunpack.c.l.b16 %v35
  %v337 = vunpack.c.h.b16 %v35
  %v338 = vunpack.c.l.b16 %v36
  %v339 = vunpack.c.h.b16 %v36
  %v340 = vunpack.c.l.b16 %v37
  %v341 = vunpack.c.h.b16 %v37
  %v342 = vunpack.c.l.b16 %v38
  %v343 = vunpack.c.h.b16 %v38
  %v344 = vunpack.c.l.b16 %v39
  %v345 = vunpack.c.h.b16 %v39
  %v346 = vunpack.c.l.b16 %v40
  %v347 = vunpack.c.h.b16 %v40
  %v348 = vunpack.c.l.b16 %v41
  %v349 = vunpack.c.h.b16 %v41
  %v350 = vunpack.c.l.b16 %v42
  %v351 = vunpack.c.h.b16 %v42
  %v352 = vunpack.c.l.b16 %v43
  %v353 = vunpack.c.h.b16 %v43
  %v354 = vunpack.c.l.b16 %v44
  %v355 = vunpack.c.h.b16 %v44
  %v356 = vunpack.c.l.b16 %v45
  %v357 = vunpack.c.h.b16 %v45
  %v358 = vunpack.c.l.b16 %v46
  %v359 = vunpack.c.h.b16 %v46
  %v360 = vunpack.c.l.b16 %v47
  %v361 = vunpack.c.h.b16 %v47
  %v362 = vunpack.c.l.b16 %v48
  %v363 = vunpack.c.h.b16 %v48
  %v364 = vunpack.c.l.b16 %v49
  %v365 = vunpack.c.h.b16 %v49
  %v366 = vunpack.c.l.b16 %v50
  %v367 = vunpack.c.h.b16 %v50
  %v368 = vunpack.c.l.b16 %v51
  %v369 = vunpack.c.h.b16 %v51
  %v370 = vunpack.c.l.b16 %v52
  %v371 = vunpack.c.h.b16 %v52
  %v372 = vunpack.c.l.b16 %v53
  %v373 = vunpack.c.h.b16 %v53
  %v374 = vunpack.c.l.b16 %v54
  %v375 = vunpack.c.h.b16 %v54
  %v376 = vunpack.c.l.b16 %v55
  %v377 = vunpack.c.h.b16 %v55
  %v378 = vunpack.c.l.b16 %v56
  %v379 = vunpack.c.h.b16 %v56
  %v380 = vunpack.c.l.b16 %v57
  %v381 = vunpack.c.h.b16 %v57
  %v382 = vunpack.c.l.b16 %v58
  %v383 = vunpack.c.h.b16 %v58
  %v384 = vunpack.c.l.b16 %v59
  %v385 = vunpack.c.h.b16 %v59
  %v386 = vunpack.c.l.b16 %v60
  %v387 = vunpack.c.h.b16 %v60
  %v388 = vunpack.c.l.b16 %v61
  %v389 = vunpack.c.h.b16 %v61
  %v390 = vunpack.c.l.b16 %v62
  %v391 = vunpack.c.h.b16 %v62
  %v392 = vunpack.c.l.b16 %v63
  %v393 = vunpack.c.h.b16 %v63
  %v394 = vunpack.c.l.b16 %v64
  %v395 = vunpack.c.h.b16 %v64
  %v396 = vunpack.c.l.b16 %v65
  %v397 = vunpack.c.h.b16 %v65
  %v398 = vunpack.c.l.b16 %v66
  %v399 = vunpack.c.h.b16 %v66
  %v400 = vunpack.c.l.b16 %v67
  %v401 = vunpack.c.h.b16 %v67
  %v402 = vunpack.c.l.b16 %v68
  %v403 = vunpack.c.h.b16 %v68
  %v404 = vunpack.c.l.b16 %v69
  %v405 = vunpack.c.h.b16 %v69
  %v406 = vunpack.c.l.b16 %v70
  %v407 = vunpack.c.h.b16 %v70
  %v408 = vunpack.c.l.b16 %v71
  %v409 = vunpack.c.h.b16 %v71
  %v410 = vunpack.c.l.b16 %v72
  %v411 = vunpack.c.h.b16 %v72
  %v412 = vunpack.c.l.b16 %v73
  %v413 = vunpack.c.h.b16 %v73
  %v414 = vunpack.c.l.b16 %v74
  %v415 = vunpack.c.h.b16 %v74
  %v416 = vunpack.c.l.b16 %v75
  %v417 = vunpack.c.h.b16 %v75
  %v418 = vunpack.c.l.b16 %v76
  %v419 = vunpack.c.h.b16 %v76
  %v420 = vunpack.c.l.b16 %v77
  %v421 = vunpack.c.h.b16 %v77
  %v422 = vunpack.c.l.b16 %v78
  %v423 = vunpack.c.h.b16 %v78
  %v424 = vunpack.c.l.b16 %v79
  %v425 = vunpack.c.h.b16 %v79
  %v426 = vunpack.c.l.b16 %v80
  %v427 = vunpack.c.h.b16 %v80
  %v428 = vunpack.c.l.b16 %v81
  %v429 = vunpack.c.h.b16 %v81
  %v430 = vunpack.c.l.b16 %v82
  %v431 = vunpack.c.h.b16 %v82
  %v432 = vunpack.c.l.b16 %v83
  %v433 = vunpack.c.h.b16 %v83
  %v434 = vunpack.c.l.b16 %v84
  %v435 = vunpack.c.h.b16 %v84
  %v436 = vunpack.c.l.b16 %v85
  %v437 = vunpack.c.h.b16 %v85
  %v438 = vunpack.c.l.b16 %v86
  %v439 = vunpack.c.h.b16 %v86
  %v440 = vunpack.c.l.b16 %v87
  %v441 = vunpack.c.h.b16 %v87
  %v442 = vunpack.c.l.b16 %v88
  %v443 = vunpack.c.h.b16 %v88
  %v444 = vunpack.c.l.b16 %v89
  %v445 = vunpack.c.h.b16 %v89
  %v446 = vunpack.c.l.b16 %v90
  %v447 = vunpack.c.h.b16 %v90
  %v448 = vunpack.c.l.b16 %v91
  %v449 = vunpack.c.h.b16 %v91
  %v450 = vunpack.c.l.b16 %v92
  %v451 = vunpack.c.h.b16 %v92
  %v452 = vunpack.c.l.b16 %v93
  %v453 = vunpack.c.h.b16 %v93
  %v454 = vunpack.c.l.b16 %v94
  %v455 = vunpack.c.h.b16 %v94
  %v456 = vunpack.c.l.b16 %v95
  %v457 = vunpack.c.h.b16 %v95
  %v458 = vunpack.c.l.b16 %v96
  %v459 = vunpack.c.h.b16 %v96
  %v460 = vunpack.c.l.b16 %v97
  %v461 = vunpack.c.h.b16 %v97
  %v462 = vunpack.c.l.b16 %v98
  %v463 = vunpack.c.h.b16 %v98
  %v464 = vunpack.c.l.b16 %v99
  %v465 = vunpack.c.h.b16 %v99
  %v466 = vunpack.c.l.b16 %v100
  %v467 = vunpack.c.h.b16 %v100
  %v468 = vunpack.c.l.b16 %v101
  %v469 = vunpack.c.h.b16 %v101
  %v470 = vunpack.c.l.b16 %v102
  %v471 = vunpack.c.h.b16 %v102
  %v472 = vunpack.c.l.b16 %v103
  %v473 = vunpack.c.h.b16 %v103
  %v474 = vunpack.c.l.b16 %v104
  %v475 = vunpack.c.h.b16 %v104
  %v476 = vunpack.c.l.b16 %v105
  %v477 = vunpack.c.h.b16 %v105
  %v478 = vunpack.c.l.b16 %v106
  %v479 = vunpack.c.h.b16 %v106
  %v480 = vunpack.c.l.b16 %v107
  %v481 = vunpack.c.h.b16 %v107
  %v482 = vunpack.c.l.b16 %v108
  %v483 = vunpack.c.h.b16 %v108
  %v484 = vunpack.c.l.b16 %v109
  %v485 = vunpack.c.h.b16 %v109
  %v486 = vunpack.c.l.b16 %v110
  %v487 = vunpack.c.h.b16 %v110
  %v488 = vunpack.c.l.b16 %v111
  %v489 = vunpack.c.h.b16 %v111
  %v490 = vunpack.c.l.b16 %v112
  %v491 = vunpack.c.h.b16 %v112
  %v492 = vunpack.c.l.b16 %v113
  %v493 = vunpack.c.h.b16 %v113
  %v494 = vunpack.c.l.b16 %v114
  %v495 = vunpack.c.h.b16 %v114
  %v496 = vunpack.c.l.b16 %v115
  %v497 = vunpack.c.h.b16 %v115
  %v498 = vunpack.c.l.b16 %v116
  %v499 = vunpack.c.h.b16 %v116
  %v500 = vunpack.c.l.b16 %v117
  %v501 = vunpack.c.h.b16 %v117
  %v502 = vunpack.c.l.b16 %v118
  %v503 = vunpack.c.h.b16 %v118
  %v504 = vunpack.c.l.b16 %v119
  %v505 = vunpack.c.h.b16 %v119
  %v506 = vunpack.c.l.b16 %v120
  %v507 = vunpack.c.h.b16 %v120
  %v508 = vunpack.c.l.b16 %v121
  %v509 = vunpack.c.h.b16 %v121
  %v510 = vunpack.c.l.b16 %v122
  %v511 = vunpack.c.h.b16 %v122
  %v512 = vunpack.c.l.b16 %v123
  %v513 = vunpack.c.h.b16 %v123
  %v514 = vunpack.c.l.b16 %v124
  %v515 = vunpack.c.h.b16 %v124
  %v516 = vunpack.c.l.b16 %v125
  %v517 = vunpack.c.h.b16 %v125
  %v518 = vunpack.c.l.b16 %v126
  %v519 = vunpack.c.h.b16 %v126
  %v520 = vunpack.c.l.b16 %v127
  %v521 = vunpack.c.h.b16 %v127
  %v522 = vunpack.c.l.b16 %v128
  %v523 = vunpack.c.h.b16 %v128
  %v524 = vunpack.c.l.b16 %v129
  %v525 = vunpack.c.h.b16 %v129
  %v526 = vunpack.c.l.b16 %v130
  %v527 = vunpack.c.h.b16 %v130
  %v528 = vunpack.c.l.b16 %v131
  %v529 = vunpack.c.h.b16 %v131
  %v530 = vunpack.c.l.b16 %v132
  %v531 = vunpack.c.h.b16 %v132
  %v532 = vunpack.c.l.b16 %v133
  %v533 = vunpack.c.h.b16 %v133
  %v534 = vunpack.c.l.b16 %v134
  %v535 = vunpack.c.h.b16 %v134
  %v536 = vunpack.c.l.b16 %v135
  %v537 = vunpack.c.h.b16 %v135
  %v538 = vunpack.c.l.b16 %v136
  %v539 = vunpack.c.h.b16 %v136
  %v540 = vunpack.c.l.b16 %v137
  %v541 = vunpack.c.h.b16 %v137
  %v542 = vunpack.c.l.b16 %v138
  %v543 = vunpack.c.h.b16 %v138
  %v544 = vunpack.c.l.b16 %v139
  %v545 = vunpack.c.h.b16 %v139
  %v546 = vunpack.c.l.b16 %v140
  %v547 = vunpack.c.h.b16 %v140
  %v548 = vunpack.c.l.b16 %v141
  %v549 = vunpack.c.h.b16 %v141
  %v550 = vunpack.c.l.b16 %v142
  %v551 = vunpack.c.h.b16 %v142
  %v552 = vunpack.c.l.b16 %v143
  %v553 = vunpack.c.h.b16 %v143
  %v554 = vunpack.c.l.b16 %v144
  %v555 = vunpack.c.h.b16 %v144
  %v556 = vunpack.c.l.b16 %v145
  %v557 = vunpack.c.h.b16 %v145
  %v558 = vunpack.c.l.b16 %v146
  %v559 = vunpack.c.h.b16 %v146
  %v560 = vunpack.c.l.b16 %v147
  %v561 = vunpack.c.h.b16 %v147
  %v562 = vunpack.c.l.b16 %v148
  %v563 = vunpack.c.h.b16 %v148
  %v564 = vunpack.c.l.b16 %v149
  %v565 = vunpack.c.h.b16 %v149
  %v566 = vunpack.c.l.b16 %v150
  %v567 = vunpack.c.h.b16 %v150
  %v568 = vunpack.c.l.b16 %v151
  %v569 = vunpack.c.h.b16 %v151
  %v570 = vpack.c.b16 %v316, %v314
  %v571 = vpack.c.b16 %v317, %v315
  %v572 = vpack.c.b16 %v320, %v318
  %v573 = vpack.c.b16 %v321, %v319
  %v574 = vpack.c.b16 %v324, %v322
  %v575 = vpack.c.b16 %v325, %v323
  %v576 = vpack.c.b16 %v328, %v326
  %v577 = vpack.c.b16 %v329, %v327
  %v578 = vpack.c.b16 %v332, %v330
  %v579 = vpack.c.b16 %v333, %v331
  %v580 = vpack.c.b16 %v336, %v334
  %v581 = vpack.c.b16 %v337, %v335
  %v582 = vpack.c.b16 %v340, %v338
  %v583 = vpack.c.b16 %v341, %v339
  %v584 = vpack.c.b16 %v344, %v342
  %v585 = vpack.c.b16 %v345, %v343
  %v586 = vpack.c.b16 %v348, %v346
  %v587 = vpack.c.b16 %v349, %v347
  %v588 = vpack.c.b16 %v352, %v350
  %v589 = vpack.c.b16 %v353, %v351
  %v590 = vpack.c.b16 %v356, %v354
  %v591 = vpack.c.b16 %v357, %v355
  %v592 = vpack.c.b16 %v360, %v358
  %v593 = vpack.c.b16 %v361, %v359
  %v594 = vpack.c.b16 %v364, %v362
  %v595 = vpack.c.b16 %v365, %v363
  %v596 = vpack.c.b16 %v368, %v366
  %v597 = vpack.c.b16 %v369, %v367
  %v598 = vpack.c.b16 %v372, %v370
  %v599 = vpack.c.b16 %v373, %v371
  %v600 = vpack.c.b16 %v376, %v374
  %v601 = vpack.c.b16 %v377, %v375
  %v602 = vpack.c.b16 %v380, %v378
  %v603 = vpack.c.b16 %v381, %v379
  %v604 = vpack.c.b16 %v384, %v382
  %v605 = vpack.c.b16 %v385, %v383
  %v606 = vpack.c.b16 %v388, %v386
  %v607 = vpack.c.b16 %v389, %v387
  %v608 = vpack.c.b16 %v392, %v390
  %v609 = vpack.c.b16 %v393, %v391
  %v610 = vpack.c.b16 %v396, %v394
  %v611 = vpack.c.b16 %v397, %v395
  %v612 = vpack.c.b16 %v400, %v398
  %v613 = vpack.c.b16 %v401, %v399
  %v614 = vpack.c.b16 %v404, %v402
  %v615 = vpack.c.b16 %v405, %v403
  %v616 = vpack.c.b16 %v408, %v406
  %v617 = vpack.c.b16 %v409, %v407
  %v618 = vpack.c.b16 %v412, %v410
  %v619 = vpack.c.b16 %v413, %v411
  %v620 = vpack.c.b16 %v416, %v414
  %v621 = vpack.c.b16 %v417, %v415
  %v622 = vpack.c.b16 %v420, %v418
  %v623 = vpack.c.b16 %v421, %v419
  %v624 = vpack.c.b16 %v424, %v422
  %v625 = vpack.c.b16 %v425, %v423
  %v626 = vpack.c.b16 %v428, %v426
  %v627 = vpack.c.b16 %v429, %v427
  %v628 = vpack.c.b16 %v432, %v430
  %v629 = vpack.c.b16 %v433, %v431
  %v630 = vpack.c.b16 %v436, %v434
  %v631 = vpack.c.b16 %v437, %v435
  %v632 = vpack.c.b16 %v440, %v438
  %v633 = vpack.c.b16 %v441, %v439
  %v634 = vpack.c.b16 %v444, %v442
  %v635 = vpack.c.b16 %v445, %v443
  %v636 = vpack.c.b16 %v448, %v446
  %v637 = vpack.c.b16 %v449, %v447
  %v638 = vpack.c.b16 %v452, %v450
  %v639 = vpack.c.b16 %v453, %v451
  %v640 = vpack.c.b16 %v456, %v454
  %v641 = vpack.c.b16 %v457, %v455
  %v642 = vpack.c.b16 %v460, %v458
  %v643 = vpack.c.b16 %v461, %v459
  %v644 = vpack.c.b16 %v464, %v462
  %v645 = vpack.c.b16 %v465, %v463
  %v646 = vpack.c.b16 %v468, %v466
  %v647 = vpack.c.b16 %v469, %v467
  %v648 = vpack.c.b16 %v472, %v470
  %v649 = vpack.c.b16 %v473, %v471
  %v650 = vpack.c.b16 %v476, %v474
  %v651 = vpack.c.b16 %v477, %v475
  %v652 = vpack.c.b16 %v480, %v478
  %v653 = vpack.c.b16 %v481, %v479
  %v654 = vpack.c.b16 %v484, %v482
  %v655 = vpack.c.b16 %v485, %v483
  %v656 = vpack.c.b16 %v488, %v486
  %v657 = vpack.c.b16 %v489, %v487
  %v658 = vpack.c.b16 %v492, %v490
  %v659 = vpack.c.b16 %v493, %v491
  %v660 = vpack.c.b16 %v496, %v494
  %v661 = vpack.c.b16 %v497, %v495
  %v662 = vpack.c.b16 %v500, %v498
  %v663 = vpack.c.b16 %v501, %v499
  %v664 = vpack.c.b16 %v504, %v502
  %v665 = vpack.c.b16 %v505, %v503
  %v666 = vpack.c.b16 %v508, %v506
  %v667 = vpack.c.b16 %v509, %v507
  %v668 = vpack.c.b16 %v512, %v510
  %v669 = vpack.c.b16 %v513, %v511
  %v670 = vpack.c.b16 %v516, %v514
  %v671 = vpack.c.b16 %v517, %v515
  %v672 = vpack.c.b16 %v520, %v518
  %v673 = vpack.c.b16 %v521, %v519
  %v674 = vpack.c.b16 %v524, %v522
  %v675 = vpack.c.b16 %v525, %v523
  %v676 = vpack.c.b16 %v528, %v526
  %v677 = vpack.c.b16 %v529, %v527
  %v678 = vpack.c.b16 %v532, %v530
  %v679 = vpack.c.b16 %v533, %v531
  %v680 = vpack.c.b16 %v536, %v534
  %v681 = vpack.c.b16 %v537, %v535
  %v682 = vpack.c.b16 %v540, %v538
  %v683 = vpack.c.b16 %v541, %v539
  %v684 = vpack.c.b16 %v544, %v542
  %v685 = vpack.c.b16 %v545, %v543
  %v686 = vpack.c.b16 %v548, %v546
  %v687 = vpack.c.b16 %v549, %v547
  %v688 = vpack.c.b16 %v552, %v550
  %v689 = vpack.c.b16 %v553, %v551
  %v690 = vpack.c.b16 %v556, %v554
  %v691 = vpack.c.b16 %v557, %v555
  %v692 = vpack.c.b16 %v560, %v558
  %v693 = vpack.c.b16 %v561, %v559
  %v694 = vpack.c.b16 %v564, %v562
  %v695 = vpack.c.b16 %v565, %v563
  %v696 = vpack.c.b16 %v568, %v566
  %v697 = vpack.c.b16 %v569, %v567
  %826 = vmatpush.bf16.msra.mxu0 %v584
  %827 = vmatpush.bf16.msra.mxu0 %v582
  %828 = vmatpush.bf16.msra.mxu0 %v580
  %829 = vmatpush.bf16.msra.mxu0 %v578
  %830 = vmatpush.bf16.msra.mxu0 %v576
  %831 = vmatpush.bf16.msra.mxu0 %v574
  %832 = vmatpush.bf16.msra.mxu0 %v572
  %833 = vmatpush.bf16.msra.mxu0 %v570
  %834 = vmatmul.bf16.gmra.mxu0 %v170
  %v835 = vpop.f32.mrf.mxu0
  %v836 = vadd.f32 %v154, %v835
  %v837 = vpop.f32.mrf.mxu0
  %838 = vdwg.mxu0
  %839 = vmatpush.bf16.msra.mxu0 %v600
  %840 = vmatpush.bf16.msra.mxu0 %v598
  %841 = vmatpush.bf16.msra.mxu0 %v596
  %842 = vmatpush.bf16.msra.mxu0 %v594
  %843 = vmatpush.bf16.msra.mxu0 %v592
  %844 = vmatpush.bf16.msra.mxu0 %v590
  %845 = vmatpush.bf16.msra.mxu0 %v588
  %846 = vmatpush.bf16.msra.mxu0 %v586
  %847 = vmatmul.bf16.gmra.mxu0 %v171
  %v848 = vpop.f32.mrf.mxu0
  %v849 = vadd.f32 %v836, %v848
  %v850 = vpop.f32.mrf.mxu0
  %851 = vdwg.mxu0
  %852 = vmatpush.bf16.msra.mxu0 %v616
  %853 = vmatpush.bf16.msra.mxu0 %v614
  %854 = vmatpush.bf16.msra.mxu0 %v612
  %855 = vmatpush.bf16.msra.mxu0 %v610
  %856 = vmatpush.bf16.msra.mxu0 %v608
  %857 = vmatpush.bf16.msra.mxu0 %v606
  %858 = vmatpush.bf16.msra.mxu0 %v604
  %859 = vmatpush.bf16.msra.mxu0 %v602
  %860 = vmatmul.bf16.gmra.mxu0 %v172
  %v861 = vpop.f32.mrf.mxu0
  %v862 = vadd.f32 %v849, %v861
  %v863 = vpop.f32.mrf.mxu0
  %864 = vdwg.mxu0
  %865 = vmatpush.bf16.msra.mxu0 %v632
  %866 = vmatpush.bf16.msra.mxu0 %v630
  %867 = vmatpush.bf16.msra.mxu0 %v628
  %868 = vmatpush.bf16.msra.mxu0 %v626
  %869 = vmatpush.bf16.msra.mxu0 %v624
  %870 = vmatpush.bf16.msra.mxu0 %v622
  %871 = vmatpush.bf16.msra.mxu0 %v620
  %872 = vmatpush.bf16.msra.mxu0 %v618
  %873 = vmatmul.bf16.gmra.mxu0 %v173
  %v874 = vpop.f32.mrf.mxu0
  %v875 = vadd.f32 %v862, %v874
  %v876 = vpop.f32.mrf.mxu0
  %877 = vdwg.mxu0
  %878 = vmatpush.bf16.msra.mxu0 %v648
  %879 = vmatpush.bf16.msra.mxu0 %v646
  %880 = vmatpush.bf16.msra.mxu0 %v644
  %881 = vmatpush.bf16.msra.mxu0 %v642
  %882 = vmatpush.bf16.msra.mxu0 %v640
  %883 = vmatpush.bf16.msra.mxu0 %v638
  %884 = vmatpush.bf16.msra.mxu0 %v636
  %885 = vmatpush.bf16.msra.mxu0 %v634
  %886 = vmatmul.bf16.gmra.mxu0 %v174
  %v887 = vpop.f32.mrf.mxu0
  %v888 = vadd.f32 %v875, %v887
  %v889 = vpop.f32.mrf.mxu0
  %890 = vdwg.mxu0
  %891 = vmatpush.bf16.msra.mxu0 %v664
  %892 = vmatpush.bf16.msra.mxu0 %v662
  %893 = vmatpush.bf16.msra.mxu0 %v660
  %894 = vmatpush.bf16.msra.mxu0 %v658
  %895 = vmatpush.bf16.msra.mxu0 %v656
  %896 = vmatpush.bf16.msra.mxu0 %v654
  %897 = vmatpush.bf16.msra.mxu0 %v652
  %898 = vmatpush.bf16.msra.mxu0 %v650
  %899 = vmatmul.bf16.gmra.mxu0 %v175
  %v900 = vpop.f32.mrf.mxu0
  %v901 = vadd.f32 %v888, %v900
  %v902 = vpop.f32.mrf.mxu0
  %903 = vdwg.mxu0
  %904 = vmatpush.bf16.msra.mxu0 %v680
  %905 = vmatpush.bf16.msra.mxu0 %v678
  %906 = vmatpush.bf16.msra.mxu0 %v676
  %907 = vmatpush.bf16.msra.mxu0 %v674
  %908 = vmatpush.bf16.msra.mxu0 %v672
  %909 = vmatpush.bf16.msra.mxu0 %v670
  %910 = vmatpush.bf16.msra.mxu0 %v668
  %911 = vmatpush.bf16.msra.mxu0 %v666
  %912 = vmatmul.bf16.gmra.mxu0 %v176
  %v913 = vpop.f32.mrf.mxu0
  %v914 = vadd.f32 %v901, %v913
  %v915 = vpop.f32.mrf.mxu0
  %916 = vdwg.mxu0
  %917 = vmatpush.bf16.msra.mxu0 %v696
  %918 = vmatpush.bf16.msra.mxu0 %v694
  %919 = vmatpush.bf16.msra.mxu0 %v692
  %920 = vmatpush.bf16.msra.mxu0 %v690
  %921 = vmatpush.bf16.msra.mxu0 %v688
  %922 = vmatpush.bf16.msra.mxu0 %v686
  %923 = vmatpush.bf16.msra.mxu0 %v684
  %924 = vmatpush.bf16.msra.mxu0 %v682
  %925 = vmatmul.bf16.gmra.mxu0 %v177
  %v926 = vpop.f32.mrf.mxu0
  %v927 = vadd.f32 %v914, %v926
  %v928 = vpop.f32.mrf.mxu0
  %929 = vdwg.mxu0
  %930 = vmatpush.bf16.msra.mxu0 %v585
  %931 = vmatpush.bf16.msra.mxu0 %v583
  %932 = vmatpush.bf16.msra.mxu0 %v581
  %933 = vmatpush.bf16.msra.mxu0 %v579
  %934 = vmatpush.bf16.msra.mxu0 %v577
  %935 = vmatpush.bf16.msra.mxu0 %v575
  %936 = vmatpush.bf16.msra.mxu0 %v573
  %937 = vmatpush.bf16.msra.mxu0 %v571
  %938 = vmatmul.bf16.gmra.mxu0 %v170
  %v939 = vpop.f32.mrf.mxu0
  %v940 = vadd.f32 %v155, %v939
  %v941 = vpop.f32.mrf.mxu0
  %942 = vdwg.mxu0
  %943 = vmatpush.bf16.msra.mxu0 %v601
  %944 = vmatpush.bf16.msra.mxu0 %v599
  %945 = vmatpush.bf16.msra.mxu0 %v597
  %946 = vmatpush.bf16.msra.mxu0 %v595
  %947 = vmatpush.bf16.msra.mxu0 %v593
  %948 = vmatpush.bf16.msra.mxu0 %v591
  %949 = vmatpush.bf16.msra.mxu0 %v589
  %950 = vmatpush.bf16.msra.mxu0 %v587
  %951 = vmatmul.bf16.gmra.mxu0 %v171
  %v952 = vpop.f32.mrf.mxu0
  %v953 = vadd.f32 %v940, %v952
  %v954 = vpop.f32.mrf.mxu0
  %955 = vdwg.mxu0
  %956 = vmatpush.bf16.msra.mxu0 %v617
  %957 = vmatpush.bf16.msra.mxu0 %v615
  %958 = vmatpush.bf16.msra.mxu0 %v613
  %959 = vmatpush.bf16.msra.mxu0 %v611
  %960 = vmatpush.bf16.msra.mxu0 %v609
  %961 = vmatpush.bf16.msra.mxu0 %v607
  %962 = vmatpush.bf16.msra.mxu0 %v605
  %963 = vmatpush.bf16.msra.mxu0 %v603
  %964 = vmatmul.bf16.gmra.mxu0 %v172
  %v965 = vpop.f32.mrf.mxu0
  %v966 = vadd.f32 %v953, %v965
  %v967 = vpop.f32.mrf.mxu0
  %968 = vdwg.mxu0
  %969 = vmatpush.bf16.msra.mxu0 %v633
  %970 = vmatpush.bf16.msra.mxu0 %v631
  %971 = vmatpush.bf16.msra.mxu0 %v629
  %972 = vmatpush.bf16.msra.mxu0 %v627
  %973 = vmatpush.bf16.msra.mxu0 %v625
  %974 = vmatpush.bf16.msra.mxu0 %v623
  %975 = vmatpush.bf16.msra.mxu0 %v621
  %976 = vmatpush.bf16.msra.mxu0 %v619
  %977 = vmatmul.bf16.gmra.mxu0 %v173
  %v978 = vpop.f32.mrf.mxu0
  %v979 = vadd.f32 %v966, %v978
  %v980 = vpop.f32.mrf.mxu0
  %981 = vdwg.mxu0
  %982 = vmatpush.bf16.msra.mxu0 %v649
  %983 = vmatpush.bf16.msra.mxu0 %v647
  %984 = vmatpush.bf16.msra.mxu0 %v645
  %985 = vmatpush.bf16.msra.mxu0 %v643
  %986 = vmatpush.bf16.msra.mxu0 %v641
  %987 = vmatpush.bf16.msra.mxu0 %v639
  %988 = vmatpush.bf16.msra.mxu0 %v637
  %989 = vmatpush.bf16.msra.mxu0 %v635
  %990 = vmatmul.bf16.gmra.mxu0 %v174
  %v991 = vpop.f32.mrf.mxu0
  %v992 = vadd.f32 %v979, %v991
  %v993 = vpop.f32.mrf.mxu0
  %994 = vdwg.mxu0
  %995 = vmatpush.bf16.msra.mxu0 %v665
  %996 = vmatpush.bf16.msra.mxu0 %v663
  %997 = vmatpush.bf16.msra.mxu0 %v661
  %998 = vmatpush.bf16.msra.mxu0 %v659
  %999 = vmatpush.bf16.msra.mxu0 %v657
  %1000 = vmatpush.bf16.msra.mxu0 %v655
  %1001 = vmatpush.bf16.msra.mxu0 %v653
  %1002 = vmatpush.bf16.msra.mxu0 %v651
  %1003 = vmatmul.bf16.gmra.mxu0 %v175
  %v1004 = vpop.f32.mrf.mxu0
  %v1005 = vadd.f32 %v992, %v1004
  %v1006 = vpop.f32.mrf.mxu0
  %1007 = vdwg.mxu0
  %1008 = vmatpush.bf16.msra.mxu0 %v681
  %1009 = vmatpush.bf16.msra.mxu0 %v679
  %1010 = vmatpush.bf16.msra.mxu0 %v677
  %1011 = vmatpush.bf16.msra.mxu0 %v675
  %1012 = vmatpush.bf16.msra.mxu0 %v673
  %1013 = vmatpush.bf16.msra.mxu0 %v671
  %1014 = vmatpush.bf16.msra.mxu0 %v669
  %1015 = vmatpush.bf16.msra.mxu0 %v667
  %1016 = vmatmul.bf16.gmra.mxu0 %v176
  %v1017 = vpop.f32.mrf.mxu0
  %v1018 = vadd.f32 %v1005, %v1017
  %v1019 = vpop.f32.mrf.mxu0
  %1020 = vdwg.mxu0
  %1021 = vmatpush.bf16.msra.mxu0 %v697
  %1022 = vmatpush.bf16.msra.mxu0 %v695
  %1023 = vmatpush.bf16.msra.mxu0 %v693
  %1024 = vmatpush.bf16.msra.mxu0 %v691
  %1025 = vmatpush.bf16.msra.mxu0 %v689
  %1026 = vmatpush.bf16.msra.mxu0 %v687
  %1027 = vmatpush.bf16.msra.mxu0 %v685
  %1028 = vmatpush.bf16.msra.mxu0 %v683
  %1029 = vmatmul.bf16.gmra.mxu0 %v177
  %v1030 = vpop.f32.mrf.mxu0
  %v1031 = vadd.f32 %v1018, %v1030
  %v1032 = vpop.f32.mrf.mxu0
  %1033 = vdwg.mxu0
  %v1034 = vmax.f32 %v927, 0.0
  %v1035 = vmax.f32 %v1031, 0.0
  %v1036 = vpack.c.bf16 %v1034, %v1034
  %v1037 = vpack.c.bf16 %v1035, %v1035
  %v1038 = vld [vmem:[%s3] sm:$0xff]
  %v1039 = vld [vmem:[%s3 + $0x8] sm:$0xff]
  %v1040 = vld [vmem:[%s3 + $0x10] sm:$0xff]
  %v1041 = vld [vmem:[%s3 + $0x18] sm:$0xff]
  %v1042 = vld [vmem:[%s3 + $0x20] sm:$0xff]
  %v1043 = vld [vmem:[%s3 + $0x28] sm:$0xff]
  %v1044 = vld [vmem:[%s3 + $0x30] sm:$0xff]
  %v1045 = vld [vmem:[%s3 + $0x38] sm:$0xff]
  %v1046 = vld [vmem:[%s3 + $0x40] sm:$0xff]
  %v1047 = vld [vmem:[%s3 + $0x48] sm:$0xff]
  %v1048 = vld [vmem:[%s3 + $0x50] sm:$0xff]
  %v1049 = vld [vmem:[%s3 + $0x58] sm:$0xff]
  %v1050 = vld [vmem:[%s3 + $0x60] sm:$0xff]
  %v1051 = vld [vmem:[%s3 + $0x68] sm:$0xff]
  %v1052 = vld [vmem:[%s3 + $0x70] sm:$0xff]
  %v1053 = vld [vmem:[%s3 + $0x78] sm:$0xff]
  %v1054 = vld [vmem:[%s3 + $0x80] sm:$0xff]
  %v1055 = vld [vmem:[%s3 + $0x88] sm:$0xff]
  %v1056 = vld [vmem:[%s3 + $0x90] sm:$0xff]
  %v1057 = vld [vmem:[%s3 + $0x98] sm:$0xff]
  %v1058 = vld [vmem:[%s3 + $0xa0] sm:$0xff]
  %v1059 = vld [vmem:[%s3 + $0xa8] sm:$0xff]
  %v1060 = vld [vmem:[%s3 + $0xb0] sm:$0xff]
  %v1061 = vld [vmem:[%s3 + $0xb8] sm:$0xff]
  %v1062 = vld [vmem:[%s3 + $0xc0] sm:$0xff]
  %v1063 = vld [vmem:[%s3 + $0xc8] sm:$0xff]
  %v1064 = vld [vmem:[%s3 + $0xd0] sm:$0xff]
  %v1065 = vld [vmem:[%s3 + $0xd8] sm:$0xff]
  %v1066 = vld [vmem:[%s3 + $0xe0] sm:$0xff]
  %v1067 = vld [vmem:[%s3 + $0xe8] sm:$0xff]
  %v1068 = vld [vmem:[%s3 + $0xf0] sm:$0xff]
  %v1069 = vld [vmem:[%s3 + $0xf8] sm:$0xff]
  %v1070 = vld [vmem:[%s3 + $0x100] sm:$0xff]
  %v1071 = vld [vmem:[%s3 + $0x108] sm:$0xff]
  %v1072 = vld [vmem:[%s3 + $0x110] sm:$0xff]
  %v1073 = vld [vmem:[%s3 + $0x118] sm:$0xff]
  %v1074 = vld [vmem:[%s3 + $0x120] sm:$0xff]
  %v1075 = vld [vmem:[%s3 + $0x128] sm:$0xff]
  %v1076 = vld [vmem:[%s3 + $0x130] sm:$0xff]
  %v1077 = vld [vmem:[%s3 + $0x138] sm:$0xff]
  %v1078 = vld [vmem:[%s3 + $0x140] sm:$0xff]
  %v1079 = vld [vmem:[%s3 + $0x148] sm:$0xff]
  %v1080 = vld [vmem:[%s3 + $0x150] sm:$0xff]
  %v1081 = vld [vmem:[%s3 + $0x158] sm:$0xff]
  %v1082 = vld [vmem:[%s3 + $0x160] sm:$0xff]
  %v1083 = vld [vmem:[%s3 + $0x168] sm:$0xff]
  %v1084 = vld [vmem:[%s3 + $0x170] sm:$0xff]
  %v1085 = vld [vmem:[%s3 + $0x178] sm:$0xff]
  %v1086 = vld [vmem:[%s3 + $0x180] sm:$0xff]
  %v1087 = vld [vmem:[%s3 + $0x188] sm:$0xff]
  %v1088 = vld [vmem:[%s3 + $0x190] sm:$0xff]
  %v1089 = vld [vmem:[%s3 + $0x198] sm:$0xff]
  %v1090 = vld [vmem:[%s3 + $0x1a0] sm:$0xff]
  %v1091 = vld [vmem:[%s3 + $0x1a8] sm:$0xff]
  %v1092 = vld [vmem:[%s3 + $0x1b0] sm:$0xff]
  %v1093 = vld [vmem:[%s3 + $0x1b8] sm:$0xff]
  %v1094 = vld [vmem:[%s3 + $0x1c0] sm:$0xff]
  %v1095 = vld [vmem:[%s3 + $0x1c8] sm:$0xff]
  %v1096 = vld [vmem:[%s3 + $0x1d0] sm:$0xff]
  %v1097 = vld [vmem:[%s3 + $0x1d8] sm:$0xff]
  %v1098 = vld [vmem:[%s3 + $0x1e0] sm:$0xff]
  %v1099 = vld [vmem:[%s3 + $0x1e8] sm:$0xff]
  %v1100 = vld [vmem:[%s3 + $0x1f0] sm:$0xff]
  %v1101 = vld [vmem:[%s3 + $0x1f8] sm:$0xff]
  %v1102 = vld [vmem:[%s3 + $0x200] sm:$0xff]
  %v1103 = vld [vmem:[%s3 + $0x208] sm:$0xff]
  %v1104 = vld [vmem:[%s3 + $0x210] sm:$0xff]
  %v1105 = vld [vmem:[%s3 + $0x218] sm:$0xff]
  %v1106 = vld [vmem:[%s3 + $0x220] sm:$0xff]
  %v1107 = vld [vmem:[%s3 + $0x228] sm:$0xff]
  %v1108 = vld [vmem:[%s3 + $0x230] sm:$0xff]
  %v1109 = vld [vmem:[%s3 + $0x238] sm:$0xff]
  %v1110 = vld [vmem:[%s3 + $0x240] sm:$0xff]
  %v1111 = vld [vmem:[%s3 + $0x248] sm:$0xff]
  %v1112 = vld [vmem:[%s3 + $0x250] sm:$0xff]
  %v1113 = vld [vmem:[%s3 + $0x258] sm:$0xff]
  %v1114 = vld [vmem:[%s3 + $0x260] sm:$0xff]
  %v1115 = vld [vmem:[%s3 + $0x268] sm:$0xff]
  %v1116 = vld [vmem:[%s3 + $0x270] sm:$0xff]
  %v1117 = vld [vmem:[%s3 + $0x278] sm:$0xff]
  %v1118 = vld [vmem:[%s3 + $0x280] sm:$0xff]
  %v1119 = vld [vmem:[%s3 + $0x288] sm:$0xff]
  %v1120 = vld [vmem:[%s3 + $0x290] sm:$0xff]
  %v1121 = vld [vmem:[%s3 + $0x298] sm:$0xff]
  %v1122 = vld [vmem:[%s3 + $0x2a0] sm:$0xff]
  %v1123 = vld [vmem:[%s3 + $0x2a8] sm:$0xff]
  %v1124 = vld [vmem:[%s3 + $0x2b0] sm:$0xff]
  %v1125 = vld [vmem:[%s3 + $0x2b8] sm:$0xff]
  %v1126 = vld [vmem:[%s3 + $0x2c0] sm:$0xff]
  %v1127 = vld [vmem:[%s3 + $0x2c8] sm:$0xff]
  %v1128 = vld [vmem:[%s3 + $0x2d0] sm:$0xff]
  %v1129 = vld [vmem:[%s3 + $0x2d8] sm:$0xff]
  %v1130 = vld [vmem:[%s3 + $0x2e0] sm:$0xff]
  %v1131 = vld [vmem:[%s3 + $0x2e8] sm:$0xff]
  %v1132 = vld [vmem:[%s3 + $0x2f0] sm:$0xff]
  %v1133 = vld [vmem:[%s3 + $0x2f8] sm:$0xff]
  %v1134 = vld [vmem:[%s3 + $0x300] sm:$0xff]
  %v1135 = vld [vmem:[%s3 + $0x308] sm:$0xff]
  %v1136 = vld [vmem:[%s3 + $0x310] sm:$0xff]
  %v1137 = vld [vmem:[%s3 + $0x318] sm:$0xff]
  %v1138 = vld [vmem:[%s3 + $0x320] sm:$0xff]
  %v1139 = vld [vmem:[%s3 + $0x328] sm:$0xff]
  %v1140 = vld [vmem:[%s3 + $0x330] sm:$0xff]
  %v1141 = vld [vmem:[%s3 + $0x338] sm:$0xff]
  %v1142 = vld [vmem:[%s3 + $0x340] sm:$0xff]
  %v1143 = vld [vmem:[%s3 + $0x348] sm:$0xff]
  %v1144 = vld [vmem:[%s3 + $0x350] sm:$0xff]
  %v1145 = vld [vmem:[%s3 + $0x358] sm:$0xff]
  %v1146 = vld [vmem:[%s3 + $0x360] sm:$0xff]
  %v1147 = vld [vmem:[%s3 + $0x368] sm:$0xff]
  %v1148 = vld [vmem:[%s3 + $0x370] sm:$0xff]
  %v1149 = vld [vmem:[%s3 + $0x378] sm:$0xff]
  %v1150 = vld [vmem:[%s3 + $0x380] sm:$0xff]
  %v1151 = vld [vmem:[%s3 + $0x388] sm:$0xff]
  %v1152 = vld [vmem:[%s3 + $0x390] sm:$0xff]
  %v1153 = vld [vmem:[%s3 + $0x398] sm:$0xff]
  %v1154 = vld [vmem:[%s3 + $0x3a0] sm:$0xff]
  %v1155 = vld [vmem:[%s3 + $0x3a8] sm:$0xff]
  %v1156 = vld [vmem:[%s3 + $0x3b0] sm:$0xff]
  %v1157 = vld [vmem:[%s3 + $0x3b8] sm:$0xff]
  %v1158 = vld [vmem:[%s3 + $0x3c0] sm:$0xff]
  %v1159 = vld [vmem:[%s3 + $0x3c8] sm:$0xff]
  %v1160 = vld [vmem:[%s3 + $0x3d0] sm:$0xff]
  %v1161 = vld [vmem:[%s3 + $0x3d8] sm:$0xff]
  %v1162 = vld [vmem:[%s3 + $0x3e0] sm:$0xff]
  %v1163 = vld [vmem:[%s3 + $0x3e8] sm:$0xff]
  %v1164 = vld [vmem:[%s3 + $0x3f0] sm:$0xff]
  %v1165 = vld [vmem:[%s3 + $0x3f8] sm:$0xff]
  %v1166 = vld [vmem:[%s4] sm:$0xff]
  %v1168 = vperm.slane %v1166, 0
  %v1169 = vperm.slane %v1166, 1
  %v1170 = vperm.slane %v1166, 2
  %v1171 = vperm.slane %v1166, 3
  %v1172 = vperm.slane %v1166, 4
  %v1173 = vperm.slane %v1166, 5
  %v1174 = vperm.slane %v1166, 6
  %v1175 = vperm.slane %v1166, 7
  %v1312 = vunpack.c.l.b16 %v1038
  %v1313 = vunpack.c.h.b16 %v1038
  %v1314 = vunpack.c.l.b16 %v1039
  %v1315 = vunpack.c.h.b16 %v1039
  %v1316 = vunpack.c.l.b16 %v1040
  %v1317 = vunpack.c.h.b16 %v1040
  %v1318 = vunpack.c.l.b16 %v1041
  %v1319 = vunpack.c.h.b16 %v1041
  %v1320 = vunpack.c.l.b16 %v1042
  %v1321 = vunpack.c.h.b16 %v1042
  %v1322 = vunpack.c.l.b16 %v1043
  %v1323 = vunpack.c.h.b16 %v1043
  %v1324 = vunpack.c.l.b16 %v1044
  %v1325 = vunpack.c.h.b16 %v1044
  %v1326 = vunpack.c.l.b16 %v1045
  %v1327 = vunpack.c.h.b16 %v1045
  %v1328 = vunpack.c.l.b16 %v1046
  %v1329 = vunpack.c.h.b16 %v1046
  %v1330 = vunpack.c.l.b16 %v1047
  %v1331 = vunpack.c.h.b16 %v1047
  %v1332 = vunpack.c.l.b16 %v1048
  %v1333 = vunpack.c.h.b16 %v1048
  %v1334 = vunpack.c.l.b16 %v1049
  %v1335 = vunpack.c.h.b16 %v1049
  %v1336 = vunpack.c.l.b16 %v1050
  %v1337 = vunpack.c.h.b16 %v1050
  %v1338 = vunpack.c.l.b16 %v1051
  %v1339 = vunpack.c.h.b16 %v1051
  %v1340 = vunpack.c.l.b16 %v1052
  %v1341 = vunpack.c.h.b16 %v1052
  %v1342 = vunpack.c.l.b16 %v1053
  %v1343 = vunpack.c.h.b16 %v1053
  %v1344 = vunpack.c.l.b16 %v1054
  %v1345 = vunpack.c.h.b16 %v1054
  %v1346 = vunpack.c.l.b16 %v1055
  %v1347 = vunpack.c.h.b16 %v1055
  %v1348 = vunpack.c.l.b16 %v1056
  %v1349 = vunpack.c.h.b16 %v1056
  %v1350 = vunpack.c.l.b16 %v1057
  %v1351 = vunpack.c.h.b16 %v1057
  %v1352 = vunpack.c.l.b16 %v1058
  %v1353 = vunpack.c.h.b16 %v1058
  %v1354 = vunpack.c.l.b16 %v1059
  %v1355 = vunpack.c.h.b16 %v1059
  %v1356 = vunpack.c.l.b16 %v1060
  %v1357 = vunpack.c.h.b16 %v1060
  %v1358 = vunpack.c.l.b16 %v1061
  %v1359 = vunpack.c.h.b16 %v1061
  %v1360 = vunpack.c.l.b16 %v1062
  %v1361 = vunpack.c.h.b16 %v1062
  %v1362 = vunpack.c.l.b16 %v1063
  %v1363 = vunpack.c.h.b16 %v1063
  %v1364 = vunpack.c.l.b16 %v1064
  %v1365 = vunpack.c.h.b16 %v1064
  %v1366 = vunpack.c.l.b16 %v1065
  %v1367 = vunpack.c.h.b16 %v1065
  %v1368 = vunpack.c.l.b16 %v1066
  %v1369 = vunpack.c.h.b16 %v1066
  %v1370 = vunpack.c.l.b16 %v1067
  %v1371 = vunpack.c.h.b16 %v1067
  %v1372 = vunpack.c.l.b16 %v1068
  %v1373 = vunpack.c.h.b16 %v1068
  %v1374 = vunpack.c.l.b16 %v1069
  %v1375 = vunpack.c.h.b16 %v1069
  %v1376 = vunpack.c.l.b16 %v1070
  %v1377 = vunpack.c.h.b16 %v1070
  %v1378 = vunpack.c.l.b16 %v1071
  %v1379 = vunpack.c.h.b16 %v1071
  %v1380 = vunpack.c.l.b16 %v1072
  %v1381 = vunpack.c.h.b16 %v1072
  %v1382 = vunpack.c.l.b16 %v1073
  %v1383 = vunpack.c.h.b16 %v1073
  %v1384 = vunpack.c.l.b16 %v1074
  %v1385 = vunpack.c.h.b16 %v1074
  %v1386 = vunpack.c.l.b16 %v1075
  %v1387 = vunpack.c.h.b16 %v1075
  %v1388 = vunpack.c.l.b16 %v1076
  %v1389 = vunpack.c.h.b16 %v1076
  %v1390 = vunpack.c.l.b16 %v1077
  %v1391 = vunpack.c.h.b16 %v1077
  %v1392 = vunpack.c.l.b16 %v1078
  %v1393 = vunpack.c.h.b16 %v1078
  %v1394 = vunpack.c.l.b16 %v1079
  %v1395 = vunpack.c.h.b16 %v1079
  %v1396 = vunpack.c.l.b16 %v1080
  %v1397 = vunpack.c.h.b16 %v1080
  %v1398 = vunpack.c.l.b16 %v1081
  %v1399 = vunpack.c.h.b16 %v1081
  %v1400 = vunpack.c.l.b16 %v1082
  %v1401 = vunpack.c.h.b16 %v1082
  %v1402 = vunpack.c.l.b16 %v1083
  %v1403 = vunpack.c.h.b16 %v1083
  %v1404 = vunpack.c.l.b16 %v1084
  %v1405 = vunpack.c.h.b16 %v1084
  %v1406 = vunpack.c.l.b16 %v1085
  %v1407 = vunpack.c.h.b16 %v1085
  %v1408 = vunpack.c.l.b16 %v1086
  %v1409 = vunpack.c.h.b16 %v1086
  %v1410 = vunpack.c.l.b16 %v1087
  %v1411 = vunpack.c.h.b16 %v1087
  %v1412 = vunpack.c.l.b16 %v1088
  %v1413 = vunpack.c.h.b16 %v1088
  %v1414 = vunpack.c.l.b16 %v1089
  %v1415 = vunpack.c.h.b16 %v1089
  %v1416 = vunpack.c.l.b16 %v1090
  %v1417 = vunpack.c.h.b16 %v1090
  %v1418 = vunpack.c.l.b16 %v1091
  %v1419 = vunpack.c.h.b16 %v1091
  %v1420 = vunpack.c.l.b16 %v1092
  %v1421 = vunpack.c.h.b16 %v1092
  %v1422 = vunpack.c.l.b16 %v1093
  %v1423 = vunpack.c.h.b16 %v1093
  %v1424 = vunpack.c.l.b16 %v1094
  %v1425 = vunpack.c.h.b16 %v1094
  %v1426 = vunpack.c.l.b16 %v1095
  %v1427 = vunpack.c.h.b16 %v1095
  %v1428 = vunpack.c.l.b16 %v1096
  %v1429 = vunpack.c.h.b16 %v1096
  %v1430 = vunpack.c.l.b16 %v1097
  %v1431 = vunpack.c.h.b16 %v1097
  %v1432 = vunpack.c.l.b16 %v1098
  %v1433 = vunpack.c.h.b16 %v1098
  %v1434 = vunpack.c.l.b16 %v1099
  %v1435 = vunpack.c.h.b16 %v1099
  %v1436 = vunpack.c.l.b16 %v1100
  %v1437 = vunpack.c.h.b16 %v1100
  %v1438 = vunpack.c.l.b16 %v1101
  %v1439 = vunpack.c.h.b16 %v1101
  %v1440 = vunpack.c.l.b16 %v1102
  %v1441 = vunpack.c.h.b16 %v1102
  %v1442 = vunpack.c.l.b16 %v1103
  %v1443 = vunpack.c.h.b16 %v1103
  %v1444 = vunpack.c.l.b16 %v1104
  %v1445 = vunpack.c.h.b16 %v1104
  %v1446 = vunpack.c.l.b16 %v1105
  %v1447 = vunpack.c.h.b16 %v1105
  %v1448 = vunpack.c.l.b16 %v1106
  %v1449 = vunpack.c.h.b16 %v1106
  %v1450 = vunpack.c.l.b16 %v1107
  %v1451 = vunpack.c.h.b16 %v1107
  %v1452 = vunpack.c.l.b16 %v1108
  %v1453 = vunpack.c.h.b16 %v1108
  %v1454 = vunpack.c.l.b16 %v1109
  %v1455 = vunpack.c.h.b16 %v1109
  %v1456 = vunpack.c.l.b16 %v1110
  %v1457 = vunpack.c.h.b16 %v1110
  %v1458 = vunpack.c.l.b16 %v1111
  %v1459 = vunpack.c.h.b16 %v1111
  %v1460 = vunpack.c.l.b16 %v1112
  %v1461 = vunpack.c.h.b16 %v1112
  %v1462 = vunpack.c.l.b16 %v1113
  %v1463 = vunpack.c.h.b16 %v1113
  %v1464 = vunpack.c.l.b16 %v1114
  %v1465 = vunpack.c.h.b16 %v1114
  %v1466 = vunpack.c.l.b16 %v1115
  %v1467 = vunpack.c.h.b16 %v1115
  %v1468 = vunpack.c.l.b16 %v1116
  %v1469 = vunpack.c.h.b16 %v1116
  %v1470 = vunpack.c.l.b16 %v1117
  %v1471 = vunpack.c.h.b16 %v1117
  %v1472 = vunpack.c.l.b16 %v1118
  %v1473 = vunpack.c.h.b16 %v1118
  %v1474 = vunpack.c.l.b16 %v1119
  %v1475 = vunpack.c.h.b16 %v1119
  %v1476 = vunpack.c.l.b16 %v1120
  %v1477 = vunpack.c.h.b16 %v1120
  %v1478 = vunpack.c.l.b16 %v1121
  %v1479 = vunpack.c.h.b16 %v1121
  %v1480 = vunpack.c.l.b16 %v1122
  %v1481 = vunpack.c.h.b16 %v1122
  %v1482 = vunpack.c.l.b16 %v1123
  %v1483 = vunpack.c.h.b16 %v1123
  %v1484 = vunpack.c.l.b16 %v1124
  %v1485 = vunpack.c.h.b16 %v1124
  %v1486 = vunpack.c.l.b16 %v1125
  %v1487 = vunpack.c.h.b16 %v1125
  %v1488 = vunpack.c.l.b16 %v1126
  %v1489 = vunpack.c.h.b16 %v1126
  %v1490 = vunpack.c.l.b16 %v1127
  %v1491 = vunpack.c.h.b16 %v1127
  %v1492 = vunpack.c.l.b16 %v1128
  %v1493 = vunpack.c.h.b16 %v1128
  %v1494 = vunpack.c.l.b16 %v1129
  %v1495 = vunpack.c.h.b16 %v1129
  %v1496 = vunpack.c.l.b16 %v1130
  %v1497 = vunpack.c.h.b16 %v1130
  %v1498 = vunpack.c.l.b16 %v1131
  %v1499 = vunpack.c.h.b16 %v1131
  %v1500 = vunpack.c.l.b16 %v1132
  %v1501 = vunpack.c.h.b16 %v1132
  %v1502 = vunpack.c.l.b16 %v1133
  %v1503 = vunpack.c.h.b16 %v1133
  %v1504 = vunpack.c.l.b16 %v1134
  %v1505 = vunpack.c.h.b16 %v1134
  %v1506 = vunpack.c.l.b16 %v1135
  %v1507 = vunpack.c.h.b16 %v1135
  %v1508 = vunpack.c.l.b16 %v1136
  %v1509 = vunpack.c.h.b16 %v1136
  %v1510 = vunpack.c.l.b16 %v1137
  %v1511 = vunpack.c.h.b16 %v1137
  %v1512 = vunpack.c.l.b16 %v1138
  %v1513 = vunpack.c.h.b16 %v1138
  %v1514 = vunpack.c.l.b16 %v1139
  %v1515 = vunpack.c.h.b16 %v1139
  %v1516 = vunpack.c.l.b16 %v1140
  %v1517 = vunpack.c.h.b16 %v1140
  %v1518 = vunpack.c.l.b16 %v1141
  %v1519 = vunpack.c.h.b16 %v1141
  %v1520 = vunpack.c.l.b16 %v1142
  %v1521 = vunpack.c.h.b16 %v1142
  %v1522 = vunpack.c.l.b16 %v1143
  %v1523 = vunpack.c.h.b16 %v1143
  %v1524 = vunpack.c.l.b16 %v1144
  %v1525 = vunpack.c.h.b16 %v1144
  %v1526 = vunpack.c.l.b16 %v1145
  %v1527 = vunpack.c.h.b16 %v1145
  %v1528 = vunpack.c.l.b16 %v1146
  %v1529 = vunpack.c.h.b16 %v1146
  %v1530 = vunpack.c.l.b16 %v1147
  %v1531 = vunpack.c.h.b16 %v1147
  %v1532 = vunpack.c.l.b16 %v1148
  %v1533 = vunpack.c.h.b16 %v1148
  %v1534 = vunpack.c.l.b16 %v1149
  %v1535 = vunpack.c.h.b16 %v1149
  %v1536 = vunpack.c.l.b16 %v1150
  %v1537 = vunpack.c.h.b16 %v1150
  %v1538 = vunpack.c.l.b16 %v1151
  %v1539 = vunpack.c.h.b16 %v1151
  %v1540 = vunpack.c.l.b16 %v1152
  %v1541 = vunpack.c.h.b16 %v1152
  %v1542 = vunpack.c.l.b16 %v1153
  %v1543 = vunpack.c.h.b16 %v1153
  %v1544 = vunpack.c.l.b16 %v1154
  %v1545 = vunpack.c.h.b16 %v1154
  %v1546 = vunpack.c.l.b16 %v1155
  %v1547 = vunpack.c.h.b16 %v1155
  %v1548 = vunpack.c.l.b16 %v1156
  %v1549 = vunpack.c.h.b16 %v1156
  %v1550 = vunpack.c.l.b16 %v1157
  %v1551 = vunpack.c.h.b16 %v1157
  %v1552 = vunpack.c.l.b16 %v1158
  %v1553 = vunpack.c.h.b16 %v1158
  %v1554 = vunpack.c.l.b16 %v1159
  %v1555 = vunpack.c.h.b16 %v1159
  %v1556 = vunpack.c.l.b16 %v1160
  %v1557 = vunpack.c.h.b16 %v1160
  %v1558 = vunpack.c.l.b16 %v1161
  %v1559 = vunpack.c.h.b16 %v1161
  %v1560 = vunpack.c.l.b16 %v1162
  %v1561 = vunpack.c.h.b16 %v1162
  %v1562 = vunpack.c.l.b16 %v1163
  %v1563 = vunpack.c.h.b16 %v1163
  %v1564 = vunpack.c.l.b16 %v1164
  %v1565 = vunpack.c.h.b16 %v1164
  %v1566 = vunpack.c.l.b16 %v1165
  %v1567 = vunpack.c.h.b16 %v1165
  %v1568 = vpack.c.b16 %v1320, %v1312
  %v1569 = vpack.c.b16 %v1321, %v1313
  %v1570 = vpack.c.b16 %v1322, %v1314
  %v1571 = vpack.c.b16 %v1323, %v1315
  %v1572 = vpack.c.b16 %v1324, %v1316
  %v1573 = vpack.c.b16 %v1325, %v1317
  %v1574 = vpack.c.b16 %v1326, %v1318
  %v1575 = vpack.c.b16 %v1327, %v1319
  %v1576 = vpack.c.b16 %v1336, %v1328
  %v1577 = vpack.c.b16 %v1337, %v1329
  %v1578 = vpack.c.b16 %v1338, %v1330
  %v1579 = vpack.c.b16 %v1339, %v1331
  %v1580 = vpack.c.b16 %v1340, %v1332
  %v1581 = vpack.c.b16 %v1341, %v1333
  %v1582 = vpack.c.b16 %v1342, %v1334
  %v1583 = vpack.c.b16 %v1343, %v1335
  %v1584 = vpack.c.b16 %v1352, %v1344
  %v1585 = vpack.c.b16 %v1353, %v1345
  %v1586 = vpack.c.b16 %v1354, %v1346
  %v1587 = vpack.c.b16 %v1355, %v1347
  %v1588 = vpack.c.b16 %v1356, %v1348
  %v1589 = vpack.c.b16 %v1357, %v1349
  %v1590 = vpack.c.b16 %v1358, %v1350
  %v1591 = vpack.c.b16 %v1359, %v1351
  %v1592 = vpack.c.b16 %v1368, %v1360
  %v1593 = vpack.c.b16 %v1369, %v1361
  %v1594 = vpack.c.b16 %v1370, %v1362
  %v1595 = vpack.c.b16 %v1371, %v1363
  %v1596 = vpack.c.b16 %v1372, %v1364
  %v1597 = vpack.c.b16 %v1373, %v1365
  %v1598 = vpack.c.b16 %v1374, %v1366
  %v1599 = vpack.c.b16 %v1375, %v1367
  %v1600 = vpack.c.b16 %v1384, %v1376
  %v1601 = vpack.c.b16 %v1385, %v1377
  %v1602 = vpack.c.b16 %v1386, %v1378
  %v1603 = vpack.c.b16 %v1387, %v1379
  %v1604 = vpack.c.b16 %v1388, %v1380
  %v1605 = vpack.c.b16 %v1389, %v1381
  %v1606 = vpack.c.b16 %v1390, %v1382
  %v1607 = vpack.c.b16 %v1391, %v1383
  %v1608 = vpack.c.b16 %v1400, %v1392
  %v1609 = vpack.c.b16 %v1401, %v1393
  %v1610 = vpack.c.b16 %v1402, %v1394
  %v1611 = vpack.c.b16 %v1403, %v1395
  %v1612 = vpack.c.b16 %v1404, %v1396
  %v1613 = vpack.c.b16 %v1405, %v1397
  %v1614 = vpack.c.b16 %v1406, %v1398
  %v1615 = vpack.c.b16 %v1407, %v1399
  %v1616 = vpack.c.b16 %v1416, %v1408
  %v1617 = vpack.c.b16 %v1417, %v1409
  %v1618 = vpack.c.b16 %v1418, %v1410
  %v1619 = vpack.c.b16 %v1419, %v1411
  %v1620 = vpack.c.b16 %v1420, %v1412
  %v1621 = vpack.c.b16 %v1421, %v1413
  %v1622 = vpack.c.b16 %v1422, %v1414
  %v1623 = vpack.c.b16 %v1423, %v1415
  %v1624 = vpack.c.b16 %v1432, %v1424
  %v1625 = vpack.c.b16 %v1433, %v1425
  %v1626 = vpack.c.b16 %v1434, %v1426
  %v1627 = vpack.c.b16 %v1435, %v1427
  %v1628 = vpack.c.b16 %v1436, %v1428
  %v1629 = vpack.c.b16 %v1437, %v1429
  %v1630 = vpack.c.b16 %v1438, %v1430
  %v1631 = vpack.c.b16 %v1439, %v1431
  %v1632 = vpack.c.b16 %v1448, %v1440
  %v1633 = vpack.c.b16 %v1449, %v1441
  %v1634 = vpack.c.b16 %v1450, %v1442
  %v1635 = vpack.c.b16 %v1451, %v1443
  %v1636 = vpack.c.b16 %v1452, %v1444
  %v1637 = vpack.c.b16 %v1453, %v1445
  %v1638 = vpack.c.b16 %v1454, %v1446
  %v1639 = vpack.c.b16 %v1455, %v1447
  %v1640 = vpack.c.b16 %v1464, %v1456
  %v1641 = vpack.c.b16 %v1465, %v1457
  %v1642 = vpack.c.b16 %v1466, %v1458
  %v1643 = vpack.c.b16 %v1467, %v1459
  %v1644 = vpack.c.b16 %v1468, %v1460
  %v1645 = vpack.c.b16 %v1469, %v1461
  %v1646 = vpack.c.b16 %v1470, %v1462
  %v1647 = vpack.c.b16 %v1471, %v1463
  %v1648 = vpack.c.b16 %v1480, %v1472
  %v1649 = vpack.c.b16 %v1481, %v1473
  %v1650 = vpack.c.b16 %v1482, %v1474
  %v1651 = vpack.c.b16 %v1483, %v1475
  %v1652 = vpack.c.b16 %v1484, %v1476
  %v1653 = vpack.c.b16 %v1485, %v1477
  %v1654 = vpack.c.b16 %v1486, %v1478
  %v1655 = vpack.c.b16 %v1487, %v1479
  %v1656 = vpack.c.b16 %v1496, %v1488
  %v1657 = vpack.c.b16 %v1497, %v1489
  %v1658 = vpack.c.b16 %v1498, %v1490
  %v1659 = vpack.c.b16 %v1499, %v1491
  %v1660 = vpack.c.b16 %v1500, %v1492
  %v1661 = vpack.c.b16 %v1501, %v1493
  %v1662 = vpack.c.b16 %v1502, %v1494
  %v1663 = vpack.c.b16 %v1503, %v1495
  %v1664 = vpack.c.b16 %v1512, %v1504
  %v1665 = vpack.c.b16 %v1513, %v1505
  %v1666 = vpack.c.b16 %v1514, %v1506
  %v1667 = vpack.c.b16 %v1515, %v1507
  %v1668 = vpack.c.b16 %v1516, %v1508
  %v1669 = vpack.c.b16 %v1517, %v1509
  %v1670 = vpack.c.b16 %v1518, %v1510
  %v1671 = vpack.c.b16 %v1519, %v1511
  %v1672 = vpack.c.b16 %v1528, %v1520
  %v1673 = vpack.c.b16 %v1529, %v1521
  %v1674 = vpack.c.b16 %v1530, %v1522
  %v1675 = vpack.c.b16 %v1531, %v1523
  %v1676 = vpack.c.b16 %v1532, %v1524
  %v1677 = vpack.c.b16 %v1533, %v1525
  %v1678 = vpack.c.b16 %v1534, %v1526
  %v1679 = vpack.c.b16 %v1535, %v1527
  %v1680 = vpack.c.b16 %v1544, %v1536
  %v1681 = vpack.c.b16 %v1545, %v1537
  %v1682 = vpack.c.b16 %v1546, %v1538
  %v1683 = vpack.c.b16 %v1547, %v1539
  %v1684 = vpack.c.b16 %v1548, %v1540
  %v1685 = vpack.c.b16 %v1549, %v1541
  %v1686 = vpack.c.b16 %v1550, %v1542
  %v1687 = vpack.c.b16 %v1551, %v1543
  %v1688 = vpack.c.b16 %v1560, %v1552
  %v1689 = vpack.c.b16 %v1561, %v1553
  %v1690 = vpack.c.b16 %v1562, %v1554
  %v1691 = vpack.c.b16 %v1563, %v1555
  %v1692 = vpack.c.b16 %v1564, %v1556
  %v1693 = vpack.c.b16 %v1565, %v1557
  %v1694 = vpack.c.b16 %v1566, %v1558
  %v1695 = vpack.c.b16 %v1567, %v1559
  %1824 = vmatpush.bf16.msra.mxu0 %v1624
  %1825 = vmatpush.bf16.msra.mxu0 %v1616
  %1826 = vmatpush.bf16.msra.mxu0 %v1608
  %1827 = vmatpush.bf16.msra.mxu0 %v1600
  %1828 = vmatpush.bf16.msra.mxu0 %v1592
  %1829 = vmatpush.bf16.msra.mxu0 %v1584
  %1830 = vmatpush.bf16.msra.mxu0 %v1576
  %1831 = vmatpush.bf16.msra.mxu0 %v1568
  %1832 = vmatmul.bf16.gmra.mxu0 %v1036
  %v1833 = vpop.f32.mrf.mxu0
  %v1834 = vadd.f32 %v1168, %v1833
  %v1835 = vpop.f32.mrf.mxu0
  %1836 = vdwg.mxu0
  %1837 = vmatpush.bf16.msra.mxu0 %v1688
  %1838 = vmatpush.bf16.msra.mxu0 %v1680
  %1839 = vmatpush.bf16.msra.mxu0 %v1672
  %1840 = vmatpush.bf16.msra.mxu0 %v1664
  %1841 = vmatpush.bf16.msra.mxu0 %v1656
  %1842 = vmatpush.bf16.msra.mxu0 %v1648
  %1843 = vmatpush.bf16.msra.mxu0 %v1640
  %1844 = vmatpush.bf16.msra.mxu0 %v1632
  %1845 = vmatmul.bf16.gmra.mxu0 %v1037
  %v1846 = vpop.f32.mrf.mxu0
  %v1847 = vadd.f32 %v1834, %v1846
  %v1848 = vpop.f32.mrf.mxu0
  %1849 = vdwg.mxu0
  %1850 = vmatpush.bf16.msra.mxu0 %v1625
  %1851 = vmatpush.bf16.msra.mxu0 %v1617
  %1852 = vmatpush.bf16.msra.mxu0 %v1609
  %1853 = vmatpush.bf16.msra.mxu0 %v1601
  %1854 = vmatpush.bf16.msra.mxu0 %v1593
  %1855 = vmatpush.bf16.msra.mxu0 %v1585
  %1856 = vmatpush.bf16.msra.mxu0 %v1577
  %1857 = vmatpush.bf16.msra.mxu0 %v1569
  %1858 = vmatmul.bf16.gmra.mxu0 %v1036
  %v1859 = vpop.f32.mrf.mxu0
  %v1860 = vadd.f32 %v1169, %v1859
  %v1861 = vpop.f32.mrf.mxu0
  %1862 = vdwg.mxu0
  %1863 = vmatpush.bf16.msra.mxu0 %v1689
  %1864 = vmatpush.bf16.msra.mxu0 %v1681
  %1865 = vmatpush.bf16.msra.mxu0 %v1673
  %1866 = vmatpush.bf16.msra.mxu0 %v1665
  %1867 = vmatpush.bf16.msra.mxu0 %v1657
  %1868 = vmatpush.bf16.msra.mxu0 %v1649
  %1869 = vmatpush.bf16.msra.mxu0 %v1641
  %1870 = vmatpush.bf16.msra.mxu0 %v1633
  %1871 = vmatmul.bf16.gmra.mxu0 %v1037
  %v1872 = vpop.f32.mrf.mxu0
  %v1873 = vadd.f32 %v1860, %v1872
  %v1874 = vpop.f32.mrf.mxu0
  %1875 = vdwg.mxu0
  %1876 = vmatpush.bf16.msra.mxu0 %v1626
  %1877 = vmatpush.bf16.msra.mxu0 %v1618
  %1878 = vmatpush.bf16.msra.mxu0 %v1610
  %1879 = vmatpush.bf16.msra.mxu0 %v1602
  %1880 = vmatpush.bf16.msra.mxu0 %v1594
  %1881 = vmatpush.bf16.msra.mxu0 %v1586
  %1882 = vmatpush.bf16.msra.mxu0 %v1578
  %1883 = vmatpush.bf16.msra.mxu0 %v1570
  %1884 = vmatmul.bf16.gmra.mxu0 %v1036
  %v1885 = vpop.f32.mrf.mxu0
  %v1886 = vadd.f32 %v1170, %v1885
  %v1887 = vpop.f32.mrf.mxu0
  %1888 = vdwg.mxu0
  %1889 = vmatpush.bf16.msra.mxu0 %v1690
  %1890 = vmatpush.bf16.msra.mxu0 %v1682
  %1891 = vmatpush.bf16.msra.mxu0 %v1674
  %1892 = vmatpush.bf16.msra.mxu0 %v1666
  %1893 = vmatpush.bf16.msra.mxu0 %v1658
  %1894 = vmatpush.bf16.msra.mxu0 %v1650
  %1895 = vmatpush.bf16.msra.mxu0 %v1642
  %1896 = vmatpush.bf16.msra.mxu0 %v1634
  %1897 = vmatmul.bf16.gmra.mxu0 %v1037
  %v1898 = vpop.f32.mrf.mxu0
  %v1899 = vadd.f32 %v1886, %v1898
  %v1900 = vpop.f32.mrf.mxu0
  %1901 = vdwg.mxu0
  %1902 = vmatpush.bf16.msra.mxu0 %v1627
  %1903 = vmatpush.bf16.msra.mxu0 %v1619
  %1904 = vmatpush.bf16.msra.mxu0 %v1611
  %1905 = vmatpush.bf16.msra.mxu0 %v1603
  %1906 = vmatpush.bf16.msra.mxu0 %v1595
  %1907 = vmatpush.bf16.msra.mxu0 %v1587
  %1908 = vmatpush.bf16.msra.mxu0 %v1579
  %1909 = vmatpush.bf16.msra.mxu0 %v1571
  %1910 = vmatmul.bf16.gmra.mxu0 %v1036
  %v1911 = vpop.f32.mrf.mxu0
  %v1912 = vadd.f32 %v1171, %v1911
  %v1913 = vpop.f32.mrf.mxu0
  %1914 = vdwg.mxu0
  %1915 = vmatpush.bf16.msra.mxu0 %v1691
  %1916 = vmatpush.bf16.msra.mxu0 %v1683
  %1917 = vmatpush.bf16.msra.mxu0 %v1675
  %1918 = vmatpush.bf16.msra.mxu0 %v1667
  %1919 = vmatpush.bf16.msra.mxu0 %v1659
  %1920 = vmatpush.bf16.msra.mxu0 %v1651
  %1921 = vmatpush.bf16.msra.mxu0 %v1643
  %1922 = vmatpush.bf16.msra.mxu0 %v1635
  %1923 = vmatmul.bf16.gmra.mxu0 %v1037
  %v1924 = vpop.f32.mrf.mxu0
  %v1925 = vadd.f32 %v1912, %v1924
  %v1926 = vpop.f32.mrf.mxu0
  %1927 = vdwg.mxu0
  %1928 = vmatpush.bf16.msra.mxu0 %v1628
  %1929 = vmatpush.bf16.msra.mxu0 %v1620
  %1930 = vmatpush.bf16.msra.mxu0 %v1612
  %1931 = vmatpush.bf16.msra.mxu0 %v1604
  %1932 = vmatpush.bf16.msra.mxu0 %v1596
  %1933 = vmatpush.bf16.msra.mxu0 %v1588
  %1934 = vmatpush.bf16.msra.mxu0 %v1580
  %1935 = vmatpush.bf16.msra.mxu0 %v1572
  %1936 = vmatmul.bf16.gmra.mxu0 %v1036
  %v1937 = vpop.f32.mrf.mxu0
  %v1938 = vadd.f32 %v1172, %v1937
  %v1939 = vpop.f32.mrf.mxu0
  %1940 = vdwg.mxu0
  %1941 = vmatpush.bf16.msra.mxu0 %v1692
  %1942 = vmatpush.bf16.msra.mxu0 %v1684
  %1943 = vmatpush.bf16.msra.mxu0 %v1676
  %1944 = vmatpush.bf16.msra.mxu0 %v1668
  %1945 = vmatpush.bf16.msra.mxu0 %v1660
  %1946 = vmatpush.bf16.msra.mxu0 %v1652
  %1947 = vmatpush.bf16.msra.mxu0 %v1644
  %1948 = vmatpush.bf16.msra.mxu0 %v1636
  %1949 = vmatmul.bf16.gmra.mxu0 %v1037
  %v1950 = vpop.f32.mrf.mxu0
  %v1951 = vadd.f32 %v1938, %v1950
  %v1952 = vpop.f32.mrf.mxu0
  %1953 = vdwg.mxu0
  %1954 = vmatpush.bf16.msra.mxu0 %v1629
  %1955 = vmatpush.bf16.msra.mxu0 %v1621
  %1956 = vmatpush.bf16.msra.mxu0 %v1613
  %1957 = vmatpush.bf16.msra.mxu0 %v1605
  %1958 = vmatpush.bf16.msra.mxu0 %v1597
  %1959 = vmatpush.bf16.msra.mxu0 %v1589
  %1960 = vmatpush.bf16.msra.mxu0 %v1581
  %1961 = vmatpush.bf16.msra.mxu0 %v1573
  %1962 = vmatmul.bf16.gmra.mxu0 %v1036
  %v1963 = vpop.f32.mrf.mxu0
  %v1964 = vadd.f32 %v1173, %v1963
  %v1965 = vpop.f32.mrf.mxu0
  %1966 = vdwg.mxu0
  %1967 = vmatpush.bf16.msra.mxu0 %v1693
  %1968 = vmatpush.bf16.msra.mxu0 %v1685
  %1969 = vmatpush.bf16.msra.mxu0 %v1677
  %1970 = vmatpush.bf16.msra.mxu0 %v1669
  %1971 = vmatpush.bf16.msra.mxu0 %v1661
  %1972 = vmatpush.bf16.msra.mxu0 %v1653
  %1973 = vmatpush.bf16.msra.mxu0 %v1645
  %1974 = vmatpush.bf16.msra.mxu0 %v1637
  %1975 = vmatmul.bf16.gmra.mxu0 %v1037
  %v1976 = vpop.f32.mrf.mxu0
  %v1977 = vadd.f32 %v1964, %v1976
  %v1978 = vpop.f32.mrf.mxu0
  %1979 = vdwg.mxu0
  %1980 = vmatpush.bf16.msra.mxu0 %v1630
  %1981 = vmatpush.bf16.msra.mxu0 %v1622
  %1982 = vmatpush.bf16.msra.mxu0 %v1614
  %1983 = vmatpush.bf16.msra.mxu0 %v1606
  %1984 = vmatpush.bf16.msra.mxu0 %v1598
  %1985 = vmatpush.bf16.msra.mxu0 %v1590
  %1986 = vmatpush.bf16.msra.mxu0 %v1582
  %1987 = vmatpush.bf16.msra.mxu0 %v1574
  %1988 = vmatmul.bf16.gmra.mxu0 %v1036
  %v1989 = vpop.f32.mrf.mxu0
  %v1990 = vadd.f32 %v1174, %v1989
  %v1991 = vpop.f32.mrf.mxu0
  %1992 = vdwg.mxu0
  %1993 = vmatpush.bf16.msra.mxu0 %v1694
  %1994 = vmatpush.bf16.msra.mxu0 %v1686
  %1995 = vmatpush.bf16.msra.mxu0 %v1678
  %1996 = vmatpush.bf16.msra.mxu0 %v1670
  %1997 = vmatpush.bf16.msra.mxu0 %v1662
  %1998 = vmatpush.bf16.msra.mxu0 %v1654
  %1999 = vmatpush.bf16.msra.mxu0 %v1646
  %2000 = vmatpush.bf16.msra.mxu0 %v1638
  %2001 = vmatmul.bf16.gmra.mxu0 %v1037
  %v2002 = vpop.f32.mrf.mxu0
  %v2003 = vadd.f32 %v1990, %v2002
  %v2004 = vpop.f32.mrf.mxu0
  %2005 = vdwg.mxu0
  %2006 = vmatpush.bf16.msra.mxu0 %v1631
  %2007 = vmatpush.bf16.msra.mxu0 %v1623
  %2008 = vmatpush.bf16.msra.mxu0 %v1615
  %2009 = vmatpush.bf16.msra.mxu0 %v1607
  %2010 = vmatpush.bf16.msra.mxu0 %v1599
  %2011 = vmatpush.bf16.msra.mxu0 %v1591
  %2012 = vmatpush.bf16.msra.mxu0 %v1583
  %2013 = vmatpush.bf16.msra.mxu0 %v1575
  %2014 = vmatmul.bf16.gmra.mxu0 %v1036
  %v2015 = vpop.f32.mrf.mxu0
  %v2016 = vadd.f32 %v1175, %v2015
  %v2017 = vpop.f32.mrf.mxu0
  %2018 = vdwg.mxu0
  %2019 = vmatpush.bf16.msra.mxu0 %v1695
  %2020 = vmatpush.bf16.msra.mxu0 %v1687
  %2021 = vmatpush.bf16.msra.mxu0 %v1679
  %2022 = vmatpush.bf16.msra.mxu0 %v1671
  %2023 = vmatpush.bf16.msra.mxu0 %v1663
  %2024 = vmatpush.bf16.msra.mxu0 %v1655
  %2025 = vmatpush.bf16.msra.mxu0 %v1647
  %2026 = vmatpush.bf16.msra.mxu0 %v1639
  %2027 = vmatmul.bf16.gmra.mxu0 %v1037
  %v2028 = vpop.f32.mrf.mxu0
  %v2029 = vadd.f32 %v2016, %v2028
  %v2030 = vpop.f32.mrf.mxu0
  %2031 = vdwg.mxu0
  %v2032 = vunpack.c.l.bf16 %v20
  %v2033 = vunpack.c.h.bf16 %v20
  %v2034 = vunpack.c.l.bf16 %v21
  %v2035 = vunpack.c.h.bf16 %v21
  %v2036 = vunpack.c.l.bf16 %v22
  %v2037 = vunpack.c.h.bf16 %v22
  %v2038 = vunpack.c.l.bf16 %v23
  %v2039 = vunpack.c.h.bf16 %v23
  %v2040 = vadd.f32 %v1847, %v2032
  %v2041 = vadd.f32 %v1873, %v2033
  %v2042 = vadd.f32 %v1899, %v2034
  %v2043 = vadd.f32 %v1925, %v2035
  %v2044 = vadd.f32 %v1951, %v2036
  %v2045 = vadd.f32 %v1977, %v2037
  %v2046 = vadd.f32 %v2003, %v2038
  %v2047 = vadd.f32 %v2029, %v2039
  %v2048 = vpack.c.bf16 %v2041, %v2040
  %v2049 = vpack.c.bf16 %v2043, %v2042
  %v2050 = vpack.c.bf16 %v2045, %v2044
  %v2051 = vpack.c.bf16 %v2047, %v2046
  %2052 = vst [vmem:[%s5] sm:$0xff] %v2048
  %2053 = vst [vmem:[%s5 + $0x8] sm:$0xff] %v2049
  %2054 = vst [vmem:[%s5 + $0x10] sm:$0xff] %v2050
  %2055 = vst [vmem:[%s5 + $0x18] sm:$0xff] %v2051
  // Predicated region
  $region22: #{adapter_clip_rn50_forward.6} parent=0 // pred_check
    _
  $region23: #{adapter_clip_rn50_forward.6} parent=0 // pred_check_branch
    %2057 = sbr.rel (0) target = $region25
  $region24: #{adapter_clip_rn50_forward.6} parent=0 // pred_region
    _
  $region25: #{adapter_clip_rn50_forward.6} parent=0 // pred_fallthru
    _
  // Predicated region
  $region26: #{adapter_clip_rn50_forward.6} parent=0 // pred_check
    _
  $region27: #{adapter_clip_rn50_forward.6} parent=0 // pred_check_branch
    %2059 = sbr.rel (0) target = $region29
  $region28: #{adapter_clip_rn50_forward.6} parent=0 // pred_region
    _
  $region29: #{adapter_clip_rn50_forward.6} parent=0 // pred_fallthru
    _

// kernel: adapter_clip_rn50_forward.7
$region0: #{adapter_clip_rn50_forward.7}
  #allocation0 [shape = 'u32[]', space=smem, size = 0x4, offset = 0x4, fixed_abs, tag = 'smem constant byte address 0x4 - core index']
  #allocation1 [shape = 'u32[72,128]{1,0:T(1,128)}', space=vmem, size = 0x9000, scoped, tag = 'internal scratch']
  %s0 = inlined_call_operand.vmem [shape: bf16[2,1,2048], index: 0, kind: input, shape index: {}]
  %s1 = inlined_call_operand.vmem [shape: bf16[2048,512], index: 1, kind: input, shape index: {}]
  %s2 = inlined_call_operand.vmem [shape: f32[1,512], index: 2, kind: input, shape index: {}]
  %s3 = inlined_call_operand.vmem [shape: bf16[512,2048], index: 3, kind: input, shape index: {}]
  %s4 = inlined_call_operand.vmem [shape: f32[1,2048], index: 4, kind: input, shape index: {}]
  %s5 = inlined_call_operand.vmem [shape: bf16[1024,256], index: 5, kind: input, shape index: {}]
  %s6 = inlined_call_operand.vmem [shape: f32[1,256], index: 6, kind: input, shape index: {}]
  %s7 = inlined_call_operand.vmem [shape: bf16[256,1024], index: 7, kind: input, shape index: {}]
  %s8 = inlined_call_operand.vmem [shape: f32[1,1024], index: 8, kind: input, shape index: {}]
  %s9 = inlined_call_operand.vmem [shape: f32[2,1,1024], index: 9, kind: output, shape index: {}]
  %s10 = sld [smem:[#allocation0]]
  $region69: #{adapter_clip_rn50_forward.7} parent=0
    _
  %s12 = ssub.s32 1, %s10
  %s13 = scalar_select 0, %s12, %s10
  loop: start=0, step=1, limit=4
  $region2: #{adapter_clip_rn50_forward.7} parent=0 // loop_pre_header
    _
  $region3: #{adapter_clip_rn50_forward.7} parent=0 // loop_header
    %s15 = sphi 0, %s19
    %p16 = scmp.ge.s32.totalorder %s15, 4
    %s25 = sphi 0, %s27
    %s28 = sphi 0, %s25
    %s29 = sphi 0, %s28
    %s45 = sphi 0, %s29
    %s49 = sphi 0, %s49
    %s51 = sphi 0, %s49
    %s52 = sphi 0, %s51
    %s66 = sphi 0, %s52
    %s70 = sphi 0, %s70
    %s72 = sphi 0, %s70
    %s73 = sphi 0, %s72
    %s87 = sphi 0, %s73
    %s91 = sphi 0, %s91
    %s93 = sphi 0, %s91
    %s94 = sphi 0, %s93
    %s108 = sphi 0, %s94
    %s112 = sphi 0, %s112
    %s114 = sphi 0, %s112
    %s115 = sphi 0, %s114
    %s129 = sphi 0, %s115
    %s133 = sphi 0, %s133
    %s135 = sphi 0, %s133
    %s136 = sphi 0, %s135
    %s150 = sphi 0, %s136
    %s154 = sphi 0, %s154
    %s156 = sphi 0, %s154
    %s157 = sphi 0, %s156
    %s171 = sphi 0, %s157
    %s175 = sphi 0, %s175
    %s177 = sphi 0, %s175
    %s178 = sphi 0, %s177
    %s192 = sphi 0, %s178
    %s196 = sphi 0, %s196
    %s198 = sphi 0, %s196
    %s199 = sphi 0, %s198
    %s213 = sphi 0, %s199
    %s219 = sphi 0, %s221
    %s222 = sphi 0, %s219
    %s223 = sphi 0, %s222
    %s239 = sphi 0, %s223
  $region4: #{adapter_clip_rn50_forward.7} parent=0 // loop_header_branch
    %18 = sbr.rel (%p16) target = $region8
  $region5: #{adapter_clip_rn50_forward.7} parent=0 // loop_body
    %s20 = ssub.s32 %s15, 1
    %s21 = ssub.s32 %s15, 2
    %s22 = sadd.s32 %s15, 1
    %s23 = ssub.s32 %s15, %s22
    %p24 = scmp.eq.s32.totalorder %s23, 0
    %s26 = sadd.s32 %s25, 1
    %s27 = scalar_select %p24, %s25, %s26
    %p30 = pneg %p24
    %p31 = scmp.eq.s32.totalorder %s15, 1
    %p32 = por %p30, %p31
    %p33 = scmp.ne.s32.totalorder %s25, %s28
    %p34 = scmp.eq.s32.totalorder %s15, 0
    %p35 = por %p33, %p34
    %p36 = scmp.ne.s32.totalorder %s25, %s28
    %p37 = scmp.eq.s32.totalorder %s20, 1
    %p38 = por %p36, %p37
    %p39 = scmp.ne.s32.totalorder %s28, %s29
    %p40 = scmp.eq.s32.totalorder %s20, 0
    %p41 = por %p39, %p40
    %p42 = scmp.ne.s32.totalorder %s28, %s29
    %p43 = scmp.eq.s32.totalorder %s21, 1
    %p44 = por %p42, %p43
    %p46 = scmp.ne.s32.totalorder %s29, %s45
    %p47 = scmp.eq.s32.totalorder %s21, 0
    %p48 = por %p46, %p47
    %s50 = sadd.s32 %s49, 1
    %p53 = scmp.eq.s32.totalorder %s15, 1
    %p54 = scmp.ne.s32.totalorder %s49, %s51
    %p55 = scmp.eq.s32.totalorder %s15, 0
    %p56 = por %p54, %p55
    %p57 = scmp.ne.s32.totalorder %s49, %s51
    %p58 = scmp.eq.s32.totalorder %s20, 1
    %p59 = por %p57, %p58
    %p60 = scmp.ne.s32.totalorder %s51, %s52
    %p61 = scmp.eq.s32.totalorder %s20, 0
    %p62 = por %p60, %p61
    %p63 = scmp.ne.s32.totalorder %s51, %s52
    %p64 = scmp.eq.s32.totalorder %s21, 1
    %p65 = por %p63, %p64
    %p67 = scmp.ne.s32.totalorder %s52, %s66
    %p68 = scmp.eq.s32.totalorder %s21, 0
    %p69 = por %p67, %p68
    %s71 = sadd.s32 %s70, 1
    %p74 = scmp.eq.s32.totalorder %s15, 1
    %p75 = scmp.ne.s32.totalorder %s70, %s72
    %p76 = scmp.eq.s32.totalorder %s15, 0
    %p77 = por %p75, %p76
    %p78 = scmp.ne.s32.totalorder %s70, %s72
    %p79 = scmp.eq.s32.totalorder %s20, 1
    %p80 = por %p78, %p79
    %p81 = scmp.ne.s32.totalorder %s72, %s73
    %p82 = scmp.eq.s32.totalorder %s20, 0
    %p83 = por %p81, %p82
    %p84 = scmp.ne.s32.totalorder %s72, %s73
    %p85 = scmp.eq.s32.totalorder %s21, 1
    %p86 = por %p84, %p85
    %p88 = scmp.ne.s32.totalorder %s73, %s87
    %p89 = scmp.eq.s32.totalorder %s21, 0
    %p90 = por %p88, %p89
    %s92 = sadd.s32 %s91, 1
    %p95 = scmp.eq.s32.totalorder %s15, 1
    %p96 = scmp.ne.s32.totalorder %s91, %s93
    %p97 = scmp.eq.s32.totalorder %s15, 0
    %p98 = por %p96, %p97
    %p99 = scmp.ne.s32.totalorder %s91, %s93
    %p100 = scmp.eq.s32.totalorder %s20, 1
    %p101 = por %p99, %p100
    %p102 = scmp.ne.s32.totalorder %s93, %s94
    %p103 = scmp.eq.s32.totalorder %s20, 0
    %p104 = por %p102, %p103
    %p105 = scmp.ne.s32.totalorder %s93, %s94
    %p106 = scmp.eq.s32.totalorder %s21, 1
    %p107 = por %p105, %p106
    %p109 = scmp.ne.s32.totalorder %s94, %s108
    %p110 = scmp.eq.s32.totalorder %s21, 0
    %p111 = por %p109, %p110
    %s113 = sadd.s32 %s112, 1
    %p116 = scmp.eq.s32.totalorder %s15, 1
    %p117 = scmp.ne.s32.totalorder %s112, %s114
    %p118 = scmp.eq.s32.totalorder %s15, 0
    %p119 = por %p117, %p118
    %p120 = scmp.ne.s32.totalorder %s112, %s114
    %p121 = scmp.eq.s32.totalorder %s20, 1
    %p122 = por %p120, %p121
    %p123 = scmp.ne.s32.totalorder %s114, %s115
    %p124 = scmp.eq.s32.totalorder %s20, 0
    %p125 = por %p123, %p124
    %p126 = scmp.ne.s32.totalorder %s114, %s115
    %p127 = scmp.eq.s32.totalorder %s21, 1
    %p128 = por %p126, %p127
    %p130 = scmp.ne.s32.totalorder %s115, %s129
    %p131 = scmp.eq.s32.totalorder %s21, 0
    %p132 = por %p130, %p131
    %s134 = sadd.s32 %s133, 1
    %p137 = scmp.eq.s32.totalorder %s15, 1
    %p138 = scmp.ne.s32.totalorder %s133, %s135
    %p139 = scmp.eq.s32.totalorder %s15, 0
    %p140 = por %p138, %p139
    %p141 = scmp.ne.s32.totalorder %s133, %s135
    %p142 = scmp.eq.s32.totalorder %s20, 1
    %p143 = por %p141, %p142
    %p144 = scmp.ne.s32.totalorder %s135, %s136
    %p145 = scmp.eq.s32.totalorder %s20, 0
    %p146 = por %p144, %p145
    %p147 = scmp.ne.s32.totalorder %s135, %s136
    %p148 = scmp.eq.s32.totalorder %s21, 1
    %p149 = por %p147, %p148
    %p151 = scmp.ne.s32.totalorder %s136, %s150
    %p152 = scmp.eq.s32.totalorder %s21, 0
    %p153 = por %p151, %p152
    %s155 = sadd.s32 %s154, 1
    %p158 = scmp.eq.s32.totalorder %s15, 1
    %p159 = scmp.ne.s32.totalorder %s154, %s156
    %p160 = scmp.eq.s32.totalorder %s15, 0
    %p161 = por %p159, %p160
    %p162 = scmp.ne.s32.totalorder %s154, %s156
    %p163 = scmp.eq.s32.totalorder %s20, 1
    %p164 = por %p162, %p163
    %p165 = scmp.ne.s32.totalorder %s156, %s157
    %p166 = scmp.eq.s32.totalorder %s20, 0
    %p167 = por %p165, %p166
    %p168 = scmp.ne.s32.totalorder %s156, %s157
    %p169 = scmp.eq.s32.totalorder %s21, 1
    %p170 = por %p168, %p169
    %p172 = scmp.ne.s32.totalorder %s157, %s171
    %p173 = scmp.eq.s32.totalorder %s21, 0
    %p174 = por %p172, %p173
    %s176 = sadd.s32 %s175, 1
    %p179 = scmp.eq.s32.totalorder %s15, 1
    %p180 = scmp.ne.s32.totalorder %s175, %s177
    %p181 = scmp.eq.s32.totalorder %s15, 0
    %p182 = por %p180, %p181
    %p183 = scmp.ne.s32.totalorder %s175, %s177
    %p184 = scmp.eq.s32.totalorder %s20, 1
    %p185 = por %p183, %p184
    %p186 = scmp.ne.s32.totalorder %s177, %s178
    %p187 = scmp.eq.s32.totalorder %s20, 0
    %p188 = por %p186, %p187
    %p189 = scmp.ne.s32.totalorder %s177, %s178
    %p190 = scmp.eq.s32.totalorder %s21, 1
    %p191 = por %p189, %p190
    %p193 = scmp.ne.s32.totalorder %s178, %s192
    %p194 = scmp.eq.s32.totalorder %s21, 0
    %p195 = por %p193, %p194
    %s197 = sadd.s32 %s196, 1
    %p200 = scmp.eq.s32.totalorder %s15, 1
    %p201 = scmp.ne.s32.totalorder %s196, %s198
    %p202 = scmp.eq.s32.totalorder %s15, 0
    %p203 = por %p201, %p202
    %p204 = scmp.ne.s32.totalorder %s196, %s198
    %p205 = scmp.eq.s32.totalorder %s20, 1
    %p206 = por %p204, %p205
    %p207 = scmp.ne.s32.totalorder %s198, %s199
    %p208 = scmp.eq.s32.totalorder %s20, 0
    %p209 = por %p207, %p208
    %p210 = scmp.ne.s32.totalorder %s198, %s199
    %p211 = scmp.eq.s32.totalorder %s21, 1
    %p212 = por %p210, %p211
    %p214 = scmp.ne.s32.totalorder %s199, %s213
    %p215 = scmp.eq.s32.totalorder %s21, 0
    %p216 = por %p214, %p215
    %s217 = ssub.s32 %s15, %s22
    %p218 = scmp.eq.s32.totalorder %s217, 0
    %s220 = sadd.s32 %s219, 1
    %s221 = scalar_select %p218, %s219, %s220
    %p224 = pneg %p218
    %p225 = scmp.eq.s32.totalorder %s15, 1
    %p226 = por %p224, %p225
    %p227 = scmp.ne.s32.totalorder %s219, %s222
    %p228 = scmp.eq.s32.totalorder %s15, 0
    %p229 = por %p227, %p228
    %p230 = scmp.ne.s32.totalorder %s219, %s222
    %p231 = scmp.eq.s32.totalorder %s20, 1
    %p232 = por %p230, %p231
    %p233 = scmp.ne.s32.totalorder %s222, %s223
    %p234 = scmp.eq.s32.totalorder %s20, 0
    %p235 = por %p233, %p234
    %p236 = scmp.ne.s32.totalorder %s222, %s223
    %p237 = scmp.eq.s32.totalorder %s21, 1
    %p238 = por %p236, %p237
    %p240 = scmp.ne.s32.totalorder %s223, %s239
    %p241 = scmp.eq.s32.totalorder %s21, 0
    %p242 = por %p240, %p241
    %p243 = scmp.le.s32.totalorder 1, %s15
    %p244 = scmp.lt.s32.totalorder %s15, 3
    %p245 = pnand %p243, %p244
    %p246 = pneg %p245
    // Predicated region
    $region9: #{adapter_clip_rn50_forward.7} parent=5 // pred_check
      _
    $region10: #{adapter_clip_rn50_forward.7} parent=5 // pred_check_branch
      %248 = sbr.rel (%p245) target = $region12
    $region11: #{adapter_clip_rn50_forward.7} parent=5 // pred_region
      %s249 = ssub.s32 %s15, 1
      // Predicated region
      $region13: #{adapter_clip_rn50_forward.7} parent=11 // pred_check
        %p250 = pneg %p62
      $region14: #{adapter_clip_rn50_forward.7} parent=11 // pred_check_branch
        %252 = sbr.rel (%p250) target = $region16
      $region15: #{adapter_clip_rn50_forward.7} parent=11 // pred_region
        _
      $region16: #{adapter_clip_rn50_forward.7} parent=11 // pred_fallthru
        _
      // Predicated region
      $region17: #{adapter_clip_rn50_forward.7} parent=11 // pred_check
        %p253 = pneg %p83
      $region18: #{adapter_clip_rn50_forward.7} parent=11 // pred_check_branch
        %255 = sbr.rel (%p253) target = $region20
      $region19: #{adapter_clip_rn50_forward.7} parent=11 // pred_region
        _
      $region20: #{adapter_clip_rn50_forward.7} parent=11 // pred_fallthru
        _
      // Predicated region
      $region21: #{adapter_clip_rn50_forward.7} parent=11 // pred_check
        %p256 = pneg %p104
      $region22: #{adapter_clip_rn50_forward.7} parent=11 // pred_check_branch
        %258 = sbr.rel (%p256) target = $region24
      $region23: #{adapter_clip_rn50_forward.7} parent=11 // pred_region
        _
      $region24: #{adapter_clip_rn50_forward.7} parent=11 // pred_fallthru
        _
      // Predicated region
      $region25: #{adapter_clip_rn50_forward.7} parent=11 // pred_check
        %p259 = pneg %p125
      $region26: #{adapter_clip_rn50_forward.7} parent=11 // pred_check_branch
        %261 = sbr.rel (%p259) target = $region28
      $region27: #{adapter_clip_rn50_forward.7} parent=11 // pred_region
        _
      $region28: #{adapter_clip_rn50_forward.7} parent=11 // pred_fallthru
        _
      // Predicated region
      $region29: #{adapter_clip_rn50_forward.7} parent=11 // pred_check
        %p262 = pneg %p146
      $region30: #{adapter_clip_rn50_forward.7} parent=11 // pred_check_branch
        %264 = sbr.rel (%p262) target = $region32
      $region31: #{adapter_clip_rn50_forward.7} parent=11 // pred_region
        _
      $region32: #{adapter_clip_rn50_forward.7} parent=11 // pred_fallthru
        _
      // Predicated region
      $region33: #{adapter_clip_rn50_forward.7} parent=11 // pred_check
        %p265 = pneg %p167
      $region34: #{adapter_clip_rn50_forward.7} parent=11 // pred_check_branch
        %267 = sbr.rel (%p265) target = $region36
      $region35: #{adapter_clip_rn50_forward.7} parent=11 // pred_region
        _
      $region36: #{adapter_clip_rn50_forward.7} parent=11 // pred_fallthru
        _
      // Predicated region
      $region37: #{adapter_clip_rn50_forward.7} parent=11 // pred_check
        %p268 = pneg %p188
      $region38: #{adapter_clip_rn50_forward.7} parent=11 // pred_check_branch
        %270 = sbr.rel (%p268) target = $region40
      $region39: #{adapter_clip_rn50_forward.7} parent=11 // pred_region
        _
      $region40: #{adapter_clip_rn50_forward.7} parent=11 // pred_fallthru
        _
      // Predicated region
      $region41: #{adapter_clip_rn50_forward.7} parent=11 // pred_check
        %p271 = pneg %p209
      $region42: #{adapter_clip_rn50_forward.7} parent=11 // pred_check_branch
        %273 = sbr.rel (%p271) target = $region44
      $region43: #{adapter_clip_rn50_forward.7} parent=11 // pred_region
        _
      $region44: #{adapter_clip_rn50_forward.7} parent=11 // pred_fallthru
        _
    $region12: #{adapter_clip_rn50_forward.7} parent=5 // pred_fallthru
      _
    %p274 = scmp.lt.s32.totalorder %s15, 2
    // Predicated region
    $region45: #{adapter_clip_rn50_forward.7} parent=5 // pred_check
      %p275 = pneg %p274
    $region46: #{adapter_clip_rn50_forward.7} parent=5 // pred_check_branch
      %277 = sbr.rel (%p275) target = $region48
    $region47: #{adapter_clip_rn50_forward.7} parent=5 // pred_region
      // Predicated region
      $region49: #{adapter_clip_rn50_forward.7} parent=47 // pred_check
        %p278 = pneg %p35
      $region50: #{adapter_clip_rn50_forward.7} parent=47 // pred_check_branch
        %280 = sbr.rel (%p278) target = $region52
      $region51: #{adapter_clip_rn50_forward.7} parent=47 // pred_region
        %p281 = scmp.lt.s32.totalorder %s15, 1
        %s282 = scalar_select %p281, %s15, 1
        %s283 = smul.addr %s282, 16
        %s284 = scalar_lea.vmem %s0, %s283
      $region52: #{adapter_clip_rn50_forward.7} parent=47 // pred_fallthru
        _
    $region48: #{adapter_clip_rn50_forward.7} parent=5 // pred_fallthru
      _
    %p285 = scmp.le.s32.totalorder 1, %s15
    %p286 = scmp.lt.s32.totalorder %s15, 3
    %p287 = pnand %p285, %p286
    %p288 = pneg %p287
    // Predicated region
    $region53: #{adapter_clip_rn50_forward.7} parent=5 // pred_check
      _
    $region54: #{adapter_clip_rn50_forward.7} parent=5 // pred_check_branch
      %290 = sbr.rel (%p287) target = $region56
    $region55: #{adapter_clip_rn50_forward.7} parent=5 // pred_region
      %s291 = ssub.s32 %s15, 1
      %p292 = scmp.lt.s32.totalorder %s20, 1
      %s293 = scalar_select %p292, %s20, 1
      %s294 = smul.addr %s293, 16
      %s295 = scalar_lea.vmem %s0, %s294
      %p296 = pneg %p41
      %p297 = pneg %p38
      %p298 = pneg %p62
      %p299 = pneg %p59
      %p300 = pneg %p83
      %p301 = pneg %p80
      %p302 = pneg %p104
      %p303 = pneg %p101
      %p304 = pneg %p125
      %p305 = pneg %p122
      %p306 = pneg %p146
      %p307 = pneg %p143
      %p308 = pneg %p167
      %p309 = pneg %p164
      %p310 = pneg %p188
      %p311 = pneg %p185
      %p312 = pneg %p209
      %p313 = pneg %p206
      %p314 = pneg %p235
      %p315 = pneg %p232
      %p316 = scmp.lt.s32.totalorder %s20, 1
      %s317 = scalar_select %p316, %s20, 1
      %s318 = smul.addr %s317, 8
      %s319 = scalar_lea.vmem %s9, %s318
      %p320 = scmp.lt.s32.totalorder %s20, 1
      %s321 = scalar_select %p320, %s20, 1
      %s322 = smul.addr %s321, 16
      %s323 = scalar_lea.vmem %s0, %s322
      %p324 = scmp.lt.s32.totalorder %s20, 1
      %s325 = scalar_select %p324, %s20, 1
      %s326 = smul.addr %s325, 8
      %s327 = scalar_lea.vmem %s9, %s326
      %v328 = vld [vmem:[%s323] sm:$0xff]
      %v329 = vld [vmem:[%s323 + $0x8] sm:$0xff]
      %v330 = vld [vmem:[%s1] sm:$0xff]
      %v331 = vld [vmem:[%s1 + $0x8] sm:$0xff]
      %v332 = vld [vmem:[%s1 + $0x10] sm:$0xff]
      %v333 = vld [vmem:[%s1 + $0x18] sm:$0xff]
      %v334 = vld [vmem:[%s1 + $0x20] sm:$0xff]
      %v335 = vld [vmem:[%s1 + $0x28] sm:$0xff]
      %v336 = vld [vmem:[%s1 + $0x30] sm:$0xff]
      %v337 = vld [vmem:[%s1 + $0x38] sm:$0xff]
      %v338 = vld [vmem:[%s1 + $0x40] sm:$0xff]
      %v339 = vld [vmem:[%s1 + $0x48] sm:$0xff]
      %v340 = vld [vmem:[%s1 + $0x50] sm:$0xff]
      %v341 = vld [vmem:[%s1 + $0x58] sm:$0xff]
      %v342 = vld [vmem:[%s1 + $0x60] sm:$0xff]
      %v343 = vld [vmem:[%s1 + $0x68] sm:$0xff]
      %v344 = vld [vmem:[%s1 + $0x70] sm:$0xff]
      %v345 = vld [vmem:[%s1 + $0x78] sm:$0xff]
      %v346 = vld [vmem:[%s1 + $0x80] sm:$0xff]
      %v347 = vld [vmem:[%s1 + $0x88] sm:$0xff]
      %v348 = vld [vmem:[%s1 + $0x90] sm:$0xff]
      %v349 = vld [vmem:[%s1 + $0x98] sm:$0xff]
      %v350 = vld [vmem:[%s1 + $0xa0] sm:$0xff]
      %v351 = vld [vmem:[%s1 + $0xa8] sm:$0xff]
      %v352 = vld [vmem:[%s1 + $0xb0] sm:$0xff]
      %v353 = vld [vmem:[%s1 + $0xb8] sm:$0xff]
      %v354 = vld [vmem:[%s1 + $0xc0] sm:$0xff]
      %v355 = vld [vmem:[%s1 + $0xc8] sm:$0xff]
      %v356 = vld [vmem:[%s1 + $0xd0] sm:$0xff]
      %v357 = vld [vmem:[%s1 + $0xd8] sm:$0xff]
      %v358 = vld [vmem:[%s1 + $0xe0] sm:$0xff]
      %v359 = vld [vmem:[%s1 + $0xe8] sm:$0xff]
      %v360 = vld [vmem:[%s1 + $0xf0] sm:$0xff]
      %v361 = vld [vmem:[%s1 + $0xf8] sm:$0xff]
      %v362 = vld [vmem:[%s1 + $0x100] sm:$0xff]
      %v363 = vld [vmem:[%s1 + $0x108] sm:$0xff]
      %v364 = vld [vmem:[%s1 + $0x110] sm:$0xff]
      %v365 = vld [vmem:[%s1 + $0x118] sm:$0xff]
      %v366 = vld [vmem:[%s1 + $0x120] sm:$0xff]
      %v367 = vld [vmem:[%s1 + $0x128] sm:$0xff]
      %v368 = vld [vmem:[%s1 + $0x130] sm:$0xff]
      %v369 = vld [vmem:[%s1 + $0x138] sm:$0xff]
      %v370 = vld [vmem:[%s1 + $0x140] sm:$0xff]
      %v371 = vld [vmem:[%s1 + $0x148] sm:$0xff]
      %v372 = vld [vmem:[%s1 + $0x150] sm:$0xff]
      %v373 = vld [vmem:[%s1 + $0x158] sm:$0xff]
      %v374 = vld [vmem:[%s1 + $0x160] sm:$0xff]
      %v375 = vld [vmem:[%s1 + $0x168] sm:$0xff]
      %v376 = vld [vmem:[%s1 + $0x170] sm:$0xff]
      %v377 = vld [vmem:[%s1 + $0x178] sm:$0xff]
      %v378 = vld [vmem:[%s1 + $0x180] sm:$0xff]
      %v379 = vld [vmem:[%s1 + $0x188] sm:$0xff]
      %v380 = vld [vmem:[%s1 + $0x190] sm:$0xff]
      %v381 = vld [vmem:[%s1 + $0x198] sm:$0xff]
      %v382 = vld [vmem:[%s1 + $0x1a0] sm:$0xff]
      %v383 = vld [vmem:[%s1 + $0x1a8] sm:$0xff]
      %v384 = vld [vmem:[%s1 + $0x1b0] sm:$0xff]
      %v385 = vld [vmem:[%s1 + $0x1b8] sm:$0xff]
      %v386 = vld [vmem:[%s1 + $0x1c0] sm:$0xff]
      %v387 = vld [vmem:[%s1 + $0x1c8] sm:$0xff]
      %v388 = vld [vmem:[%s1 + $0x1d0] sm:$0xff]
      %v389 = vld [vmem:[%s1 + $0x1d8] sm:$0xff]
      %v390 = vld [vmem:[%s1 + $0x1e0] sm:$0xff]
      %v391 = vld [vmem:[%s1 + $0x1e8] sm:$0xff]
      %v392 = vld [vmem:[%s1 + $0x1f0] sm:$0xff]
      %v393 = vld [vmem:[%s1 + $0x1f8] sm:$0xff]
      %v394 = vld [vmem:[%s1 + $0x200] sm:$0xff]
      %v395 = vld [vmem:[%s1 + $0x208] sm:$0xff]
      %v396 = vld [vmem:[%s1 + $0x210] sm:$0xff]
      %v397 = vld [vmem:[%s1 + $0x218] sm:$0xff]
      %v398 = vld [vmem:[%s1 + $0x220] sm:$0xff]
      %v399 = vld [vmem:[%s1 + $0x228] sm:$0xff]
      %v400 = vld [vmem:[%s1 + $0x230] sm:$0xff]
      %v401 = vld [vmem:[%s1 + $0x238] sm:$0xff]
      %v402 = vld [vmem:[%s1 + $0x240] sm:$0xff]
      %v403 = vld [vmem:[%s1 + $0x248] sm:$0xff]
      %v404 = vld [vmem:[%s1 + $0x250] sm:$0xff]
      %v405 = vld [vmem:[%s1 + $0x258] sm:$0xff]
      %v406 = vld [vmem:[%s1 + $0x260] sm:$0xff]
      %v407 = vld [vmem:[%s1 + $0x268] sm:$0xff]
      %v408 = vld [vmem:[%s1 + $0x270] sm:$0xff]
      %v409 = vld [vmem:[%s1 + $0x278] sm:$0xff]
      %v410 = vld [vmem:[%s1 + $0x280] sm:$0xff]
      %v411 = vld [vmem:[%s1 + $0x288] sm:$0xff]
      %v412 = vld [vmem:[%s1 + $0x290] sm:$0xff]
      %v413 = vld [vmem:[%s1 + $0x298] sm:$0xff]
      %v414 = vld [vmem:[%s1 + $0x2a0] sm:$0xff]
      %v415 = vld [vmem:[%s1 + $0x2a8] sm:$0xff]
      %v416 = vld [vmem:[%s1 + $0x2b0] sm:$0xff]
      %v417 = vld [vmem:[%s1 + $0x2b8] sm:$0xff]
      %v418 = vld [vmem:[%s1 + $0x2c0] sm:$0xff]
      %v419 = vld [vmem:[%s1 + $0x2c8] sm:$0xff]
      %v420 = vld [vmem:[%s1 + $0x2d0] sm:$0xff]
      %v421 = vld [vmem:[%s1 + $0x2d8] sm:$0xff]
      %v422 = vld [vmem:[%s1 + $0x2e0] sm:$0xff]
      %v423 = vld [vmem:[%s1 + $0x2e8] sm:$0xff]
      %v424 = vld [vmem:[%s1 + $0x2f0] sm:$0xff]
      %v425 = vld [vmem:[%s1 + $0x2f8] sm:$0xff]
      %v426 = vld [vmem:[%s1 + $0x300] sm:$0xff]
      %v427 = vld [vmem:[%s1 + $0x308] sm:$0xff]
      %v428 = vld [vmem:[%s1 + $0x310] sm:$0xff]
      %v429 = vld [vmem:[%s1 + $0x318] sm:$0xff]
      %v430 = vld [vmem:[%s1 + $0x320] sm:$0xff]
      %v431 = vld [vmem:[%s1 + $0x328] sm:$0xff]
      %v432 = vld [vmem:[%s1 + $0x330] sm:$0xff]
      %v433 = vld [vmem:[%s1 + $0x338] sm:$0xff]
      %v434 = vld [vmem:[%s1 + $0x340] sm:$0xff]
      %v435 = vld [vmem:[%s1 + $0x348] sm:$0xff]
      %v436 = vld [vmem:[%s1 + $0x350] sm:$0xff]
      %v437 = vld [vmem:[%s1 + $0x358] sm:$0xff]
      %v438 = vld [vmem:[%s1 + $0x360] sm:$0xff]
      %v439 = vld [vmem:[%s1 + $0x368] sm:$0xff]
      %v440 = vld [vmem:[%s1 + $0x370] sm:$0xff]
      %v441 = vld [vmem:[%s1 + $0x378] sm:$0xff]
      %v442 = vld [vmem:[%s1 + $0x380] sm:$0xff]
      %v443 = vld [vmem:[%s1 + $0x388] sm:$0xff]
      %v444 = vld [vmem:[%s1 + $0x390] sm:$0xff]
      %v445 = vld [vmem:[%s1 + $0x398] sm:$0xff]
      %v446 = vld [vmem:[%s1 + $0x3a0] sm:$0xff]
      %v447 = vld [vmem:[%s1 + $0x3a8] sm:$0xff]
      %v448 = vld [vmem:[%s1 + $0x3b0] sm:$0xff]
      %v449 = vld [vmem:[%s1 + $0x3b8] sm:$0xff]
      %v450 = vld [vmem:[%s1 + $0x3c0] sm:$0xff]
      %v451 = vld [vmem:[%s1 + $0x3c8] sm:$0xff]
      %v452 = vld [vmem:[%s1 + $0x3d0] sm:$0xff]
      %v453 = vld [vmem:[%s1 + $0x3d8] sm:$0xff]
      %v454 = vld [vmem:[%s1 + $0x3e0] sm:$0xff]
      %v455 = vld [vmem:[%s1 + $0x3e8] sm:$0xff]
      %v456 = vld [vmem:[%s1 + $0x3f0] sm:$0xff]
      %v457 = vld [vmem:[%s1 + $0x3f8] sm:$0xff]
      %v458 = vld [vmem:[%s1 + $0x400] sm:$0xff]
      %v459 = vld [vmem:[%s1 + $0x408] sm:$0xff]
      %v460 = vld [vmem:[%s1 + $0x410] sm:$0xff]
      %v461 = vld [vmem:[%s1 + $0x418] sm:$0xff]
      %v462 = vld [vmem:[%s1 + $0x420] sm:$0xff]
      %v463 = vld [vmem:[%s1 + $0x428] sm:$0xff]
      %v464 = vld [vmem:[%s1 + $0x430] sm:$0xff]
      %v465 = vld [vmem:[%s1 + $0x438] sm:$0xff]
      %v466 = vld [vmem:[%s1 + $0x440] sm:$0xff]
      %v467 = vld [vmem:[%s1 + $0x448] sm:$0xff]
      %v468 = vld [vmem:[%s1 + $0x450] sm:$0xff]
      %v469 = vld [vmem:[%s1 + $0x458] sm:$0xff]
      %v470 = vld [vmem:[%s1 + $0x460] sm:$0xff]
      %v471 = vld [vmem:[%s1 + $0x468] sm:$0xff]
      %v472 = vld [vmem:[%s1 + $0x470] sm:$0xff]
      %v473 = vld [vmem:[%s1 + $0x478] sm:$0xff]
      %v474 = vld [vmem:[%s1 + $0x480] sm:$0xff]
      %v475 = vld [vmem:[%s1 + $0x488] sm:$0xff]
      %v476 = vld [vmem:[%s1 + $0x490] sm:$0xff]
      %v477 = vld [vmem:[%s1 + $0x498] sm:$0xff]
      %v478 = vld [vmem:[%s1 + $0x4a0] sm:$0xff]
      %v479 = vld [vmem:[%s1 + $0x4a8] sm:$0xff]
      %v480 = vld [vmem:[%s1 + $0x4b0] sm:$0xff]
      %v481 = vld [vmem:[%s1 + $0x4b8] sm:$0xff]
      %v482 = vld [vmem:[%s1 + $0x4c0] sm:$0xff]
      %v483 = vld [vmem:[%s1 + $0x4c8] sm:$0xff]
      %v484 = vld [vmem:[%s1 + $0x4d0] sm:$0xff]
      %v485 = vld [vmem:[%s1 + $0x4d8] sm:$0xff]
      %v486 = vld [vmem:[%s1 + $0x4e0] sm:$0xff]
      %v487 = vld [vmem:[%s1 + $0x4e8] sm:$0xff]
      %v488 = vld [vmem:[%s1 + $0x4f0] sm:$0xff]
      %v489 = vld [vmem:[%s1 + $0x4f8] sm:$0xff]
      %v490 = vld [vmem:[%s1 + $0x500] sm:$0xff]
      %v491 = vld [vmem:[%s1 + $0x508] sm:$0xff]
      %v492 = vld [vmem:[%s1 + $0x510] sm:$0xff]
      %v493 = vld [vmem:[%s1 + $0x518] sm:$0xff]
      %v494 = vld [vmem:[%s1 + $0x520] sm:$0xff]
      %v495 = vld [vmem:[%s1 + $0x528] sm:$0xff]
      %v496 = vld [vmem:[%s1 + $0x530] sm:$0xff]
      %v497 = vld [vmem:[%s1 + $0x538] sm:$0xff]
      %v498 = vld [vmem:[%s1 + $0x540] sm:$0xff]
      %v499 = vld [vmem:[%s1 + $0x548] sm:$0xff]
      %v500 = vld [vmem:[%s1 + $0x550] sm:$0xff]
      %v501 = vld [vmem:[%s1 + $0x558] sm:$0xff]
      %v502 = vld [vmem:[%s1 + $0x560] sm:$0xff]
      %v503 = vld [vmem:[%s1 + $0x568] sm:$0xff]
      %v504 = vld [vmem:[%s1 + $0x570] sm:$0xff]
      %v505 = vld [vmem:[%s1 + $0x578] sm:$0xff]
      %v506 = vld [vmem:[%s1 + $0x580] sm:$0xff]
      %v507 = vld [vmem:[%s1 + $0x588] sm:$0xff]
      %v508 = vld [vmem:[%s1 + $0x590] sm:$0xff]
      %v509 = vld [vmem:[%s1 + $0x598] sm:$0xff]
      %v510 = vld [vmem:[%s1 + $0x5a0] sm:$0xff]
      %v511 = vld [vmem:[%s1 + $0x5a8] sm:$0xff]
      %v512 = vld [vmem:[%s1 + $0x5b0] sm:$0xff]
      %v513 = vld [vmem:[%s1 + $0x5b8] sm:$0xff]
      %v514 = vld [vmem:[%s1 + $0x5c0] sm:$0xff]
      %v515 = vld [vmem:[%s1 + $0x5c8] sm:$0xff]
      %v516 = vld [vmem:[%s1 + $0x5d0] sm:$0xff]
      %v517 = vld [vmem:[%s1 + $0x5d8] sm:$0xff]
      %v518 = vld [vmem:[%s1 + $0x5e0] sm:$0xff]
      %v519 = vld [vmem:[%s1 + $0x5e8] sm:$0xff]
      %v520 = vld [vmem:[%s1 + $0x5f0] sm:$0xff]
      %v521 = vld [vmem:[%s1 + $0x5f8] sm:$0xff]
      %v522 = vld [vmem:[%s1 + $0x600] sm:$0xff]
      %v523 = vld [vmem:[%s1 + $0x608] sm:$0xff]
      %v524 = vld [vmem:[%s1 + $0x610] sm:$0xff]
      %v525 = vld [vmem:[%s1 + $0x618] sm:$0xff]
      %v526 = vld [vmem:[%s1 + $0x620] sm:$0xff]
      %v527 = vld [vmem:[%s1 + $0x628] sm:$0xff]
      %v528 = vld [vmem:[%s1 + $0x630] sm:$0xff]
      %v529 = vld [vmem:[%s1 + $0x638] sm:$0xff]
      %v530 = vld [vmem:[%s1 + $0x640] sm:$0xff]
      %v531 = vld [vmem:[%s1 + $0x648] sm:$0xff]
      %v532 = vld [vmem:[%s1 + $0x650] sm:$0xff]
      %v533 = vld [vmem:[%s1 + $0x658] sm:$0xff]
      %v534 = vld [vmem:[%s1 + $0x660] sm:$0xff]
      %v535 = vld [vmem:[%s1 + $0x668] sm:$0xff]
      %v536 = vld [vmem:[%s1 + $0x670] sm:$0xff]
      %v537 = vld [vmem:[%s1 + $0x678] sm:$0xff]
      %v538 = vld [vmem:[%s1 + $0x680] sm:$0xff]
      %v539 = vld [vmem:[%s1 + $0x688] sm:$0xff]
      %v540 = vld [vmem:[%s1 + $0x690] sm:$0xff]
      %v541 = vld [vmem:[%s1 + $0x698] sm:$0xff]
      %v542 = vld [vmem:[%s1 + $0x6a0] sm:$0xff]
      %v543 = vld [vmem:[%s1 + $0x6a8] sm:$0xff]
      %v544 = vld [vmem:[%s1 + $0x6b0] sm:$0xff]
      %v545 = vld [vmem:[%s1 + $0x6b8] sm:$0xff]
      %v546 = vld [vmem:[%s1 + $0x6c0] sm:$0xff]
      %v547 = vld [vmem:[%s1 + $0x6c8] sm:$0xff]
      %v548 = vld [vmem:[%s1 + $0x6d0] sm:$0xff]
      %v549 = vld [vmem:[%s1 + $0x6d8] sm:$0xff]
      %v550 = vld [vmem:[%s1 + $0x6e0] sm:$0xff]
      %v551 = vld [vmem:[%s1 + $0x6e8] sm:$0xff]
      %v552 = vld [vmem:[%s1 + $0x6f0] sm:$0xff]
      %v553 = vld [vmem:[%s1 + $0x6f8] sm:$0xff]
      %v554 = vld [vmem:[%s1 + $0x700] sm:$0xff]
      %v555 = vld [vmem:[%s1 + $0x708] sm:$0xff]
      %v556 = vld [vmem:[%s1 + $0x710] sm:$0xff]
      %v557 = vld [vmem:[%s1 + $0x718] sm:$0xff]
      %v558 = vld [vmem:[%s1 + $0x720] sm:$0xff]
      %v559 = vld [vmem:[%s1 + $0x728] sm:$0xff]
      %v560 = vld [vmem:[%s1 + $0x730] sm:$0xff]
      %v561 = vld [vmem:[%s1 + $0x738] sm:$0xff]
      %v562 = vld [vmem:[%s1 + $0x740] sm:$0xff]
      %v563 = vld [vmem:[%s1 + $0x748] sm:$0xff]
      %v564 = vld [vmem:[%s1 + $0x750] sm:$0xff]
      %v565 = vld [vmem:[%s1 + $0x758] sm:$0xff]
      %v566 = vld [vmem:[%s1 + $0x760] sm:$0xff]
      %v567 = vld [vmem:[%s1 + $0x768] sm:$0xff]
      %v568 = vld [vmem:[%s1 + $0x770] sm:$0xff]
      %v569 = vld [vmem:[%s1 + $0x778] sm:$0xff]
      %v570 = vld [vmem:[%s1 + $0x780] sm:$0xff]
      %v571 = vld [vmem:[%s1 + $0x788] sm:$0xff]
      %v572 = vld [vmem:[%s1 + $0x790] sm:$0xff]
      %v573 = vld [vmem:[%s1 + $0x798] sm:$0xff]
      %v574 = vld [vmem:[%s1 + $0x7a0] sm:$0xff]
      %v575 = vld [vmem:[%s1 + $0x7a8] sm:$0xff]
      %v576 = vld [vmem:[%s1 + $0x7b0] sm:$0xff]
      %v577 = vld [vmem:[%s1 + $0x7b8] sm:$0xff]
      %v578 = vld [vmem:[%s1 + $0x7c0] sm:$0xff]
      %v579 = vld [vmem:[%s1 + $0x7c8] sm:$0xff]
      %v580 = vld [vmem:[%s1 + $0x7d0] sm:$0xff]
      %v581 = vld [vmem:[%s1 + $0x7d8] sm:$0xff]
      %v582 = vld [vmem:[%s1 + $0x7e0] sm:$0xff]
      %v583 = vld [vmem:[%s1 + $0x7e8] sm:$0xff]
      %v584 = vld [vmem:[%s1 + $0x7f0] sm:$0xff]
      %v585 = vld [vmem:[%s1 + $0x7f8] sm:$0xff]
      %v586 = vld [vmem:[%s1 + $0x800] sm:$0xff]
      %v587 = vld [vmem:[%s1 + $0x808] sm:$0xff]
      %v588 = vld [vmem:[%s1 + $0x810] sm:$0xff]
      %v589 = vld [vmem:[%s1 + $0x818] sm:$0xff]
      %v590 = vld [vmem:[%s1 + $0x820] sm:$0xff]
      %v591 = vld [vmem:[%s1 + $0x828] sm:$0xff]
      %v592 = vld [vmem:[%s1 + $0x830] sm:$0xff]
      %v593 = vld [vmem:[%s1 + $0x838] sm:$0xff]
      %v594 = vld [vmem:[%s1 + $0x840] sm:$0xff]
      %v595 = vld [vmem:[%s1 + $0x848] sm:$0xff]
      %v596 = vld [vmem:[%s1 + $0x850] sm:$0xff]
      %v597 = vld [vmem:[%s1 + $0x858] sm:$0xff]
      %v598 = vld [vmem:[%s1 + $0x860] sm:$0xff]
      %v599 = vld [vmem:[%s1 + $0x868] sm:$0xff]
      %v600 = vld [vmem:[%s1 + $0x870] sm:$0xff]
      %v601 = vld [vmem:[%s1 + $0x878] sm:$0xff]
      %v602 = vld [vmem:[%s1 + $0x880] sm:$0xff]
      %v603 = vld [vmem:[%s1 + $0x888] sm:$0xff]
      %v604 = vld [vmem:[%s1 + $0x890] sm:$0xff]
      %v605 = vld [vmem:[%s1 + $0x898] sm:$0xff]
      %v606 = vld [vmem:[%s1 + $0x8a0] sm:$0xff]
      %v607 = vld [vmem:[%s1 + $0x8a8] sm:$0xff]
      %v608 = vld [vmem:[%s1 + $0x8b0] sm:$0xff]
      %v609 = vld [vmem:[%s1 + $0x8b8] sm:$0xff]
      %v610 = vld [vmem:[%s1 + $0x8c0] sm:$0xff]
      %v611 = vld [vmem:[%s1 + $0x8c8] sm:$0xff]
      %v612 = vld [vmem:[%s1 + $0x8d0] sm:$0xff]
      %v613 = vld [vmem:[%s1 + $0x8d8] sm:$0xff]
      %v614 = vld [vmem:[%s1 + $0x8e0] sm:$0xff]
      %v615 = vld [vmem:[%s1 + $0x8e8] sm:$0xff]
      %v616 = vld [vmem:[%s1 + $0x8f0] sm:$0xff]
      %v617 = vld [vmem:[%s1 + $0x8f8] sm:$0xff]
      %v618 = vld [vmem:[%s1 + $0x900] sm:$0xff]
      %v619 = vld [vmem:[%s1 + $0x908] sm:$0xff]
      %v620 = vld [vmem:[%s1 + $0x910] sm:$0xff]
      %v621 = vld [vmem:[%s1 + $0x918] sm:$0xff]
      %v622 = vld [vmem:[%s1 + $0x920] sm:$0xff]
      %v623 = vld [vmem:[%s1 + $0x928] sm:$0xff]
      %v624 = vld [vmem:[%s1 + $0x930] sm:$0xff]
      %v625 = vld [vmem:[%s1 + $0x938] sm:$0xff]
      %v626 = vld [vmem:[%s1 + $0x940] sm:$0xff]
      %v627 = vld [vmem:[%s1 + $0x948] sm:$0xff]
      %v628 = vld [vmem:[%s1 + $0x950] sm:$0xff]
      %v629 = vld [vmem:[%s1 + $0x958] sm:$0xff]
      %v630 = vld [vmem:[%s1 + $0x960] sm:$0xff]
      %v631 = vld [vmem:[%s1 + $0x968] sm:$0xff]
      %v632 = vld [vmem:[%s1 + $0x970] sm:$0xff]
      %v633 = vld [vmem:[%s1 + $0x978] sm:$0xff]
      %v634 = vld [vmem:[%s1 + $0x980] sm:$0xff]
      %v635 = vld [vmem:[%s1 + $0x988] sm:$0xff]
      %v636 = vld [vmem:[%s1 + $0x990] sm:$0xff]
      %v637 = vld [vmem:[%s1 + $0x998] sm:$0xff]
      %v638 = vld [vmem:[%s1 + $0x9a0] sm:$0xff]
      %v639 = vld [vmem:[%s1 + $0x9a8] sm:$0xff]
      %v640 = vld [vmem:[%s1 + $0x9b0] sm:$0xff]
      %v641 = vld [vmem:[%s1 + $0x9b8] sm:$0xff]
      %v642 = vld [vmem:[%s1 + $0x9c0] sm:$0xff]
      %v643 = vld [vmem:[%s1 + $0x9c8] sm:$0xff]
      %v644 = vld [vmem:[%s1 + $0x9d0] sm:$0xff]
      %v645 = vld [vmem:[%s1 + $0x9d8] sm:$0xff]
      %v646 = vld [vmem:[%s1 + $0x9e0] sm:$0xff]
      %v647 = vld [vmem:[%s1 + $0x9e8] sm:$0xff]
      %v648 = vld [vmem:[%s1 + $0x9f0] sm:$0xff]
      %v649 = vld [vmem:[%s1 + $0x9f8] sm:$0xff]
      %v650 = vld [vmem:[%s1 + $0xa00] sm:$0xff]
      %v651 = vld [vmem:[%s1 + $0xa08] sm:$0xff]
      %v652 = vld [vmem:[%s1 + $0xa10] sm:$0xff]
      %v653 = vld [vmem:[%s1 + $0xa18] sm:$0xff]
      %v654 = vld [vmem:[%s1 + $0xa20] sm:$0xff]
      %v655 = vld [vmem:[%s1 + $0xa28] sm:$0xff]
      %v656 = vld [vmem:[%s1 + $0xa30] sm:$0xff]
      %v657 = vld [vmem:[%s1 + $0xa38] sm:$0xff]
      %v658 = vld [vmem:[%s1 + $0xa40] sm:$0xff]
      %v659 = vld [vmem:[%s1 + $0xa48] sm:$0xff]
      %v660 = vld [vmem:[%s1 + $0xa50] sm:$0xff]
      %v661 = vld [vmem:[%s1 + $0xa58] sm:$0xff]
      %v662 = vld [vmem:[%s1 + $0xa60] sm:$0xff]
      %v663 = vld [vmem:[%s1 + $0xa68] sm:$0xff]
      %v664 = vld [vmem:[%s1 + $0xa70] sm:$0xff]
      %v665 = vld [vmem:[%s1 + $0xa78] sm:$0xff]
      %v666 = vld [vmem:[%s1 + $0xa80] sm:$0xff]
      %v667 = vld [vmem:[%s1 + $0xa88] sm:$0xff]
      %v668 = vld [vmem:[%s1 + $0xa90] sm:$0xff]
      %v669 = vld [vmem:[%s1 + $0xa98] sm:$0xff]
      %v670 = vld [vmem:[%s1 + $0xaa0] sm:$0xff]
      %v671 = vld [vmem:[%s1 + $0xaa8] sm:$0xff]
      %v672 = vld [vmem:[%s1 + $0xab0] sm:$0xff]
      %v673 = vld [vmem:[%s1 + $0xab8] sm:$0xff]
      %v674 = vld [vmem:[%s1 + $0xac0] sm:$0xff]
      %v675 = vld [vmem:[%s1 + $0xac8] sm:$0xff]
      %v676 = vld [vmem:[%s1 + $0xad0] sm:$0xff]
      %v677 = vld [vmem:[%s1 + $0xad8] sm:$0xff]
      %v678 = vld [vmem:[%s1 + $0xae0] sm:$0xff]
      %v679 = vld [vmem:[%s1 + $0xae8] sm:$0xff]
      %v680 = vld [vmem:[%s1 + $0xaf0] sm:$0xff]
      %v681 = vld [vmem:[%s1 + $0xaf8] sm:$0xff]
      %v682 = vld [vmem:[%s1 + $0xb00] sm:$0xff]
      %v683 = vld [vmem:[%s1 + $0xb08] sm:$0xff]
      %v684 = vld [vmem:[%s1 + $0xb10] sm:$0xff]
      %v685 = vld [vmem:[%s1 + $0xb18] sm:$0xff]
      %v686 = vld [vmem:[%s1 + $0xb20] sm:$0xff]
      %v687 = vld [vmem:[%s1 + $0xb28] sm:$0xff]
      %v688 = vld [vmem:[%s1 + $0xb30] sm:$0xff]
      %v689 = vld [vmem:[%s1 + $0xb38] sm:$0xff]
      %v690 = vld [vmem:[%s1 + $0xb40] sm:$0xff]
      %v691 = vld [vmem:[%s1 + $0xb48] sm:$0xff]
      %v692 = vld [vmem:[%s1 + $0xb50] sm:$0xff]
      %v693 = vld [vmem:[%s1 + $0xb58] sm:$0xff]
      %v694 = vld [vmem:[%s1 + $0xb60] sm:$0xff]
      %v695 = vld [vmem:[%s1 + $0xb68] sm:$0xff]
      %v696 = vld [vmem:[%s1 + $0xb70] sm:$0xff]
      %v697 = vld [vmem:[%s1 + $0xb78] sm:$0xff]
      %v698 = vld [vmem:[%s1 + $0xb80] sm:$0xff]
      %v699 = vld [vmem:[%s1 + $0xb88] sm:$0xff]
      %v700 = vld [vmem:[%s1 + $0xb90] sm:$0xff]
      %v701 = vld [vmem:[%s1 + $0xb98] sm:$0xff]
      %v702 = vld [vmem:[%s1 + $0xba0] sm:$0xff]
      %v703 = vld [vmem:[%s1 + $0xba8] sm:$0xff]
      %v704 = vld [vmem:[%s1 + $0xbb0] sm:$0xff]
      %v705 = vld [vmem:[%s1 + $0xbb8] sm:$0xff]
      %v706 = vld [vmem:[%s1 + $0xbc0] sm:$0xff]
      %v707 = vld [vmem:[%s1 + $0xbc8] sm:$0xff]
      %v708 = vld [vmem:[%s1 + $0xbd0] sm:$0xff]
      %v709 = vld [vmem:[%s1 + $0xbd8] sm:$0xff]
      %v710 = vld [vmem:[%s1 + $0xbe0] sm:$0xff]
      %v711 = vld [vmem:[%s1 + $0xbe8] sm:$0xff]
      %v712 = vld [vmem:[%s1 + $0xbf0] sm:$0xff]
      %v713 = vld [vmem:[%s1 + $0xbf8] sm:$0xff]
      %v714 = vld [vmem:[%s1 + $0xc00] sm:$0xff]
      %v715 = vld [vmem:[%s1 + $0xc08] sm:$0xff]
      %v716 = vld [vmem:[%s1 + $0xc10] sm:$0xff]
      %v717 = vld [vmem:[%s1 + $0xc18] sm:$0xff]
      %v718 = vld [vmem:[%s1 + $0xc20] sm:$0xff]
      %v719 = vld [vmem:[%s1 + $0xc28] sm:$0xff]
      %v720 = vld [vmem:[%s1 + $0xc30] sm:$0xff]
      %v721 = vld [vmem:[%s1 + $0xc38] sm:$0xff]
      %v722 = vld [vmem:[%s1 + $0xc40] sm:$0xff]
      %v723 = vld [vmem:[%s1 + $0xc48] sm:$0xff]
      %v724 = vld [vmem:[%s1 + $0xc50] sm:$0xff]
      %v725 = vld [vmem:[%s1 + $0xc58] sm:$0xff]
      %v726 = vld [vmem:[%s1 + $0xc60] sm:$0xff]
      %v727 = vld [vmem:[%s1 + $0xc68] sm:$0xff]
      %v728 = vld [vmem:[%s1 + $0xc70] sm:$0xff]
      %v729 = vld [vmem:[%s1 + $0xc78] sm:$0xff]
      %v730 = vld [vmem:[%s1 + $0xc80] sm:$0xff]
      %v731 = vld [vmem:[%s1 + $0xc88] sm:$0xff]
      %v732 = vld [vmem:[%s1 + $0xc90] sm:$0xff]
      %v733 = vld [vmem:[%s1 + $0xc98] sm:$0xff]
      %v734 = vld [vmem:[%s1 + $0xca0] sm:$0xff]
      %v735 = vld [vmem:[%s1 + $0xca8] sm:$0xff]
      %v736 = vld [vmem:[%s1 + $0xcb0] sm:$0xff]
      %v737 = vld [vmem:[%s1 + $0xcb8] sm:$0xff]
      %v738 = vld [vmem:[%s1 + $0xcc0] sm:$0xff]
      %v739 = vld [vmem:[%s1 + $0xcc8] sm:$0xff]
      %v740 = vld [vmem:[%s1 + $0xcd0] sm:$0xff]
      %v741 = vld [vmem:[%s1 + $0xcd8] sm:$0xff]
      %v742 = vld [vmem:[%s1 + $0xce0] sm:$0xff]
      %v743 = vld [vmem:[%s1 + $0xce8] sm:$0xff]
      %v744 = vld [vmem:[%s1 + $0xcf0] sm:$0xff]
      %v745 = vld [vmem:[%s1 + $0xcf8] sm:$0xff]
      %v746 = vld [vmem:[%s1 + $0xd00] sm:$0xff]
      %v747 = vld [vmem:[%s1 + $0xd08] sm:$0xff]
      %v748 = vld [vmem:[%s1 + $0xd10] sm:$0xff]
      %v749 = vld [vmem:[%s1 + $0xd18] sm:$0xff]
      %v750 = vld [vmem:[%s1 + $0xd20] sm:$0xff]
      %v751 = vld [vmem:[%s1 + $0xd28] sm:$0xff]
      %v752 = vld [vmem:[%s1 + $0xd30] sm:$0xff]
      %v753 = vld [vmem:[%s1 + $0xd38] sm:$0xff]
      %v754 = vld [vmem:[%s1 + $0xd40] sm:$0xff]
      %v755 = vld [vmem:[%s1 + $0xd48] sm:$0xff]
      %v756 = vld [vmem:[%s1 + $0xd50] sm:$0xff]
      %v757 = vld [vmem:[%s1 + $0xd58] sm:$0xff]
      %v758 = vld [vmem:[%s1 + $0xd60] sm:$0xff]
      %v759 = vld [vmem:[%s1 + $0xd68] sm:$0xff]
      %v760 = vld [vmem:[%s1 + $0xd70] sm:$0xff]
      %v761 = vld [vmem:[%s1 + $0xd78] sm:$0xff]
      %v762 = vld [vmem:[%s1 + $0xd80] sm:$0xff]
      %v763 = vld [vmem:[%s1 + $0xd88] sm:$0xff]
      %v764 = vld [vmem:[%s1 + $0xd90] sm:$0xff]
      %v765 = vld [vmem:[%s1 + $0xd98] sm:$0xff]
      %v766 = vld [vmem:[%s1 + $0xda0] sm:$0xff]
      %v767 = vld [vmem:[%s1 + $0xda8] sm:$0xff]
      %v768 = vld [vmem:[%s1 + $0xdb0] sm:$0xff]
      %v769 = vld [vmem:[%s1 + $0xdb8] sm:$0xff]
      %v770 = vld [vmem:[%s1 + $0xdc0] sm:$0xff]
      %v771 = vld [vmem:[%s1 + $0xdc8] sm:$0xff]
      %v772 = vld [vmem:[%s1 + $0xdd0] sm:$0xff]
      %v773 = vld [vmem:[%s1 + $0xdd8] sm:$0xff]
      %v774 = vld [vmem:[%s1 + $0xde0] sm:$0xff]
      %v775 = vld [vmem:[%s1 + $0xde8] sm:$0xff]
      %v776 = vld [vmem:[%s1 + $0xdf0] sm:$0xff]
      %v777 = vld [vmem:[%s1 + $0xdf8] sm:$0xff]
      %v778 = vld [vmem:[%s1 + $0xe00] sm:$0xff]
      %v779 = vld [vmem:[%s1 + $0xe08] sm:$0xff]
      %v780 = vld [vmem:[%s1 + $0xe10] sm:$0xff]
      %v781 = vld [vmem:[%s1 + $0xe18] sm:$0xff]
      %v782 = vld [vmem:[%s1 + $0xe20] sm:$0xff]
      %v783 = vld [vmem:[%s1 + $0xe28] sm:$0xff]
      %v784 = vld [vmem:[%s1 + $0xe30] sm:$0xff]
      %v785 = vld [vmem:[%s1 + $0xe38] sm:$0xff]
      %v786 = vld [vmem:[%s1 + $0xe40] sm:$0xff]
      %v787 = vld [vmem:[%s1 + $0xe48] sm:$0xff]
      %v788 = vld [vmem:[%s1 + $0xe50] sm:$0xff]
      %v789 = vld [vmem:[%s1 + $0xe58] sm:$0xff]
      %v790 = vld [vmem:[%s1 + $0xe60] sm:$0xff]
      %v791 = vld [vmem:[%s1 + $0xe68] sm:$0xff]
      %v792 = vld [vmem:[%s1 + $0xe70] sm:$0xff]
      %v793 = vld [vmem:[%s1 + $0xe78] sm:$0xff]
      %v794 = vld [vmem:[%s1 + $0xe80] sm:$0xff]
      %v795 = vld [vmem:[%s1 + $0xe88] sm:$0xff]
      %v796 = vld [vmem:[%s1 + $0xe90] sm:$0xff]
      %v797 = vld [vmem:[%s1 + $0xe98] sm:$0xff]
      %v798 = vld [vmem:[%s1 + $0xea0] sm:$0xff]
      %v799 = vld [vmem:[%s1 + $0xea8] sm:$0xff]
      %v800 = vld [vmem:[%s1 + $0xeb0] sm:$0xff]
      %v801 = vld [vmem:[%s1 + $0xeb8] sm:$0xff]
      %v802 = vld [vmem:[%s1 + $0xec0] sm:$0xff]
      %v803 = vld [vmem:[%s1 + $0xec8] sm:$0xff]
      %v804 = vld [vmem:[%s1 + $0xed0] sm:$0xff]
      %v805 = vld [vmem:[%s1 + $0xed8] sm:$0xff]
      %v806 = vld [vmem:[%s1 + $0xee0] sm:$0xff]
      %v807 = vld [vmem:[%s1 + $0xee8] sm:$0xff]
      %v808 = vld [vmem:[%s1 + $0xef0] sm:$0xff]
      %v809 = vld [vmem:[%s1 + $0xef8] sm:$0xff]
      %v810 = vld [vmem:[%s1 + $0xf00] sm:$0xff]
      %v811 = vld [vmem:[%s1 + $0xf08] sm:$0xff]
      %v812 = vld [vmem:[%s1 + $0xf10] sm:$0xff]
      %v813 = vld [vmem:[%s1 + $0xf18] sm:$0xff]
      %v814 = vld [vmem:[%s1 + $0xf20] sm:$0xff]
      %v815 = vld [vmem:[%s1 + $0xf28] sm:$0xff]
      %v816 = vld [vmem:[%s1 + $0xf30] sm:$0xff]
      %v817 = vld [vmem:[%s1 + $0xf38] sm:$0xff]
      %v818 = vld [vmem:[%s1 + $0xf40] sm:$0xff]
      %v819 = vld [vmem:[%s1 + $0xf48] sm:$0xff]
      %v820 = vld [vmem:[%s1 + $0xf50] sm:$0xff]
      %v821 = vld [vmem:[%s1 + $0xf58] sm:$0xff]
      %v822 = vld [vmem:[%s1 + $0xf60] sm:$0xff]
      %v823 = vld [vmem:[%s1 + $0xf68] sm:$0xff]
      %v824 = vld [vmem:[%s1 + $0xf70] sm:$0xff]
      %v825 = vld [vmem:[%s1 + $0xf78] sm:$0xff]
      %v826 = vld [vmem:[%s1 + $0xf80] sm:$0xff]
      %v827 = vld [vmem:[%s1 + $0xf88] sm:$0xff]
      %v828 = vld [vmem:[%s1 + $0xf90] sm:$0xff]
      %v829 = vld [vmem:[%s1 + $0xf98] sm:$0xff]
      %v830 = vld [vmem:[%s1 + $0xfa0] sm:$0xff]
      %v831 = vld [vmem:[%s1 + $0xfa8] sm:$0xff]
      %v832 = vld [vmem:[%s1 + $0xfb0] sm:$0xff]
      %v833 = vld [vmem:[%s1 + $0xfb8] sm:$0xff]
      %v834 = vld [vmem:[%s1 + $0xfc0] sm:$0xff]
      %v835 = vld [vmem:[%s1 + $0xfc8] sm:$0xff]
      %v836 = vld [vmem:[%s1 + $0xfd0] sm:$0xff]
      %v837 = vld [vmem:[%s1 + $0xfd8] sm:$0xff]
      %v838 = vld [vmem:[%s1 + $0xfe0] sm:$0xff]
      %v839 = vld [vmem:[%s1 + $0xfe8] sm:$0xff]
      %v840 = vld [vmem:[%s1 + $0xff0] sm:$0xff]
      %v841 = vld [vmem:[%s1 + $0xff8] sm:$0xff]
      %v842 = vld [vmem:[%s2] sm:$0xf]
      %844 = vst [vmem:[#allocation1] ss:$9 sm:$0xff] %v328
      %v845 = vld [vmem:[#allocation1] sm:$0xff]
      %v846 = vld [vmem:[#allocation1 + $0x9] sm:$0xff]
      %v847 = vld [vmem:[#allocation1 + $0x12] sm:$0xff]
      %v848 = vld [vmem:[#allocation1 + $0x1b] sm:$0xff]
      %v849 = vld [vmem:[#allocation1 + $0x24] sm:$0xff]
      %v850 = vld [vmem:[#allocation1 + $0x2d] sm:$0xff]
      %v851 = vld [vmem:[#allocation1 + $0x36] sm:$0xff]
      %v852 = vld [vmem:[#allocation1 + $0x3f] sm:$0xff]
      %854 = vst [vmem:[#allocation1] ss:$9 sm:$0xff] %v329
      %v855 = vld [vmem:[#allocation1] sm:$0xff]
      %v856 = vld [vmem:[#allocation1 + $0x9] sm:$0xff]
      %v857 = vld [vmem:[#allocation1 + $0x12] sm:$0xff]
      %v858 = vld [vmem:[#allocation1 + $0x1b] sm:$0xff]
      %v859 = vld [vmem:[#allocation1 + $0x24] sm:$0xff]
      %v860 = vld [vmem:[#allocation1 + $0x2d] sm:$0xff]
      %v861 = vld [vmem:[#allocation1 + $0x36] sm:$0xff]
      %v862 = vld [vmem:[#allocation1 + $0x3f] sm:$0xff]
      %v1391 = vunpack.c.l.b16 %v330
      %v1392 = vunpack.c.h.b16 %v330
      %v1393 = vunpack.c.l.b16 %v331
      %v1394 = vunpack.c.h.b16 %v331
      %v1395 = vunpack.c.l.b16 %v332
      %v1396 = vunpack.c.h.b16 %v332
      %v1397 = vunpack.c.l.b16 %v333
      %v1398 = vunpack.c.h.b16 %v333
      %v1399 = vunpack.c.l.b16 %v334
      %v1400 = vunpack.c.h.b16 %v334
      %v1401 = vunpack.c.l.b16 %v335
      %v1402 = vunpack.c.h.b16 %v335
      %v1403 = vunpack.c.l.b16 %v336
      %v1404 = vunpack.c.h.b16 %v336
      %v1405 = vunpack.c.l.b16 %v337
      %v1406 = vunpack.c.h.b16 %v337
      %v1407 = vunpack.c.l.b16 %v338
      %v1408 = vunpack.c.h.b16 %v338
      %v1409 = vunpack.c.l.b16 %v339
      %v1410 = vunpack.c.h.b16 %v339
      %v1411 = vunpack.c.l.b16 %v340
      %v1412 = vunpack.c.h.b16 %v340
      %v1413 = vunpack.c.l.b16 %v341
      %v1414 = vunpack.c.h.b16 %v341
      %v1415 = vunpack.c.l.b16 %v342
      %v1416 = vunpack.c.h.b16 %v342
      %v1417 = vunpack.c.l.b16 %v343
      %v1418 = vunpack.c.h.b16 %v343
      %v1419 = vunpack.c.l.b16 %v344
      %v1420 = vunpack.c.h.b16 %v344
      %v1421 = vunpack.c.l.b16 %v345
      %v1422 = vunpack.c.h.b16 %v345
      %v1423 = vunpack.c.l.b16 %v346
      %v1424 = vunpack.c.h.b16 %v346
      %v1425 = vunpack.c.l.b16 %v347
      %v1426 = vunpack.c.h.b16 %v347
      %v1427 = vunpack.c.l.b16 %v348
      %v1428 = vunpack.c.h.b16 %v348
      %v1429 = vunpack.c.l.b16 %v349
      %v1430 = vunpack.c.h.b16 %v349
      %v1431 = vunpack.c.l.b16 %v350
      %v1432 = vunpack.c.h.b16 %v350
      %v1433 = vunpack.c.l.b16 %v351
      %v1434 = vunpack.c.h.b16 %v351
      %v1435 = vunpack.c.l.b16 %v352
      %v1436 = vunpack.c.h.b16 %v352
      %v1437 = vunpack.c.l.b16 %v353
      %v1438 = vunpack.c.h.b16 %v353
      %v1439 = vunpack.c.l.b16 %v354
      %v1440 = vunpack.c.h.b16 %v354
      %v1441 = vunpack.c.l.b16 %v355
      %v1442 = vunpack.c.h.b16 %v355
      %v1443 = vunpack.c.l.b16 %v356
      %v1444 = vunpack.c.h.b16 %v356
      %v1445 = vunpack.c.l.b16 %v357
      %v1446 = vunpack.c.h.b16 %v357
      %v1447 = vunpack.c.l.b16 %v358
      %v1448 = vunpack.c.h.b16 %v358
      %v1449 = vunpack.c.l.b16 %v359
      %v1450 = vunpack.c.h.b16 %v359
      %v1451 = vunpack.c.l.b16 %v360
      %v1452 = vunpack.c.h.b16 %v360
      %v1453 = vunpack.c.l.b16 %v361
      %v1454 = vunpack.c.h.b16 %v361
      %v1455 = vunpack.c.l.b16 %v362
      %v1456 = vunpack.c.h.b16 %v362
      %v1457 = vunpack.c.l.b16 %v363
      %v1458 = vunpack.c.h.b16 %v363
      %v1459 = vunpack.c.l.b16 %v364
      %v1460 = vunpack.c.h.b16 %v364
      %v1461 = vunpack.c.l.b16 %v365
      %v1462 = vunpack.c.h.b16 %v365
      %v1463 = vunpack.c.l.b16 %v366
      %v1464 = vunpack.c.h.b16 %v366
      %v1465 = vunpack.c.l.b16 %v367
      %v1466 = vunpack.c.h.b16 %v367
      %v1467 = vunpack.c.l.b16 %v368
      %v1468 = vunpack.c.h.b16 %v368
      %v1469 = vunpack.c.l.b16 %v369
      %v1470 = vunpack.c.h.b16 %v369
      %v1471 = vunpack.c.l.b16 %v370
      %v1472 = vunpack.c.h.b16 %v370
      %v1473 = vunpack.c.l.b16 %v371
      %v1474 = vunpack.c.h.b16 %v371
      %v1475 = vunpack.c.l.b16 %v372
      %v1476 = vunpack.c.h.b16 %v372
      %v1477 = vunpack.c.l.b16 %v373
      %v1478 = vunpack.c.h.b16 %v373
      %v1479 = vunpack.c.l.b16 %v374
      %v1480 = vunpack.c.h.b16 %v374
      %v1481 = vunpack.c.l.b16 %v375
      %v1482 = vunpack.c.h.b16 %v375
      %v1483 = vunpack.c.l.b16 %v376
      %v1484 = vunpack.c.h.b16 %v376
      %v1485 = vunpack.c.l.b16 %v377
      %v1486 = vunpack.c.h.b16 %v377
      %v1487 = vunpack.c.l.b16 %v378
      %v1488 = vunpack.c.h.b16 %v378
      %v1489 = vunpack.c.l.b16 %v379
      %v1490 = vunpack.c.h.b16 %v379
      %v1491 = vunpack.c.l.b16 %v380
      %v1492 = vunpack.c.h.b16 %v380
      %v1493 = vunpack.c.l.b16 %v381
      %v1494 = vunpack.c.h.b16 %v381
      %v1495 = vunpack.c.l.b16 %v382
      %v1496 = vunpack.c.h.b16 %v382
      %v1497 = vunpack.c.l.b16 %v383
      %v1498 = vunpack.c.h.b16 %v383
      %v1499 = vunpack.c.l.b16 %v384
      %v1500 = vunpack.c.h.b16 %v384
      %v1501 = vunpack.c.l.b16 %v385
      %v1502 = vunpack.c.h.b16 %v385
      %v1503 = vunpack.c.l.b16 %v386
      %v1504 = vunpack.c.h.b16 %v386
      %v1505 = vunpack.c.l.b16 %v387
      %v1506 = vunpack.c.h.b16 %v387
      %v1507 = vunpack.c.l.b16 %v388
      %v1508 = vunpack.c.h.b16 %v388
      %v1509 = vunpack.c.l.b16 %v389
      %v1510 = vunpack.c.h.b16 %v389
      %v1511 = vunpack.c.l.b16 %v390
      %v1512 = vunpack.c.h.b16 %v390
      %v1513 = vunpack.c.l.b16 %v391
      %v1514 = vunpack.c.h.b16 %v391
      %v1515 = vunpack.c.l.b16 %v392
      %v1516 = vunpack.c.h.b16 %v392
      %v1517 = vunpack.c.l.b16 %v393
      %v1518 = vunpack.c.h.b16 %v393
      %v1519 = vunpack.c.l.b16 %v394
      %v1520 = vunpack.c.h.b16 %v394
      %v1521 = vunpack.c.l.b16 %v395
      %v1522 = vunpack.c.h.b16 %v395
      %v1523 = vunpack.c.l.b16 %v396
      %v1524 = vunpack.c.h.b16 %v396
      %v1525 = vunpack.c.l.b16 %v397
      %v1526 = vunpack.c.h.b16 %v397
      %v1527 = vunpack.c.l.b16 %v398
      %v1528 = vunpack.c.h.b16 %v398
      %v1529 = vunpack.c.l.b16 %v399
      %v1530 = vunpack.c.h.b16 %v399
      %v1531 = vunpack.c.l.b16 %v400
      %v1532 = vunpack.c.h.b16 %v400
      %v1533 = vunpack.c.l.b16 %v401
      %v1534 = vunpack.c.h.b16 %v401
      %v1535 = vunpack.c.l.b16 %v402
      %v1536 = vunpack.c.h.b16 %v402
      %v1537 = vunpack.c.l.b16 %v403
      %v1538 = vunpack.c.h.b16 %v403
      %v1539 = vunpack.c.l.b16 %v404
      %v1540 = vunpack.c.h.b16 %v404
      %v1541 = vunpack.c.l.b16 %v405
      %v1542 = vunpack.c.h.b16 %v405
      %v1543 = vunpack.c.l.b16 %v406
      %v1544 = vunpack.c.h.b16 %v406
      %v1545 = vunpack.c.l.b16 %v407
      %v1546 = vunpack.c.h.b16 %v407
      %v1547 = vunpack.c.l.b16 %v408
      %v1548 = vunpack.c.h.b16 %v408
      %v1549 = vunpack.c.l.b16 %v409
      %v1550 = vunpack.c.h.b16 %v409
      %v1551 = vunpack.c.l.b16 %v410
      %v1552 = vunpack.c.h.b16 %v410
      %v1553 = vunpack.c.l.b16 %v411
      %v1554 = vunpack.c.h.b16 %v411
      %v1555 = vunpack.c.l.b16 %v412
      %v1556 = vunpack.c.h.b16 %v412
      %v1557 = vunpack.c.l.b16 %v413
      %v1558 = vunpack.c.h.b16 %v413
      %v1559 = vunpack.c.l.b16 %v414
      %v1560 = vunpack.c.h.b16 %v414
      %v1561 = vunpack.c.l.b16 %v415
      %v1562 = vunpack.c.h.b16 %v415
      %v1563 = vunpack.c.l.b16 %v416
      %v1564 = vunpack.c.h.b16 %v416
      %v1565 = vunpack.c.l.b16 %v417
      %v1566 = vunpack.c.h.b16 %v417
      %v1567 = vunpack.c.l.b16 %v418
      %v1568 = vunpack.c.h.b16 %v418
      %v1569 = vunpack.c.l.b16 %v419
      %v1570 = vunpack.c.h.b16 %v419
      %v1571 = vunpack.c.l.b16 %v420
      %v1572 = vunpack.c.h.b16 %v420
      %v1573 = vunpack.c.l.b16 %v421
      %v1574 = vunpack.c.h.b16 %v421
      %v1575 = vunpack.c.l.b16 %v422
      %v1576 = vunpack.c.h.b16 %v422
      %v1577 = vunpack.c.l.b16 %v423
      %v1578 = vunpack.c.h.b16 %v423
      %v1579 = vunpack.c.l.b16 %v424
      %v1580 = vunpack.c.h.b16 %v424
      %v1581 = vunpack.c.l.b16 %v425
      %v1582 = vunpack.c.h.b16 %v425
      %v1583 = vunpack.c.l.b16 %v426
      %v1584 = vunpack.c.h.b16 %v426
      %v1585 = vunpack.c.l.b16 %v427
      %v1586 = vunpack.c.h.b16 %v427
      %v1587 = vunpack.c.l.b16 %v428
      %v1588 = vunpack.c.h.b16 %v428
      %v1589 = vunpack.c.l.b16 %v429
      %v1590 = vunpack.c.h.b16 %v429
      %v1591 = vunpack.c.l.b16 %v430
      %v1592 = vunpack.c.h.b16 %v430
      %v1593 = vunpack.c.l.b16 %v431
      %v1594 = vunpack.c.h.b16 %v431
      %v1595 = vunpack.c.l.b16 %v432
      %v1596 = vunpack.c.h.b16 %v432
      %v1597 = vunpack.c.l.b16 %v433
      %v1598 = vunpack.c.h.b16 %v433
      %v1599 = vunpack.c.l.b16 %v434
      %v1600 = vunpack.c.h.b16 %v434
      %v1601 = vunpack.c.l.b16 %v435
      %v1602 = vunpack.c.h.b16 %v435
      %v1603 = vunpack.c.l.b16 %v436
      %v1604 = vunpack.c.h.b16 %v436
      %v1605 = vunpack.c.l.b16 %v437
      %v1606 = vunpack.c.h.b16 %v437
      %v1607 = vunpack.c.l.b16 %v438
      %v1608 = vunpack.c.h.b16 %v438
      %v1609 = vunpack.c.l.b16 %v439
      %v1610 = vunpack.c.h.b16 %v439
      %v1611 = vunpack.c.l.b16 %v440
      %v1612 = vunpack.c.h.b16 %v440
      %v1613 = vunpack.c.l.b16 %v441
      %v1614 = vunpack.c.h.b16 %v441
      %v1615 = vunpack.c.l.b16 %v442
      %v1616 = vunpack.c.h.b16 %v442
      %v1617 = vunpack.c.l.b16 %v443
      %v1618 = vunpack.c.h.b16 %v443
      %v1619 = vunpack.c.l.b16 %v444
      %v1620 = vunpack.c.h.b16 %v444
      %v1621 = vunpack.c.l.b16 %v445
      %v1622 = vunpack.c.h.b16 %v445
      %v1623 = vunpack.c.l.b16 %v446
      %v1624 = vunpack.c.h.b16 %v446
      %v1625 = vunpack.c.l.b16 %v447
      %v1626 = vunpack.c.h.b16 %v447
      %v1627 = vunpack.c.l.b16 %v448
      %v1628 = vunpack.c.h.b16 %v448
      %v1629 = vunpack.c.l.b16 %v449
      %v1630 = vunpack.c.h.b16 %v449
      %v1631 = vunpack.c.l.b16 %v450
      %v1632 = vunpack.c.h.b16 %v450
      %v1633 = vunpack.c.l.b16 %v451
      %v1634 = vunpack.c.h.b16 %v451
      %v1635 = vunpack.c.l.b16 %v452
      %v1636 = vunpack.c.h.b16 %v452
      %v1637 = vunpack.c.l.b16 %v453
      %v1638 = vunpack.c.h.b16 %v453
      %v1639 = vunpack.c.l.b16 %v454
      %v1640 = vunpack.c.h.b16 %v454
      %v1641 = vunpack.c.l.b16 %v455
      %v1642 = vunpack.c.h.b16 %v455
      %v1643 = vunpack.c.l.b16 %v456
      %v1644 = vunpack.c.h.b16 %v456
      %v1645 = vunpack.c.l.b16 %v457
      %v1646 = vunpack.c.h.b16 %v457
      %v1647 = vunpack.c.l.b16 %v458
      %v1648 = vunpack.c.h.b16 %v458
      %v1649 = vunpack.c.l.b16 %v459
      %v1650 = vunpack.c.h.b16 %v459
      %v1651 = vunpack.c.l.b16 %v460
      %v1652 = vunpack.c.h.b16 %v460
      %v1653 = vunpack.c.l.b16 %v461
      %v1654 = vunpack.c.h.b16 %v461
      %v1655 = vunpack.c.l.b16 %v462
      %v1656 = vunpack.c.h.b16 %v462
      %v1657 = vunpack.c.l.b16 %v463
      %v1658 = vunpack.c.h.b16 %v463
      %v1659 = vunpack.c.l.b16 %v464
      %v1660 = vunpack.c.h.b16 %v464
      %v1661 = vunpack.c.l.b16 %v465
      %v1662 = vunpack.c.h.b16 %v465
      %v1663 = vunpack.c.l.b16 %v466
      %v1664 = vunpack.c.h.b16 %v466
      %v1665 = vunpack.c.l.b16 %v467
      %v1666 = vunpack.c.h.b16 %v467
      %v1667 = vunpack.c.l.b16 %v468
      %v1668 = vunpack.c.h.b16 %v468
      %v1669 = vunpack.c.l.b16 %v469
      %v1670 = vunpack.c.h.b16 %v469
      %v1671 = vunpack.c.l.b16 %v470
      %v1672 = vunpack.c.h.b16 %v470
      %v1673 = vunpack.c.l.b16 %v471
      %v1674 = vunpack.c.h.b16 %v471
      %v1675 = vunpack.c.l.b16 %v472
      %v1676 = vunpack.c.h.b16 %v472
      %v1677 = vunpack.c.l.b16 %v473
      %v1678 = vunpack.c.h.b16 %v473
      %v1679 = vunpack.c.l.b16 %v474
      %v1680 = vunpack.c.h.b16 %v474
      %v1681 = vunpack.c.l.b16 %v475
      %v1682 = vunpack.c.h.b16 %v475
      %v1683 = vunpack.c.l.b16 %v476
      %v1684 = vunpack.c.h.b16 %v476
      %v1685 = vunpack.c.l.b16 %v477
      %v1686 = vunpack.c.h.b16 %v477
      %v1687 = vunpack.c.l.b16 %v478
      %v1688 = vunpack.c.h.b16 %v478
      %v1689 = vunpack.c.l.b16 %v479
      %v1690 = vunpack.c.h.b16 %v479
      %v1691 = vunpack.c.l.b16 %v480
      %v1692 = vunpack.c.h.b16 %v480
      %v1693 = vunpack.c.l.b16 %v481
      %v1694 = vunpack.c.h.b16 %v481
      %v1695 = vunpack.c.l.b16 %v482
      %v1696 = vunpack.c.h.b16 %v482
      %v1697 = vunpack.c.l.b16 %v483
      %v1698 = vunpack.c.h.b16 %v483
      %v1699 = vunpack.c.l.b16 %v484
      %v1700 = vunpack.c.h.b16 %v484
      %v1701 = vunpack.c.l.b16 %v485
      %v1702 = vunpack.c.h.b16 %v485
      %v1703 = vunpack.c.l.b16 %v486
      %v1704 = vunpack.c.h.b16 %v486
      %v1705 = vunpack.c.l.b16 %v487
      %v1706 = vunpack.c.h.b16 %v487
      %v1707 = vunpack.c.l.b16 %v488
      %v1708 = vunpack.c.h.b16 %v488
      %v1709 = vunpack.c.l.b16 %v489
      %v1710 = vunpack.c.h.b16 %v489
      %v1711 = vunpack.c.l.b16 %v490
      %v1712 = vunpack.c.h.b16 %v490
      %v1713 = vunpack.c.l.b16 %v491
      %v1714 = vunpack.c.h.b16 %v491
      %v1715 = vunpack.c.l.b16 %v492
      %v1716 = vunpack.c.h.b16 %v492
      %v1717 = vunpack.c.l.b16 %v493
      %v1718 = vunpack.c.h.b16 %v493
      %v1719 = vunpack.c.l.b16 %v494
      %v1720 = vunpack.c.h.b16 %v494
      %v1721 = vunpack.c.l.b16 %v495
      %v1722 = vunpack.c.h.b16 %v495
      %v1723 = vunpack.c.l.b16 %v496
      %v1724 = vunpack.c.h.b16 %v496
      %v1725 = vunpack.c.l.b16 %v497
      %v1726 = vunpack.c.h.b16 %v497
      %v1727 = vunpack.c.l.b16 %v498
      %v1728 = vunpack.c.h.b16 %v498
      %v1729 = vunpack.c.l.b16 %v499
      %v1730 = vunpack.c.h.b16 %v499
      %v1731 = vunpack.c.l.b16 %v500
      %v1732 = vunpack.c.h.b16 %v500
      %v1733 = vunpack.c.l.b16 %v501
      %v1734 = vunpack.c.h.b16 %v501
      %v1735 = vunpack.c.l.b16 %v502
      %v1736 = vunpack.c.h.b16 %v502
      %v1737 = vunpack.c.l.b16 %v503
      %v1738 = vunpack.c.h.b16 %v503
      %v1739 = vunpack.c.l.b16 %v504
      %v1740 = vunpack.c.h.b16 %v504
      %v1741 = vunpack.c.l.b16 %v505
      %v1742 = vunpack.c.h.b16 %v505
      %v1743 = vunpack.c.l.b16 %v506
      %v1744 = vunpack.c.h.b16 %v506
      %v1745 = vunpack.c.l.b16 %v507
      %v1746 = vunpack.c.h.b16 %v507
      %v1747 = vunpack.c.l.b16 %v508
      %v1748 = vunpack.c.h.b16 %v508
      %v1749 = vunpack.c.l.b16 %v509
      %v1750 = vunpack.c.h.b16 %v509
      %v1751 = vunpack.c.l.b16 %v510
      %v1752 = vunpack.c.h.b16 %v510
      %v1753 = vunpack.c.l.b16 %v511
      %v1754 = vunpack.c.h.b16 %v511
      %v1755 = vunpack.c.l.b16 %v512
      %v1756 = vunpack.c.h.b16 %v512
      %v1757 = vunpack.c.l.b16 %v513
      %v1758 = vunpack.c.h.b16 %v513
      %v1759 = vunpack.c.l.b16 %v514
      %v1760 = vunpack.c.h.b16 %v514
      %v1761 = vunpack.c.l.b16 %v515
      %v1762 = vunpack.c.h.b16 %v515
      %v1763 = vunpack.c.l.b16 %v516
      %v1764 = vunpack.c.h.b16 %v516
      %v1765 = vunpack.c.l.b16 %v517
      %v1766 = vunpack.c.h.b16 %v517
      %v1767 = vunpack.c.l.b16 %v518
      %v1768 = vunpack.c.h.b16 %v518
      %v1769 = vunpack.c.l.b16 %v519
      %v1770 = vunpack.c.h.b16 %v519
      %v1771 = vunpack.c.l.b16 %v520
      %v1772 = vunpack.c.h.b16 %v520
      %v1773 = vunpack.c.l.b16 %v521
      %v1774 = vunpack.c.h.b16 %v521
      %v1775 = vunpack.c.l.b16 %v522
      %v1776 = vunpack.c.h.b16 %v522
      %v1777 = vunpack.c.l.b16 %v523
      %v1778 = vunpack.c.h.b16 %v523
      %v1779 = vunpack.c.l.b16 %v524
      %v1780 = vunpack.c.h.b16 %v524
      %v1781 = vunpack.c.l.b16 %v525
      %v1782 = vunpack.c.h.b16 %v525
      %v1783 = vunpack.c.l.b16 %v526
      %v1784 = vunpack.c.h.b16 %v526
      %v1785 = vunpack.c.l.b16 %v527
      %v1786 = vunpack.c.h.b16 %v527
      %v1787 = vunpack.c.l.b16 %v528
      %v1788 = vunpack.c.h.b16 %v528
      %v1789 = vunpack.c.l.b16 %v529
      %v1790 = vunpack.c.h.b16 %v529
      %v1791 = vunpack.c.l.b16 %v530
      %v1792 = vunpack.c.h.b16 %v530
      %v1793 = vunpack.c.l.b16 %v531
      %v1794 = vunpack.c.h.b16 %v531
      %v1795 = vunpack.c.l.b16 %v532
      %v1796 = vunpack.c.h.b16 %v532
      %v1797 = vunpack.c.l.b16 %v533
      %v1798 = vunpack.c.h.b16 %v533
      %v1799 = vunpack.c.l.b16 %v534
      %v1800 = vunpack.c.h.b16 %v534
      %v1801 = vunpack.c.l.b16 %v535
      %v1802 = vunpack.c.h.b16 %v535
      %v1803 = vunpack.c.l.b16 %v536
      %v1804 = vunpack.c.h.b16 %v536
      %v1805 = vunpack.c.l.b16 %v537
      %v1806 = vunpack.c.h.b16 %v537
      %v1807 = vunpack.c.l.b16 %v538
      %v1808 = vunpack.c.h.b16 %v538
      %v1809 = vunpack.c.l.b16 %v539
      %v1810 = vunpack.c.h.b16 %v539
      %v1811 = vunpack.c.l.b16 %v540
      %v1812 = vunpack.c.h.b16 %v540
      %v1813 = vunpack.c.l.b16 %v541
      %v1814 = vunpack.c.h.b16 %v541
      %v1815 = vunpack.c.l.b16 %v542
      %v1816 = vunpack.c.h.b16 %v542
      %v1817 = vunpack.c.l.b16 %v543
      %v1818 = vunpack.c.h.b16 %v543
      %v1819 = vunpack.c.l.b16 %v544
      %v1820 = vunpack.c.h.b16 %v544
      %v1821 = vunpack.c.l.b16 %v545
      %v1822 = vunpack.c.h.b16 %v545
      %v1823 = vunpack.c.l.b16 %v546
      %v1824 = vunpack.c.h.b16 %v546
      %v1825 = vunpack.c.l.b16 %v547
      %v1826 = vunpack.c.h.b16 %v547
      %v1827 = vunpack.c.l.b16 %v548
      %v1828 = vunpack.c.h.b16 %v548
      %v1829 = vunpack.c.l.b16 %v549
      %v1830 = vunpack.c.h.b16 %v549
      %v1831 = vunpack.c.l.b16 %v550
      %v1832 = vunpack.c.h.b16 %v550
      %v1833 = vunpack.c.l.b16 %v551
      %v1834 = vunpack.c.h.b16 %v551
      %v1835 = vunpack.c.l.b16 %v552
      %v1836 = vunpack.c.h.b16 %v552
      %v1837 = vunpack.c.l.b16 %v553
      %v1838 = vunpack.c.h.b16 %v553
      %v1839 = vunpack.c.l.b16 %v554
      %v1840 = vunpack.c.h.b16 %v554
      %v1841 = vunpack.c.l.b16 %v555
      %v1842 = vunpack.c.h.b16 %v555
      %v1843 = vunpack.c.l.b16 %v556
      %v1844 = vunpack.c.h.b16 %v556
      %v1845 = vunpack.c.l.b16 %v557
      %v1846 = vunpack.c.h.b16 %v557
      %v1847 = vunpack.c.l.b16 %v558
      %v1848 = vunpack.c.h.b16 %v558
      %v1849 = vunpack.c.l.b16 %v559
      %v1850 = vunpack.c.h.b16 %v559
      %v1851 = vunpack.c.l.b16 %v560
      %v1852 = vunpack.c.h.b16 %v560
      %v1853 = vunpack.c.l.b16 %v561
      %v1854 = vunpack.c.h.b16 %v561
      %v1855 = vunpack.c.l.b16 %v562
      %v1856 = vunpack.c.h.b16 %v562
      %v1857 = vunpack.c.l.b16 %v563
      %v1858 = vunpack.c.h.b16 %v563
      %v1859 = vunpack.c.l.b16 %v564
      %v1860 = vunpack.c.h.b16 %v564
      %v1861 = vunpack.c.l.b16 %v565
      %v1862 = vunpack.c.h.b16 %v565
      %v1863 = vunpack.c.l.b16 %v566
      %v1864 = vunpack.c.h.b16 %v566
      %v1865 = vunpack.c.l.b16 %v567
      %v1866 = vunpack.c.h.b16 %v567
      %v1867 = vunpack.c.l.b16 %v568
      %v1868 = vunpack.c.h.b16 %v568
      %v1869 = vunpack.c.l.b16 %v569
      %v1870 = vunpack.c.h.b16 %v569
      %v1871 = vunpack.c.l.b16 %v570
      %v1872 = vunpack.c.h.b16 %v570
      %v1873 = vunpack.c.l.b16 %v571
      %v1874 = vunpack.c.h.b16 %v571
      %v1875 = vunpack.c.l.b16 %v572
      %v1876 = vunpack.c.h.b16 %v572
      %v1877 = vunpack.c.l.b16 %v573
      %v1878 = vunpack.c.h.b16 %v573
      %v1879 = vunpack.c.l.b16 %v574
      %v1880 = vunpack.c.h.b16 %v574
      %v1881 = vunpack.c.l.b16 %v575
      %v1882 = vunpack.c.h.b16 %v575
      %v1883 = vunpack.c.l.b16 %v576
      %v1884 = vunpack.c.h.b16 %v576
      %v1885 = vunpack.c.l.b16 %v577
      %v1886 = vunpack.c.h.b16 %v577
      %v1887 = vunpack.c.l.b16 %v578
      %v1888 = vunpack.c.h.b16 %v578
      %v1889 = vunpack.c.l.b16 %v579
      %v1890 = vunpack.c.h.b16 %v579
      %v1891 = vunpack.c.l.b16 %v580
      %v1892 = vunpack.c.h.b16 %v580
      %v1893 = vunpack.c.l.b16 %v581
      %v1894 = vunpack.c.h.b16 %v581
      %v1895 = vunpack.c.l.b16 %v582
      %v1896 = vunpack.c.h.b16 %v582
      %v1897 = vunpack.c.l.b16 %v583
      %v1898 = vunpack.c.h.b16 %v583
      %v1899 = vunpack.c.l.b16 %v584
      %v1900 = vunpack.c.h.b16 %v584
      %v1901 = vunpack.c.l.b16 %v585
      %v1902 = vunpack.c.h.b16 %v585
      %v1903 = vunpack.c.l.b16 %v586
      %v1904 = vunpack.c.h.b16 %v586
      %v1905 = vunpack.c.l.b16 %v587
      %v1906 = vunpack.c.h.b16 %v587
      %v1907 = vunpack.c.l.b16 %v588
      %v1908 = vunpack.c.h.b16 %v588
      %v1909 = vunpack.c.l.b16 %v589
      %v1910 = vunpack.c.h.b16 %v589
      %v1911 = vunpack.c.l.b16 %v590
      %v1912 = vunpack.c.h.b16 %v590
      %v1913 = vunpack.c.l.b16 %v591
      %v1914 = vunpack.c.h.b16 %v591
      %v1915 = vunpack.c.l.b16 %v592
      %v1916 = vunpack.c.h.b16 %v592
      %v1917 = vunpack.c.l.b16 %v593
      %v1918 = vunpack.c.h.b16 %v593
      %v1919 = vunpack.c.l.b16 %v594
      %v1920 = vunpack.c.h.b16 %v594
      %v1921 = vunpack.c.l.b16 %v595
      %v1922 = vunpack.c.h.b16 %v595
      %v1923 = vunpack.c.l.b16 %v596
      %v1924 = vunpack.c.h.b16 %v596
      %v1925 = vunpack.c.l.b16 %v597
      %v1926 = vunpack.c.h.b16 %v597
      %v1927 = vunpack.c.l.b16 %v598
      %v1928 = vunpack.c.h.b16 %v598
      %v1929 = vunpack.c.l.b16 %v599
      %v1930 = vunpack.c.h.b16 %v599
      %v1931 = vunpack.c.l.b16 %v600
      %v1932 = vunpack.c.h.b16 %v600
      %v1933 = vunpack.c.l.b16 %v601
      %v1934 = vunpack.c.h.b16 %v601
      %v1935 = vunpack.c.l.b16 %v602
      %v1936 = vunpack.c.h.b16 %v602
      %v1937 = vunpack.c.l.b16 %v603
      %v1938 = vunpack.c.h.b16 %v603
      %v1939 = vunpack.c.l.b16 %v604
      %v1940 = vunpack.c.h.b16 %v604
      %v1941 = vunpack.c.l.b16 %v605
      %v1942 = vunpack.c.h.b16 %v605
      %v1943 = vunpack.c.l.b16 %v606
      %v1944 = vunpack.c.h.b16 %v606
      %v1945 = vunpack.c.l.b16 %v607
      %v1946 = vunpack.c.h.b16 %v607
      %v1947 = vunpack.c.l.b16 %v608
      %v1948 = vunpack.c.h.b16 %v608
      %v1949 = vunpack.c.l.b16 %v609
      %v1950 = vunpack.c.h.b16 %v609
      %v1951 = vunpack.c.l.b16 %v610
      %v1952 = vunpack.c.h.b16 %v610
      %v1953 = vunpack.c.l.b16 %v611
      %v1954 = vunpack.c.h.b16 %v611
      %v1955 = vunpack.c.l.b16 %v612
      %v1956 = vunpack.c.h.b16 %v612
      %v1957 = vunpack.c.l.b16 %v613
      %v1958 = vunpack.c.h.b16 %v613
      %v1959 = vunpack.c.l.b16 %v614
      %v1960 = vunpack.c.h.b16 %v614
      %v1961 = vunpack.c.l.b16 %v615
      %v1962 = vunpack.c.h.b16 %v615
      %v1963 = vunpack.c.l.b16 %v616
      %v1964 = vunpack.c.h.b16 %v616
      %v1965 = vunpack.c.l.b16 %v617
      %v1966 = vunpack.c.h.b16 %v617
      %v1967 = vunpack.c.l.b16 %v618
      %v1968 = vunpack.c.h.b16 %v618
      %v1969 = vunpack.c.l.b16 %v619
      %v1970 = vunpack.c.h.b16 %v619
      %v1971 = vunpack.c.l.b16 %v620
      %v1972 = vunpack.c.h.b16 %v620
      %v1973 = vunpack.c.l.b16 %v621
      %v1974 = vunpack.c.h.b16 %v621
      %v1975 = vunpack.c.l.b16 %v622
      %v1976 = vunpack.c.h.b16 %v622
      %v1977 = vunpack.c.l.b16 %v623
      %v1978 = vunpack.c.h.b16 %v623
      %v1979 = vunpack.c.l.b16 %v624
      %v1980 = vunpack.c.h.b16 %v624
      %v1981 = vunpack.c.l.b16 %v625
      %v1982 = vunpack.c.h.b16 %v625
      %v1983 = vunpack.c.l.b16 %v626
      %v1984 = vunpack.c.h.b16 %v626
      %v1985 = vunpack.c.l.b16 %v627
      %v1986 = vunpack.c.h.b16 %v627
      %v1987 = vunpack.c.l.b16 %v628
      %v1988 = vunpack.c.h.b16 %v628
      %v1989 = vunpack.c.l.b16 %v629
      %v1990 = vunpack.c.h.b16 %v629
      %v1991 = vunpack.c.l.b16 %v630
      %v1992 = vunpack.c.h.b16 %v630
      %v1993 = vunpack.c.l.b16 %v631
      %v1994 = vunpack.c.h.b16 %v631
      %v1995 = vunpack.c.l.b16 %v632
      %v1996 = vunpack.c.h.b16 %v632
      %v1997 = vunpack.c.l.b16 %v633
      %v1998 = vunpack.c.h.b16 %v633
      %v1999 = vunpack.c.l.b16 %v634
      %v2000 = vunpack.c.h.b16 %v634
      %v2001 = vunpack.c.l.b16 %v635
      %v2002 = vunpack.c.h.b16 %v635
      %v2003 = vunpack.c.l.b16 %v636
      %v2004 = vunpack.c.h.b16 %v636
      %v2005 = vunpack.c.l.b16 %v637
      %v2006 = vunpack.c.h.b16 %v637
      %v2007 = vunpack.c.l.b16 %v638
      %v2008 = vunpack.c.h.b16 %v638
      %v2009 = vunpack.c.l.b16 %v639
      %v2010 = vunpack.c.h.b16 %v639
      %v2011 = vunpack.c.l.b16 %v640
      %v2012 = vunpack.c.h.b16 %v640
      %v2013 = vunpack.c.l.b16 %v641
      %v2014 = vunpack.c.h.b16 %v641
      %v2015 = vunpack.c.l.b16 %v642
      %v2016 = vunpack.c.h.b16 %v642
      %v2017 = vunpack.c.l.b16 %v643
      %v2018 = vunpack.c.h.b16 %v643
      %v2019 = vunpack.c.l.b16 %v644
      %v2020 = vunpack.c.h.b16 %v644
      %v2021 = vunpack.c.l.b16 %v645
      %v2022 = vunpack.c.h.b16 %v645
      %v2023 = vunpack.c.l.b16 %v646
      %v2024 = vunpack.c.h.b16 %v646
      %v2025 = vunpack.c.l.b16 %v647
      %v2026 = vunpack.c.h.b16 %v647
      %v2027 = vunpack.c.l.b16 %v648
      %v2028 = vunpack.c.h.b16 %v648
      %v2029 = vunpack.c.l.b16 %v649
      %v2030 = vunpack.c.h.b16 %v649
      %v2031 = vunpack.c.l.b16 %v650
      %v2032 = vunpack.c.h.b16 %v650
      %v2033 = vunpack.c.l.b16 %v651
      %v2034 = vunpack.c.h.b16 %v651
      %v2035 = vunpack.c.l.b16 %v652
      %v2036 = vunpack.c.h.b16 %v652
      %v2037 = vunpack.c.l.b16 %v653
      %v2038 = vunpack.c.h.b16 %v653
      %v2039 = vunpack.c.l.b16 %v654
      %v2040 = vunpack.c.h.b16 %v654
      %v2041 = vunpack.c.l.b16 %v655
      %v2042 = vunpack.c.h.b16 %v655
      %v2043 = vunpack.c.l.b16 %v656
      %v2044 = vunpack.c.h.b16 %v656
      %v2045 = vunpack.c.l.b16 %v657
      %v2046 = vunpack.c.h.b16 %v657
      %v2047 = vunpack.c.l.b16 %v658
      %v2048 = vunpack.c.h.b16 %v658
      %v2049 = vunpack.c.l.b16 %v659
      %v2050 = vunpack.c.h.b16 %v659
      %v2051 = vunpack.c.l.b16 %v660
      %v2052 = vunpack.c.h.b16 %v660
      %v2053 = vunpack.c.l.b16 %v661
      %v2054 = vunpack.c.h.b16 %v661
      %v2055 = vunpack.c.l.b16 %v662
      %v2056 = vunpack.c.h.b16 %v662
      %v2057 = vunpack.c.l.b16 %v663
      %v2058 = vunpack.c.h.b16 %v663
      %v2059 = vunpack.c.l.b16 %v664
      %v2060 = vunpack.c.h.b16 %v664
      %v2061 = vunpack.c.l.b16 %v665
      %v2062 = vunpack.c.h.b16 %v665
      %v2063 = vunpack.c.l.b16 %v666
      %v2064 = vunpack.c.h.b16 %v666
      %v2065 = vunpack.c.l.b16 %v667
      %v2066 = vunpack.c.h.b16 %v667
      %v2067 = vunpack.c.l.b16 %v668
      %v2068 = vunpack.c.h.b16 %v668
      %v2069 = vunpack.c.l.b16 %v669
      %v2070 = vunpack.c.h.b16 %v669
      %v2071 = vunpack.c.l.b16 %v670
      %v2072 = vunpack.c.h.b16 %v670
      %v2073 = vunpack.c.l.b16 %v671
      %v2074 = vunpack.c.h.b16 %v671
      %v2075 = vunpack.c.l.b16 %v672
      %v2076 = vunpack.c.h.b16 %v672
      %v2077 = vunpack.c.l.b16 %v673
      %v2078 = vunpack.c.h.b16 %v673
      %v2079 = vunpack.c.l.b16 %v674
      %v2080 = vunpack.c.h.b16 %v674
      %v2081 = vunpack.c.l.b16 %v675
      %v2082 = vunpack.c.h.b16 %v675
      %v2083 = vunpack.c.l.b16 %v676
      %v2084 = vunpack.c.h.b16 %v676
      %v2085 = vunpack.c.l.b16 %v677
      %v2086 = vunpack.c.h.b16 %v677
      %v2087 = vunpack.c.l.b16 %v678
      %v2088 = vunpack.c.h.b16 %v678
      %v2089 = vunpack.c.l.b16 %v679
      %v2090 = vunpack.c.h.b16 %v679
      %v2091 = vunpack.c.l.b16 %v680
      %v2092 = vunpack.c.h.b16 %v680
      %v2093 = vunpack.c.l.b16 %v681
      %v2094 = vunpack.c.h.b16 %v681
      %v2095 = vunpack.c.l.b16 %v682
      %v2096 = vunpack.c.h.b16 %v682
      %v2097 = vunpack.c.l.b16 %v683
      %v2098 = vunpack.c.h.b16 %v683
      %v2099 = vunpack.c.l.b16 %v684
      %v2100 = vunpack.c.h.b16 %v684
      %v2101 = vunpack.c.l.b16 %v685
      %v2102 = vunpack.c.h.b16 %v685
      %v2103 = vunpack.c.l.b16 %v686
      %v2104 = vunpack.c.h.b16 %v686
      %v2105 = vunpack.c.l.b16 %v687
      %v2106 = vunpack.c.h.b16 %v687
      %v2107 = vunpack.c.l.b16 %v688
      %v2108 = vunpack.c.h.b16 %v688
      %v2109 = vunpack.c.l.b16 %v689
      %v2110 = vunpack.c.h.b16 %v689
      %v2111 = vunpack.c.l.b16 %v690
      %v2112 = vunpack.c.h.b16 %v690
      %v2113 = vunpack.c.l.b16 %v691
      %v2114 = vunpack.c.h.b16 %v691
      %v2115 = vunpack.c.l.b16 %v692
      %v2116 = vunpack.c.h.b16 %v692
      %v2117 = vunpack.c.l.b16 %v693
      %v2118 = vunpack.c.h.b16 %v693
      %v2119 = vunpack.c.l.b16 %v694
      %v2120 = vunpack.c.h.b16 %v694
      %v2121 = vunpack.c.l.b16 %v695
      %v2122 = vunpack.c.h.b16 %v695
      %v2123 = vunpack.c.l.b16 %v696
      %v2124 = vunpack.c.h.b16 %v696
      %v2125 = vunpack.c.l.b16 %v697
      %v2126 = vunpack.c.h.b16 %v697
      %v2127 = vunpack.c.l.b16 %v698
      %v2128 = vunpack.c.h.b16 %v698
      %v2129 = vunpack.c.l.b16 %v699
      %v2130 = vunpack.c.h.b16 %v699
      %v2131 = vunpack.c.l.b16 %v700
      %v2132 = vunpack.c.h.b16 %v700
      %v2133 = vunpack.c.l.b16 %v701
      %v2134 = vunpack.c.h.b16 %v701
      %v2135 = vunpack.c.l.b16 %v702
      %v2136 = vunpack.c.h.b16 %v702
      %v2137 = vunpack.c.l.b16 %v703
      %v2138 = vunpack.c.h.b16 %v703
      %v2139 = vunpack.c.l.b16 %v704
      %v2140 = vunpack.c.h.b16 %v704
      %v2141 = vunpack.c.l.b16 %v705
      %v2142 = vunpack.c.h.b16 %v705
      %v2143 = vunpack.c.l.b16 %v706
      %v2144 = vunpack.c.h.b16 %v706
      %v2145 = vunpack.c.l.b16 %v707
      %v2146 = vunpack.c.h.b16 %v707
      %v2147 = vunpack.c.l.b16 %v708
      %v2148 = vunpack.c.h.b16 %v708
      %v2149 = vunpack.c.l.b16 %v709
      %v2150 = vunpack.c.h.b16 %v709
      %v2151 = vunpack.c.l.b16 %v710
      %v2152 = vunpack.c.h.b16 %v710
      %v2153 = vunpack.c.l.b16 %v711
      %v2154 = vunpack.c.h.b16 %v711
      %v2155 = vunpack.c.l.b16 %v712
      %v2156 = vunpack.c.h.b16 %v712
      %v2157 = vunpack.c.l.b16 %v713
      %v2158 = vunpack.c.h.b16 %v713
      %v2159 = vunpack.c.l.b16 %v714
      %v2160 = vunpack.c.h.b16 %v714
      %v2161 = vunpack.c.l.b16 %v715
      %v2162 = vunpack.c.h.b16 %v715
      %v2163 = vunpack.c.l.b16 %v716
      %v2164 = vunpack.c.h.b16 %v716
      %v2165 = vunpack.c.l.b16 %v717
      %v2166 = vunpack.c.h.b16 %v717
      %v2167 = vunpack.c.l.b16 %v718
      %v2168 = vunpack.c.h.b16 %v718
      %v2169 = vunpack.c.l.b16 %v719
      %v2170 = vunpack.c.h.b16 %v719
      %v2171 = vunpack.c.l.b16 %v720
      %v2172 = vunpack.c.h.b16 %v720
      %v2173 = vunpack.c.l.b16 %v721
      %v2174 = vunpack.c.h.b16 %v721
      %v2175 = vunpack.c.l.b16 %v722
      %v2176 = vunpack.c.h.b16 %v722
      %v2177 = vunpack.c.l.b16 %v723
      %v2178 = vunpack.c.h.b16 %v723
      %v2179 = vunpack.c.l.b16 %v724
      %v2180 = vunpack.c.h.b16 %v724
      %v2181 = vunpack.c.l.b16 %v725
      %v2182 = vunpack.c.h.b16 %v725
      %v2183 = vunpack.c.l.b16 %v726
      %v2184 = vunpack.c.h.b16 %v726
      %v2185 = vunpack.c.l.b16 %v727
      %v2186 = vunpack.c.h.b16 %v727
      %v2187 = vunpack.c.l.b16 %v728
      %v2188 = vunpack.c.h.b16 %v728
      %v2189 = vunpack.c.l.b16 %v729
      %v2190 = vunpack.c.h.b16 %v729
      %v2191 = vunpack.c.l.b16 %v730
      %v2192 = vunpack.c.h.b16 %v730
      %v2193 = vunpack.c.l.b16 %v731
      %v2194 = vunpack.c.h.b16 %v731
      %v2195 = vunpack.c.l.b16 %v732
      %v2196 = vunpack.c.h.b16 %v732
      %v2197 = vunpack.c.l.b16 %v733
      %v2198 = vunpack.c.h.b16 %v733
      %v2199 = vunpack.c.l.b16 %v734
      %v2200 = vunpack.c.h.b16 %v734
      %v2201 = vunpack.c.l.b16 %v735
      %v2202 = vunpack.c.h.b16 %v735
      %v2203 = vunpack.c.l.b16 %v736
      %v2204 = vunpack.c.h.b16 %v736
      %v2205 = vunpack.c.l.b16 %v737
      %v2206 = vunpack.c.h.b16 %v737
      %v2207 = vunpack.c.l.b16 %v738
      %v2208 = vunpack.c.h.b16 %v738
      %v2209 = vunpack.c.l.b16 %v739
      %v2210 = vunpack.c.h.b16 %v739
      %v2211 = vunpack.c.l.b16 %v740
      %v2212 = vunpack.c.h.b16 %v740
      %v2213 = vunpack.c.l.b16 %v741
      %v2214 = vunpack.c.h.b16 %v741
      %v2215 = vunpack.c.l.b16 %v742
      %v2216 = vunpack.c.h.b16 %v742
      %v2217 = vunpack.c.l.b16 %v743
      %v2218 = vunpack.c.h.b16 %v743
      %v2219 = vunpack.c.l.b16 %v744
      %v2220 = vunpack.c.h.b16 %v744
      %v2221 = vunpack.c.l.b16 %v745
      %v2222 = vunpack.c.h.b16 %v745
      %v2223 = vunpack.c.l.b16 %v746
      %v2224 = vunpack.c.h.b16 %v746
      %v2225 = vunpack.c.l.b16 %v747
      %v2226 = vunpack.c.h.b16 %v747
      %v2227 = vunpack.c.l.b16 %v748
      %v2228 = vunpack.c.h.b16 %v748
      %v2229 = vunpack.c.l.b16 %v749
      %v2230 = vunpack.c.h.b16 %v749
      %v2231 = vunpack.c.l.b16 %v750
      %v2232 = vunpack.c.h.b16 %v750
      %v2233 = vunpack.c.l.b16 %v751
      %v2234 = vunpack.c.h.b16 %v751
      %v2235 = vunpack.c.l.b16 %v752
      %v2236 = vunpack.c.h.b16 %v752
      %v2237 = vunpack.c.l.b16 %v753
      %v2238 = vunpack.c.h.b16 %v753
      %v2239 = vunpack.c.l.b16 %v754
      %v2240 = vunpack.c.h.b16 %v754
      %v2241 = vunpack.c.l.b16 %v755
      %v2242 = vunpack.c.h.b16 %v755
      %v2243 = vunpack.c.l.b16 %v756
      %v2244 = vunpack.c.h.b16 %v756
      %v2245 = vunpack.c.l.b16 %v757
      %v2246 = vunpack.c.h.b16 %v757
      %v2247 = vunpack.c.l.b16 %v758
      %v2248 = vunpack.c.h.b16 %v758
      %v2249 = vunpack.c.l.b16 %v759
      %v2250 = vunpack.c.h.b16 %v759
      %v2251 = vunpack.c.l.b16 %v760
      %v2252 = vunpack.c.h.b16 %v760
      %v2253 = vunpack.c.l.b16 %v761
      %v2254 = vunpack.c.h.b16 %v761
      %v2255 = vunpack.c.l.b16 %v762
      %v2256 = vunpack.c.h.b16 %v762
      %v2257 = vunpack.c.l.b16 %v763
      %v2258 = vunpack.c.h.b16 %v763
      %v2259 = vunpack.c.l.b16 %v764
      %v2260 = vunpack.c.h.b16 %v764
      %v2261 = vunpack.c.l.b16 %v765
      %v2262 = vunpack.c.h.b16 %v765
      %v2263 = vunpack.c.l.b16 %v766
      %v2264 = vunpack.c.h.b16 %v766
      %v2265 = vunpack.c.l.b16 %v767
      %v2266 = vunpack.c.h.b16 %v767
      %v2267 = vunpack.c.l.b16 %v768
      %v2268 = vunpack.c.h.b16 %v768
      %v2269 = vunpack.c.l.b16 %v769
      %v2270 = vunpack.c.h.b16 %v769
      %v2271 = vunpack.c.l.b16 %v770
      %v2272 = vunpack.c.h.b16 %v770
      %v2273 = vunpack.c.l.b16 %v771
      %v2274 = vunpack.c.h.b16 %v771
      %v2275 = vunpack.c.l.b16 %v772
      %v2276 = vunpack.c.h.b16 %v772
      %v2277 = vunpack.c.l.b16 %v773
      %v2278 = vunpack.c.h.b16 %v773
      %v2279 = vunpack.c.l.b16 %v774
      %v2280 = vunpack.c.h.b16 %v774
      %v2281 = vunpack.c.l.b16 %v775
      %v2282 = vunpack.c.h.b16 %v775
      %v2283 = vunpack.c.l.b16 %v776
      %v2284 = vunpack.c.h.b16 %v776
      %v2285 = vunpack.c.l.b16 %v777
      %v2286 = vunpack.c.h.b16 %v777
      %v2287 = vunpack.c.l.b16 %v778
      %v2288 = vunpack.c.h.b16 %v778
      %v2289 = vunpack.c.l.b16 %v779
      %v2290 = vunpack.c.h.b16 %v779
      %v2291 = vunpack.c.l.b16 %v780
      %v2292 = vunpack.c.h.b16 %v780
      %v2293 = vunpack.c.l.b16 %v781
      %v2294 = vunpack.c.h.b16 %v781
      %v2295 = vunpack.c.l.b16 %v782
      %v2296 = vunpack.c.h.b16 %v782
      %v2297 = vunpack.c.l.b16 %v783
      %v2298 = vunpack.c.h.b16 %v783
      %v2299 = vunpack.c.l.b16 %v784
      %v2300 = vunpack.c.h.b16 %v784
      %v2301 = vunpack.c.l.b16 %v785
      %v2302 = vunpack.c.h.b16 %v785
      %v2303 = vunpack.c.l.b16 %v786
      %v2304 = vunpack.c.h.b16 %v786
      %v2305 = vunpack.c.l.b16 %v787
      %v2306 = vunpack.c.h.b16 %v787
      %v2307 = vunpack.c.l.b16 %v788
      %v2308 = vunpack.c.h.b16 %v788
      %v2309 = vunpack.c.l.b16 %v789
      %v2310 = vunpack.c.h.b16 %v789
      %v2311 = vunpack.c.l.b16 %v790
      %v2312 = vunpack.c.h.b16 %v790
      %v2313 = vunpack.c.l.b16 %v791
      %v2314 = vunpack.c.h.b16 %v791
      %v2315 = vunpack.c.l.b16 %v792
      %v2316 = vunpack.c.h.b16 %v792
      %v2317 = vunpack.c.l.b16 %v793
      %v2318 = vunpack.c.h.b16 %v793
      %v2319 = vunpack.c.l.b16 %v794
      %v2320 = vunpack.c.h.b16 %v794
      %v2321 = vunpack.c.l.b16 %v795
      %v2322 = vunpack.c.h.b16 %v795
      %v2323 = vunpack.c.l.b16 %v796
      %v2324 = vunpack.c.h.b16 %v796
      %v2325 = vunpack.c.l.b16 %v797
      %v2326 = vunpack.c.h.b16 %v797
      %v2327 = vunpack.c.l.b16 %v798
      %v2328 = vunpack.c.h.b16 %v798
      %v2329 = vunpack.c.l.b16 %v799
      %v2330 = vunpack.c.h.b16 %v799
      %v2331 = vunpack.c.l.b16 %v800
      %v2332 = vunpack.c.h.b16 %v800
      %v2333 = vunpack.c.l.b16 %v801
      %v2334 = vunpack.c.h.b16 %v801
      %v2335 = vunpack.c.l.b16 %v802
      %v2336 = vunpack.c.h.b16 %v802
      %v2337 = vunpack.c.l.b16 %v803
      %v2338 = vunpack.c.h.b16 %v803
      %v2339 = vunpack.c.l.b16 %v804
      %v2340 = vunpack.c.h.b16 %v804
      %v2341 = vunpack.c.l.b16 %v805
      %v2342 = vunpack.c.h.b16 %v805
      %v2343 = vunpack.c.l.b16 %v806
      %v2344 = vunpack.c.h.b16 %v806
      %v2345 = vunpack.c.l.b16 %v807
      %v2346 = vunpack.c.h.b16 %v807
      %v2347 = vunpack.c.l.b16 %v808
      %v2348 = vunpack.c.h.b16 %v808
      %v2349 = vunpack.c.l.b16 %v809
      %v2350 = vunpack.c.h.b16 %v809
      %v2351 = vunpack.c.l.b16 %v810
      %v2352 = vunpack.c.h.b16 %v810
      %v2353 = vunpack.c.l.b16 %v811
      %v2354 = vunpack.c.h.b16 %v811
      %v2355 = vunpack.c.l.b16 %v812
      %v2356 = vunpack.c.h.b16 %v812
      %v2357 = vunpack.c.l.b16 %v813
      %v2358 = vunpack.c.h.b16 %v813
      %v2359 = vunpack.c.l.b16 %v814
      %v2360 = vunpack.c.h.b16 %v814
      %v2361 = vunpack.c.l.b16 %v815
      %v2362 = vunpack.c.h.b16 %v815
      %v2363 = vunpack.c.l.b16 %v816
      %v2364 = vunpack.c.h.b16 %v816
      %v2365 = vunpack.c.l.b16 %v817
      %v2366 = vunpack.c.h.b16 %v817
      %v2367 = vunpack.c.l.b16 %v818
      %v2368 = vunpack.c.h.b16 %v818
      %v2369 = vunpack.c.l.b16 %v819
      %v2370 = vunpack.c.h.b16 %v819
      %v2371 = vunpack.c.l.b16 %v820
      %v2372 = vunpack.c.h.b16 %v820
      %v2373 = vunpack.c.l.b16 %v821
      %v2374 = vunpack.c.h.b16 %v821
      %v2375 = vunpack.c.l.b16 %v822
      %v2376 = vunpack.c.h.b16 %v822
      %v2377 = vunpack.c.l.b16 %v823
      %v2378 = vunpack.c.h.b16 %v823
      %v2379 = vunpack.c.l.b16 %v824
      %v2380 = vunpack.c.h.b16 %v824
      %v2381 = vunpack.c.l.b16 %v825
      %v2382 = vunpack.c.h.b16 %v825
      %v2383 = vunpack.c.l.b16 %v826
      %v2384 = vunpack.c.h.b16 %v826
      %v2385 = vunpack.c.l.b16 %v827
      %v2386 = vunpack.c.h.b16 %v827
      %v2387 = vunpack.c.l.b16 %v828
      %v2388 = vunpack.c.h.b16 %v828
      %v2389 = vunpack.c.l.b16 %v829
      %v2390 = vunpack.c.h.b16 %v829
      %v2391 = vunpack.c.l.b16 %v830
      %v2392 = vunpack.c.h.b16 %v830
      %v2393 = vunpack.c.l.b16 %v831
      %v2394 = vunpack.c.h.b16 %v831
      %v2395 = vunpack.c.l.b16 %v832
      %v2396 = vunpack.c.h.b16 %v832
      %v2397 = vunpack.c.l.b16 %v833
      %v2398 = vunpack.c.h.b16 %v833
      %v2399 = vunpack.c.l.b16 %v834
      %v2400 = vunpack.c.h.b16 %v834
      %v2401 = vunpack.c.l.b16 %v835
      %v2402 = vunpack.c.h.b16 %v835
      %v2403 = vunpack.c.l.b16 %v836
      %v2404 = vunpack.c.h.b16 %v836
      %v2405 = vunpack.c.l.b16 %v837
      %v2406 = vunpack.c.h.b16 %v837
      %v2407 = vunpack.c.l.b16 %v838
      %v2408 = vunpack.c.h.b16 %v838
      %v2409 = vunpack.c.l.b16 %v839
      %v2410 = vunpack.c.h.b16 %v839
      %v2411 = vunpack.c.l.b16 %v840
      %v2412 = vunpack.c.h.b16 %v840
      %v2413 = vunpack.c.l.b16 %v841
      %v2414 = vunpack.c.h.b16 %v841
      %v2415 = vpack.c.b16 %v1395, %v1391
      %v2416 = vpack.c.b16 %v1396, %v1392
      %v2417 = vpack.c.b16 %v1397, %v1393
      %v2418 = vpack.c.b16 %v1398, %v1394
      %v2419 = vpack.c.b16 %v1403, %v1399
      %v2420 = vpack.c.b16 %v1404, %v1400
      %v2421 = vpack.c.b16 %v1405, %v1401
      %v2422 = vpack.c.b16 %v1406, %v1402
      %v2423 = vpack.c.b16 %v1411, %v1407
      %v2424 = vpack.c.b16 %v1412, %v1408
      %v2425 = vpack.c.b16 %v1413, %v1409
      %v2426 = vpack.c.b16 %v1414, %v1410
      %v2427 = vpack.c.b16 %v1419, %v1415
      %v2428 = vpack.c.b16 %v1420, %v1416
      %v2429 = vpack.c.b16 %v1421, %v1417
      %v2430 = vpack.c.b16 %v1422, %v1418
      %v2431 = vpack.c.b16 %v1427, %v1423
      %v2432 = vpack.c.b16 %v1428, %v1424
      %v2433 = vpack.c.b16 %v1429, %v1425
      %v2434 = vpack.c.b16 %v1430, %v1426
      %v2435 = vpack.c.b16 %v1435, %v1431
      %v2436 = vpack.c.b16 %v1436, %v1432
      %v2437 = vpack.c.b16 %v1437, %v1433
      %v2438 = vpack.c.b16 %v1438, %v1434
      %v2439 = vpack.c.b16 %v1443, %v1439
      %v2440 = vpack.c.b16 %v1444, %v1440
      %v2441 = vpack.c.b16 %v1445, %v1441
      %v2442 = vpack.c.b16 %v1446, %v1442
      %v2443 = vpack.c.b16 %v1451, %v1447
      %v2444 = vpack.c.b16 %v1452, %v1448
      %v2445 = vpack.c.b16 %v1453, %v1449
      %v2446 = vpack.c.b16 %v1454, %v1450
      %v2447 = vpack.c.b16 %v1459, %v1455
      %v2448 = vpack.c.b16 %v1460, %v1456
      %v2449 = vpack.c.b16 %v1461, %v1457
      %v2450 = vpack.c.b16 %v1462, %v1458
      %v2451 = vpack.c.b16 %v1467, %v1463
      %v2452 = vpack.c.b16 %v1468, %v1464
      %v2453 = vpack.c.b16 %v1469, %v1465
      %v2454 = vpack.c.b16 %v1470, %v1466
      %v2455 = vpack.c.b16 %v1475, %v1471
      %v2456 = vpack.c.b16 %v1476, %v1472
      %v2457 = vpack.c.b16 %v1477, %v1473
      %v2458 = vpack.c.b16 %v1478, %v1474
      %v2459 = vpack.c.b16 %v1483, %v1479
      %v2460 = vpack.c.b16 %v1484, %v1480
      %v2461 = vpack.c.b16 %v1485, %v1481
      %v2462 = vpack.c.b16 %v1486, %v1482
      %v2463 = vpack.c.b16 %v1491, %v1487
      %v2464 = vpack.c.b16 %v1492, %v1488
      %v2465 = vpack.c.b16 %v1493, %v1489
      %v2466 = vpack.c.b16 %v1494, %v1490
      %v2467 = vpack.c.b16 %v1499, %v1495
      %v2468 = vpack.c.b16 %v1500, %v1496
      %v2469 = vpack.c.b16 %v1501, %v1497
      %v2470 = vpack.c.b16 %v1502, %v1498
      %v2471 = vpack.c.b16 %v1507, %v1503
      %v2472 = vpack.c.b16 %v1508, %v1504
      %v2473 = vpack.c.b16 %v1509, %v1505
      %v2474 = vpack.c.b16 %v1510, %v1506
      %v2475 = vpack.c.b16 %v1515, %v1511
      %v2476 = vpack.c.b16 %v1516, %v1512
      %v2477 = vpack.c.b16 %v1517, %v1513
      %v2478 = vpack.c.b16 %v1518, %v1514
      %v2479 = vpack.c.b16 %v1523, %v1519
      %v2480 = vpack.c.b16 %v1524, %v1520
      %v2481 = vpack.c.b16 %v1525, %v1521
      %v2482 = vpack.c.b16 %v1526, %v1522
      %v2483 = vpack.c.b16 %v1531, %v1527
      %v2484 = vpack.c.b16 %v1532, %v1528
      %v2485 = vpack.c.b16 %v1533, %v1529
      %v2486 = vpack.c.b16 %v1534, %v1530
      %v2487 = vpack.c.b16 %v1539, %v1535
      %v2488 = vpack.c.b16 %v1540, %v1536
      %v2489 = vpack.c.b16 %v1541, %v1537
      %v2490 = vpack.c.b16 %v1542, %v1538
      %v2491 = vpack.c.b16 %v1547, %v1543
      %v2492 = vpack.c.b16 %v1548, %v1544
      %v2493 = vpack.c.b16 %v1549, %v1545
      %v2494 = vpack.c.b16 %v1550, %v1546
      %v2495 = vpack.c.b16 %v1555, %v1551
      %v2496 = vpack.c.b16 %v1556, %v1552
      %v2497 = vpack.c.b16 %v1557, %v1553
      %v2498 = vpack.c.b16 %v1558, %v1554
      %v2499 = vpack.c.b16 %v1563, %v1559
      %v2500 = vpack.c.b16 %v1564, %v1560
      %v2501 = vpack.c.b16 %v1565, %v1561
      %v2502 = vpack.c.b16 %v1566, %v1562
      %v2503 = vpack.c.b16 %v1571, %v1567
      %v2504 = vpack.c.b16 %v1572, %v1568
      %v2505 = vpack.c.b16 %v1573, %v1569
      %v2506 = vpack.c.b16 %v1574, %v1570
      %v2507 = vpack.c.b16 %v1579, %v1575
      %v2508 = vpack.c.b16 %v1580, %v1576
      %v2509 = vpack.c.b16 %v1581, %v1577
      %v2510 = vpack.c.b16 %v1582, %v1578
      %v2511 = vpack.c.b16 %v1587, %v1583
      %v2512 = vpack.c.b16 %v1588, %v1584
      %v2513 = vpack.c.b16 %v1589, %v1585
      %v2514 = vpack.c.b16 %v1590, %v1586
      %v2515 = vpack.c.b16 %v1595, %v1591
      %v2516 = vpack.c.b16 %v1596, %v1592
      %v2517 = vpack.c.b16 %v1597, %v1593
      %v2518 = vpack.c.b16 %v1598, %v1594
      %v2519 = vpack.c.b16 %v1603, %v1599
      %v2520 = vpack.c.b16 %v1604, %v1600
      %v2521 = vpack.c.b16 %v1605, %v1601
      %v2522 = vpack.c.b16 %v1606, %v1602
      %v2523 = vpack.c.b16 %v1611, %v1607
      %v2524 = vpack.c.b16 %v1612, %v1608
      %v2525 = vpack.c.b16 %v1613, %v1609
      %v2526 = vpack.c.b16 %v1614, %v1610
      %v2527 = vpack.c.b16 %v1619, %v1615
      %v2528 = vpack.c.b16 %v1620, %v1616
      %v2529 = vpack.c.b16 %v1621, %v1617
      %v2530 = vpack.c.b16 %v1622, %v1618
      %v2531 = vpack.c.b16 %v1627, %v1623
      %v2532 = vpack.c.b16 %v1628, %v1624
      %v2533 = vpack.c.b16 %v1629, %v1625
      %v2534 = vpack.c.b16 %v1630, %v1626
      %v2535 = vpack.c.b16 %v1635, %v1631
      %v2536 = vpack.c.b16 %v1636, %v1632
      %v2537 = vpack.c.b16 %v1637, %v1633
      %v2538 = vpack.c.b16 %v1638, %v1634
      %v2539 = vpack.c.b16 %v1643, %v1639
      %v2540 = vpack.c.b16 %v1644, %v1640
      %v2541 = vpack.c.b16 %v1645, %v1641
      %v2542 = vpack.c.b16 %v1646, %v1642
      %v2543 = vpack.c.b16 %v1651, %v1647
      %v2544 = vpack.c.b16 %v1652, %v1648
      %v2545 = vpack.c.b16 %v1653, %v1649
      %v2546 = vpack.c.b16 %v1654, %v1650
      %v2547 = vpack.c.b16 %v1659, %v1655
      %v2548 = vpack.c.b16 %v1660, %v1656
      %v2549 = vpack.c.b16 %v1661, %v1657
      %v2550 = vpack.c.b16 %v1662, %v1658
      %v2551 = vpack.c.b16 %v1667, %v1663
      %v2552 = vpack.c.b16 %v1668, %v1664
      %v2553 = vpack.c.b16 %v1669, %v1665
      %v2554 = vpack.c.b16 %v1670, %v1666
      %v2555 = vpack.c.b16 %v1675, %v1671
      %v2556 = vpack.c.b16 %v1676, %v1672
      %v2557 = vpack.c.b16 %v1677, %v1673
      %v2558 = vpack.c.b16 %v1678, %v1674
      %v2559 = vpack.c.b16 %v1683, %v1679
      %v2560 = vpack.c.b16 %v1684, %v1680
      %v2561 = vpack.c.b16 %v1685, %v1681
      %v2562 = vpack.c.b16 %v1686, %v1682
      %v2563 = vpack.c.b16 %v1691, %v1687
      %v2564 = vpack.c.b16 %v1692, %v1688
      %v2565 = vpack.c.b16 %v1693, %v1689
      %v2566 = vpack.c.b16 %v1694, %v1690
      %v2567 = vpack.c.b16 %v1699, %v1695
      %v2568 = vpack.c.b16 %v1700, %v1696
      %v2569 = vpack.c.b16 %v1701, %v1697
      %v2570 = vpack.c.b16 %v1702, %v1698
      %v2571 = vpack.c.b16 %v1707, %v1703
      %v2572 = vpack.c.b16 %v1708, %v1704
      %v2573 = vpack.c.b16 %v1709, %v1705
      %v2574 = vpack.c.b16 %v1710, %v1706
      %v2575 = vpack.c.b16 %v1715, %v1711
      %v2576 = vpack.c.b16 %v1716, %v1712
      %v2577 = vpack.c.b16 %v1717, %v1713
      %v2578 = vpack.c.b16 %v1718, %v1714
      %v2579 = vpack.c.b16 %v1723, %v1719
      %v2580 = vpack.c.b16 %v1724, %v1720
      %v2581 = vpack.c.b16 %v1725, %v1721
      %v2582 = vpack.c.b16 %v1726, %v1722
      %v2583 = vpack.c.b16 %v1731, %v1727
      %v2584 = vpack.c.b16 %v1732, %v1728
      %v2585 = vpack.c.b16 %v1733, %v1729
      %v2586 = vpack.c.b16 %v1734, %v1730
      %v2587 = vpack.c.b16 %v1739, %v1735
      %v2588 = vpack.c.b16 %v1740, %v1736
      %v2589 = vpack.c.b16 %v1741, %v1737
      %v2590 = vpack.c.b16 %v1742, %v1738
      %v2591 = vpack.c.b16 %v1747, %v1743
      %v2592 = vpack.c.b16 %v1748, %v1744
      %v2593 = vpack.c.b16 %v1749, %v1745
      %v2594 = vpack.c.b16 %v1750, %v1746
      %v2595 = vpack.c.b16 %v1755, %v1751
      %v2596 = vpack.c.b16 %v1756, %v1752
      %v2597 = vpack.c.b16 %v1757, %v1753
      %v2598 = vpack.c.b16 %v1758, %v1754
      %v2599 = vpack.c.b16 %v1763, %v1759
      %v2600 = vpack.c.b16 %v1764, %v1760
      %v2601 = vpack.c.b16 %v1765, %v1761
      %v2602 = vpack.c.b16 %v1766, %v1762
      %v2603 = vpack.c.b16 %v1771, %v1767
      %v2604 = vpack.c.b16 %v1772, %v1768
      %v2605 = vpack.c.b16 %v1773, %v1769
      %v2606 = vpack.c.b16 %v1774, %v1770
      %v2607 = vpack.c.b16 %v1779, %v1775
      %v2608 = vpack.c.b16 %v1780, %v1776
      %v2609 = vpack.c.b16 %v1781, %v1777
      %v2610 = vpack.c.b16 %v1782, %v1778
      %v2611 = vpack.c.b16 %v1787, %v1783
      %v2612 = vpack.c.b16 %v1788, %v1784
      %v2613 = vpack.c.b16 %v1789, %v1785
      %v2614 = vpack.c.b16 %v1790, %v1786
      %v2615 = vpack.c.b16 %v1795, %v1791
      %v2616 = vpack.c.b16 %v1796, %v1792
      %v2617 = vpack.c.b16 %v1797, %v1793
      %v2618 = vpack.c.b16 %v1798, %v1794
      %v2619 = vpack.c.b16 %v1803, %v1799
      %v2620 = vpack.c.b16 %v1804, %v1800
      %v2621 = vpack.c.b16 %v1805, %v1801
      %v2622 = vpack.c.b16 %v1806, %v1802
      %v2623 = vpack.c.b16 %v1811, %v1807
      %v2624 = vpack.c.b16 %v1812, %v1808
      %v2625 = vpack.c.b16 %v1813, %v1809
      %v2626 = vpack.c.b16 %v1814, %v1810
      %v2627 = vpack.c.b16 %v1819, %v1815
      %v2628 = vpack.c.b16 %v1820, %v1816
      %v2629 = vpack.c.b16 %v1821, %v1817
      %v2630 = vpack.c.b16 %v1822, %v1818
      %v2631 = vpack.c.b16 %v1827, %v1823
      %v2632 = vpack.c.b16 %v1828, %v1824
      %v2633 = vpack.c.b16 %v1829, %v1825
      %v2634 = vpack.c.b16 %v1830, %v1826
      %v2635 = vpack.c.b16 %v1835, %v1831
      %v2636 = vpack.c.b16 %v1836, %v1832
      %v2637 = vpack.c.b16 %v1837, %v1833
      %v2638 = vpack.c.b16 %v1838, %v1834
      %v2639 = vpack.c.b16 %v1843, %v1839
      %v2640 = vpack.c.b16 %v1844, %v1840
      %v2641 = vpack.c.b16 %v1845, %v1841
      %v2642 = vpack.c.b16 %v1846, %v1842
      %v2643 = vpack.c.b16 %v1851, %v1847
      %v2644 = vpack.c.b16 %v1852, %v1848
      %v2645 = vpack.c.b16 %v1853, %v1849
      %v2646 = vpack.c.b16 %v1854, %v1850
      %v2647 = vpack.c.b16 %v1859, %v1855
      %v2648 = vpack.c.b16 %v1860, %v1856
      %v2649 = vpack.c.b16 %v1861, %v1857
      %v2650 = vpack.c.b16 %v1862, %v1858
      %v2651 = vpack.c.b16 %v1867, %v1863
      %v2652 = vpack.c.b16 %v1868, %v1864
      %v2653 = vpack.c.b16 %v1869, %v1865
      %v2654 = vpack.c.b16 %v1870, %v1866
      %v2655 = vpack.c.b16 %v1875, %v1871
      %v2656 = vpack.c.b16 %v1876, %v1872
      %v2657 = vpack.c.b16 %v1877, %v1873
      %v2658 = vpack.c.b16 %v1878, %v1874
      %v2659 = vpack.c.b16 %v1883, %v1879
      %v2660 = vpack.c.b16 %v1884, %v1880
      %v2661 = vpack.c.b16 %v1885, %v1881
      %v2662 = vpack.c.b16 %v1886, %v1882
      %v2663 = vpack.c.b16 %v1891, %v1887
      %v2664 = vpack.c.b16 %v1892, %v1888
      %v2665 = vpack.c.b16 %v1893, %v1889
      %v2666 = vpack.c.b16 %v1894, %v1890
      %v2667 = vpack.c.b16 %v1899, %v1895
      %v2668 = vpack.c.b16 %v1900, %v1896
      %v2669 = vpack.c.b16 %v1901, %v1897
      %v2670 = vpack.c.b16 %v1902, %v1898
      %v2671 = vpack.c.b16 %v1907, %v1903
      %v2672 = vpack.c.b16 %v1908, %v1904
      %v2673 = vpack.c.b16 %v1909, %v1905
      %v2674 = vpack.c.b16 %v1910, %v1906
      %v2675 = vpack.c.b16 %v1915, %v1911
      %v2676 = vpack.c.b16 %v1916, %v1912
      %v2677 = vpack.c.b16 %v1917, %v1913
      %v2678 = vpack.c.b16 %v1918, %v1914
      %v2679 = vpack.c.b16 %v1923, %v1919
      %v2680 = vpack.c.b16 %v1924, %v1920
      %v2681 = vpack.c.b16 %v1925, %v1921
      %v2682 = vpack.c.b16 %v1926, %v1922
      %v2683 = vpack.c.b16 %v1931, %v1927
      %v2684 = vpack.c.b16 %v1932, %v1928
      %v2685 = vpack.c.b16 %v1933, %v1929
      %v2686 = vpack.c.b16 %v1934, %v1930
      %v2687 = vpack.c.b16 %v1939, %v1935
      %v2688 = vpack.c.b16 %v1940, %v1936
      %v2689 = vpack.c.b16 %v1941, %v1937
      %v2690 = vpack.c.b16 %v1942, %v1938
      %v2691 = vpack.c.b16 %v1947, %v1943
      %v2692 = vpack.c.b16 %v1948, %v1944
      %v2693 = vpack.c.b16 %v1949, %v1945
      %v2694 = vpack.c.b16 %v1950, %v1946
      %v2695 = vpack.c.b16 %v1955, %v1951
      %v2696 = vpack.c.b16 %v1956, %v1952
      %v2697 = vpack.c.b16 %v1957, %v1953
      %v2698 = vpack.c.b16 %v1958, %v1954
      %v2699 = vpack.c.b16 %v1963, %v1959
      %v2700 = vpack.c.b16 %v1964, %v1960
      %v2701 = vpack.c.b16 %v1965, %v1961
      %v2702 = vpack.c.b16 %v1966, %v1962
      %v2703 = vpack.c.b16 %v1971, %v1967
      %v2704 = vpack.c.b16 %v1972, %v1968
      %v2705 = vpack.c.b16 %v1973, %v1969
      %v2706 = vpack.c.b16 %v1974, %v1970
      %v2707 = vpack.c.b16 %v1979, %v1975
      %v2708 = vpack.c.b16 %v1980, %v1976
      %v2709 = vpack.c.b16 %v1981, %v1977
      %v2710 = vpack.c.b16 %v1982, %v1978
      %v2711 = vpack.c.b16 %v1987, %v1983
      %v2712 = vpack.c.b16 %v1988, %v1984
      %v2713 = vpack.c.b16 %v1989, %v1985
      %v2714 = vpack.c.b16 %v1990, %v1986
      %v2715 = vpack.c.b16 %v1995, %v1991
      %v2716 = vpack.c.b16 %v1996, %v1992
      %v2717 = vpack.c.b16 %v1997, %v1993
      %v2718 = vpack.c.b16 %v1998, %v1994
      %v2719 = vpack.c.b16 %v2003, %v1999
      %v2720 = vpack.c.b16 %v2004, %v2000
      %v2721 = vpack.c.b16 %v2005, %v2001
      %v2722 = vpack.c.b16 %v2006, %v2002
      %v2723 = vpack.c.b16 %v2011, %v2007
      %v2724 = vpack.c.b16 %v2012, %v2008
      %v2725 = vpack.c.b16 %v2013, %v2009
      %v2726 = vpack.c.b16 %v2014, %v2010
      %v2727 = vpack.c.b16 %v2019, %v2015
      %v2728 = vpack.c.b16 %v2020, %v2016
      %v2729 = vpack.c.b16 %v2021, %v2017
      %v2730 = vpack.c.b16 %v2022, %v2018
      %v2731 = vpack.c.b16 %v2027, %v2023
      %v2732 = vpack.c.b16 %v2028, %v2024
      %v2733 = vpack.c.b16 %v2029, %v2025
      %v2734 = vpack.c.b16 %v2030, %v2026
      %v2735 = vpack.c.b16 %v2035, %v2031
      %v2736 = vpack.c.b16 %v2036, %v2032
      %v2737 = vpack.c.b16 %v2037, %v2033
      %v2738 = vpack.c.b16 %v2038, %v2034
      %v2739 = vpack.c.b16 %v2043, %v2039
      %v2740 = vpack.c.b16 %v2044, %v2040
      %v2741 = vpack.c.b16 %v2045, %v2041
      %v2742 = vpack.c.b16 %v2046, %v2042
      %v2743 = vpack.c.b16 %v2051, %v2047
      %v2744 = vpack.c.b16 %v2052, %v2048
      %v2745 = vpack.c.b16 %v2053, %v2049
      %v2746 = vpack.c.b16 %v2054, %v2050
      %v2747 = vpack.c.b16 %v2059, %v2055
      %v2748 = vpack.c.b16 %v2060, %v2056
      %v2749 = vpack.c.b16 %v2061, %v2057
      %v2750 = vpack.c.b16 %v2062, %v2058
      %v2751 = vpack.c.b16 %v2067, %v2063
      %v2752 = vpack.c.b16 %v2068, %v2064
      %v2753 = vpack.c.b16 %v2069, %v2065
      %v2754 = vpack.c.b16 %v2070, %v2066
      %v2755 = vpack.c.b16 %v2075, %v2071
      %v2756 = vpack.c.b16 %v2076, %v2072
      %v2757 = vpack.c.b16 %v2077, %v2073
      %v2758 = vpack.c.b16 %v2078, %v2074
      %v2759 = vpack.c.b16 %v2083, %v2079
      %v2760 = vpack.c.b16 %v2084, %v2080
      %v2761 = vpack.c.b16 %v2085, %v2081
      %v2762 = vpack.c.b16 %v2086, %v2082
      %v2763 = vpack.c.b16 %v2091, %v2087
      %v2764 = vpack.c.b16 %v2092, %v2088
      %v2765 = vpack.c.b16 %v2093, %v2089
      %v2766 = vpack.c.b16 %v2094, %v2090
      %v2767 = vpack.c.b16 %v2099, %v2095
      %v2768 = vpack.c.b16 %v2100, %v2096
      %v2769 = vpack.c.b16 %v2101, %v2097
      %v2770 = vpack.c.b16 %v2102, %v2098
      %v2771 = vpack.c.b16 %v2107, %v2103
      %v2772 = vpack.c.b16 %v2108, %v2104
      %v2773 = vpack.c.b16 %v2109, %v2105
      %v2774 = vpack.c.b16 %v2110, %v2106
      %v2775 = vpack.c.b16 %v2115, %v2111
      %v2776 = vpack.c.b16 %v2116, %v2112
      %v2777 = vpack.c.b16 %v2117, %v2113
      %v2778 = vpack.c.b16 %v2118, %v2114
      %v2779 = vpack.c.b16 %v2123, %v2119
      %v2780 = vpack.c.b16 %v2124, %v2120
      %v2781 = vpack.c.b16 %v2125, %v2121
      %v2782 = vpack.c.b16 %v2126, %v2122
      %v2783 = vpack.c.b16 %v2131, %v2127
      %v2784 = vpack.c.b16 %v2132, %v2128
      %v2785 = vpack.c.b16 %v2133, %v2129
      %v2786 = vpack.c.b16 %v2134, %v2130
      %v2787 = vpack.c.b16 %v2139, %v2135
      %v2788 = vpack.c.b16 %v2140, %v2136
      %v2789 = vpack.c.b16 %v2141, %v2137
      %v2790 = vpack.c.b16 %v2142, %v2138
      %v2791 = vpack.c.b16 %v2147, %v2143
      %v2792 = vpack.c.b16 %v2148, %v2144
      %v2793 = vpack.c.b16 %v2149, %v2145
      %v2794 = vpack.c.b16 %v2150, %v2146
      %v2795 = vpack.c.b16 %v2155, %v2151
      %v2796 = vpack.c.b16 %v2156, %v2152
      %v2797 = vpack.c.b16 %v2157, %v2153
      %v2798 = vpack.c.b16 %v2158, %v2154
      %v2799 = vpack.c.b16 %v2163, %v2159
      %v2800 = vpack.c.b16 %v2164, %v2160
      %v2801 = vpack.c.b16 %v2165, %v2161
      %v2802 = vpack.c.b16 %v2166, %v2162
      %v2803 = vpack.c.b16 %v2171, %v2167
      %v2804 = vpack.c.b16 %v2172, %v2168
      %v2805 = vpack.c.b16 %v2173, %v2169
      %v2806 = vpack.c.b16 %v2174, %v2170
      %v2807 = vpack.c.b16 %v2179, %v2175
      %v2808 = vpack.c.b16 %v2180, %v2176
      %v2809 = vpack.c.b16 %v2181, %v2177
      %v2810 = vpack.c.b16 %v2182, %v2178
      %v2811 = vpack.c.b16 %v2187, %v2183
      %v2812 = vpack.c.b16 %v2188, %v2184
      %v2813 = vpack.c.b16 %v2189, %v2185
      %v2814 = vpack.c.b16 %v2190, %v2186
      %v2815 = vpack.c.b16 %v2195, %v2191
      %v2816 = vpack.c.b16 %v2196, %v2192
      %v2817 = vpack.c.b16 %v2197, %v2193
      %v2818 = vpack.c.b16 %v2198, %v2194
      %v2819 = vpack.c.b16 %v2203, %v2199
      %v2820 = vpack.c.b16 %v2204, %v2200
      %v2821 = vpack.c.b16 %v2205, %v2201
      %v2822 = vpack.c.b16 %v2206, %v2202
      %v2823 = vpack.c.b16 %v2211, %v2207
      %v2824 = vpack.c.b16 %v2212, %v2208
      %v2825 = vpack.c.b16 %v2213, %v2209
      %v2826 = vpack.c.b16 %v2214, %v2210
      %v2827 = vpack.c.b16 %v2219, %v2215
      %v2828 = vpack.c.b16 %v2220, %v2216
      %v2829 = vpack.c.b16 %v2221, %v2217
      %v2830 = vpack.c.b16 %v2222, %v2218
      %v2831 = vpack.c.b16 %v2227, %v2223
      %v2832 = vpack.c.b16 %v2228, %v2224
      %v2833 = vpack.c.b16 %v2229, %v2225
      %v2834 = vpack.c.b16 %v2230, %v2226
      %v2835 = vpack.c.b16 %v2235, %v2231
      %v2836 = vpack.c.b16 %v2236, %v2232
      %v2837 = vpack.c.b16 %v2237, %v2233
      %v2838 = vpack.c.b16 %v2238, %v2234
      %v2839 = vpack.c.b16 %v2243, %v2239
      %v2840 = vpack.c.b16 %v2244, %v2240
      %v2841 = vpack.c.b16 %v2245, %v2241
      %v2842 = vpack.c.b16 %v2246, %v2242
      %v2843 = vpack.c.b16 %v2251, %v2247
      %v2844 = vpack.c.b16 %v2252, %v2248
      %v2845 = vpack.c.b16 %v2253, %v2249
      %v2846 = vpack.c.b16 %v2254, %v2250
      %v2847 = vpack.c.b16 %v2259, %v2255
      %v2848 = vpack.c.b16 %v2260, %v2256
      %v2849 = vpack.c.b16 %v2261, %v2257
      %v2850 = vpack.c.b16 %v2262, %v2258
      %v2851 = vpack.c.b16 %v2267, %v2263
      %v2852 = vpack.c.b16 %v2268, %v2264
      %v2853 = vpack.c.b16 %v2269, %v2265
      %v2854 = vpack.c.b16 %v2270, %v2266
      %v2855 = vpack.c.b16 %v2275, %v2271
      %v2856 = vpack.c.b16 %v2276, %v2272
      %v2857 = vpack.c.b16 %v2277, %v2273
      %v2858 = vpack.c.b16 %v2278, %v2274
      %v2859 = vpack.c.b16 %v2283, %v2279
      %v2860 = vpack.c.b16 %v2284, %v2280
      %v2861 = vpack.c.b16 %v2285, %v2281
      %v2862 = vpack.c.b16 %v2286, %v2282
      %v2863 = vpack.c.b16 %v2291, %v2287
      %v2864 = vpack.c.b16 %v2292, %v2288
      %v2865 = vpack.c.b16 %v2293, %v2289
      %v2866 = vpack.c.b16 %v2294, %v2290
      %v2867 = vpack.c.b16 %v2299, %v2295
      %v2868 = vpack.c.b16 %v2300, %v2296
      %v2869 = vpack.c.b16 %v2301, %v2297
      %v2870 = vpack.c.b16 %v2302, %v2298
      %v2871 = vpack.c.b16 %v2307, %v2303
      %v2872 = vpack.c.b16 %v2308, %v2304
      %v2873 = vpack.c.b16 %v2309, %v2305
      %v2874 = vpack.c.b16 %v2310, %v2306
      %v2875 = vpack.c.b16 %v2315, %v2311
      %v2876 = vpack.c.b16 %v2316, %v2312
      %v2877 = vpack.c.b16 %v2317, %v2313
      %v2878 = vpack.c.b16 %v2318, %v2314
      %v2879 = vpack.c.b16 %v2323, %v2319
      %v2880 = vpack.c.b16 %v2324, %v2320
      %v2881 = vpack.c.b16 %v2325, %v2321
      %v2882 = vpack.c.b16 %v2326, %v2322
      %v2883 = vpack.c.b16 %v2331, %v2327
      %v2884 = vpack.c.b16 %v2332, %v2328
      %v2885 = vpack.c.b16 %v2333, %v2329
      %v2886 = vpack.c.b16 %v2334, %v2330
      %v2887 = vpack.c.b16 %v2339, %v2335
      %v2888 = vpack.c.b16 %v2340, %v2336
      %v2889 = vpack.c.b16 %v2341, %v2337
      %v2890 = vpack.c.b16 %v2342, %v2338
      %v2891 = vpack.c.b16 %v2347, %v2343
      %v2892 = vpack.c.b16 %v2348, %v2344
      %v2893 = vpack.c.b16 %v2349, %v2345
      %v2894 = vpack.c.b16 %v2350, %v2346
      %v2895 = vpack.c.b16 %v2355, %v2351
      %v2896 = vpack.c.b16 %v2356, %v2352
      %v2897 = vpack.c.b16 %v2357, %v2353
      %v2898 = vpack.c.b16 %v2358, %v2354
      %v2899 = vpack.c.b16 %v2363, %v2359
      %v2900 = vpack.c.b16 %v2364, %v2360
      %v2901 = vpack.c.b16 %v2365, %v2361
      %v2902 = vpack.c.b16 %v2366, %v2362
      %v2903 = vpack.c.b16 %v2371, %v2367
      %v2904 = vpack.c.b16 %v2372, %v2368
      %v2905 = vpack.c.b16 %v2373, %v2369
      %v2906 = vpack.c.b16 %v2374, %v2370
      %v2907 = vpack.c.b16 %v2379, %v2375
      %v2908 = vpack.c.b16 %v2380, %v2376
      %v2909 = vpack.c.b16 %v2381, %v2377
      %v2910 = vpack.c.b16 %v2382, %v2378
      %v2911 = vpack.c.b16 %v2387, %v2383
      %v2912 = vpack.c.b16 %v2388, %v2384
      %v2913 = vpack.c.b16 %v2389, %v2385
      %v2914 = vpack.c.b16 %v2390, %v2386
      %v2915 = vpack.c.b16 %v2395, %v2391
      %v2916 = vpack.c.b16 %v2396, %v2392
      %v2917 = vpack.c.b16 %v2397, %v2393
      %v2918 = vpack.c.b16 %v2398, %v2394
      %v2919 = vpack.c.b16 %v2403, %v2399
      %v2920 = vpack.c.b16 %v2404, %v2400
      %v2921 = vpack.c.b16 %v2405, %v2401
      %v2922 = vpack.c.b16 %v2406, %v2402
      %v2923 = vpack.c.b16 %v2411, %v2407
      %v2924 = vpack.c.b16 %v2412, %v2408
      %v2925 = vpack.c.b16 %v2413, %v2409
      %v2926 = vpack.c.b16 %v2414, %v2410
      %v3440 = vperm.slane %v842, 0
      %v3441 = vperm.slane %v842, 1
      %v3442 = vperm.slane %v842, 2
      %v3443 = vperm.slane %v842, 3
      %3448 = vmatpush.bf16.msra.mxu0 %v2443
      %3449 = vmatpush.bf16.msra.mxu0 %v2439
      %3450 = vmatpush.bf16.msra.mxu0 %v2435
      %3451 = vmatpush.bf16.msra.mxu0 %v2431
      %3452 = vmatpush.bf16.msra.mxu0 %v2427
      %3453 = vmatpush.bf16.msra.mxu0 %v2423
      %3454 = vmatpush.bf16.msra.mxu0 %v2419
      %3455 = vmatpush.bf16.msra.mxu0 %v2415
      %3456 = vmatmul.bf16.gmra.mxu0 %v845
      %v3457 = vpop.f32.mrf.mxu0
      %v3458 = vadd.f32 %v3440, %v3457
      %v3459 = vpop.f32.mrf.mxu0
      %3460 = vdwg.mxu0
      %3461 = vmatpush.bf16.msra.mxu0 %v2475
      %3462 = vmatpush.bf16.msra.mxu0 %v2471
      %3463 = vmatpush.bf16.msra.mxu0 %v2467
      %3464 = vmatpush.bf16.msra.mxu0 %v2463
      %3465 = vmatpush.bf16.msra.mxu0 %v2459
      %3466 = vmatpush.bf16.msra.mxu0 %v2455
      %3467 = vmatpush.bf16.msra.mxu0 %v2451
      %3468 = vmatpush.bf16.msra.mxu0 %v2447
      %3469 = vmatmul.bf16.gmra.mxu0 %v846
      %v3470 = vpop.f32.mrf.mxu0
      %v3471 = vadd.f32 %v3458, %v3470
      %v3472 = vpop.f32.mrf.mxu0
      %3473 = vdwg.mxu0
      %3474 = vmatpush.bf16.msra.mxu0 %v2507
      %3475 = vmatpush.bf16.msra.mxu0 %v2503
      %3476 = vmatpush.bf16.msra.mxu0 %v2499
      %3477 = vmatpush.bf16.msra.mxu0 %v2495
      %3478 = vmatpush.bf16.msra.mxu0 %v2491
      %3479 = vmatpush.bf16.msra.mxu0 %v2487
      %3480 = vmatpush.bf16.msra.mxu0 %v2483
      %3481 = vmatpush.bf16.msra.mxu0 %v2479
      %3482 = vmatmul.bf16.gmra.mxu0 %v847
      %v3483 = vpop.f32.mrf.mxu0
      %v3484 = vadd.f32 %v3471, %v3483
      %v3485 = vpop.f32.mrf.mxu0
      %3486 = vdwg.mxu0
      %3487 = vmatpush.bf16.msra.mxu0 %v2539
      %3488 = vmatpush.bf16.msra.mxu0 %v2535
      %3489 = vmatpush.bf16.msra.mxu0 %v2531
      %3490 = vmatpush.bf16.msra.mxu0 %v2527
      %3491 = vmatpush.bf16.msra.mxu0 %v2523
      %3492 = vmatpush.bf16.msra.mxu0 %v2519
      %3493 = vmatpush.bf16.msra.mxu0 %v2515
      %3494 = vmatpush.bf16.msra.mxu0 %v2511
      %3495 = vmatmul.bf16.gmra.mxu0 %v848
      %v3496 = vpop.f32.mrf.mxu0
      %v3497 = vadd.f32 %v3484, %v3496
      %v3498 = vpop.f32.mrf.mxu0
      %3499 = vdwg.mxu0
      %3500 = vmatpush.bf16.msra.mxu0 %v2571
      %3501 = vmatpush.bf16.msra.mxu0 %v2567
      %3502 = vmatpush.bf16.msra.mxu0 %v2563
      %3503 = vmatpush.bf16.msra.mxu0 %v2559
      %3504 = vmatpush.bf16.msra.mxu0 %v2555
      %3505 = vmatpush.bf16.msra.mxu0 %v2551
      %3506 = vmatpush.bf16.msra.mxu0 %v2547
      %3507 = vmatpush.bf16.msra.mxu0 %v2543
      %3508 = vmatmul.bf16.gmra.mxu0 %v849
      %v3509 = vpop.f32.mrf.mxu0
      %v3510 = vadd.f32 %v3497, %v3509
      %v3511 = vpop.f32.mrf.mxu0
      %3512 = vdwg.mxu0
      %3513 = vmatpush.bf16.msra.mxu0 %v2603
      %3514 = vmatpush.bf16.msra.mxu0 %v2599
      %3515 = vmatpush.bf16.msra.mxu0 %v2595
      %3516 = vmatpush.bf16.msra.mxu0 %v2591
      %3517 = vmatpush.bf16.msra.mxu0 %v2587
      %3518 = vmatpush.bf16.msra.mxu0 %v2583
      %3519 = vmatpush.bf16.msra.mxu0 %v2579
      %3520 = vmatpush.bf16.msra.mxu0 %v2575
      %3521 = vmatmul.bf16.gmra.mxu0 %v850
      %v3522 = vpop.f32.mrf.mxu0
      %v3523 = vadd.f32 %v3510, %v3522
      %v3524 = vpop.f32.mrf.mxu0
      %3525 = vdwg.mxu0
      %3526 = vmatpush.bf16.msra.mxu0 %v2635
      %3527 = vmatpush.bf16.msra.mxu0 %v2631
      %3528 = vmatpush.bf16.msra.mxu0 %v2627
      %3529 = vmatpush.bf16.msra.mxu0 %v2623
      %3530 = vmatpush.bf16.msra.mxu0 %v2619
      %3531 = vmatpush.bf16.msra.mxu0 %v2615
      %3532 = vmatpush.bf16.msra.mxu0 %v2611
      %3533 = vmatpush.bf16.msra.mxu0 %v2607
      %3534 = vmatmul.bf16.gmra.mxu0 %v851
      %v3535 = vpop.f32.mrf.mxu0
      %v3536 = vadd.f32 %v3523, %v3535
      %v3537 = vpop.f32.mrf.mxu0
      %3538 = vdwg.mxu0
      %3539 = vmatpush.bf16.msra.mxu0 %v2667
      %3540 = vmatpush.bf16.msra.mxu0 %v2663
      %3541 = vmatpush.bf16.msra.mxu0 %v2659
      %3542 = vmatpush.bf16.msra.mxu0 %v2655
      %3543 = vmatpush.bf16.msra.mxu0 %v2651
      %3544 = vmatpush.bf16.msra.mxu0 %v2647
      %3545 = vmatpush.bf16.msra.mxu0 %v2643
      %3546 = vmatpush.bf16.msra.mxu0 %v2639
      %3547 = vmatmul.bf16.gmra.mxu0 %v852
      %v3548 = vpop.f32.mrf.mxu0
      %v3549 = vadd.f32 %v3536, %v3548
      %v3550 = vpop.f32.mrf.mxu0
      %3551 = vdwg.mxu0
      %3552 = vmatpush.bf16.msra.mxu0 %v2699
      %3553 = vmatpush.bf16.msra.mxu0 %v2695
      %3554 = vmatpush.bf16.msra.mxu0 %v2691
      %3555 = vmatpush.bf16.msra.mxu0 %v2687
      %3556 = vmatpush.bf16.msra.mxu0 %v2683
      %3557 = vmatpush.bf16.msra.mxu0 %v2679
      %3558 = vmatpush.bf16.msra.mxu0 %v2675
      %3559 = vmatpush.bf16.msra.mxu0 %v2671
      %3560 = vmatmul.bf16.gmra.mxu0 %v855
      %v3561 = vpop.f32.mrf.mxu0
      %v3562 = vadd.f32 %v3549, %v3561
      %v3563 = vpop.f32.mrf.mxu0
      %3564 = vdwg.mxu0
      %3565 = vmatpush.bf16.msra.mxu0 %v2731
      %3566 = vmatpush.bf16.msra.mxu0 %v2727
      %3567 = vmatpush.bf16.msra.mxu0 %v2723
      %3568 = vmatpush.bf16.msra.mxu0 %v2719
      %3569 = vmatpush.bf16.msra.mxu0 %v2715
      %3570 = vmatpush.bf16.msra.mxu0 %v2711
      %3571 = vmatpush.bf16.msra.mxu0 %v2707
      %3572 = vmatpush.bf16.msra.mxu0 %v2703
      %3573 = vmatmul.bf16.gmra.mxu0 %v856
      %v3574 = vpop.f32.mrf.mxu0
      %v3575 = vadd.f32 %v3562, %v3574
      %v3576 = vpop.f32.mrf.mxu0
      %3577 = vdwg.mxu0
      %3578 = vmatpush.bf16.msra.mxu0 %v2763
      %3579 = vmatpush.bf16.msra.mxu0 %v2759
      %3580 = vmatpush.bf16.msra.mxu0 %v2755
      %3581 = vmatpush.bf16.msra.mxu0 %v2751
      %3582 = vmatpush.bf16.msra.mxu0 %v2747
      %3583 = vmatpush.bf16.msra.mxu0 %v2743
      %3584 = vmatpush.bf16.msra.mxu0 %v2739
      %3585 = vmatpush.bf16.msra.mxu0 %v2735
      %3586 = vmatmul.bf16.gmra.mxu0 %v857
      %v3587 = vpop.f32.mrf.mxu0
      %v3588 = vadd.f32 %v3575, %v3587
      %v3589 = vpop.f32.mrf.mxu0
      %3590 = vdwg.mxu0
      %3591 = vmatpush.bf16.msra.mxu0 %v2795
      %3592 = vmatpush.bf16.msra.mxu0 %v2791
      %3593 = vmatpush.bf16.msra.mxu0 %v2787
      %3594 = vmatpush.bf16.msra.mxu0 %v2783
      %3595 = vmatpush.bf16.msra.mxu0 %v2779
      %3596 = vmatpush.bf16.msra.mxu0 %v2775
      %3597 = vmatpush.bf16.msra.mxu0 %v2771
      %3598 = vmatpush.bf16.msra.mxu0 %v2767
      %3599 = vmatmul.bf16.gmra.mxu0 %v858
      %v3600 = vpop.f32.mrf.mxu0
      %v3601 = vadd.f32 %v3588, %v3600
      %v3602 = vpop.f32.mrf.mxu0
      %3603 = vdwg.mxu0
      %3604 = vmatpush.bf16.msra.mxu0 %v2827
      %3605 = vmatpush.bf16.msra.mxu0 %v2823
      %3606 = vmatpush.bf16.msra.mxu0 %v2819
      %3607 = vmatpush.bf16.msra.mxu0 %v2815
      %3608 = vmatpush.bf16.msra.mxu0 %v2811
      %3609 = vmatpush.bf16.msra.mxu0 %v2807
      %3610 = vmatpush.bf16.msra.mxu0 %v2803
      %3611 = vmatpush.bf16.msra.mxu0 %v2799
      %3612 = vmatmul.bf16.gmra.mxu0 %v859
      %v3613 = vpop.f32.mrf.mxu0
      %v3614 = vadd.f32 %v3601, %v3613
      %v3615 = vpop.f32.mrf.mxu0
      %3616 = vdwg.mxu0
      %3617 = vmatpush.bf16.msra.mxu0 %v2859
      %3618 = vmatpush.bf16.msra.mxu0 %v2855
      %3619 = vmatpush.bf16.msra.mxu0 %v2851
      %3620 = vmatpush.bf16.msra.mxu0 %v2847
      %3621 = vmatpush.bf16.msra.mxu0 %v2843
      %3622 = vmatpush.bf16.msra.mxu0 %v2839
      %3623 = vmatpush.bf16.msra.mxu0 %v2835
      %3624 = vmatpush.bf16.msra.mxu0 %v2831
      %3625 = vmatmul.bf16.gmra.mxu0 %v860
      %v3626 = vpop.f32.mrf.mxu0
      %v3627 = vadd.f32 %v3614, %v3626
      %v3628 = vpop.f32.mrf.mxu0
      %3629 = vdwg.mxu0
      %3630 = vmatpush.bf16.msra.mxu0 %v2891
      %3631 = vmatpush.bf16.msra.mxu0 %v2887
      %3632 = vmatpush.bf16.msra.mxu0 %v2883
      %3633 = vmatpush.bf16.msra.mxu0 %v2879
      %3634 = vmatpush.bf16.msra.mxu0 %v2875
      %3635 = vmatpush.bf16.msra.mxu0 %v2871
      %3636 = vmatpush.bf16.msra.mxu0 %v2867
      %3637 = vmatpush.bf16.msra.mxu0 %v2863
      %3638 = vmatmul.bf16.gmra.mxu0 %v861
      %v3639 = vpop.f32.mrf.mxu0
      %v3640 = vadd.f32 %v3627, %v3639
      %v3641 = vpop.f32.mrf.mxu0
      %3642 = vdwg.mxu0
      %3643 = vmatpush.bf16.msra.mxu0 %v2923
      %3644 = vmatpush.bf16.msra.mxu0 %v2919
      %3645 = vmatpush.bf16.msra.mxu0 %v2915
      %3646 = vmatpush.bf16.msra.mxu0 %v2911
      %3647 = vmatpush.bf16.msra.mxu0 %v2907
      %3648 = vmatpush.bf16.msra.mxu0 %v2903
      %3649 = vmatpush.bf16.msra.mxu0 %v2899
      %3650 = vmatpush.bf16.msra.mxu0 %v2895
      %3651 = vmatmul.bf16.gmra.mxu0 %v862
      %v3652 = vpop.f32.mrf.mxu0
      %v3653 = vadd.f32 %v3640, %v3652
      %v3654 = vpop.f32.mrf.mxu0
      %3655 = vdwg.mxu0
      %3656 = vmatpush.bf16.msra.mxu0 %v2444
      %3657 = vmatpush.bf16.msra.mxu0 %v2440
      %3658 = vmatpush.bf16.msra.mxu0 %v2436
      %3659 = vmatpush.bf16.msra.mxu0 %v2432
      %3660 = vmatpush.bf16.msra.mxu0 %v2428
      %3661 = vmatpush.bf16.msra.mxu0 %v2424
      %3662 = vmatpush.bf16.msra.mxu0 %v2420
      %3663 = vmatpush.bf16.msra.mxu0 %v2416
      %3664 = vmatmul.bf16.gmra.mxu0 %v845
      %v3665 = vpop.f32.mrf.mxu0
      %v3666 = vadd.f32 %v3441, %v3665
      %v3667 = vpop.f32.mrf.mxu0
      %3668 = vdwg.mxu0
      %3669 = vmatpush.bf16.msra.mxu0 %v2476
      %3670 = vmatpush.bf16.msra.mxu0 %v2472
      %3671 = vmatpush.bf16.msra.mxu0 %v2468
      %3672 = vmatpush.bf16.msra.mxu0 %v2464
      %3673 = vmatpush.bf16.msra.mxu0 %v2460
      %3674 = vmatpush.bf16.msra.mxu0 %v2456
      %3675 = vmatpush.bf16.msra.mxu0 %v2452
      %3676 = vmatpush.bf16.msra.mxu0 %v2448
      %3677 = vmatmul.bf16.gmra.mxu0 %v846
      %v3678 = vpop.f32.mrf.mxu0
      %v3679 = vadd.f32 %v3666, %v3678
      %v3680 = vpop.f32.mrf.mxu0
      %3681 = vdwg.mxu0
      %3682 = vmatpush.bf16.msra.mxu0 %v2508
      %3683 = vmatpush.bf16.msra.mxu0 %v2504
      %3684 = vmatpush.bf16.msra.mxu0 %v2500
      %3685 = vmatpush.bf16.msra.mxu0 %v2496
      %3686 = vmatpush.bf16.msra.mxu0 %v2492
      %3687 = vmatpush.bf16.msra.mxu0 %v2488
      %3688 = vmatpush.bf16.msra.mxu0 %v2484
      %3689 = vmatpush.bf16.msra.mxu0 %v2480
      %3690 = vmatmul.bf16.gmra.mxu0 %v847
      %v3691 = vpop.f32.mrf.mxu0
      %v3692 = vadd.f32 %v3679, %v3691
      %v3693 = vpop.f32.mrf.mxu0
      %3694 = vdwg.mxu0
      %3695 = vmatpush.bf16.msra.mxu0 %v2540
      %3696 = vmatpush.bf16.msra.mxu0 %v2536
      %3697 = vmatpush.bf16.msra.mxu0 %v2532
      %3698 = vmatpush.bf16.msra.mxu0 %v2528
      %3699 = vmatpush.bf16.msra.mxu0 %v2524
      %3700 = vmatpush.bf16.msra.mxu0 %v2520
      %3701 = vmatpush.bf16.msra.mxu0 %v2516
      %3702 = vmatpush.bf16.msra.mxu0 %v2512
      %3703 = vmatmul.bf16.gmra.mxu0 %v848
      %v3704 = vpop.f32.mrf.mxu0
      %v3705 = vadd.f32 %v3692, %v3704
      %v3706 = vpop.f32.mrf.mxu0
      %3707 = vdwg.mxu0
      %3708 = vmatpush.bf16.msra.mxu0 %v2572
      %3709 = vmatpush.bf16.msra.mxu0 %v2568
      %3710 = vmatpush.bf16.msra.mxu0 %v2564
      %3711 = vmatpush.bf16.msra.mxu0 %v2560
      %3712 = vmatpush.bf16.msra.mxu0 %v2556
      %3713 = vmatpush.bf16.msra.mxu0 %v2552
      %3714 = vmatpush.bf16.msra.mxu0 %v2548
      %3715 = vmatpush.bf16.msra.mxu0 %v2544
      %3716 = vmatmul.bf16.gmra.mxu0 %v849
      %v3717 = vpop.f32.mrf.mxu0
      %v3718 = vadd.f32 %v3705, %v3717
      %v3719 = vpop.f32.mrf.mxu0
      %3720 = vdwg.mxu0
      %3721 = vmatpush.bf16.msra.mxu0 %v2604
      %3722 = vmatpush.bf16.msra.mxu0 %v2600
      %3723 = vmatpush.bf16.msra.mxu0 %v2596
      %3724 = vmatpush.bf16.msra.mxu0 %v2592
      %3725 = vmatpush.bf16.msra.mxu0 %v2588
      %3726 = vmatpush.bf16.msra.mxu0 %v2584
      %3727 = vmatpush.bf16.msra.mxu0 %v2580
      %3728 = vmatpush.bf16.msra.mxu0 %v2576
      %3729 = vmatmul.bf16.gmra.mxu0 %v850
      %v3730 = vpop.f32.mrf.mxu0
      %v3731 = vadd.f32 %v3718, %v3730
      %v3732 = vpop.f32.mrf.mxu0
      %3733 = vdwg.mxu0
      %3734 = vmatpush.bf16.msra.mxu0 %v2636
      %3735 = vmatpush.bf16.msra.mxu0 %v2632
      %3736 = vmatpush.bf16.msra.mxu0 %v2628
      %3737 = vmatpush.bf16.msra.mxu0 %v2624
      %3738 = vmatpush.bf16.msra.mxu0 %v2620
      %3739 = vmatpush.bf16.msra.mxu0 %v2616
      %3740 = vmatpush.bf16.msra.mxu0 %v2612
      %3741 = vmatpush.bf16.msra.mxu0 %v2608
      %3742 = vmatmul.bf16.gmra.mxu0 %v851
      %v3743 = vpop.f32.mrf.mxu0
      %v3744 = vadd.f32 %v3731, %v3743
      %v3745 = vpop.f32.mrf.mxu0
      %3746 = vdwg.mxu0
      %3747 = vmatpush.bf16.msra.mxu0 %v2668
      %3748 = vmatpush.bf16.msra.mxu0 %v2664
      %3749 = vmatpush.bf16.msra.mxu0 %v2660
      %3750 = vmatpush.bf16.msra.mxu0 %v2656
      %3751 = vmatpush.bf16.msra.mxu0 %v2652
      %3752 = vmatpush.bf16.msra.mxu0 %v2648
      %3753 = vmatpush.bf16.msra.mxu0 %v2644
      %3754 = vmatpush.bf16.msra.mxu0 %v2640
      %3755 = vmatmul.bf16.gmra.mxu0 %v852
      %v3756 = vpop.f32.mrf.mxu0
      %v3757 = vadd.f32 %v3744, %v3756
      %v3758 = vpop.f32.mrf.mxu0
      %3759 = vdwg.mxu0
      %3760 = vmatpush.bf16.msra.mxu0 %v2700
      %3761 = vmatpush.bf16.msra.mxu0 %v2696
      %3762 = vmatpush.bf16.msra.mxu0 %v2692
      %3763 = vmatpush.bf16.msra.mxu0 %v2688
      %3764 = vmatpush.bf16.msra.mxu0 %v2684
      %3765 = vmatpush.bf16.msra.mxu0 %v2680
      %3766 = vmatpush.bf16.msra.mxu0 %v2676
      %3767 = vmatpush.bf16.msra.mxu0 %v2672
      %3768 = vmatmul.bf16.gmra.mxu0 %v855
      %v3769 = vpop.f32.mrf.mxu0
      %v3770 = vadd.f32 %v3757, %v3769
      %v3771 = vpop.f32.mrf.mxu0
      %3772 = vdwg.mxu0
      %3773 = vmatpush.bf16.msra.mxu0 %v2732
      %3774 = vmatpush.bf16.msra.mxu0 %v2728
      %3775 = vmatpush.bf16.msra.mxu0 %v2724
      %3776 = vmatpush.bf16.msra.mxu0 %v2720
      %3777 = vmatpush.bf16.msra.mxu0 %v2716
      %3778 = vmatpush.bf16.msra.mxu0 %v2712
      %3779 = vmatpush.bf16.msra.mxu0 %v2708
      %3780 = vmatpush.bf16.msra.mxu0 %v2704
      %3781 = vmatmul.bf16.gmra.mxu0 %v856
      %v3782 = vpop.f32.mrf.mxu0
      %v3783 = vadd.f32 %v3770, %v3782
      %v3784 = vpop.f32.mrf.mxu0
      %3785 = vdwg.mxu0
      %3786 = vmatpush.bf16.msra.mxu0 %v2764
      %3787 = vmatpush.bf16.msra.mxu0 %v2760
      %3788 = vmatpush.bf16.msra.mxu0 %v2756
      %3789 = vmatpush.bf16.msra.mxu0 %v2752
      %3790 = vmatpush.bf16.msra.mxu0 %v2748
      %3791 = vmatpush.bf16.msra.mxu0 %v2744
      %3792 = vmatpush.bf16.msra.mxu0 %v2740
      %3793 = vmatpush.bf16.msra.mxu0 %v2736
      %3794 = vmatmul.bf16.gmra.mxu0 %v857
      %v3795 = vpop.f32.mrf.mxu0
      %v3796 = vadd.f32 %v3783, %v3795
      %v3797 = vpop.f32.mrf.mxu0
      %3798 = vdwg.mxu0
      %3799 = vmatpush.bf16.msra.mxu0 %v2796
      %3800 = vmatpush.bf16.msra.mxu0 %v2792
      %3801 = vmatpush.bf16.msra.mxu0 %v2788
      %3802 = vmatpush.bf16.msra.mxu0 %v2784
      %3803 = vmatpush.bf16.msra.mxu0 %v2780
      %3804 = vmatpush.bf16.msra.mxu0 %v2776
      %3805 = vmatpush.bf16.msra.mxu0 %v2772
      %3806 = vmatpush.bf16.msra.mxu0 %v2768
      %3807 = vmatmul.bf16.gmra.mxu0 %v858
      %v3808 = vpop.f32.mrf.mxu0
      %v3809 = vadd.f32 %v3796, %v3808
      %v3810 = vpop.f32.mrf.mxu0
      %3811 = vdwg.mxu0
      %3812 = vmatpush.bf16.msra.mxu0 %v2828
      %3813 = vmatpush.bf16.msra.mxu0 %v2824
      %3814 = vmatpush.bf16.msra.mxu0 %v2820
      %3815 = vmatpush.bf16.msra.mxu0 %v2816
      %3816 = vmatpush.bf16.msra.mxu0 %v2812
      %3817 = vmatpush.bf16.msra.mxu0 %v2808
      %3818 = vmatpush.bf16.msra.mxu0 %v2804
      %3819 = vmatpush.bf16.msra.mxu0 %v2800
      %3820 = vmatmul.bf16.gmra.mxu0 %v859
      %v3821 = vpop.f32.mrf.mxu0
      %v3822 = vadd.f32 %v3809, %v3821
      %v3823 = vpop.f32.mrf.mxu0
      %3824 = vdwg.mxu0
      %3825 = vmatpush.bf16.msra.mxu0 %v2860
      %3826 = vmatpush.bf16.msra.mxu0 %v2856
      %3827 = vmatpush.bf16.msra.mxu0 %v2852
      %3828 = vmatpush.bf16.msra.mxu0 %v2848
      %3829 = vmatpush.bf16.msra.mxu0 %v2844
      %3830 = vmatpush.bf16.msra.mxu0 %v2840
      %3831 = vmatpush.bf16.msra.mxu0 %v2836
      %3832 = vmatpush.bf16.msra.mxu0 %v2832
      %3833 = vmatmul.bf16.gmra.mxu0 %v860
      %v3834 = vpop.f32.mrf.mxu0
      %v3835 = vadd.f32 %v3822, %v3834
      %v3836 = vpop.f32.mrf.mxu0
      %3837 = vdwg.mxu0
      %3838 = vmatpush.bf16.msra.mxu0 %v2892
      %3839 = vmatpush.bf16.msra.mxu0 %v2888
      %3840 = vmatpush.bf16.msra.mxu0 %v2884
      %3841 = vmatpush.bf16.msra.mxu0 %v2880
      %3842 = vmatpush.bf16.msra.mxu0 %v2876
      %3843 = vmatpush.bf16.msra.mxu0 %v2872
      %3844 = vmatpush.bf16.msra.mxu0 %v2868
      %3845 = vmatpush.bf16.msra.mxu0 %v2864
      %3846 = vmatmul.bf16.gmra.mxu0 %v861
      %v3847 = vpop.f32.mrf.mxu0
      %v3848 = vadd.f32 %v3835, %v3847
      %v3849 = vpop.f32.mrf.mxu0
      %3850 = vdwg.mxu0
      %3851 = vmatpush.bf16.msra.mxu0 %v2924
      %3852 = vmatpush.bf16.msra.mxu0 %v2920
      %3853 = vmatpush.bf16.msra.mxu0 %v2916
      %3854 = vmatpush.bf16.msra.mxu0 %v2912
      %3855 = vmatpush.bf16.msra.mxu0 %v2908
      %3856 = vmatpush.bf16.msra.mxu0 %v2904
      %3857 = vmatpush.bf16.msra.mxu0 %v2900
      %3858 = vmatpush.bf16.msra.mxu0 %v2896
      %3859 = vmatmul.bf16.gmra.mxu0 %v862
      %v3860 = vpop.f32.mrf.mxu0
      %v3861 = vadd.f32 %v3848, %v3860
      %v3862 = vpop.f32.mrf.mxu0
      %3863 = vdwg.mxu0
      %3864 = vmatpush.bf16.msra.mxu0 %v2445
      %3865 = vmatpush.bf16.msra.mxu0 %v2441
      %3866 = vmatpush.bf16.msra.mxu0 %v2437
      %3867 = vmatpush.bf16.msra.mxu0 %v2433
      %3868 = vmatpush.bf16.msra.mxu0 %v2429
      %3869 = vmatpush.bf16.msra.mxu0 %v2425
      %3870 = vmatpush.bf16.msra.mxu0 %v2421
      %3871 = vmatpush.bf16.msra.mxu0 %v2417
      %3872 = vmatmul.bf16.gmra.mxu0 %v845
      %v3873 = vpop.f32.mrf.mxu0
      %v3874 = vadd.f32 %v3442, %v3873
      %v3875 = vpop.f32.mrf.mxu0
      %3876 = vdwg.mxu0
      %3877 = vmatpush.bf16.msra.mxu0 %v2477
      %3878 = vmatpush.bf16.msra.mxu0 %v2473
      %3879 = vmatpush.bf16.msra.mxu0 %v2469
      %3880 = vmatpush.bf16.msra.mxu0 %v2465
      %3881 = vmatpush.bf16.msra.mxu0 %v2461
      %3882 = vmatpush.bf16.msra.mxu0 %v2457
      %3883 = vmatpush.bf16.msra.mxu0 %v2453
      %3884 = vmatpush.bf16.msra.mxu0 %v2449
      %3885 = vmatmul.bf16.gmra.mxu0 %v846
      %v3886 = vpop.f32.mrf.mxu0
      %v3887 = vadd.f32 %v3874, %v3886
      %v3888 = vpop.f32.mrf.mxu0
      %3889 = vdwg.mxu0
      %3890 = vmatpush.bf16.msra.mxu0 %v2509
      %3891 = vmatpush.bf16.msra.mxu0 %v2505
      %3892 = vmatpush.bf16.msra.mxu0 %v2501
      %3893 = vmatpush.bf16.msra.mxu0 %v2497
      %3894 = vmatpush.bf16.msra.mxu0 %v2493
      %3895 = vmatpush.bf16.msra.mxu0 %v2489
      %3896 = vmatpush.bf16.msra.mxu0 %v2485
      %3897 = vmatpush.bf16.msra.mxu0 %v2481
      %3898 = vmatmul.bf16.gmra.mxu0 %v847
      %v3899 = vpop.f32.mrf.mxu0
      %v3900 = vadd.f32 %v3887, %v3899
      %v3901 = vpop.f32.mrf.mxu0
      %3902 = vdwg.mxu0
      %3903 = vmatpush.bf16.msra.mxu0 %v2541
      %3904 = vmatpush.bf16.msra.mxu0 %v2537
      %3905 = vmatpush.bf16.msra.mxu0 %v2533
      %3906 = vmatpush.bf16.msra.mxu0 %v2529
      %3907 = vmatpush.bf16.msra.mxu0 %v2525
      %3908 = vmatpush.bf16.msra.mxu0 %v2521
      %3909 = vmatpush.bf16.msra.mxu0 %v2517
      %3910 = vmatpush.bf16.msra.mxu0 %v2513
      %3911 = vmatmul.bf16.gmra.mxu0 %v848
      %v3912 = vpop.f32.mrf.mxu0
      %v3913 = vadd.f32 %v3900, %v3912
      %v3914 = vpop.f32.mrf.mxu0
      %3915 = vdwg.mxu0
      %3916 = vmatpush.bf16.msra.mxu0 %v2573
      %3917 = vmatpush.bf16.msra.mxu0 %v2569
      %3918 = vmatpush.bf16.msra.mxu0 %v2565
      %3919 = vmatpush.bf16.msra.mxu0 %v2561
      %3920 = vmatpush.bf16.msra.mxu0 %v2557
      %3921 = vmatpush.bf16.msra.mxu0 %v2553
      %3922 = vmatpush.bf16.msra.mxu0 %v2549
      %3923 = vmatpush.bf16.msra.mxu0 %v2545
      %3924 = vmatmul.bf16.gmra.mxu0 %v849
      %v3925 = vpop.f32.mrf.mxu0
      %v3926 = vadd.f32 %v3913, %v3925
      %v3927 = vpop.f32.mrf.mxu0
      %3928 = vdwg.mxu0
      %3929 = vmatpush.bf16.msra.mxu0 %v2605
      %3930 = vmatpush.bf16.msra.mxu0 %v2601
      %3931 = vmatpush.bf16.msra.mxu0 %v2597
      %3932 = vmatpush.bf16.msra.mxu0 %v2593
      %3933 = vmatpush.bf16.msra.mxu0 %v2589
      %3934 = vmatpush.bf16.msra.mxu0 %v2585
      %3935 = vmatpush.bf16.msra.mxu0 %v2581
      %3936 = vmatpush.bf16.msra.mxu0 %v2577
      %3937 = vmatmul.bf16.gmra.mxu0 %v850
      %v3938 = vpop.f32.mrf.mxu0
      %v3939 = vadd.f32 %v3926, %v3938
      %v3940 = vpop.f32.mrf.mxu0
      %3941 = vdwg.mxu0
      %3942 = vmatpush.bf16.msra.mxu0 %v2637
      %3943 = vmatpush.bf16.msra.mxu0 %v2633
      %3944 = vmatpush.bf16.msra.mxu0 %v2629
      %3945 = vmatpush.bf16.msra.mxu0 %v2625
      %3946 = vmatpush.bf16.msra.mxu0 %v2621
      %3947 = vmatpush.bf16.msra.mxu0 %v2617
      %3948 = vmatpush.bf16.msra.mxu0 %v2613
      %3949 = vmatpush.bf16.msra.mxu0 %v2609
      %3950 = vmatmul.bf16.gmra.mxu0 %v851
      %v3951 = vpop.f32.mrf.mxu0
      %v3952 = vadd.f32 %v3939, %v3951
      %v3953 = vpop.f32.mrf.mxu0
      %3954 = vdwg.mxu0
      %3955 = vmatpush.bf16.msra.mxu0 %v2669
      %3956 = vmatpush.bf16.msra.mxu0 %v2665
      %3957 = vmatpush.bf16.msra.mxu0 %v2661
      %3958 = vmatpush.bf16.msra.mxu0 %v2657
      %3959 = vmatpush.bf16.msra.mxu0 %v2653
      %3960 = vmatpush.bf16.msra.mxu0 %v2649
      %3961 = vmatpush.bf16.msra.mxu0 %v2645
      %3962 = vmatpush.bf16.msra.mxu0 %v2641
      %3963 = vmatmul.bf16.gmra.mxu0 %v852
      %v3964 = vpop.f32.mrf.mxu0
      %v3965 = vadd.f32 %v3952, %v3964
      %v3966 = vpop.f32.mrf.mxu0
      %3967 = vdwg.mxu0
      %3968 = vmatpush.bf16.msra.mxu0 %v2701
      %3969 = vmatpush.bf16.msra.mxu0 %v2697
      %3970 = vmatpush.bf16.msra.mxu0 %v2693
      %3971 = vmatpush.bf16.msra.mxu0 %v2689
      %3972 = vmatpush.bf16.msra.mxu0 %v2685
      %3973 = vmatpush.bf16.msra.mxu0 %v2681
      %3974 = vmatpush.bf16.msra.mxu0 %v2677
      %3975 = vmatpush.bf16.msra.mxu0 %v2673
      %3976 = vmatmul.bf16.gmra.mxu0 %v855
      %v3977 = vpop.f32.mrf.mxu0
      %v3978 = vadd.f32 %v3965, %v3977
      %v3979 = vpop.f32.mrf.mxu0
      %3980 = vdwg.mxu0
      %3981 = vmatpush.bf16.msra.mxu0 %v2733
      %3982 = vmatpush.bf16.msra.mxu0 %v2729
      %3983 = vmatpush.bf16.msra.mxu0 %v2725
      %3984 = vmatpush.bf16.msra.mxu0 %v2721
      %3985 = vmatpush.bf16.msra.mxu0 %v2717
      %3986 = vmatpush.bf16.msra.mxu0 %v2713
      %3987 = vmatpush.bf16.msra.mxu0 %v2709
      %3988 = vmatpush.bf16.msra.mxu0 %v2705
      %3989 = vmatmul.bf16.gmra.mxu0 %v856
      %v3990 = vpop.f32.mrf.mxu0
      %v3991 = vadd.f32 %v3978, %v3990
      %v3992 = vpop.f32.mrf.mxu0
      %3993 = vdwg.mxu0
      %3994 = vmatpush.bf16.msra.mxu0 %v2765
      %3995 = vmatpush.bf16.msra.mxu0 %v2761
      %3996 = vmatpush.bf16.msra.mxu0 %v2757
      %3997 = vmatpush.bf16.msra.mxu0 %v2753
      %3998 = vmatpush.bf16.msra.mxu0 %v2749
      %3999 = vmatpush.bf16.msra.mxu0 %v2745
      %4000 = vmatpush.bf16.msra.mxu0 %v2741
      %4001 = vmatpush.bf16.msra.mxu0 %v2737
      %4002 = vmatmul.bf16.gmra.mxu0 %v857
      %v4003 = vpop.f32.mrf.mxu0
      %v4004 = vadd.f32 %v3991, %v4003
      %v4005 = vpop.f32.mrf.mxu0
      %4006 = vdwg.mxu0
      %4007 = vmatpush.bf16.msra.mxu0 %v2797
      %4008 = vmatpush.bf16.msra.mxu0 %v2793
      %4009 = vmatpush.bf16.msra.mxu0 %v2789
      %4010 = vmatpush.bf16.msra.mxu0 %v2785
      %4011 = vmatpush.bf16.msra.mxu0 %v2781
      %4012 = vmatpush.bf16.msra.mxu0 %v2777
      %4013 = vmatpush.bf16.msra.mxu0 %v2773
      %4014 = vmatpush.bf16.msra.mxu0 %v2769
      %4015 = vmatmul.bf16.gmra.mxu0 %v858
      %v4016 = vpop.f32.mrf.mxu0
      %v4017 = vadd.f32 %v4004, %v4016
      %v4018 = vpop.f32.mrf.mxu0
      %4019 = vdwg.mxu0
      %4020 = vmatpush.bf16.msra.mxu0 %v2829
      %4021 = vmatpush.bf16.msra.mxu0 %v2825
      %4022 = vmatpush.bf16.msra.mxu0 %v2821
      %4023 = vmatpush.bf16.msra.mxu0 %v2817
      %4024 = vmatpush.bf16.msra.mxu0 %v2813
      %4025 = vmatpush.bf16.msra.mxu0 %v2809
      %4026 = vmatpush.bf16.msra.mxu0 %v2805
      %4027 = vmatpush.bf16.msra.mxu0 %v2801
      %4028 = vmatmul.bf16.gmra.mxu0 %v859
      %v4029 = vpop.f32.mrf.mxu0
      %v4030 = vadd.f32 %v4017, %v4029
      %v4031 = vpop.f32.mrf.mxu0
      %4032 = vdwg.mxu0
      %4033 = vmatpush.bf16.msra.mxu0 %v2861
      %4034 = vmatpush.bf16.msra.mxu0 %v2857
      %4035 = vmatpush.bf16.msra.mxu0 %v2853
      %4036 = vmatpush.bf16.msra.mxu0 %v2849
      %4037 = vmatpush.bf16.msra.mxu0 %v2845
      %4038 = vmatpush.bf16.msra.mxu0 %v2841
      %4039 = vmatpush.bf16.msra.mxu0 %v2837
      %4040 = vmatpush.bf16.msra.mxu0 %v2833
      %4041 = vmatmul.bf16.gmra.mxu0 %v860
      %v4042 = vpop.f32.mrf.mxu0
      %v4043 = vadd.f32 %v4030, %v4042
      %v4044 = vpop.f32.mrf.mxu0
      %4045 = vdwg.mxu0
      %4046 = vmatpush.bf16.msra.mxu0 %v2893
      %4047 = vmatpush.bf16.msra.mxu0 %v2889
      %4048 = vmatpush.bf16.msra.mxu0 %v2885
      %4049 = vmatpush.bf16.msra.mxu0 %v2881
      %4050 = vmatpush.bf16.msra.mxu0 %v2877
      %4051 = vmatpush.bf16.msra.mxu0 %v2873
      %4052 = vmatpush.bf16.msra.mxu0 %v2869
      %4053 = vmatpush.bf16.msra.mxu0 %v2865
      %4054 = vmatmul.bf16.gmra.mxu0 %v861
      %v4055 = vpop.f32.mrf.mxu0
      %v4056 = vadd.f32 %v4043, %v4055
      %v4057 = vpop.f32.mrf.mxu0
      %4058 = vdwg.mxu0
      %4059 = vmatpush.bf16.msra.mxu0 %v2925
      %4060 = vmatpush.bf16.msra.mxu0 %v2921
      %4061 = vmatpush.bf16.msra.mxu0 %v2917
      %4062 = vmatpush.bf16.msra.mxu0 %v2913
      %4063 = vmatpush.bf16.msra.mxu0 %v2909
      %4064 = vmatpush.bf16.msra.mxu0 %v2905
      %4065 = vmatpush.bf16.msra.mxu0 %v2901
      %4066 = vmatpush.bf16.msra.mxu0 %v2897
      %4067 = vmatmul.bf16.gmra.mxu0 %v862
      %v4068 = vpop.f32.mrf.mxu0
      %v4069 = vadd.f32 %v4056, %v4068
      %v4070 = vpop.f32.mrf.mxu0
      %4071 = vdwg.mxu0
      %4072 = vmatpush.bf16.msra.mxu0 %v2446
      %4073 = vmatpush.bf16.msra.mxu0 %v2442
      %4074 = vmatpush.bf16.msra.mxu0 %v2438
      %4075 = vmatpush.bf16.msra.mxu0 %v2434
      %4076 = vmatpush.bf16.msra.mxu0 %v2430
      %4077 = vmatpush.bf16.msra.mxu0 %v2426
      %4078 = vmatpush.bf16.msra.mxu0 %v2422
      %4079 = vmatpush.bf16.msra.mxu0 %v2418
      %4080 = vmatmul.bf16.gmra.mxu0 %v845
      %v4081 = vpop.f32.mrf.mxu0
      %v4082 = vadd.f32 %v3443, %v4081
      %v4083 = vpop.f32.mrf.mxu0
      %4084 = vdwg.mxu0
      %4085 = vmatpush.bf16.msra.mxu0 %v2478
      %4086 = vmatpush.bf16.msra.mxu0 %v2474
      %4087 = vmatpush.bf16.msra.mxu0 %v2470
      %4088 = vmatpush.bf16.msra.mxu0 %v2466
      %4089 = vmatpush.bf16.msra.mxu0 %v2462
      %4090 = vmatpush.bf16.msra.mxu0 %v2458
      %4091 = vmatpush.bf16.msra.mxu0 %v2454
      %4092 = vmatpush.bf16.msra.mxu0 %v2450
      %4093 = vmatmul.bf16.gmra.mxu0 %v846
      %v4094 = vpop.f32.mrf.mxu0
      %v4095 = vadd.f32 %v4082, %v4094
      %v4096 = vpop.f32.mrf.mxu0
      %4097 = vdwg.mxu0
      %4098 = vmatpush.bf16.msra.mxu0 %v2510
      %4099 = vmatpush.bf16.msra.mxu0 %v2506
      %4100 = vmatpush.bf16.msra.mxu0 %v2502
      %4101 = vmatpush.bf16.msra.mxu0 %v2498
      %4102 = vmatpush.bf16.msra.mxu0 %v2494
      %4103 = vmatpush.bf16.msra.mxu0 %v2490
      %4104 = vmatpush.bf16.msra.mxu0 %v2486
      %4105 = vmatpush.bf16.msra.mxu0 %v2482
      %4106 = vmatmul.bf16.gmra.mxu0 %v847
      %v4107 = vpop.f32.mrf.mxu0
      %v4108 = vadd.f32 %v4095, %v4107
      %v4109 = vpop.f32.mrf.mxu0
      %4110 = vdwg.mxu0
      %4111 = vmatpush.bf16.msra.mxu0 %v2542
      %4112 = vmatpush.bf16.msra.mxu0 %v2538
      %4113 = vmatpush.bf16.msra.mxu0 %v2534
      %4114 = vmatpush.bf16.msra.mxu0 %v2530
      %4115 = vmatpush.bf16.msra.mxu0 %v2526
      %4116 = vmatpush.bf16.msra.mxu0 %v2522
      %4117 = vmatpush.bf16.msra.mxu0 %v2518
      %4118 = vmatpush.bf16.msra.mxu0 %v2514
      %4119 = vmatmul.bf16.gmra.mxu0 %v848
      %v4120 = vpop.f32.mrf.mxu0
      %v4121 = vadd.f32 %v4108, %v4120
      %v4122 = vpop.f32.mrf.mxu0
      %4123 = vdwg.mxu0
      %4124 = vmatpush.bf16.msra.mxu0 %v2574
      %4125 = vmatpush.bf16.msra.mxu0 %v2570
      %4126 = vmatpush.bf16.msra.mxu0 %v2566
      %4127 = vmatpush.bf16.msra.mxu0 %v2562
      %4128 = vmatpush.bf16.msra.mxu0 %v2558
      %4129 = vmatpush.bf16.msra.mxu0 %v2554
      %4130 = vmatpush.bf16.msra.mxu0 %v2550
      %4131 = vmatpush.bf16.msra.mxu0 %v2546
      %4132 = vmatmul.bf16.gmra.mxu0 %v849
      %v4133 = vpop.f32.mrf.mxu0
      %v4134 = vadd.f32 %v4121, %v4133
      %v4135 = vpop.f32.mrf.mxu0
      %4136 = vdwg.mxu0
      %4137 = vmatpush.bf16.msra.mxu0 %v2606
      %4138 = vmatpush.bf16.msra.mxu0 %v2602
      %4139 = vmatpush.bf16.msra.mxu0 %v2598
      %4140 = vmatpush.bf16.msra.mxu0 %v2594
      %4141 = vmatpush.bf16.msra.mxu0 %v2590
      %4142 = vmatpush.bf16.msra.mxu0 %v2586
      %4143 = vmatpush.bf16.msra.mxu0 %v2582
      %4144 = vmatpush.bf16.msra.mxu0 %v2578
      %4145 = vmatmul.bf16.gmra.mxu0 %v850
      %v4146 = vpop.f32.mrf.mxu0
      %v4147 = vadd.f32 %v4134, %v4146
      %v4148 = vpop.f32.mrf.mxu0
      %4149 = vdwg.mxu0
      %4150 = vmatpush.bf16.msra.mxu0 %v2638
      %4151 = vmatpush.bf16.msra.mxu0 %v2634
      %4152 = vmatpush.bf16.msra.mxu0 %v2630
      %4153 = vmatpush.bf16.msra.mxu0 %v2626
      %4154 = vmatpush.bf16.msra.mxu0 %v2622
      %4155 = vmatpush.bf16.msra.mxu0 %v2618
      %4156 = vmatpush.bf16.msra.mxu0 %v2614
      %4157 = vmatpush.bf16.msra.mxu0 %v2610
      %4158 = vmatmul.bf16.gmra.mxu0 %v851
      %v4159 = vpop.f32.mrf.mxu0
      %v4160 = vadd.f32 %v4147, %v4159
      %v4161 = vpop.f32.mrf.mxu0
      %4162 = vdwg.mxu0
      %4163 = vmatpush.bf16.msra.mxu0 %v2670
      %4164 = vmatpush.bf16.msra.mxu0 %v2666
      %4165 = vmatpush.bf16.msra.mxu0 %v2662
      %4166 = vmatpush.bf16.msra.mxu0 %v2658
      %4167 = vmatpush.bf16.msra.mxu0 %v2654
      %4168 = vmatpush.bf16.msra.mxu0 %v2650
      %4169 = vmatpush.bf16.msra.mxu0 %v2646
      %4170 = vmatpush.bf16.msra.mxu0 %v2642
      %4171 = vmatmul.bf16.gmra.mxu0 %v852
      %v4172 = vpop.f32.mrf.mxu0
      %v4173 = vadd.f32 %v4160, %v4172
      %v4174 = vpop.f32.mrf.mxu0
      %4175 = vdwg.mxu0
      %4176 = vmatpush.bf16.msra.mxu0 %v2702
      %4177 = vmatpush.bf16.msra.mxu0 %v2698
      %4178 = vmatpush.bf16.msra.mxu0 %v2694
      %4179 = vmatpush.bf16.msra.mxu0 %v2690
      %4180 = vmatpush.bf16.msra.mxu0 %v2686
      %4181 = vmatpush.bf16.msra.mxu0 %v2682
      %4182 = vmatpush.bf16.msra.mxu0 %v2678
      %4183 = vmatpush.bf16.msra.mxu0 %v2674
      %4184 = vmatmul.bf16.gmra.mxu0 %v855
      %v4185 = vpop.f32.mrf.mxu0
      %v4186 = vadd.f32 %v4173, %v4185
      %v4187 = vpop.f32.mrf.mxu0
      %4188 = vdwg.mxu0
      %4189 = vmatpush.bf16.msra.mxu0 %v2734
      %4190 = vmatpush.bf16.msra.mxu0 %v2730
      %4191 = vmatpush.bf16.msra.mxu0 %v2726
      %4192 = vmatpush.bf16.msra.mxu0 %v2722
      %4193 = vmatpush.bf16.msra.mxu0 %v2718
      %4194 = vmatpush.bf16.msra.mxu0 %v2714
      %4195 = vmatpush.bf16.msra.mxu0 %v2710
      %4196 = vmatpush.bf16.msra.mxu0 %v2706
      %4197 = vmatmul.bf16.gmra.mxu0 %v856
      %v4198 = vpop.f32.mrf.mxu0
      %v4199 = vadd.f32 %v4186, %v4198
      %v4200 = vpop.f32.mrf.mxu0
      %4201 = vdwg.mxu0
      %4202 = vmatpush.bf16.msra.mxu0 %v2766
      %4203 = vmatpush.bf16.msra.mxu0 %v2762
      %4204 = vmatpush.bf16.msra.mxu0 %v2758
      %4205 = vmatpush.bf16.msra.mxu0 %v2754
      %4206 = vmatpush.bf16.msra.mxu0 %v2750
      %4207 = vmatpush.bf16.msra.mxu0 %v2746
      %4208 = vmatpush.bf16.msra.mxu0 %v2742
      %4209 = vmatpush.bf16.msra.mxu0 %v2738
      %4210 = vmatmul.bf16.gmra.mxu0 %v857
      %v4211 = vpop.f32.mrf.mxu0
      %v4212 = vadd.f32 %v4199, %v4211
      %v4213 = vpop.f32.mrf.mxu0
      %4214 = vdwg.mxu0
      %4215 = vmatpush.bf16.msra.mxu0 %v2798
      %4216 = vmatpush.bf16.msra.mxu0 %v2794
      %4217 = vmatpush.bf16.msra.mxu0 %v2790
      %4218 = vmatpush.bf16.msra.mxu0 %v2786
      %4219 = vmatpush.bf16.msra.mxu0 %v2782
      %4220 = vmatpush.bf16.msra.mxu0 %v2778
      %4221 = vmatpush.bf16.msra.mxu0 %v2774
      %4222 = vmatpush.bf16.msra.mxu0 %v2770
      %4223 = vmatmul.bf16.gmra.mxu0 %v858
      %v4224 = vpop.f32.mrf.mxu0
      %v4225 = vadd.f32 %v4212, %v4224
      %v4226 = vpop.f32.mrf.mxu0
      %4227 = vdwg.mxu0
      %4228 = vmatpush.bf16.msra.mxu0 %v2830
      %4229 = vmatpush.bf16.msra.mxu0 %v2826
      %4230 = vmatpush.bf16.msra.mxu0 %v2822
      %4231 = vmatpush.bf16.msra.mxu0 %v2818
      %4232 = vmatpush.bf16.msra.mxu0 %v2814
      %4233 = vmatpush.bf16.msra.mxu0 %v2810
      %4234 = vmatpush.bf16.msra.mxu0 %v2806
      %4235 = vmatpush.bf16.msra.mxu0 %v2802
      %4236 = vmatmul.bf16.gmra.mxu0 %v859
      %v4237 = vpop.f32.mrf.mxu0
      %v4238 = vadd.f32 %v4225, %v4237
      %v4239 = vpop.f32.mrf.mxu0
      %4240 = vdwg.mxu0
      %4241 = vmatpush.bf16.msra.mxu0 %v2862
      %4242 = vmatpush.bf16.msra.mxu0 %v2858
      %4243 = vmatpush.bf16.msra.mxu0 %v2854
      %4244 = vmatpush.bf16.msra.mxu0 %v2850
      %4245 = vmatpush.bf16.msra.mxu0 %v2846
      %4246 = vmatpush.bf16.msra.mxu0 %v2842
      %4247 = vmatpush.bf16.msra.mxu0 %v2838
      %4248 = vmatpush.bf16.msra.mxu0 %v2834
      %4249 = vmatmul.bf16.gmra.mxu0 %v860
      %v4250 = vpop.f32.mrf.mxu0
      %v4251 = vadd.f32 %v4238, %v4250
      %v4252 = vpop.f32.mrf.mxu0
      %4253 = vdwg.mxu0
      %4254 = vmatpush.bf16.msra.mxu0 %v2894
      %4255 = vmatpush.bf16.msra.mxu0 %v2890
      %4256 = vmatpush.bf16.msra.mxu0 %v2886
      %4257 = vmatpush.bf16.msra.mxu0 %v2882
      %4258 = vmatpush.bf16.msra.mxu0 %v2878
      %4259 = vmatpush.bf16.msra.mxu0 %v2874
      %4260 = vmatpush.bf16.msra.mxu0 %v2870
      %4261 = vmatpush.bf16.msra.mxu0 %v2866
      %4262 = vmatmul.bf16.gmra.mxu0 %v861
      %v4263 = vpop.f32.mrf.mxu0
      %v4264 = vadd.f32 %v4251, %v4263
      %v4265 = vpop.f32.mrf.mxu0
      %4266 = vdwg.mxu0
      %4267 = vmatpush.bf16.msra.mxu0 %v2926
      %4268 = vmatpush.bf16.msra.mxu0 %v2922
      %4269 = vmatpush.bf16.msra.mxu0 %v2918
      %4270 = vmatpush.bf16.msra.mxu0 %v2914
      %4271 = vmatpush.bf16.msra.mxu0 %v2910
      %4272 = vmatpush.bf16.msra.mxu0 %v2906
      %4273 = vmatpush.bf16.msra.mxu0 %v2902
      %4274 = vmatpush.bf16.msra.mxu0 %v2898
      %4275 = vmatmul.bf16.gmra.mxu0 %v862
      %v4276 = vpop.f32.mrf.mxu0
      %v4277 = vadd.f32 %v4264, %v4276
      %v4278 = vpop.f32.mrf.mxu0
      %4279 = vdwg.mxu0
      %v4280 = vmax.f32 %v3653, 0.0
      %v4281 = vmax.f32 %v3861, 0.0
      %v4282 = vmax.f32 %v4069, 0.0
      %v4283 = vmax.f32 %v4277, 0.0
      %v4284 = vpack.c.bf16 %v4280, %v4280
      %v4285 = vpack.c.bf16 %v4281, %v4281
      %v4286 = vpack.c.bf16 %v4282, %v4282
      %v4287 = vpack.c.bf16 %v4283, %v4283
      %v4288 = vld [vmem:[%s3] sm:$0xff]
      %v4289 = vld [vmem:[%s3 + $0x8] sm:$0xff]
      %v4290 = vld [vmem:[%s3 + $0x10] sm:$0xff]
      %v4291 = vld [vmem:[%s3 + $0x18] sm:$0xff]
      %v4292 = vld [vmem:[%s3 + $0x20] sm:$0xff]
      %v4293 = vld [vmem:[%s3 + $0x28] sm:$0xff]
      %v4294 = vld [vmem:[%s3 + $0x30] sm:$0xff]
      %v4295 = vld [vmem:[%s3 + $0x38] sm:$0xff]
      %v4296 = vld [vmem:[%s3 + $0x40] sm:$0xff]
      %v4297 = vld [vmem:[%s3 + $0x48] sm:$0xff]
      %v4298 = vld [vmem:[%s3 + $0x50] sm:$0xff]
      %v4299 = vld [vmem:[%s3 + $0x58] sm:$0xff]
      %v4300 = vld [vmem:[%s3 + $0x60] sm:$0xff]
      %v4301 = vld [vmem:[%s3 + $0x68] sm:$0xff]
      %v4302 = vld [vmem:[%s3 + $0x70] sm:$0xff]
      %v4303 = vld [vmem:[%s3 + $0x78] sm:$0xff]
      %v4304 = vld [vmem:[%s3 + $0x80] sm:$0xff]
      %v4305 = vld [vmem:[%s3 + $0x88] sm:$0xff]
      %v4306 = vld [vmem:[%s3 + $0x90] sm:$0xff]
      %v4307 = vld [vmem:[%s3 + $0x98] sm:$0xff]
      %v4308 = vld [vmem:[%s3 + $0xa0] sm:$0xff]
      %v4309 = vld [vmem:[%s3 + $0xa8] sm:$0xff]
      %v4310 = vld [vmem:[%s3 + $0xb0] sm:$0xff]
      %v4311 = vld [vmem:[%s3 + $0xb8] sm:$0xff]
      %v4312 = vld [vmem:[%s3 + $0xc0] sm:$0xff]
      %v4313 = vld [vmem:[%s3 + $0xc8] sm:$0xff]
      %v4314 = vld [vmem:[%s3 + $0xd0] sm:$0xff]
      %v4315 = vld [vmem:[%s3 + $0xd8] sm:$0xff]
      %v4316 = vld [vmem:[%s3 + $0xe0] sm:$0xff]
      %v4317 = vld [vmem:[%s3 + $0xe8] sm:$0xff]
      %v4318 = vld [vmem:[%s3 + $0xf0] sm:$0xff]
      %v4319 = vld [vmem:[%s3 + $0xf8] sm:$0xff]
      %v4320 = vld [vmem:[%s3 + $0x100] sm:$0xff]
      %v4321 = vld [vmem:[%s3 + $0x108] sm:$0xff]
      %v4322 = vld [vmem:[%s3 + $0x110] sm:$0xff]
      %v4323 = vld [vmem:[%s3 + $0x118] sm:$0xff]
      %v4324 = vld [vmem:[%s3 + $0x120] sm:$0xff]
      %v4325 = vld [vmem:[%s3 + $0x128] sm:$0xff]
      %v4326 = vld [vmem:[%s3 + $0x130] sm:$0xff]
      %v4327 = vld [vmem:[%s3 + $0x138] sm:$0xff]
      %v4328 = vld [vmem:[%s3 + $0x140] sm:$0xff]
      %v4329 = vld [vmem:[%s3 + $0x148] sm:$0xff]
      %v4330 = vld [vmem:[%s3 + $0x150] sm:$0xff]
      %v4331 = vld [vmem:[%s3 + $0x158] sm:$0xff]
      %v4332 = vld [vmem:[%s3 + $0x160] sm:$0xff]
      %v4333 = vld [vmem:[%s3 + $0x168] sm:$0xff]
      %v4334 = vld [vmem:[%s3 + $0x170] sm:$0xff]
      %v4335 = vld [vmem:[%s3 + $0x178] sm:$0xff]
      %v4336 = vld [vmem:[%s3 + $0x180] sm:$0xff]
      %v4337 = vld [vmem:[%s3 + $0x188] sm:$0xff]
      %v4338 = vld [vmem:[%s3 + $0x190] sm:$0xff]
      %v4339 = vld [vmem:[%s3 + $0x198] sm:$0xff]
      %v4340 = vld [vmem:[%s3 + $0x1a0] sm:$0xff]
      %v4341 = vld [vmem:[%s3 + $0x1a8] sm:$0xff]
      %v4342 = vld [vmem:[%s3 + $0x1b0] sm:$0xff]
      %v4343 = vld [vmem:[%s3 + $0x1b8] sm:$0xff]
      %v4344 = vld [vmem:[%s3 + $0x1c0] sm:$0xff]
      %v4345 = vld [vmem:[%s3 + $0x1c8] sm:$0xff]
      %v4346 = vld [vmem:[%s3 + $0x1d0] sm:$0xff]
      %v4347 = vld [vmem:[%s3 + $0x1d8] sm:$0xff]
      %v4348 = vld [vmem:[%s3 + $0x1e0] sm:$0xff]
      %v4349 = vld [vmem:[%s3 + $0x1e8] sm:$0xff]
      %v4350 = vld [vmem:[%s3 + $0x1f0] sm:$0xff]
      %v4351 = vld [vmem:[%s3 + $0x1f8] sm:$0xff]
      %v4352 = vld [vmem:[%s3 + $0x200] sm:$0xff]
      %v4353 = vld [vmem:[%s3 + $0x208] sm:$0xff]
      %v4354 = vld [vmem:[%s3 + $0x210] sm:$0xff]
      %v4355 = vld [vmem:[%s3 + $0x218] sm:$0xff]
      %v4356 = vld [vmem:[%s3 + $0x220] sm:$0xff]
      %v4357 = vld [vmem:[%s3 + $0x228] sm:$0xff]
      %v4358 = vld [vmem:[%s3 + $0x230] sm:$0xff]
      %v4359 = vld [vmem:[%s3 + $0x238] sm:$0xff]
      %v4360 = vld [vmem:[%s3 + $0x240] sm:$0xff]
      %v4361 = vld [vmem:[%s3 + $0x248] sm:$0xff]
      %v4362 = vld [vmem:[%s3 + $0x250] sm:$0xff]
      %v4363 = vld [vmem:[%s3 + $0x258] sm:$0xff]
      %v4364 = vld [vmem:[%s3 + $0x260] sm:$0xff]
      %v4365 = vld [vmem:[%s3 + $0x268] sm:$0xff]
      %v4366 = vld [vmem:[%s3 + $0x270] sm:$0xff]
      %v4367 = vld [vmem:[%s3 + $0x278] sm:$0xff]
      %v4368 = vld [vmem:[%s3 + $0x280] sm:$0xff]
      %v4369 = vld [vmem:[%s3 + $0x288] sm:$0xff]
      %v4370 = vld [vmem:[%s3 + $0x290] sm:$0xff]
      %v4371 = vld [vmem:[%s3 + $0x298] sm:$0xff]
      %v4372 = vld [vmem:[%s3 + $0x2a0] sm:$0xff]
      %v4373 = vld [vmem:[%s3 + $0x2a8] sm:$0xff]
      %v4374 = vld [vmem:[%s3 + $0x2b0] sm:$0xff]
      %v4375 = vld [vmem:[%s3 + $0x2b8] sm:$0xff]
      %v4376 = vld [vmem:[%s3 + $0x2c0] sm:$0xff]
      %v4377 = vld [vmem:[%s3 + $0x2c8] sm:$0xff]
      %v4378 = vld [vmem:[%s3 + $0x2d0] sm:$0xff]
      %v4379 = vld [vmem:[%s3 + $0x2d8] sm:$0xff]
      %v4380 = vld [vmem:[%s3 + $0x2e0] sm:$0xff]
      %v4381 = vld [vmem:[%s3 + $0x2e8] sm:$0xff]
      %v4382 = vld [vmem:[%s3 + $0x2f0] sm:$0xff]
      %v4383 = vld [vmem:[%s3 + $0x2f8] sm:$0xff]
      %v4384 = vld [vmem:[%s3 + $0x300] sm:$0xff]
      %v4385 = vld [vmem:[%s3 + $0x308] sm:$0xff]
      %v4386 = vld [vmem:[%s3 + $0x310] sm:$0xff]
      %v4387 = vld [vmem:[%s3 + $0x318] sm:$0xff]
      %v4388 = vld [vmem:[%s3 + $0x320] sm:$0xff]
      %v4389 = vld [vmem:[%s3 + $0x328] sm:$0xff]
      %v4390 = vld [vmem:[%s3 + $0x330] sm:$0xff]
      %v4391 = vld [vmem:[%s3 + $0x338] sm:$0xff]
      %v4392 = vld [vmem:[%s3 + $0x340] sm:$0xff]
      %v4393 = vld [vmem:[%s3 + $0x348] sm:$0xff]
      %v4394 = vld [vmem:[%s3 + $0x350] sm:$0xff]
      %v4395 = vld [vmem:[%s3 + $0x358] sm:$0xff]
      %v4396 = vld [vmem:[%s3 + $0x360] sm:$0xff]
      %v4397 = vld [vmem:[%s3 + $0x368] sm:$0xff]
      %v4398 = vld [vmem:[%s3 + $0x370] sm:$0xff]
      %v4399 = vld [vmem:[%s3 + $0x378] sm:$0xff]
      %v4400 = vld [vmem:[%s3 + $0x380] sm:$0xff]
      %v4401 = vld [vmem:[%s3 + $0x388] sm:$0xff]
      %v4402 = vld [vmem:[%s3 + $0x390] sm:$0xff]
      %v4403 = vld [vmem:[%s3 + $0x398] sm:$0xff]
      %v4404 = vld [vmem:[%s3 + $0x3a0] sm:$0xff]
      %v4405 = vld [vmem:[%s3 + $0x3a8] sm:$0xff]
      %v4406 = vld [vmem:[%s3 + $0x3b0] sm:$0xff]
      %v4407 = vld [vmem:[%s3 + $0x3b8] sm:$0xff]
      %v4408 = vld [vmem:[%s3 + $0x3c0] sm:$0xff]
      %v4409 = vld [vmem:[%s3 + $0x3c8] sm:$0xff]
      %v4410 = vld [vmem:[%s3 + $0x3d0] sm:$0xff]
      %v4411 = vld [vmem:[%s3 + $0x3d8] sm:$0xff]
      %v4412 = vld [vmem:[%s3 + $0x3e0] sm:$0xff]
      %v4413 = vld [vmem:[%s3 + $0x3e8] sm:$0xff]
      %v4414 = vld [vmem:[%s3 + $0x3f0] sm:$0xff]
      %v4415 = vld [vmem:[%s3 + $0x3f8] sm:$0xff]
      %v4416 = vld [vmem:[%s3 + $0x400] sm:$0xff]
      %v4417 = vld [vmem:[%s3 + $0x408] sm:$0xff]
      %v4418 = vld [vmem:[%s3 + $0x410] sm:$0xff]
      %v4419 = vld [vmem:[%s3 + $0x418] sm:$0xff]
      %v4420 = vld [vmem:[%s3 + $0x420] sm:$0xff]
      %v4421 = vld [vmem:[%s3 + $0x428] sm:$0xff]
      %v4422 = vld [vmem:[%s3 + $0x430] sm:$0xff]
      %v4423 = vld [vmem:[%s3 + $0x438] sm:$0xff]
      %v4424 = vld [vmem:[%s3 + $0x440] sm:$0xff]
      %v4425 = vld [vmem:[%s3 + $0x448] sm:$0xff]
      %v4426 = vld [vmem:[%s3 + $0x450] sm:$0xff]
      %v4427 = vld [vmem:[%s3 + $0x458] sm:$0xff]
      %v4428 = vld [vmem:[%s3 + $0x460] sm:$0xff]
      %v4429 = vld [vmem:[%s3 + $0x468] sm:$0xff]
      %v4430 = vld [vmem:[%s3 + $0x470] sm:$0xff]
      %v4431 = vld [vmem:[%s3 + $0x478] sm:$0xff]
      %v4432 = vld [vmem:[%s3 + $0x480] sm:$0xff]
      %v4433 = vld [vmem:[%s3 + $0x488] sm:$0xff]
      %v4434 = vld [vmem:[%s3 + $0x490] sm:$0xff]
      %v4435 = vld [vmem:[%s3 + $0x498] sm:$0xff]
      %v4436 = vld [vmem:[%s3 + $0x4a0] sm:$0xff]
      %v4437 = vld [vmem:[%s3 + $0x4a8] sm:$0xff]
      %v4438 = vld [vmem:[%s3 + $0x4b0] sm:$0xff]
      %v4439 = vld [vmem:[%s3 + $0x4b8] sm:$0xff]
      %v4440 = vld [vmem:[%s3 + $0x4c0] sm:$0xff]
      %v4441 = vld [vmem:[%s3 + $0x4c8] sm:$0xff]
      %v4442 = vld [vmem:[%s3 + $0x4d0] sm:$0xff]
      %v4443 = vld [vmem:[%s3 + $0x4d8] sm:$0xff]
      %v4444 = vld [vmem:[%s3 + $0x4e0] sm:$0xff]
      %v4445 = vld [vmem:[%s3 + $0x4e8] sm:$0xff]
      %v4446 = vld [vmem:[%s3 + $0x4f0] sm:$0xff]
      %v4447 = vld [vmem:[%s3 + $0x4f8] sm:$0xff]
      %v4448 = vld [vmem:[%s3 + $0x500] sm:$0xff]
      %v4449 = vld [vmem:[%s3 + $0x508] sm:$0xff]
      %v4450 = vld [vmem:[%s3 + $0x510] sm:$0xff]
      %v4451 = vld [vmem:[%s3 + $0x518] sm:$0xff]
      %v4452 = vld [vmem:[%s3 + $0x520] sm:$0xff]
      %v4453 = vld [vmem:[%s3 + $0x528] sm:$0xff]
      %v4454 = vld [vmem:[%s3 + $0x530] sm:$0xff]
      %v4455 = vld [vmem:[%s3 + $0x538] sm:$0xff]
      %v4456 = vld [vmem:[%s3 + $0x540] sm:$0xff]
      %v4457 = vld [vmem:[%s3 + $0x548] sm:$0xff]
      %v4458 = vld [vmem:[%s3 + $0x550] sm:$0xff]
      %v4459 = vld [vmem:[%s3 + $0x558] sm:$0xff]
      %v4460 = vld [vmem:[%s3 + $0x560] sm:$0xff]
      %v4461 = vld [vmem:[%s3 + $0x568] sm:$0xff]
      %v4462 = vld [vmem:[%s3 + $0x570] sm:$0xff]
      %v4463 = vld [vmem:[%s3 + $0x578] sm:$0xff]
      %v4464 = vld [vmem:[%s3 + $0x580] sm:$0xff]
      %v4465 = vld [vmem:[%s3 + $0x588] sm:$0xff]
      %v4466 = vld [vmem:[%s3 + $0x590] sm:$0xff]
      %v4467 = vld [vmem:[%s3 + $0x598] sm:$0xff]
      %v4468 = vld [vmem:[%s3 + $0x5a0] sm:$0xff]
      %v4469 = vld [vmem:[%s3 + $0x5a8] sm:$0xff]
      %v4470 = vld [vmem:[%s3 + $0x5b0] sm:$0xff]
      %v4471 = vld [vmem:[%s3 + $0x5b8] sm:$0xff]
      %v4472 = vld [vmem:[%s3 + $0x5c0] sm:$0xff]
      %v4473 = vld [vmem:[%s3 + $0x5c8] sm:$0xff]
      %v4474 = vld [vmem:[%s3 + $0x5d0] sm:$0xff]
      %v4475 = vld [vmem:[%s3 + $0x5d8] sm:$0xff]
      %v4476 = vld [vmem:[%s3 + $0x5e0] sm:$0xff]
      %v4477 = vld [vmem:[%s3 + $0x5e8] sm:$0xff]
      %v4478 = vld [vmem:[%s3 + $0x5f0] sm:$0xff]
      %v4479 = vld [vmem:[%s3 + $0x5f8] sm:$0xff]
      %v4480 = vld [vmem:[%s3 + $0x600] sm:$0xff]
      %v4481 = vld [vmem:[%s3 + $0x608] sm:$0xff]
      %v4482 = vld [vmem:[%s3 + $0x610] sm:$0xff]
      %v4483 = vld [vmem:[%s3 + $0x618] sm:$0xff]
      %v4484 = vld [vmem:[%s3 + $0x620] sm:$0xff]
      %v4485 = vld [vmem:[%s3 + $0x628] sm:$0xff]
      %v4486 = vld [vmem:[%s3 + $0x630] sm:$0xff]
      %v4487 = vld [vmem:[%s3 + $0x638] sm:$0xff]
      %v4488 = vld [vmem:[%s3 + $0x640] sm:$0xff]
      %v4489 = vld [vmem:[%s3 + $0x648] sm:$0xff]
      %v4490 = vld [vmem:[%s3 + $0x650] sm:$0xff]
      %v4491 = vld [vmem:[%s3 + $0x658] sm:$0xff]
      %v4492 = vld [vmem:[%s3 + $0x660] sm:$0xff]
      %v4493 = vld [vmem:[%s3 + $0x668] sm:$0xff]
      %v4494 = vld [vmem:[%s3 + $0x670] sm:$0xff]
      %v4495 = vld [vmem:[%s3 + $0x678] sm:$0xff]
      %v4496 = vld [vmem:[%s3 + $0x680] sm:$0xff]
      %v4497 = vld [vmem:[%s3 + $0x688] sm:$0xff]
      %v4498 = vld [vmem:[%s3 + $0x690] sm:$0xff]
      %v4499 = vld [vmem:[%s3 + $0x698] sm:$0xff]
      %v4500 = vld [vmem:[%s3 + $0x6a0] sm:$0xff]
      %v4501 = vld [vmem:[%s3 + $0x6a8] sm:$0xff]
      %v4502 = vld [vmem:[%s3 + $0x6b0] sm:$0xff]
      %v4503 = vld [vmem:[%s3 + $0x6b8] sm:$0xff]
      %v4504 = vld [vmem:[%s3 + $0x6c0] sm:$0xff]
      %v4505 = vld [vmem:[%s3 + $0x6c8] sm:$0xff]
      %v4506 = vld [vmem:[%s3 + $0x6d0] sm:$0xff]
      %v4507 = vld [vmem:[%s3 + $0x6d8] sm:$0xff]
      %v4508 = vld [vmem:[%s3 + $0x6e0] sm:$0xff]
      %v4509 = vld [vmem:[%s3 + $0x6e8] sm:$0xff]
      %v4510 = vld [vmem:[%s3 + $0x6f0] sm:$0xff]
      %v4511 = vld [vmem:[%s3 + $0x6f8] sm:$0xff]
      %v4512 = vld [vmem:[%s3 + $0x700] sm:$0xff]
      %v4513 = vld [vmem:[%s3 + $0x708] sm:$0xff]
      %v4514 = vld [vmem:[%s3 + $0x710] sm:$0xff]
      %v4515 = vld [vmem:[%s3 + $0x718] sm:$0xff]
      %v4516 = vld [vmem:[%s3 + $0x720] sm:$0xff]
      %v4517 = vld [vmem:[%s3 + $0x728] sm:$0xff]
      %v4518 = vld [vmem:[%s3 + $0x730] sm:$0xff]
      %v4519 = vld [vmem:[%s3 + $0x738] sm:$0xff]
      %v4520 = vld [vmem:[%s3 + $0x740] sm:$0xff]
      %v4521 = vld [vmem:[%s3 + $0x748] sm:$0xff]
      %v4522 = vld [vmem:[%s3 + $0x750] sm:$0xff]
      %v4523 = vld [vmem:[%s3 + $0x758] sm:$0xff]
      %v4524 = vld [vmem:[%s3 + $0x760] sm:$0xff]
      %v4525 = vld [vmem:[%s3 + $0x768] sm:$0xff]
      %v4526 = vld [vmem:[%s3 + $0x770] sm:$0xff]
      %v4527 = vld [vmem:[%s3 + $0x778] sm:$0xff]
      %v4528 = vld [vmem:[%s3 + $0x780] sm:$0xff]
      %v4529 = vld [vmem:[%s3 + $0x788] sm:$0xff]
      %v4530 = vld [vmem:[%s3 + $0x790] sm:$0xff]
      %v4531 = vld [vmem:[%s3 + $0x798] sm:$0xff]
      %v4532 = vld [vmem:[%s3 + $0x7a0] sm:$0xff]
      %v4533 = vld [vmem:[%s3 + $0x7a8] sm:$0xff]
      %v4534 = vld [vmem:[%s3 + $0x7b0] sm:$0xff]
      %v4535 = vld [vmem:[%s3 + $0x7b8] sm:$0xff]
      %v4536 = vld [vmem:[%s3 + $0x7c0] sm:$0xff]
      %v4537 = vld [vmem:[%s3 + $0x7c8] sm:$0xff]
      %v4538 = vld [vmem:[%s3 + $0x7d0] sm:$0xff]
      %v4539 = vld [vmem:[%s3 + $0x7d8] sm:$0xff]
      %v4540 = vld [vmem:[%s3 + $0x7e0] sm:$0xff]
      %v4541 = vld [vmem:[%s3 + $0x7e8] sm:$0xff]
      %v4542 = vld [vmem:[%s3 + $0x7f0] sm:$0xff]
      %v4543 = vld [vmem:[%s3 + $0x7f8] sm:$0xff]
      %v4544 = vld [vmem:[%s3 + $0x800] sm:$0xff]
      %v4545 = vld [vmem:[%s3 + $0x808] sm:$0xff]
      %v4546 = vld [vmem:[%s3 + $0x810] sm:$0xff]
      %v4547 = vld [vmem:[%s3 + $0x818] sm:$0xff]
      %v4548 = vld [vmem:[%s3 + $0x820] sm:$0xff]
      %v4549 = vld [vmem:[%s3 + $0x828] sm:$0xff]
      %v4550 = vld [vmem:[%s3 + $0x830] sm:$0xff]
      %v4551 = vld [vmem:[%s3 + $0x838] sm:$0xff]
      %v4552 = vld [vmem:[%s3 + $0x840] sm:$0xff]
      %v4553 = vld [vmem:[%s3 + $0x848] sm:$0xff]
      %v4554 = vld [vmem:[%s3 + $0x850] sm:$0xff]
      %v4555 = vld [vmem:[%s3 + $0x858] sm:$0xff]
      %v4556 = vld [vmem:[%s3 + $0x860] sm:$0xff]
      %v4557 = vld [vmem:[%s3 + $0x868] sm:$0xff]
      %v4558 = vld [vmem:[%s3 + $0x870] sm:$0xff]
      %v4559 = vld [vmem:[%s3 + $0x878] sm:$0xff]
      %v4560 = vld [vmem:[%s3 + $0x880] sm:$0xff]
      %v4561 = vld [vmem:[%s3 + $0x888] sm:$0xff]
      %v4562 = vld [vmem:[%s3 + $0x890] sm:$0xff]
      %v4563 = vld [vmem:[%s3 + $0x898] sm:$0xff]
      %v4564 = vld [vmem:[%s3 + $0x8a0] sm:$0xff]
      %v4565 = vld [vmem:[%s3 + $0x8a8] sm:$0xff]
      %v4566 = vld [vmem:[%s3 + $0x8b0] sm:$0xff]
      %v4567 = vld [vmem:[%s3 + $0x8b8] sm:$0xff]
      %v4568 = vld [vmem:[%s3 + $0x8c0] sm:$0xff]
      %v4569 = vld [vmem:[%s3 + $0x8c8] sm:$0xff]
      %v4570 = vld [vmem:[%s3 + $0x8d0] sm:$0xff]
      %v4571 = vld [vmem:[%s3 + $0x8d8] sm:$0xff]
      %v4572 = vld [vmem:[%s3 + $0x8e0] sm:$0xff]
      %v4573 = vld [vmem:[%s3 + $0x8e8] sm:$0xff]
      %v4574 = vld [vmem:[%s3 + $0x8f0] sm:$0xff]
      %v4575 = vld [vmem:[%s3 + $0x8f8] sm:$0xff]
      %v4576 = vld [vmem:[%s3 + $0x900] sm:$0xff]
      %v4577 = vld [vmem:[%s3 + $0x908] sm:$0xff]
      %v4578 = vld [vmem:[%s3 + $0x910] sm:$0xff]
      %v4579 = vld [vmem:[%s3 + $0x918] sm:$0xff]
      %v4580 = vld [vmem:[%s3 + $0x920] sm:$0xff]
      %v4581 = vld [vmem:[%s3 + $0x928] sm:$0xff]
      %v4582 = vld [vmem:[%s3 + $0x930] sm:$0xff]
      %v4583 = vld [vmem:[%s3 + $0x938] sm:$0xff]
      %v4584 = vld [vmem:[%s3 + $0x940] sm:$0xff]
      %v4585 = vld [vmem:[%s3 + $0x948] sm:$0xff]
      %v4586 = vld [vmem:[%s3 + $0x950] sm:$0xff]
      %v4587 = vld [vmem:[%s3 + $0x958] sm:$0xff]
      %v4588 = vld [vmem:[%s3 + $0x960] sm:$0xff]
      %v4589 = vld [vmem:[%s3 + $0x968] sm:$0xff]
      %v4590 = vld [vmem:[%s3 + $0x970] sm:$0xff]
      %v4591 = vld [vmem:[%s3 + $0x978] sm:$0xff]
      %v4592 = vld [vmem:[%s3 + $0x980] sm:$0xff]
      %v4593 = vld [vmem:[%s3 + $0x988] sm:$0xff]
      %v4594 = vld [vmem:[%s3 + $0x990] sm:$0xff]
      %v4595 = vld [vmem:[%s3 + $0x998] sm:$0xff]
      %v4596 = vld [vmem:[%s3 + $0x9a0] sm:$0xff]
      %v4597 = vld [vmem:[%s3 + $0x9a8] sm:$0xff]
      %v4598 = vld [vmem:[%s3 + $0x9b0] sm:$0xff]
      %v4599 = vld [vmem:[%s3 + $0x9b8] sm:$0xff]
      %v4600 = vld [vmem:[%s3 + $0x9c0] sm:$0xff]
      %v4601 = vld [vmem:[%s3 + $0x9c8] sm:$0xff]
      %v4602 = vld [vmem:[%s3 + $0x9d0] sm:$0xff]
      %v4603 = vld [vmem:[%s3 + $0x9d8] sm:$0xff]
      %v4604 = vld [vmem:[%s3 + $0x9e0] sm:$0xff]
      %v4605 = vld [vmem:[%s3 + $0x9e8] sm:$0xff]
      %v4606 = vld [vmem:[%s3 + $0x9f0] sm:$0xff]
      %v4607 = vld [vmem:[%s3 + $0x9f8] sm:$0xff]
      %v4608 = vld [vmem:[%s3 + $0xa00] sm:$0xff]
      %v4609 = vld [vmem:[%s3 + $0xa08] sm:$0xff]
      %v4610 = vld [vmem:[%s3 + $0xa10] sm:$0xff]
      %v4611 = vld [vmem:[%s3 + $0xa18] sm:$0xff]
      %v4612 = vld [vmem:[%s3 + $0xa20] sm:$0xff]
      %v4613 = vld [vmem:[%s3 + $0xa28] sm:$0xff]
      %v4614 = vld [vmem:[%s3 + $0xa30] sm:$0xff]
      %v4615 = vld [vmem:[%s3 + $0xa38] sm:$0xff]
      %v4616 = vld [vmem:[%s3 + $0xa40] sm:$0xff]
      %v4617 = vld [vmem:[%s3 + $0xa48] sm:$0xff]
      %v4618 = vld [vmem:[%s3 + $0xa50] sm:$0xff]
      %v4619 = vld [vmem:[%s3 + $0xa58] sm:$0xff]
      %v4620 = vld [vmem:[%s3 + $0xa60] sm:$0xff]
      %v4621 = vld [vmem:[%s3 + $0xa68] sm:$0xff]
      %v4622 = vld [vmem:[%s3 + $0xa70] sm:$0xff]
      %v4623 = vld [vmem:[%s3 + $0xa78] sm:$0xff]
      %v4624 = vld [vmem:[%s3 + $0xa80] sm:$0xff]
      %v4625 = vld [vmem:[%s3 + $0xa88] sm:$0xff]
      %v4626 = vld [vmem:[%s3 + $0xa90] sm:$0xff]
      %v4627 = vld [vmem:[%s3 + $0xa98] sm:$0xff]
      %v4628 = vld [vmem:[%s3 + $0xaa0] sm:$0xff]
      %v4629 = vld [vmem:[%s3 + $0xaa8] sm:$0xff]
      %v4630 = vld [vmem:[%s3 + $0xab0] sm:$0xff]
      %v4631 = vld [vmem:[%s3 + $0xab8] sm:$0xff]
      %v4632 = vld [vmem:[%s3 + $0xac0] sm:$0xff]
      %v4633 = vld [vmem:[%s3 + $0xac8] sm:$0xff]
      %v4634 = vld [vmem:[%s3 + $0xad0] sm:$0xff]
      %v4635 = vld [vmem:[%s3 + $0xad8] sm:$0xff]
      %v4636 = vld [vmem:[%s3 + $0xae0] sm:$0xff]
      %v4637 = vld [vmem:[%s3 + $0xae8] sm:$0xff]
      %v4638 = vld [vmem:[%s3 + $0xaf0] sm:$0xff]
      %v4639 = vld [vmem:[%s3 + $0xaf8] sm:$0xff]
      %v4640 = vld [vmem:[%s3 + $0xb00] sm:$0xff]
      %v4641 = vld [vmem:[%s3 + $0xb08] sm:$0xff]
      %v4642 = vld [vmem:[%s3 + $0xb10] sm:$0xff]
      %v4643 = vld [vmem:[%s3 + $0xb18] sm:$0xff]
      %v4644 = vld [vmem:[%s3 + $0xb20] sm:$0xff]
      %v4645 = vld [vmem:[%s3 + $0xb28] sm:$0xff]
      %v4646 = vld [vmem:[%s3 + $0xb30] sm:$0xff]
      %v4647 = vld [vmem:[%s3 + $0xb38] sm:$0xff]
      %v4648 = vld [vmem:[%s3 + $0xb40] sm:$0xff]
      %v4649 = vld [vmem:[%s3 + $0xb48] sm:$0xff]
      %v4650 = vld [vmem:[%s3 + $0xb50] sm:$0xff]
      %v4651 = vld [vmem:[%s3 + $0xb58] sm:$0xff]
      %v4652 = vld [vmem:[%s3 + $0xb60] sm:$0xff]
      %v4653 = vld [vmem:[%s3 + $0xb68] sm:$0xff]
      %v4654 = vld [vmem:[%s3 + $0xb70] sm:$0xff]
      %v4655 = vld [vmem:[%s3 + $0xb78] sm:$0xff]
      %v4656 = vld [vmem:[%s3 + $0xb80] sm:$0xff]
      %v4657 = vld [vmem:[%s3 + $0xb88] sm:$0xff]
      %v4658 = vld [vmem:[%s3 + $0xb90] sm:$0xff]
      %v4659 = vld [vmem:[%s3 + $0xb98] sm:$0xff]
      %v4660 = vld [vmem:[%s3 + $0xba0] sm:$0xff]
      %v4661 = vld [vmem:[%s3 + $0xba8] sm:$0xff]
      %v4662 = vld [vmem:[%s3 + $0xbb0] sm:$0xff]
      %v4663 = vld [vmem:[%s3 + $0xbb8] sm:$0xff]
      %v4664 = vld [vmem:[%s3 + $0xbc0] sm:$0xff]
      %v4665 = vld [vmem:[%s3 + $0xbc8] sm:$0xff]
      %v4666 = vld [vmem:[%s3 + $0xbd0] sm:$0xff]
      %v4667 = vld [vmem:[%s3 + $0xbd8] sm:$0xff]
      %v4668 = vld [vmem:[%s3 + $0xbe0] sm:$0xff]
      %v4669 = vld [vmem:[%s3 + $0xbe8] sm:$0xff]
      %v4670 = vld [vmem:[%s3 + $0xbf0] sm:$0xff]
      %v4671 = vld [vmem:[%s3 + $0xbf8] sm:$0xff]
      %v4672 = vld [vmem:[%s3 + $0xc00] sm:$0xff]
      %v4673 = vld [vmem:[%s3 + $0xc08] sm:$0xff]
      %v4674 = vld [vmem:[%s3 + $0xc10] sm:$0xff]
      %v4675 = vld [vmem:[%s3 + $0xc18] sm:$0xff]
      %v4676 = vld [vmem:[%s3 + $0xc20] sm:$0xff]
      %v4677 = vld [vmem:[%s3 + $0xc28] sm:$0xff]
      %v4678 = vld [vmem:[%s3 + $0xc30] sm:$0xff]
      %v4679 = vld [vmem:[%s3 + $0xc38] sm:$0xff]
      %v4680 = vld [vmem:[%s3 + $0xc40] sm:$0xff]
      %v4681 = vld [vmem:[%s3 + $0xc48] sm:$0xff]
      %v4682 = vld [vmem:[%s3 + $0xc50] sm:$0xff]
      %v4683 = vld [vmem:[%s3 + $0xc58] sm:$0xff]
      %v4684 = vld [vmem:[%s3 + $0xc60] sm:$0xff]
      %v4685 = vld [vmem:[%s3 + $0xc68] sm:$0xff]
      %v4686 = vld [vmem:[%s3 + $0xc70] sm:$0xff]
      %v4687 = vld [vmem:[%s3 + $0xc78] sm:$0xff]
      %v4688 = vld [vmem:[%s3 + $0xc80] sm:$0xff]
      %v4689 = vld [vmem:[%s3 + $0xc88] sm:$0xff]
      %v4690 = vld [vmem:[%s3 + $0xc90] sm:$0xff]
      %v4691 = vld [vmem:[%s3 + $0xc98] sm:$0xff]
      %v4692 = vld [vmem:[%s3 + $0xca0] sm:$0xff]
      %v4693 = vld [vmem:[%s3 + $0xca8] sm:$0xff]
      %v4694 = vld [vmem:[%s3 + $0xcb0] sm:$0xff]
      %v4695 = vld [vmem:[%s3 + $0xcb8] sm:$0xff]
      %v4696 = vld [vmem:[%s3 + $0xcc0] sm:$0xff]
      %v4697 = vld [vmem:[%s3 + $0xcc8] sm:$0xff]
      %v4698 = vld [vmem:[%s3 + $0xcd0] sm:$0xff]
      %v4699 = vld [vmem:[%s3 + $0xcd8] sm:$0xff]
      %v4700 = vld [vmem:[%s3 + $0xce0] sm:$0xff]
      %v4701 = vld [vmem:[%s3 + $0xce8] sm:$0xff]
      %v4702 = vld [vmem:[%s3 + $0xcf0] sm:$0xff]
      %v4703 = vld [vmem:[%s3 + $0xcf8] sm:$0xff]
      %v4704 = vld [vmem:[%s3 + $0xd00] sm:$0xff]
      %v4705 = vld [vmem:[%s3 + $0xd08] sm:$0xff]
      %v4706 = vld [vmem:[%s3 + $0xd10] sm:$0xff]
      %v4707 = vld [vmem:[%s3 + $0xd18] sm:$0xff]
      %v4708 = vld [vmem:[%s3 + $0xd20] sm:$0xff]
      %v4709 = vld [vmem:[%s3 + $0xd28] sm:$0xff]
      %v4710 = vld [vmem:[%s3 + $0xd30] sm:$0xff]
      %v4711 = vld [vmem:[%s3 + $0xd38] sm:$0xff]
      %v4712 = vld [vmem:[%s3 + $0xd40] sm:$0xff]
      %v4713 = vld [vmem:[%s3 + $0xd48] sm:$0xff]
      %v4714 = vld [vmem:[%s3 + $0xd50] sm:$0xff]
      %v4715 = vld [vmem:[%s3 + $0xd58] sm:$0xff]
      %v4716 = vld [vmem:[%s3 + $0xd60] sm:$0xff]
      %v4717 = vld [vmem:[%s3 + $0xd68] sm:$0xff]
      %v4718 = vld [vmem:[%s3 + $0xd70] sm:$0xff]
      %v4719 = vld [vmem:[%s3 + $0xd78] sm:$0xff]
      %v4720 = vld [vmem:[%s3 + $0xd80] sm:$0xff]
      %v4721 = vld [vmem:[%s3 + $0xd88] sm:$0xff]
      %v4722 = vld [vmem:[%s3 + $0xd90] sm:$0xff]
      %v4723 = vld [vmem:[%s3 + $0xd98] sm:$0xff]
      %v4724 = vld [vmem:[%s3 + $0xda0] sm:$0xff]
      %v4725 = vld [vmem:[%s3 + $0xda8] sm:$0xff]
      %v4726 = vld [vmem:[%s3 + $0xdb0] sm:$0xff]
      %v4727 = vld [vmem:[%s3 + $0xdb8] sm:$0xff]
      %v4728 = vld [vmem:[%s3 + $0xdc0] sm:$0xff]
      %v4729 = vld [vmem:[%s3 + $0xdc8] sm:$0xff]
      %v4730 = vld [vmem:[%s3 + $0xdd0] sm:$0xff]
      %v4731 = vld [vmem:[%s3 + $0xdd8] sm:$0xff]
      %v4732 = vld [vmem:[%s3 + $0xde0] sm:$0xff]
      %v4733 = vld [vmem:[%s3 + $0xde8] sm:$0xff]
      %v4734 = vld [vmem:[%s3 + $0xdf0] sm:$0xff]
      %v4735 = vld [vmem:[%s3 + $0xdf8] sm:$0xff]
      %v4736 = vld [vmem:[%s3 + $0xe00] sm:$0xff]
      %v4737 = vld [vmem:[%s3 + $0xe08] sm:$0xff]
      %v4738 = vld [vmem:[%s3 + $0xe10] sm:$0xff]
      %v4739 = vld [vmem:[%s3 + $0xe18] sm:$0xff]
      %v4740 = vld [vmem:[%s3 + $0xe20] sm:$0xff]
      %v4741 = vld [vmem:[%s3 + $0xe28] sm:$0xff]
      %v4742 = vld [vmem:[%s3 + $0xe30] sm:$0xff]
      %v4743 = vld [vmem:[%s3 + $0xe38] sm:$0xff]
      %v4744 = vld [vmem:[%s3 + $0xe40] sm:$0xff]
      %v4745 = vld [vmem:[%s3 + $0xe48] sm:$0xff]
      %v4746 = vld [vmem:[%s3 + $0xe50] sm:$0xff]
      %v4747 = vld [vmem:[%s3 + $0xe58] sm:$0xff]
      %v4748 = vld [vmem:[%s3 + $0xe60] sm:$0xff]
      %v4749 = vld [vmem:[%s3 + $0xe68] sm:$0xff]
      %v4750 = vld [vmem:[%s3 + $0xe70] sm:$0xff]
      %v4751 = vld [vmem:[%s3 + $0xe78] sm:$0xff]
      %v4752 = vld [vmem:[%s3 + $0xe80] sm:$0xff]
      %v4753 = vld [vmem:[%s3 + $0xe88] sm:$0xff]
      %v4754 = vld [vmem:[%s3 + $0xe90] sm:$0xff]
      %v4755 = vld [vmem:[%s3 + $0xe98] sm:$0xff]
      %v4756 = vld [vmem:[%s3 + $0xea0] sm:$0xff]
      %v4757 = vld [vmem:[%s3 + $0xea8] sm:$0xff]
      %v4758 = vld [vmem:[%s3 + $0xeb0] sm:$0xff]
      %v4759 = vld [vmem:[%s3 + $0xeb8] sm:$0xff]
      %v4760 = vld [vmem:[%s3 + $0xec0] sm:$0xff]
      %v4761 = vld [vmem:[%s3 + $0xec8] sm:$0xff]
      %v4762 = vld [vmem:[%s3 + $0xed0] sm:$0xff]
      %v4763 = vld [vmem:[%s3 + $0xed8] sm:$0xff]
      %v4764 = vld [vmem:[%s3 + $0xee0] sm:$0xff]
      %v4765 = vld [vmem:[%s3 + $0xee8] sm:$0xff]
      %v4766 = vld [vmem:[%s3 + $0xef0] sm:$0xff]
      %v4767 = vld [vmem:[%s3 + $0xef8] sm:$0xff]
      %v4768 = vld [vmem:[%s3 + $0xf00] sm:$0xff]
      %v4769 = vld [vmem:[%s3 + $0xf08] sm:$0xff]
      %v4770 = vld [vmem:[%s3 + $0xf10] sm:$0xff]
      %v4771 = vld [vmem:[%s3 + $0xf18] sm:$0xff]
      %v4772 = vld [vmem:[%s3 + $0xf20] sm:$0xff]
      %v4773 = vld [vmem:[%s3 + $0xf28] sm:$0xff]
      %v4774 = vld [vmem:[%s3 + $0xf30] sm:$0xff]
      %v4775 = vld [vmem:[%s3 + $0xf38] sm:$0xff]
      %v4776 = vld [vmem:[%s3 + $0xf40] sm:$0xff]
      %v4777 = vld [vmem:[%s3 + $0xf48] sm:$0xff]
      %v4778 = vld [vmem:[%s3 + $0xf50] sm:$0xff]
      %v4779 = vld [vmem:[%s3 + $0xf58] sm:$0xff]
      %v4780 = vld [vmem:[%s3 + $0xf60] sm:$0xff]
      %v4781 = vld [vmem:[%s3 + $0xf68] sm:$0xff]
      %v4782 = vld [vmem:[%s3 + $0xf70] sm:$0xff]
      %v4783 = vld [vmem:[%s3 + $0xf78] sm:$0xff]
      %v4784 = vld [vmem:[%s3 + $0xf80] sm:$0xff]
      %v4785 = vld [vmem:[%s3 + $0xf88] sm:$0xff]
      %v4786 = vld [vmem:[%s3 + $0xf90] sm:$0xff]
      %v4787 = vld [vmem:[%s3 + $0xf98] sm:$0xff]
      %v4788 = vld [vmem:[%s3 + $0xfa0] sm:$0xff]
      %v4789 = vld [vmem:[%s3 + $0xfa8] sm:$0xff]
      %v4790 = vld [vmem:[%s3 + $0xfb0] sm:$0xff]
      %v4791 = vld [vmem:[%s3 + $0xfb8] sm:$0xff]
      %v4792 = vld [vmem:[%s3 + $0xfc0] sm:$0xff]
      %v4793 = vld [vmem:[%s3 + $0xfc8] sm:$0xff]
      %v4794 = vld [vmem:[%s3 + $0xfd0] sm:$0xff]
      %v4795 = vld [vmem:[%s3 + $0xfd8] sm:$0xff]
      %v4796 = vld [vmem:[%s3 + $0xfe0] sm:$0xff]
      %v4797 = vld [vmem:[%s3 + $0xfe8] sm:$0xff]
      %v4798 = vld [vmem:[%s3 + $0xff0] sm:$0xff]
      %v4799 = vld [vmem:[%s3 + $0xff8] sm:$0xff]
      %v4800 = vld [vmem:[%s4] sm:$0xff]
      %v4801 = vld [vmem:[%s4 + $0x8] sm:$0xff]
      %v5314 = vunpack.c.l.b16 %v4288
      %v5315 = vunpack.c.h.b16 %v4288
      %v5316 = vunpack.c.l.b16 %v4289
      %v5317 = vunpack.c.h.b16 %v4289
      %v5318 = vunpack.c.l.b16 %v4290
      %v5319 = vunpack.c.h.b16 %v4290
      %v5320 = vunpack.c.l.b16 %v4291
      %v5321 = vunpack.c.h.b16 %v4291
      %v5322 = vunpack.c.l.b16 %v4292
      %v5323 = vunpack.c.h.b16 %v4292
      %v5324 = vunpack.c.l.b16 %v4293
      %v5325 = vunpack.c.h.b16 %v4293
      %v5326 = vunpack.c.l.b16 %v4294
      %v5327 = vunpack.c.h.b16 %v4294
      %v5328 = vunpack.c.l.b16 %v4295
      %v5329 = vunpack.c.h.b16 %v4295
      %v5330 = vunpack.c.l.b16 %v4296
      %v5331 = vunpack.c.h.b16 %v4296
      %v5332 = vunpack.c.l.b16 %v4297
      %v5333 = vunpack.c.h.b16 %v4297
      %v5334 = vunpack.c.l.b16 %v4298
      %v5335 = vunpack.c.h.b16 %v4298
      %v5336 = vunpack.c.l.b16 %v4299
      %v5337 = vunpack.c.h.b16 %v4299
      %v5338 = vunpack.c.l.b16 %v4300
      %v5339 = vunpack.c.h.b16 %v4300
      %v5340 = vunpack.c.l.b16 %v4301
      %v5341 = vunpack.c.h.b16 %v4301
      %v5342 = vunpack.c.l.b16 %v4302
      %v5343 = vunpack.c.h.b16 %v4302
      %v5344 = vunpack.c.l.b16 %v4303
      %v5345 = vunpack.c.h.b16 %v4303
      %v5346 = vunpack.c.l.b16 %v4304
      %v5347 = vunpack.c.h.b16 %v4304
      %v5348 = vunpack.c.l.b16 %v4305
      %v5349 = vunpack.c.h.b16 %v4305
      %v5350 = vunpack.c.l.b16 %v4306
      %v5351 = vunpack.c.h.b16 %v4306
      %v5352 = vunpack.c.l.b16 %v4307
      %v5353 = vunpack.c.h.b16 %v4307
      %v5354 = vunpack.c.l.b16 %v4308
      %v5355 = vunpack.c.h.b16 %v4308
      %v5356 = vunpack.c.l.b16 %v4309
      %v5357 = vunpack.c.h.b16 %v4309
      %v5358 = vunpack.c.l.b16 %v4310
      %v5359 = vunpack.c.h.b16 %v4310
      %v5360 = vunpack.c.l.b16 %v4311
      %v5361 = vunpack.c.h.b16 %v4311
      %v5362 = vunpack.c.l.b16 %v4312
      %v5363 = vunpack.c.h.b16 %v4312
      %v5364 = vunpack.c.l.b16 %v4313
      %v5365 = vunpack.c.h.b16 %v4313
      %v5366 = vunpack.c.l.b16 %v4314
      %v5367 = vunpack.c.h.b16 %v4314
      %v5368 = vunpack.c.l.b16 %v4315
      %v5369 = vunpack.c.h.b16 %v4315
      %v5370 = vunpack.c.l.b16 %v4316
      %v5371 = vunpack.c.h.b16 %v4316
      %v5372 = vunpack.c.l.b16 %v4317
      %v5373 = vunpack.c.h.b16 %v4317
      %v5374 = vunpack.c.l.b16 %v4318
      %v5375 = vunpack.c.h.b16 %v4318
      %v5376 = vunpack.c.l.b16 %v4319
      %v5377 = vunpack.c.h.b16 %v4319
      %v5378 = vunpack.c.l.b16 %v4320
      %v5379 = vunpack.c.h.b16 %v4320
      %v5380 = vunpack.c.l.b16 %v4321
      %v5381 = vunpack.c.h.b16 %v4321
      %v5382 = vunpack.c.l.b16 %v4322
      %v5383 = vunpack.c.h.b16 %v4322
      %v5384 = vunpack.c.l.b16 %v4323
      %v5385 = vunpack.c.h.b16 %v4323
      %v5386 = vunpack.c.l.b16 %v4324
      %v5387 = vunpack.c.h.b16 %v4324
      %v5388 = vunpack.c.l.b16 %v4325
      %v5389 = vunpack.c.h.b16 %v4325
      %v5390 = vunpack.c.l.b16 %v4326
      %v5391 = vunpack.c.h.b16 %v4326
      %v5392 = vunpack.c.l.b16 %v4327
      %v5393 = vunpack.c.h.b16 %v4327
      %v5394 = vunpack.c.l.b16 %v4328
      %v5395 = vunpack.c.h.b16 %v4328
      %v5396 = vunpack.c.l.b16 %v4329
      %v5397 = vunpack.c.h.b16 %v4329
      %v5398 = vunpack.c.l.b16 %v4330
      %v5399 = vunpack.c.h.b16 %v4330
      %v5400 = vunpack.c.l.b16 %v4331
      %v5401 = vunpack.c.h.b16 %v4331
      %v5402 = vunpack.c.l.b16 %v4332
      %v5403 = vunpack.c.h.b16 %v4332
      %v5404 = vunpack.c.l.b16 %v4333
      %v5405 = vunpack.c.h.b16 %v4333
      %v5406 = vunpack.c.l.b16 %v4334
      %v5407 = vunpack.c.h.b16 %v4334
      %v5408 = vunpack.c.l.b16 %v4335
      %v5409 = vunpack.c.h.b16 %v4335
      %v5410 = vunpack.c.l.b16 %v4336
      %v5411 = vunpack.c.h.b16 %v4336
      %v5412 = vunpack.c.l.b16 %v4337
      %v5413 = vunpack.c.h.b16 %v4337
      %v5414 = vunpack.c.l.b16 %v4338
      %v5415 = vunpack.c.h.b16 %v4338
      %v5416 = vunpack.c.l.b16 %v4339
      %v5417 = vunpack.c.h.b16 %v4339
      %v5418 = vunpack.c.l.b16 %v4340
      %v5419 = vunpack.c.h.b16 %v4340
      %v5420 = vunpack.c.l.b16 %v4341
      %v5421 = vunpack.c.h.b16 %v4341
      %v5422 = vunpack.c.l.b16 %v4342
      %v5423 = vunpack.c.h.b16 %v4342
      %v5424 = vunpack.c.l.b16 %v4343
      %v5425 = vunpack.c.h.b16 %v4343
      %v5426 = vunpack.c.l.b16 %v4344
      %v5427 = vunpack.c.h.b16 %v4344
      %v5428 = vunpack.c.l.b16 %v4345
      %v5429 = vunpack.c.h.b16 %v4345
      %v5430 = vunpack.c.l.b16 %v4346
      %v5431 = vunpack.c.h.b16 %v4346
      %v5432 = vunpack.c.l.b16 %v4347
      %v5433 = vunpack.c.h.b16 %v4347
      %v5434 = vunpack.c.l.b16 %v4348
      %v5435 = vunpack.c.h.b16 %v4348
      %v5436 = vunpack.c.l.b16 %v4349
      %v5437 = vunpack.c.h.b16 %v4349
      %v5438 = vunpack.c.l.b16 %v4350
      %v5439 = vunpack.c.h.b16 %v4350
      %v5440 = vunpack.c.l.b16 %v4351
      %v5441 = vunpack.c.h.b16 %v4351
      %v5442 = vunpack.c.l.b16 %v4352
      %v5443 = vunpack.c.h.b16 %v4352
      %v5444 = vunpack.c.l.b16 %v4353
      %v5445 = vunpack.c.h.b16 %v4353
      %v5446 = vunpack.c.l.b16 %v4354
      %v5447 = vunpack.c.h.b16 %v4354
      %v5448 = vunpack.c.l.b16 %v4355
      %v5449 = vunpack.c.h.b16 %v4355
      %v5450 = vunpack.c.l.b16 %v4356
      %v5451 = vunpack.c.h.b16 %v4356
      %v5452 = vunpack.c.l.b16 %v4357
      %v5453 = vunpack.c.h.b16 %v4357
      %v5454 = vunpack.c.l.b16 %v4358
      %v5455 = vunpack.c.h.b16 %v4358
      %v5456 = vunpack.c.l.b16 %v4359
      %v5457 = vunpack.c.h.b16 %v4359
      %v5458 = vunpack.c.l.b16 %v4360
      %v5459 = vunpack.c.h.b16 %v4360
      %v5460 = vunpack.c.l.b16 %v4361
      %v5461 = vunpack.c.h.b16 %v4361
      %v5462 = vunpack.c.l.b16 %v4362
      %v5463 = vunpack.c.h.b16 %v4362
      %v5464 = vunpack.c.l.b16 %v4363
      %v5465 = vunpack.c.h.b16 %v4363
      %v5466 = vunpack.c.l.b16 %v4364
      %v5467 = vunpack.c.h.b16 %v4364
      %v5468 = vunpack.c.l.b16 %v4365
      %v5469 = vunpack.c.h.b16 %v4365
      %v5470 = vunpack.c.l.b16 %v4366
      %v5471 = vunpack.c.h.b16 %v4366
      %v5472 = vunpack.c.l.b16 %v4367
      %v5473 = vunpack.c.h.b16 %v4367
      %v5474 = vunpack.c.l.b16 %v4368
      %v5475 = vunpack.c.h.b16 %v4368
      %v5476 = vunpack.c.l.b16 %v4369
      %v5477 = vunpack.c.h.b16 %v4369
      %v5478 = vunpack.c.l.b16 %v4370
      %v5479 = vunpack.c.h.b16 %v4370
      %v5480 = vunpack.c.l.b16 %v4371
      %v5481 = vunpack.c.h.b16 %v4371
      %v5482 = vunpack.c.l.b16 %v4372
      %v5483 = vunpack.c.h.b16 %v4372
      %v5484 = vunpack.c.l.b16 %v4373
      %v5485 = vunpack.c.h.b16 %v4373
      %v5486 = vunpack.c.l.b16 %v4374
      %v5487 = vunpack.c.h.b16 %v4374
      %v5488 = vunpack.c.l.b16 %v4375
      %v5489 = vunpack.c.h.b16 %v4375
      %v5490 = vunpack.c.l.b16 %v4376
      %v5491 = vunpack.c.h.b16 %v4376
      %v5492 = vunpack.c.l.b16 %v4377
      %v5493 = vunpack.c.h.b16 %v4377
      %v5494 = vunpack.c.l.b16 %v4378
      %v5495 = vunpack.c.h.b16 %v4378
      %v5496 = vunpack.c.l.b16 %v4379
      %v5497 = vunpack.c.h.b16 %v4379
      %v5498 = vunpack.c.l.b16 %v4380
      %v5499 = vunpack.c.h.b16 %v4380
      %v5500 = vunpack.c.l.b16 %v4381
      %v5501 = vunpack.c.h.b16 %v4381
      %v5502 = vunpack.c.l.b16 %v4382
      %v5503 = vunpack.c.h.b16 %v4382
      %v5504 = vunpack.c.l.b16 %v4383
      %v5505 = vunpack.c.h.b16 %v4383
      %v5506 = vunpack.c.l.b16 %v4384
      %v5507 = vunpack.c.h.b16 %v4384
      %v5508 = vunpack.c.l.b16 %v4385
      %v5509 = vunpack.c.h.b16 %v4385
      %v5510 = vunpack.c.l.b16 %v4386
      %v5511 = vunpack.c.h.b16 %v4386
      %v5512 = vunpack.c.l.b16 %v4387
      %v5513 = vunpack.c.h.b16 %v4387
      %v5514 = vunpack.c.l.b16 %v4388
      %v5515 = vunpack.c.h.b16 %v4388
      %v5516 = vunpack.c.l.b16 %v4389
      %v5517 = vunpack.c.h.b16 %v4389
      %v5518 = vunpack.c.l.b16 %v4390
      %v5519 = vunpack.c.h.b16 %v4390
      %v5520 = vunpack.c.l.b16 %v4391
      %v5521 = vunpack.c.h.b16 %v4391
      %v5522 = vunpack.c.l.b16 %v4392
      %v5523 = vunpack.c.h.b16 %v4392
      %v5524 = vunpack.c.l.b16 %v4393
      %v5525 = vunpack.c.h.b16 %v4393
      %v5526 = vunpack.c.l.b16 %v4394
      %v5527 = vunpack.c.h.b16 %v4394
      %v5528 = vunpack.c.l.b16 %v4395
      %v5529 = vunpack.c.h.b16 %v4395
      %v5530 = vunpack.c.l.b16 %v4396
      %v5531 = vunpack.c.h.b16 %v4396
      %v5532 = vunpack.c.l.b16 %v4397
      %v5533 = vunpack.c.h.b16 %v4397
      %v5534 = vunpack.c.l.b16 %v4398
      %v5535 = vunpack.c.h.b16 %v4398
      %v5536 = vunpack.c.l.b16 %v4399
      %v5537 = vunpack.c.h.b16 %v4399
      %v5538 = vunpack.c.l.b16 %v4400
      %v5539 = vunpack.c.h.b16 %v4400
      %v5540 = vunpack.c.l.b16 %v4401
      %v5541 = vunpack.c.h.b16 %v4401
      %v5542 = vunpack.c.l.b16 %v4402
      %v5543 = vunpack.c.h.b16 %v4402
      %v5544 = vunpack.c.l.b16 %v4403
      %v5545 = vunpack.c.h.b16 %v4403
      %v5546 = vunpack.c.l.b16 %v4404
      %v5547 = vunpack.c.h.b16 %v4404
      %v5548 = vunpack.c.l.b16 %v4405
      %v5549 = vunpack.c.h.b16 %v4405
      %v5550 = vunpack.c.l.b16 %v4406
      %v5551 = vunpack.c.h.b16 %v4406
      %v5552 = vunpack.c.l.b16 %v4407
      %v5553 = vunpack.c.h.b16 %v4407
      %v5554 = vunpack.c.l.b16 %v4408
      %v5555 = vunpack.c.h.b16 %v4408
      %v5556 = vunpack.c.l.b16 %v4409
      %v5557 = vunpack.c.h.b16 %v4409
      %v5558 = vunpack.c.l.b16 %v4410
      %v5559 = vunpack.c.h.b16 %v4410
      %v5560 = vunpack.c.l.b16 %v4411
      %v5561 = vunpack.c.h.b16 %v4411
      %v5562 = vunpack.c.l.b16 %v4412
      %v5563 = vunpack.c.h.b16 %v4412
      %v5564 = vunpack.c.l.b16 %v4413
      %v5565 = vunpack.c.h.b16 %v4413
      %v5566 = vunpack.c.l.b16 %v4414
      %v5567 = vunpack.c.h.b16 %v4414
      %v5568 = vunpack.c.l.b16 %v4415
      %v5569 = vunpack.c.h.b16 %v4415
      %v5570 = vunpack.c.l.b16 %v4416
      %v5571 = vunpack.c.h.b16 %v4416
      %v5572 = vunpack.c.l.b16 %v4417
      %v5573 = vunpack.c.h.b16 %v4417
      %v5574 = vunpack.c.l.b16 %v4418
      %v5575 = vunpack.c.h.b16 %v4418
      %v5576 = vunpack.c.l.b16 %v4419
      %v5577 = vunpack.c.h.b16 %v4419
      %v5578 = vunpack.c.l.b16 %v4420
      %v5579 = vunpack.c.h.b16 %v4420
      %v5580 = vunpack.c.l.b16 %v4421
      %v5581 = vunpack.c.h.b16 %v4421
      %v5582 = vunpack.c.l.b16 %v4422
      %v5583 = vunpack.c.h.b16 %v4422
      %v5584 = vunpack.c.l.b16 %v4423
      %v5585 = vunpack.c.h.b16 %v4423
      %v5586 = vunpack.c.l.b16 %v4424
      %v5587 = vunpack.c.h.b16 %v4424
      %v5588 = vunpack.c.l.b16 %v4425
      %v5589 = vunpack.c.h.b16 %v4425
      %v5590 = vunpack.c.l.b16 %v4426
      %v5591 = vunpack.c.h.b16 %v4426
      %v5592 = vunpack.c.l.b16 %v4427
      %v5593 = vunpack.c.h.b16 %v4427
      %v5594 = vunpack.c.l.b16 %v4428
      %v5595 = vunpack.c.h.b16 %v4428
      %v5596 = vunpack.c.l.b16 %v4429
      %v5597 = vunpack.c.h.b16 %v4429
      %v5598 = vunpack.c.l.b16 %v4430
      %v5599 = vunpack.c.h.b16 %v4430
      %v5600 = vunpack.c.l.b16 %v4431
      %v5601 = vunpack.c.h.b16 %v4431
      %v5602 = vunpack.c.l.b16 %v4432
      %v5603 = vunpack.c.h.b16 %v4432
      %v5604 = vunpack.c.l.b16 %v4433
      %v5605 = vunpack.c.h.b16 %v4433
      %v5606 = vunpack.c.l.b16 %v4434
      %v5607 = vunpack.c.h.b16 %v4434
      %v5608 = vunpack.c.l.b16 %v4435
      %v5609 = vunpack.c.h.b16 %v4435
      %v5610 = vunpack.c.l.b16 %v4436
      %v5611 = vunpack.c.h.b16 %v4436
      %v5612 = vunpack.c.l.b16 %v4437
      %v5613 = vunpack.c.h.b16 %v4437
      %v5614 = vunpack.c.l.b16 %v4438
      %v5615 = vunpack.c.h.b16 %v4438
      %v5616 = vunpack.c.l.b16 %v4439
      %v5617 = vunpack.c.h.b16 %v4439
      %v5618 = vunpack.c.l.b16 %v4440
      %v5619 = vunpack.c.h.b16 %v4440
      %v5620 = vunpack.c.l.b16 %v4441
      %v5621 = vunpack.c.h.b16 %v4441
      %v5622 = vunpack.c.l.b16 %v4442
      %v5623 = vunpack.c.h.b16 %v4442
      %v5624 = vunpack.c.l.b16 %v4443
      %v5625 = vunpack.c.h.b16 %v4443
      %v5626 = vunpack.c.l.b16 %v4444
      %v5627 = vunpack.c.h.b16 %v4444
      %v5628 = vunpack.c.l.b16 %v4445
      %v5629 = vunpack.c.h.b16 %v4445
      %v5630 = vunpack.c.l.b16 %v4446
      %v5631 = vunpack.c.h.b16 %v4446
      %v5632 = vunpack.c.l.b16 %v4447
      %v5633 = vunpack.c.h.b16 %v4447
      %v5634 = vunpack.c.l.b16 %v4448
      %v5635 = vunpack.c.h.b16 %v4448
      %v5636 = vunpack.c.l.b16 %v4449
      %v5637 = vunpack.c.h.b16 %v4449
      %v5638 = vunpack.c.l.b16 %v4450
      %v5639 = vunpack.c.h.b16 %v4450
      %v5640 = vunpack.c.l.b16 %v4451
      %v5641 = vunpack.c.h.b16 %v4451
      %v5642 = vunpack.c.l.b16 %v4452
      %v5643 = vunpack.c.h.b16 %v4452
      %v5644 = vunpack.c.l.b16 %v4453
      %v5645 = vunpack.c.h.b16 %v4453
      %v5646 = vunpack.c.l.b16 %v4454
      %v5647 = vunpack.c.h.b16 %v4454
      %v5648 = vunpack.c.l.b16 %v4455
      %v5649 = vunpack.c.h.b16 %v4455
      %v5650 = vunpack.c.l.b16 %v4456
      %v5651 = vunpack.c.h.b16 %v4456
      %v5652 = vunpack.c.l.b16 %v4457
      %v5653 = vunpack.c.h.b16 %v4457
      %v5654 = vunpack.c.l.b16 %v4458
      %v5655 = vunpack.c.h.b16 %v4458
      %v5656 = vunpack.c.l.b16 %v4459
      %v5657 = vunpack.c.h.b16 %v4459
      %v5658 = vunpack.c.l.b16 %v4460
      %v5659 = vunpack.c.h.b16 %v4460
      %v5660 = vunpack.c.l.b16 %v4461
      %v5661 = vunpack.c.h.b16 %v4461
      %v5662 = vunpack.c.l.b16 %v4462
      %v5663 = vunpack.c.h.b16 %v4462
      %v5664 = vunpack.c.l.b16 %v4463
      %v5665 = vunpack.c.h.b16 %v4463
      %v5666 = vunpack.c.l.b16 %v4464
      %v5667 = vunpack.c.h.b16 %v4464
      %v5668 = vunpack.c.l.b16 %v4465
      %v5669 = vunpack.c.h.b16 %v4465
      %v5670 = vunpack.c.l.b16 %v4466
      %v5671 = vunpack.c.h.b16 %v4466
      %v5672 = vunpack.c.l.b16 %v4467
      %v5673 = vunpack.c.h.b16 %v4467
      %v5674 = vunpack.c.l.b16 %v4468
      %v5675 = vunpack.c.h.b16 %v4468
      %v5676 = vunpack.c.l.b16 %v4469
      %v5677 = vunpack.c.h.b16 %v4469
      %v5678 = vunpack.c.l.b16 %v4470
      %v5679 = vunpack.c.h.b16 %v4470
      %v5680 = vunpack.c.l.b16 %v4471
      %v5681 = vunpack.c.h.b16 %v4471
      %v5682 = vunpack.c.l.b16 %v4472
      %v5683 = vunpack.c.h.b16 %v4472
      %v5684 = vunpack.c.l.b16 %v4473
      %v5685 = vunpack.c.h.b16 %v4473
      %v5686 = vunpack.c.l.b16 %v4474
      %v5687 = vunpack.c.h.b16 %v4474
      %v5688 = vunpack.c.l.b16 %v4475
      %v5689 = vunpack.c.h.b16 %v4475
      %v5690 = vunpack.c.l.b16 %v4476
      %v5691 = vunpack.c.h.b16 %v4476
      %v5692 = vunpack.c.l.b16 %v4477
      %v5693 = vunpack.c.h.b16 %v4477
      %v5694 = vunpack.c.l.b16 %v4478
      %v5695 = vunpack.c.h.b16 %v4478
      %v5696 = vunpack.c.l.b16 %v4479
      %v5697 = vunpack.c.h.b16 %v4479
      %v5698 = vunpack.c.l.b16 %v4480
      %v5699 = vunpack.c.h.b16 %v4480
      %v5700 = vunpack.c.l.b16 %v4481
      %v5701 = vunpack.c.h.b16 %v4481
      %v5702 = vunpack.c.l.b16 %v4482
      %v5703 = vunpack.c.h.b16 %v4482
      %v5704 = vunpack.c.l.b16 %v4483
      %v5705 = vunpack.c.h.b16 %v4483
      %v5706 = vunpack.c.l.b16 %v4484
      %v5707 = vunpack.c.h.b16 %v4484
      %v5708 = vunpack.c.l.b16 %v4485
      %v5709 = vunpack.c.h.b16 %v4485
      %v5710 = vunpack.c.l.b16 %v4486
      %v5711 = vunpack.c.h.b16 %v4486
      %v5712 = vunpack.c.l.b16 %v4487
      %v5713 = vunpack.c.h.b16 %v4487
      %v5714 = vunpack.c.l.b16 %v4488
      %v5715 = vunpack.c.h.b16 %v4488
      %v5716 = vunpack.c.l.b16 %v4489
      %v5717 = vunpack.c.h.b16 %v4489
      %v5718 = vunpack.c.l.b16 %v4490
      %v5719 = vunpack.c.h.b16 %v4490
      %v5720 = vunpack.c.l.b16 %v4491
      %v5721 = vunpack.c.h.b16 %v4491
      %v5722 = vunpack.c.l.b16 %v4492
      %v5723 = vunpack.c.h.b16 %v4492
      %v5724 = vunpack.c.l.b16 %v4493
      %v5725 = vunpack.c.h.b16 %v4493
      %v5726 = vunpack.c.l.b16 %v4494
      %v5727 = vunpack.c.h.b16 %v4494
      %v5728 = vunpack.c.l.b16 %v4495
      %v5729 = vunpack.c.h.b16 %v4495
      %v5730 = vunpack.c.l.b16 %v4496
      %v5731 = vunpack.c.h.b16 %v4496
      %v5732 = vunpack.c.l.b16 %v4497
      %v5733 = vunpack.c.h.b16 %v4497
      %v5734 = vunpack.c.l.b16 %v4498
      %v5735 = vunpack.c.h.b16 %v4498
      %v5736 = vunpack.c.l.b16 %v4499
      %v5737 = vunpack.c.h.b16 %v4499
      %v5738 = vunpack.c.l.b16 %v4500
      %v5739 = vunpack.c.h.b16 %v4500
      %v5740 = vunpack.c.l.b16 %v4501
      %v5741 = vunpack.c.h.b16 %v4501
      %v5742 = vunpack.c.l.b16 %v4502
      %v5743 = vunpack.c.h.b16 %v4502
      %v5744 = vunpack.c.l.b16 %v4503
      %v5745 = vunpack.c.h.b16 %v4503
      %v5746 = vunpack.c.l.b16 %v4504
      %v5747 = vunpack.c.h.b16 %v4504
      %v5748 = vunpack.c.l.b16 %v4505
      %v5749 = vunpack.c.h.b16 %v4505
      %v5750 = vunpack.c.l.b16 %v4506
      %v5751 = vunpack.c.h.b16 %v4506
      %v5752 = vunpack.c.l.b16 %v4507
      %v5753 = vunpack.c.h.b16 %v4507
      %v5754 = vunpack.c.l.b16 %v4508
      %v5755 = vunpack.c.h.b16 %v4508
      %v5756 = vunpack.c.l.b16 %v4509
      %v5757 = vunpack.c.h.b16 %v4509
      %v5758 = vunpack.c.l.b16 %v4510
      %v5759 = vunpack.c.h.b16 %v4510
      %v5760 = vunpack.c.l.b16 %v4511
      %v5761 = vunpack.c.h.b16 %v4511
      %v5762 = vunpack.c.l.b16 %v4512
      %v5763 = vunpack.c.h.b16 %v4512
      %v5764 = vunpack.c.l.b16 %v4513
      %v5765 = vunpack.c.h.b16 %v4513
      %v5766 = vunpack.c.l.b16 %v4514
      %v5767 = vunpack.c.h.b16 %v4514
      %v5768 = vunpack.c.l.b16 %v4515
      %v5769 = vunpack.c.h.b16 %v4515
      %v5770 = vunpack.c.l.b16 %v4516
      %v5771 = vunpack.c.h.b16 %v4516
      %v5772 = vunpack.c.l.b16 %v4517
      %v5773 = vunpack.c.h.b16 %v4517
      %v5774 = vunpack.c.l.b16 %v4518
      %v5775 = vunpack.c.h.b16 %v4518
      %v5776 = vunpack.c.l.b16 %v4519
      %v5777 = vunpack.c.h.b16 %v4519
      %v5778 = vunpack.c.l.b16 %v4520
      %v5779 = vunpack.c.h.b16 %v4520
      %v5780 = vunpack.c.l.b16 %v4521
      %v5781 = vunpack.c.h.b16 %v4521
      %v5782 = vunpack.c.l.b16 %v4522
      %v5783 = vunpack.c.h.b16 %v4522
      %v5784 = vunpack.c.l.b16 %v4523
      %v5785 = vunpack.c.h.b16 %v4523
      %v5786 = vunpack.c.l.b16 %v4524
      %v5787 = vunpack.c.h.b16 %v4524
      %v5788 = vunpack.c.l.b16 %v4525
      %v5789 = vunpack.c.h.b16 %v4525
      %v5790 = vunpack.c.l.b16 %v4526
      %v5791 = vunpack.c.h.b16 %v4526
      %v5792 = vunpack.c.l.b16 %v4527
      %v5793 = vunpack.c.h.b16 %v4527
      %v5794 = vunpack.c.l.b16 %v4528
      %v5795 = vunpack.c.h.b16 %v4528
      %v5796 = vunpack.c.l.b16 %v4529
      %v5797 = vunpack.c.h.b16 %v4529
      %v5798 = vunpack.c.l.b16 %v4530
      %v5799 = vunpack.c.h.b16 %v4530
      %v5800 = vunpack.c.l.b16 %v4531
      %v5801 = vunpack.c.h.b16 %v4531
      %v5802 = vunpack.c.l.b16 %v4532
      %v5803 = vunpack.c.h.b16 %v4532
      %v5804 = vunpack.c.l.b16 %v4533
      %v5805 = vunpack.c.h.b16 %v4533
      %v5806 = vunpack.c.l.b16 %v4534
      %v5807 = vunpack.c.h.b16 %v4534
      %v5808 = vunpack.c.l.b16 %v4535
      %v5809 = vunpack.c.h.b16 %v4535
      %v5810 = vunpack.c.l.b16 %v4536
      %v5811 = vunpack.c.h.b16 %v4536
      %v5812 = vunpack.c.l.b16 %v4537
      %v5813 = vunpack.c.h.b16 %v4537
      %v5814 = vunpack.c.l.b16 %v4538
      %v5815 = vunpack.c.h.b16 %v4538
      %v5816 = vunpack.c.l.b16 %v4539
      %v5817 = vunpack.c.h.b16 %v4539
      %v5818 = vunpack.c.l.b16 %v4540
      %v5819 = vunpack.c.h.b16 %v4540
      %v5820 = vunpack.c.l.b16 %v4541
      %v5821 = vunpack.c.h.b16 %v4541
      %v5822 = vunpack.c.l.b16 %v4542
      %v5823 = vunpack.c.h.b16 %v4542
      %v5824 = vunpack.c.l.b16 %v4543
      %v5825 = vunpack.c.h.b16 %v4543
      %v5826 = vunpack.c.l.b16 %v4544
      %v5827 = vunpack.c.h.b16 %v4544
      %v5828 = vunpack.c.l.b16 %v4545
      %v5829 = vunpack.c.h.b16 %v4545
      %v5830 = vunpack.c.l.b16 %v4546
      %v5831 = vunpack.c.h.b16 %v4546
      %v5832 = vunpack.c.l.b16 %v4547
      %v5833 = vunpack.c.h.b16 %v4547
      %v5834 = vunpack.c.l.b16 %v4548
      %v5835 = vunpack.c.h.b16 %v4548
      %v5836 = vunpack.c.l.b16 %v4549
      %v5837 = vunpack.c.h.b16 %v4549
      %v5838 = vunpack.c.l.b16 %v4550
      %v5839 = vunpack.c.h.b16 %v4550
      %v5840 = vunpack.c.l.b16 %v4551
      %v5841 = vunpack.c.h.b16 %v4551
      %v5842 = vunpack.c.l.b16 %v4552
      %v5843 = vunpack.c.h.b16 %v4552
      %v5844 = vunpack.c.l.b16 %v4553
      %v5845 = vunpack.c.h.b16 %v4553
      %v5846 = vunpack.c.l.b16 %v4554
      %v5847 = vunpack.c.h.b16 %v4554
      %v5848 = vunpack.c.l.b16 %v4555
      %v5849 = vunpack.c.h.b16 %v4555
      %v5850 = vunpack.c.l.b16 %v4556
      %v5851 = vunpack.c.h.b16 %v4556
      %v5852 = vunpack.c.l.b16 %v4557
      %v5853 = vunpack.c.h.b16 %v4557
      %v5854 = vunpack.c.l.b16 %v4558
      %v5855 = vunpack.c.h.b16 %v4558
      %v5856 = vunpack.c.l.b16 %v4559
      %v5857 = vunpack.c.h.b16 %v4559
      %v5858 = vunpack.c.l.b16 %v4560
      %v5859 = vunpack.c.h.b16 %v4560
      %v5860 = vunpack.c.l.b16 %v4561
      %v5861 = vunpack.c.h.b16 %v4561
      %v5862 = vunpack.c.l.b16 %v4562
      %v5863 = vunpack.c.h.b16 %v4562
      %v5864 = vunpack.c.l.b16 %v4563
      %v5865 = vunpack.c.h.b16 %v4563
      %v5866 = vunpack.c.l.b16 %v4564
      %v5867 = vunpack.c.h.b16 %v4564
      %v5868 = vunpack.c.l.b16 %v4565
      %v5869 = vunpack.c.h.b16 %v4565
      %v5870 = vunpack.c.l.b16 %v4566
      %v5871 = vunpack.c.h.b16 %v4566
      %v5872 = vunpack.c.l.b16 %v4567
      %v5873 = vunpack.c.h.b16 %v4567
      %v5874 = vunpack.c.l.b16 %v4568
      %v5875 = vunpack.c.h.b16 %v4568
      %v5876 = vunpack.c.l.b16 %v4569
      %v5877 = vunpack.c.h.b16 %v4569
      %v5878 = vunpack.c.l.b16 %v4570
      %v5879 = vunpack.c.h.b16 %v4570
      %v5880 = vunpack.c.l.b16 %v4571
      %v5881 = vunpack.c.h.b16 %v4571
      %v5882 = vunpack.c.l.b16 %v4572
      %v5883 = vunpack.c.h.b16 %v4572
      %v5884 = vunpack.c.l.b16 %v4573
      %v5885 = vunpack.c.h.b16 %v4573
      %v5886 = vunpack.c.l.b16 %v4574
      %v5887 = vunpack.c.h.b16 %v4574
      %v5888 = vunpack.c.l.b16 %v4575
      %v5889 = vunpack.c.h.b16 %v4575
      %v5890 = vunpack.c.l.b16 %v4576
      %v5891 = vunpack.c.h.b16 %v4576
      %v5892 = vunpack.c.l.b16 %v4577
      %v5893 = vunpack.c.h.b16 %v4577
      %v5894 = vunpack.c.l.b16 %v4578
      %v5895 = vunpack.c.h.b16 %v4578
      %v5896 = vunpack.c.l.b16 %v4579
      %v5897 = vunpack.c.h.b16 %v4579
      %v5898 = vunpack.c.l.b16 %v4580
      %v5899 = vunpack.c.h.b16 %v4580
      %v5900 = vunpack.c.l.b16 %v4581
      %v5901 = vunpack.c.h.b16 %v4581
      %v5902 = vunpack.c.l.b16 %v4582
      %v5903 = vunpack.c.h.b16 %v4582
      %v5904 = vunpack.c.l.b16 %v4583
      %v5905 = vunpack.c.h.b16 %v4583
      %v5906 = vunpack.c.l.b16 %v4584
      %v5907 = vunpack.c.h.b16 %v4584
      %v5908 = vunpack.c.l.b16 %v4585
      %v5909 = vunpack.c.h.b16 %v4585
      %v5910 = vunpack.c.l.b16 %v4586
      %v5911 = vunpack.c.h.b16 %v4586
      %v5912 = vunpack.c.l.b16 %v4587
      %v5913 = vunpack.c.h.b16 %v4587
      %v5914 = vunpack.c.l.b16 %v4588
      %v5915 = vunpack.c.h.b16 %v4588
      %v5916 = vunpack.c.l.b16 %v4589
      %v5917 = vunpack.c.h.b16 %v4589
      %v5918 = vunpack.c.l.b16 %v4590
      %v5919 = vunpack.c.h.b16 %v4590
      %v5920 = vunpack.c.l.b16 %v4591
      %v5921 = vunpack.c.h.b16 %v4591
      %v5922 = vunpack.c.l.b16 %v4592
      %v5923 = vunpack.c.h.b16 %v4592
      %v5924 = vunpack.c.l.b16 %v4593
      %v5925 = vunpack.c.h.b16 %v4593
      %v5926 = vunpack.c.l.b16 %v4594
      %v5927 = vunpack.c.h.b16 %v4594
      %v5928 = vunpack.c.l.b16 %v4595
      %v5929 = vunpack.c.h.b16 %v4595
      %v5930 = vunpack.c.l.b16 %v4596
      %v5931 = vunpack.c.h.b16 %v4596
      %v5932 = vunpack.c.l.b16 %v4597
      %v5933 = vunpack.c.h.b16 %v4597
      %v5934 = vunpack.c.l.b16 %v4598
      %v5935 = vunpack.c.h.b16 %v4598
      %v5936 = vunpack.c.l.b16 %v4599
      %v5937 = vunpack.c.h.b16 %v4599
      %v5938 = vunpack.c.l.b16 %v4600
      %v5939 = vunpack.c.h.b16 %v4600
      %v5940 = vunpack.c.l.b16 %v4601
      %v5941 = vunpack.c.h.b16 %v4601
      %v5942 = vunpack.c.l.b16 %v4602
      %v5943 = vunpack.c.h.b16 %v4602
      %v5944 = vunpack.c.l.b16 %v4603
      %v5945 = vunpack.c.h.b16 %v4603
      %v5946 = vunpack.c.l.b16 %v4604
      %v5947 = vunpack.c.h.b16 %v4604
      %v5948 = vunpack.c.l.b16 %v4605
      %v5949 = vunpack.c.h.b16 %v4605
      %v5950 = vunpack.c.l.b16 %v4606
      %v5951 = vunpack.c.h.b16 %v4606
      %v5952 = vunpack.c.l.b16 %v4607
      %v5953 = vunpack.c.h.b16 %v4607
      %v5954 = vunpack.c.l.b16 %v4608
      %v5955 = vunpack.c.h.b16 %v4608
      %v5956 = vunpack.c.l.b16 %v4609
      %v5957 = vunpack.c.h.b16 %v4609
      %v5958 = vunpack.c.l.b16 %v4610
      %v5959 = vunpack.c.h.b16 %v4610
      %v5960 = vunpack.c.l.b16 %v4611
      %v5961 = vunpack.c.h.b16 %v4611
      %v5962 = vunpack.c.l.b16 %v4612
      %v5963 = vunpack.c.h.b16 %v4612
      %v5964 = vunpack.c.l.b16 %v4613
      %v5965 = vunpack.c.h.b16 %v4613
      %v5966 = vunpack.c.l.b16 %v4614
      %v5967 = vunpack.c.h.b16 %v4614
      %v5968 = vunpack.c.l.b16 %v4615
      %v5969 = vunpack.c.h.b16 %v4615
      %v5970 = vunpack.c.l.b16 %v4616
      %v5971 = vunpack.c.h.b16 %v4616
      %v5972 = vunpack.c.l.b16 %v4617
      %v5973 = vunpack.c.h.b16 %v4617
      %v5974 = vunpack.c.l.b16 %v4618
      %v5975 = vunpack.c.h.b16 %v4618
      %v5976 = vunpack.c.l.b16 %v4619
      %v5977 = vunpack.c.h.b16 %v4619
      %v5978 = vunpack.c.l.b16 %v4620
      %v5979 = vunpack.c.h.b16 %v4620
      %v5980 = vunpack.c.l.b16 %v4621
      %v5981 = vunpack.c.h.b16 %v4621
      %v5982 = vunpack.c.l.b16 %v4622
      %v5983 = vunpack.c.h.b16 %v4622
      %v5984 = vunpack.c.l.b16 %v4623
      %v5985 = vunpack.c.h.b16 %v4623
      %v5986 = vunpack.c.l.b16 %v4624
      %v5987 = vunpack.c.h.b16 %v4624
      %v5988 = vunpack.c.l.b16 %v4625
      %v5989 = vunpack.c.h.b16 %v4625
      %v5990 = vunpack.c.l.b16 %v4626
      %v5991 = vunpack.c.h.b16 %v4626
      %v5992 = vunpack.c.l.b16 %v4627
      %v5993 = vunpack.c.h.b16 %v4627
      %v5994 = vunpack.c.l.b16 %v4628
      %v5995 = vunpack.c.h.b16 %v4628
      %v5996 = vunpack.c.l.b16 %v4629
      %v5997 = vunpack.c.h.b16 %v4629
      %v5998 = vunpack.c.l.b16 %v4630
      %v5999 = vunpack.c.h.b16 %v4630
      %v6000 = vunpack.c.l.b16 %v4631
      %v6001 = vunpack.c.h.b16 %v4631
      %v6002 = vunpack.c.l.b16 %v4632
      %v6003 = vunpack.c.h.b16 %v4632
      %v6004 = vunpack.c.l.b16 %v4633
      %v6005 = vunpack.c.h.b16 %v4633
      %v6006 = vunpack.c.l.b16 %v4634
      %v6007 = vunpack.c.h.b16 %v4634
      %v6008 = vunpack.c.l.b16 %v4635
      %v6009 = vunpack.c.h.b16 %v4635
      %v6010 = vunpack.c.l.b16 %v4636
      %v6011 = vunpack.c.h.b16 %v4636
      %v6012 = vunpack.c.l.b16 %v4637
      %v6013 = vunpack.c.h.b16 %v4637
      %v6014 = vunpack.c.l.b16 %v4638
      %v6015 = vunpack.c.h.b16 %v4638
      %v6016 = vunpack.c.l.b16 %v4639
      %v6017 = vunpack.c.h.b16 %v4639
      %v6018 = vunpack.c.l.b16 %v4640
      %v6019 = vunpack.c.h.b16 %v4640
      %v6020 = vunpack.c.l.b16 %v4641
      %v6021 = vunpack.c.h.b16 %v4641
      %v6022 = vunpack.c.l.b16 %v4642
      %v6023 = vunpack.c.h.b16 %v4642
      %v6024 = vunpack.c.l.b16 %v4643
      %v6025 = vunpack.c.h.b16 %v4643
      %v6026 = vunpack.c.l.b16 %v4644
      %v6027 = vunpack.c.h.b16 %v4644
      %v6028 = vunpack.c.l.b16 %v4645
      %v6029 = vunpack.c.h.b16 %v4645
      %v6030 = vunpack.c.l.b16 %v4646
      %v6031 = vunpack.c.h.b16 %v4646
      %v6032 = vunpack.c.l.b16 %v4647
      %v6033 = vunpack.c.h.b16 %v4647
      %v6034 = vunpack.c.l.b16 %v4648
      %v6035 = vunpack.c.h.b16 %v4648
      %v6036 = vunpack.c.l.b16 %v4649
      %v6037 = vunpack.c.h.b16 %v4649
      %v6038 = vunpack.c.l.b16 %v4650
      %v6039 = vunpack.c.h.b16 %v4650
      %v6040 = vunpack.c.l.b16 %v4651
      %v6041 = vunpack.c.h.b16 %v4651
      %v6042 = vunpack.c.l.b16 %v4652
      %v6043 = vunpack.c.h.b16 %v4652
      %v6044 = vunpack.c.l.b16 %v4653
      %v6045 = vunpack.c.h.b16 %v4653
      %v6046 = vunpack.c.l.b16 %v4654
      %v6047 = vunpack.c.h.b16 %v4654
      %v6048 = vunpack.c.l.b16 %v4655
      %v6049 = vunpack.c.h.b16 %v4655
      %v6050 = vunpack.c.l.b16 %v4656
      %v6051 = vunpack.c.h.b16 %v4656
      %v6052 = vunpack.c.l.b16 %v4657
      %v6053 = vunpack.c.h.b16 %v4657
      %v6054 = vunpack.c.l.b16 %v4658
      %v6055 = vunpack.c.h.b16 %v4658
      %v6056 = vunpack.c.l.b16 %v4659
      %v6057 = vunpack.c.h.b16 %v4659
      %v6058 = vunpack.c.l.b16 %v4660
      %v6059 = vunpack.c.h.b16 %v4660
      %v6060 = vunpack.c.l.b16 %v4661
      %v6061 = vunpack.c.h.b16 %v4661
      %v6062 = vunpack.c.l.b16 %v4662
      %v6063 = vunpack.c.h.b16 %v4662
      %v6064 = vunpack.c.l.b16 %v4663
      %v6065 = vunpack.c.h.b16 %v4663
      %v6066 = vunpack.c.l.b16 %v4664
      %v6067 = vunpack.c.h.b16 %v4664
      %v6068 = vunpack.c.l.b16 %v4665
      %v6069 = vunpack.c.h.b16 %v4665
      %v6070 = vunpack.c.l.b16 %v4666
      %v6071 = vunpack.c.h.b16 %v4666
      %v6072 = vunpack.c.l.b16 %v4667
      %v6073 = vunpack.c.h.b16 %v4667
      %v6074 = vunpack.c.l.b16 %v4668
      %v6075 = vunpack.c.h.b16 %v4668
      %v6076 = vunpack.c.l.b16 %v4669
      %v6077 = vunpack.c.h.b16 %v4669
      %v6078 = vunpack.c.l.b16 %v4670
      %v6079 = vunpack.c.h.b16 %v4670
      %v6080 = vunpack.c.l.b16 %v4671
      %v6081 = vunpack.c.h.b16 %v4671
      %v6082 = vunpack.c.l.b16 %v4672
      %v6083 = vunpack.c.h.b16 %v4672
      %v6084 = vunpack.c.l.b16 %v4673
      %v6085 = vunpack.c.h.b16 %v4673
      %v6086 = vunpack.c.l.b16 %v4674
      %v6087 = vunpack.c.h.b16 %v4674
      %v6088 = vunpack.c.l.b16 %v4675
      %v6089 = vunpack.c.h.b16 %v4675
      %v6090 = vunpack.c.l.b16 %v4676
      %v6091 = vunpack.c.h.b16 %v4676
      %v6092 = vunpack.c.l.b16 %v4677
      %v6093 = vunpack.c.h.b16 %v4677
      %v6094 = vunpack.c.l.b16 %v4678
      %v6095 = vunpack.c.h.b16 %v4678
      %v6096 = vunpack.c.l.b16 %v4679
      %v6097 = vunpack.c.h.b16 %v4679
      %v6098 = vunpack.c.l.b16 %v4680
      %v6099 = vunpack.c.h.b16 %v4680
      %v6100 = vunpack.c.l.b16 %v4681
      %v6101 = vunpack.c.h.b16 %v4681
      %v6102 = vunpack.c.l.b16 %v4682
      %v6103 = vunpack.c.h.b16 %v4682
      %v6104 = vunpack.c.l.b16 %v4683
      %v6105 = vunpack.c.h.b16 %v4683
      %v6106 = vunpack.c.l.b16 %v4684
      %v6107 = vunpack.c.h.b16 %v4684
      %v6108 = vunpack.c.l.b16 %v4685
      %v6109 = vunpack.c.h.b16 %v4685
      %v6110 = vunpack.c.l.b16 %v4686
      %v6111 = vunpack.c.h.b16 %v4686
      %v6112 = vunpack.c.l.b16 %v4687
      %v6113 = vunpack.c.h.b16 %v4687
      %v6114 = vunpack.c.l.b16 %v4688
      %v6115 = vunpack.c.h.b16 %v4688
      %v6116 = vunpack.c.l.b16 %v4689
      %v6117 = vunpack.c.h.b16 %v4689
      %v6118 = vunpack.c.l.b16 %v4690
      %v6119 = vunpack.c.h.b16 %v4690
      %v6120 = vunpack.c.l.b16 %v4691
      %v6121 = vunpack.c.h.b16 %v4691
      %v6122 = vunpack.c.l.b16 %v4692
      %v6123 = vunpack.c.h.b16 %v4692
      %v6124 = vunpack.c.l.b16 %v4693
      %v6125 = vunpack.c.h.b16 %v4693
      %v6126 = vunpack.c.l.b16 %v4694
      %v6127 = vunpack.c.h.b16 %v4694
      %v6128 = vunpack.c.l.b16 %v4695
      %v6129 = vunpack.c.h.b16 %v4695
      %v6130 = vunpack.c.l.b16 %v4696
      %v6131 = vunpack.c.h.b16 %v4696
      %v6132 = vunpack.c.l.b16 %v4697
      %v6133 = vunpack.c.h.b16 %v4697
      %v6134 = vunpack.c.l.b16 %v4698
      %v6135 = vunpack.c.h.b16 %v4698
      %v6136 = vunpack.c.l.b16 %v4699
      %v6137 = vunpack.c.h.b16 %v4699
      %v6138 = vunpack.c.l.b16 %v4700
      %v6139 = vunpack.c.h.b16 %v4700
      %v6140 = vunpack.c.l.b16 %v4701
      %v6141 = vunpack.c.h.b16 %v4701
      %v6142 = vunpack.c.l.b16 %v4702
      %v6143 = vunpack.c.h.b16 %v4702
      %v6144 = vunpack.c.l.b16 %v4703
      %v6145 = vunpack.c.h.b16 %v4703
      %v6146 = vunpack.c.l.b16 %v4704
      %v6147 = vunpack.c.h.b16 %v4704
      %v6148 = vunpack.c.l.b16 %v4705
      %v6149 = vunpack.c.h.b16 %v4705
      %v6150 = vunpack.c.l.b16 %v4706
      %v6151 = vunpack.c.h.b16 %v4706
      %v6152 = vunpack.c.l.b16 %v4707
      %v6153 = vunpack.c.h.b16 %v4707
      %v6154 = vunpack.c.l.b16 %v4708
      %v6155 = vunpack.c.h.b16 %v4708
      %v6156 = vunpack.c.l.b16 %v4709
      %v6157 = vunpack.c.h.b16 %v4709
      %v6158 = vunpack.c.l.b16 %v4710
      %v6159 = vunpack.c.h.b16 %v4710
      %v6160 = vunpack.c.l.b16 %v4711
      %v6161 = vunpack.c.h.b16 %v4711
      %v6162 = vunpack.c.l.b16 %v4712
      %v6163 = vunpack.c.h.b16 %v4712
      %v6164 = vunpack.c.l.b16 %v4713
      %v6165 = vunpack.c.h.b16 %v4713
      %v6166 = vunpack.c.l.b16 %v4714
      %v6167 = vunpack.c.h.b16 %v4714
      %v6168 = vunpack.c.l.b16 %v4715
      %v6169 = vunpack.c.h.b16 %v4715
      %v6170 = vunpack.c.l.b16 %v4716
      %v6171 = vunpack.c.h.b16 %v4716
      %v6172 = vunpack.c.l.b16 %v4717
      %v6173 = vunpack.c.h.b16 %v4717
      %v6174 = vunpack.c.l.b16 %v4718
      %v6175 = vunpack.c.h.b16 %v4718
      %v6176 = vunpack.c.l.b16 %v4719
      %v6177 = vunpack.c.h.b16 %v4719
      %v6178 = vunpack.c.l.b16 %v4720
      %v6179 = vunpack.c.h.b16 %v4720
      %v6180 = vunpack.c.l.b16 %v4721
      %v6181 = vunpack.c.h.b16 %v4721
      %v6182 = vunpack.c.l.b16 %v4722
      %v6183 = vunpack.c.h.b16 %v4722
      %v6184 = vunpack.c.l.b16 %v4723
      %v6185 = vunpack.c.h.b16 %v4723
      %v6186 = vunpack.c.l.b16 %v4724
      %v6187 = vunpack.c.h.b16 %v4724
      %v6188 = vunpack.c.l.b16 %v4725
      %v6189 = vunpack.c.h.b16 %v4725
      %v6190 = vunpack.c.l.b16 %v4726
      %v6191 = vunpack.c.h.b16 %v4726
      %v6192 = vunpack.c.l.b16 %v4727
      %v6193 = vunpack.c.h.b16 %v4727
      %v6194 = vunpack.c.l.b16 %v4728
      %v6195 = vunpack.c.h.b16 %v4728
      %v6196 = vunpack.c.l.b16 %v4729
      %v6197 = vunpack.c.h.b16 %v4729
      %v6198 = vunpack.c.l.b16 %v4730
      %v6199 = vunpack.c.h.b16 %v4730
      %v6200 = vunpack.c.l.b16 %v4731
      %v6201 = vunpack.c.h.b16 %v4731
      %v6202 = vunpack.c.l.b16 %v4732
      %v6203 = vunpack.c.h.b16 %v4732
      %v6204 = vunpack.c.l.b16 %v4733
      %v6205 = vunpack.c.h.b16 %v4733
      %v6206 = vunpack.c.l.b16 %v4734
      %v6207 = vunpack.c.h.b16 %v4734
      %v6208 = vunpack.c.l.b16 %v4735
      %v6209 = vunpack.c.h.b16 %v4735
      %v6210 = vunpack.c.l.b16 %v4736
      %v6211 = vunpack.c.h.b16 %v4736
      %v6212 = vunpack.c.l.b16 %v4737
      %v6213 = vunpack.c.h.b16 %v4737
      %v6214 = vunpack.c.l.b16 %v4738
      %v6215 = vunpack.c.h.b16 %v4738
      %v6216 = vunpack.c.l.b16 %v4739
      %v6217 = vunpack.c.h.b16 %v4739
      %v6218 = vunpack.c.l.b16 %v4740
      %v6219 = vunpack.c.h.b16 %v4740
      %v6220 = vunpack.c.l.b16 %v4741
      %v6221 = vunpack.c.h.b16 %v4741
      %v6222 = vunpack.c.l.b16 %v4742
      %v6223 = vunpack.c.h.b16 %v4742
      %v6224 = vunpack.c.l.b16 %v4743
      %v6225 = vunpack.c.h.b16 %v4743
      %v6226 = vunpack.c.l.b16 %v4744
      %v6227 = vunpack.c.h.b16 %v4744
      %v6228 = vunpack.c.l.b16 %v4745
      %v6229 = vunpack.c.h.b16 %v4745
      %v6230 = vunpack.c.l.b16 %v4746
      %v6231 = vunpack.c.h.b16 %v4746
      %v6232 = vunpack.c.l.b16 %v4747
      %v6233 = vunpack.c.h.b16 %v4747
      %v6234 = vunpack.c.l.b16 %v4748
      %v6235 = vunpack.c.h.b16 %v4748
      %v6236 = vunpack.c.l.b16 %v4749
      %v6237 = vunpack.c.h.b16 %v4749
      %v6238 = vunpack.c.l.b16 %v4750
      %v6239 = vunpack.c.h.b16 %v4750
      %v6240 = vunpack.c.l.b16 %v4751
      %v6241 = vunpack.c.h.b16 %v4751
      %v6242 = vunpack.c.l.b16 %v4752
      %v6243 = vunpack.c.h.b16 %v4752
      %v6244 = vunpack.c.l.b16 %v4753
      %v6245 = vunpack.c.h.b16 %v4753
      %v6246 = vunpack.c.l.b16 %v4754
      %v6247 = vunpack.c.h.b16 %v4754
      %v6248 = vunpack.c.l.b16 %v4755
      %v6249 = vunpack.c.h.b16 %v4755
      %v6250 = vunpack.c.l.b16 %v4756
      %v6251 = vunpack.c.h.b16 %v4756
      %v6252 = vunpack.c.l.b16 %v4757
      %v6253 = vunpack.c.h.b16 %v4757
      %v6254 = vunpack.c.l.b16 %v4758
      %v6255 = vunpack.c.h.b16 %v4758
      %v6256 = vunpack.c.l.b16 %v4759
      %v6257 = vunpack.c.h.b16 %v4759
      %v6258 = vunpack.c.l.b16 %v4760
      %v6259 = vunpack.c.h.b16 %v4760
      %v6260 = vunpack.c.l.b16 %v4761
      %v6261 = vunpack.c.h.b16 %v4761
      %v6262 = vunpack.c.l.b16 %v4762
      %v6263 = vunpack.c.h.b16 %v4762
      %v6264 = vunpack.c.l.b16 %v4763
      %v6265 = vunpack.c.h.b16 %v4763
      %v6266 = vunpack.c.l.b16 %v4764
      %v6267 = vunpack.c.h.b16 %v4764
      %v6268 = vunpack.c.l.b16 %v4765
      %v6269 = vunpack.c.h.b16 %v4765
      %v6270 = vunpack.c.l.b16 %v4766
      %v6271 = vunpack.c.h.b16 %v4766
      %v6272 = vunpack.c.l.b16 %v4767
      %v6273 = vunpack.c.h.b16 %v4767
      %v6274 = vunpack.c.l.b16 %v4768
      %v6275 = vunpack.c.h.b16 %v4768
      %v6276 = vunpack.c.l.b16 %v4769
      %v6277 = vunpack.c.h.b16 %v4769
      %v6278 = vunpack.c.l.b16 %v4770
      %v6279 = vunpack.c.h.b16 %v4770
      %v6280 = vunpack.c.l.b16 %v4771
      %v6281 = vunpack.c.h.b16 %v4771
      %v6282 = vunpack.c.l.b16 %v4772
      %v6283 = vunpack.c.h.b16 %v4772
      %v6284 = vunpack.c.l.b16 %v4773
      %v6285 = vunpack.c.h.b16 %v4773
      %v6286 = vunpack.c.l.b16 %v4774
      %v6287 = vunpack.c.h.b16 %v4774
      %v6288 = vunpack.c.l.b16 %v4775
      %v6289 = vunpack.c.h.b16 %v4775
      %v6290 = vunpack.c.l.b16 %v4776
      %v6291 = vunpack.c.h.b16 %v4776
      %v6292 = vunpack.c.l.b16 %v4777
      %v6293 = vunpack.c.h.b16 %v4777
      %v6294 = vunpack.c.l.b16 %v4778
      %v6295 = vunpack.c.h.b16 %v4778
      %v6296 = vunpack.c.l.b16 %v4779
      %v6297 = vunpack.c.h.b16 %v4779
      %v6298 = vunpack.c.l.b16 %v4780
      %v6299 = vunpack.c.h.b16 %v4780
      %v6300 = vunpack.c.l.b16 %v4781
      %v6301 = vunpack.c.h.b16 %v4781
      %v6302 = vunpack.c.l.b16 %v4782
      %v6303 = vunpack.c.h.b16 %v4782
      %v6304 = vunpack.c.l.b16 %v4783
      %v6305 = vunpack.c.h.b16 %v4783
      %v6306 = vunpack.c.l.b16 %v4784
      %v6307 = vunpack.c.h.b16 %v4784
      %v6308 = vunpack.c.l.b16 %v4785
      %v6309 = vunpack.c.h.b16 %v4785
      %v6310 = vunpack.c.l.b16 %v4786
      %v6311 = vunpack.c.h.b16 %v4786
      %v6312 = vunpack.c.l.b16 %v4787
      %v6313 = vunpack.c.h.b16 %v4787
      %v6314 = vunpack.c.l.b16 %v4788
      %v6315 = vunpack.c.h.b16 %v4788
      %v6316 = vunpack.c.l.b16 %v4789
      %v6317 = vunpack.c.h.b16 %v4789
      %v6318 = vunpack.c.l.b16 %v4790
      %v6319 = vunpack.c.h.b16 %v4790
      %v6320 = vunpack.c.l.b16 %v4791
      %v6321 = vunpack.c.h.b16 %v4791
      %v6322 = vunpack.c.l.b16 %v4792
      %v6323 = vunpack.c.h.b16 %v4792
      %v6324 = vunpack.c.l.b16 %v4793
      %v6325 = vunpack.c.h.b16 %v4793
      %v6326 = vunpack.c.l.b16 %v4794
      %v6327 = vunpack.c.h.b16 %v4794
      %v6328 = vunpack.c.l.b16 %v4795
      %v6329 = vunpack.c.h.b16 %v4795
      %v6330 = vunpack.c.l.b16 %v4796
      %v6331 = vunpack.c.h.b16 %v4796
      %v6332 = vunpack.c.l.b16 %v4797
      %v6333 = vunpack.c.h.b16 %v4797
      %v6334 = vunpack.c.l.b16 %v4798
      %v6335 = vunpack.c.h.b16 %v4798
      %v6336 = vunpack.c.l.b16 %v4799
      %v6337 = vunpack.c.h.b16 %v4799
      %v6338 = vpack.c.b16 %v5330, %v5314
      %v6339 = vpack.c.b16 %v5331, %v5315
      %v6340 = vpack.c.b16 %v5332, %v5316
      %v6341 = vpack.c.b16 %v5333, %v5317
      %v6342 = vpack.c.b16 %v5334, %v5318
      %v6343 = vpack.c.b16 %v5335, %v5319
      %v6344 = vpack.c.b16 %v5336, %v5320
      %v6345 = vpack.c.b16 %v5337, %v5321
      %v6346 = vpack.c.b16 %v5338, %v5322
      %v6347 = vpack.c.b16 %v5339, %v5323
      %v6348 = vpack.c.b16 %v5340, %v5324
      %v6349 = vpack.c.b16 %v5341, %v5325
      %v6350 = vpack.c.b16 %v5342, %v5326
      %v6351 = vpack.c.b16 %v5343, %v5327
      %v6352 = vpack.c.b16 %v5344, %v5328
      %v6353 = vpack.c.b16 %v5345, %v5329
      %v6354 = vpack.c.b16 %v5362, %v5346
      %v6355 = vpack.c.b16 %v5363, %v5347
      %v6356 = vpack.c.b16 %v5364, %v5348
      %v6357 = vpack.c.b16 %v5365, %v5349
      %v6358 = vpack.c.b16 %v5366, %v5350
      %v6359 = vpack.c.b16 %v5367, %v5351
      %v6360 = vpack.c.b16 %v5368, %v5352
      %v6361 = vpack.c.b16 %v5369, %v5353
      %v6362 = vpack.c.b16 %v5370, %v5354
      %v6363 = vpack.c.b16 %v5371, %v5355
      %v6364 = vpack.c.b16 %v5372, %v5356
      %v6365 = vpack.c.b16 %v5373, %v5357
      %v6366 = vpack.c.b16 %v5374, %v5358
      %v6367 = vpack.c.b16 %v5375, %v5359
      %v6368 = vpack.c.b16 %v5376, %v5360
      %v6369 = vpack.c.b16 %v5377, %v5361
      %v6370 = vpack.c.b16 %v5394, %v5378
      %v6371 = vpack.c.b16 %v5395, %v5379
      %v6372 = vpack.c.b16 %v5396, %v5380
      %v6373 = vpack.c.b16 %v5397, %v5381
      %v6374 = vpack.c.b16 %v5398, %v5382
      %v6375 = vpack.c.b16 %v5399, %v5383
      %v6376 = vpack.c.b16 %v5400, %v5384
      %v6377 = vpack.c.b16 %v5401, %v5385
      %v6378 = vpack.c.b16 %v5402, %v5386
      %v6379 = vpack.c.b16 %v5403, %v5387
      %v6380 = vpack.c.b16 %v5404, %v5388
      %v6381 = vpack.c.b16 %v5405, %v5389
      %v6382 = vpack.c.b16 %v5406, %v5390
      %v6383 = vpack.c.b16 %v5407, %v5391
      %v6384 = vpack.c.b16 %v5408, %v5392
      %v6385 = vpack.c.b16 %v5409, %v5393
      %v6386 = vpack.c.b16 %v5426, %v5410
      %v6387 = vpack.c.b16 %v5427, %v5411
      %v6388 = vpack.c.b16 %v5428, %v5412
      %v6389 = vpack.c.b16 %v5429, %v5413
      %v6390 = vpack.c.b16 %v5430, %v5414
      %v6391 = vpack.c.b16 %v5431, %v5415
      %v6392 = vpack.c.b16 %v5432, %v5416
      %v6393 = vpack.c.b16 %v5433, %v5417
      %v6394 = vpack.c.b16 %v5434, %v5418
      %v6395 = vpack.c.b16 %v5435, %v5419
      %v6396 = vpack.c.b16 %v5436, %v5420
      %v6397 = vpack.c.b16 %v5437, %v5421
      %v6398 = vpack.c.b16 %v5438, %v5422
      %v6399 = vpack.c.b16 %v5439, %v5423
      %v6400 = vpack.c.b16 %v5440, %v5424
      %v6401 = vpack.c.b16 %v5441, %v5425
      %v6402 = vpack.c.b16 %v5458, %v5442
      %v6403 = vpack.c.b16 %v5459, %v5443
      %v6404 = vpack.c.b16 %v5460, %v5444
      %v6405 = vpack.c.b16 %v5461, %v5445
      %v6406 = vpack.c.b16 %v5462, %v5446
      %v6407 = vpack.c.b16 %v5463, %v5447
      %v6408 = vpack.c.b16 %v5464, %v5448
      %v6409 = vpack.c.b16 %v5465, %v5449
      %v6410 = vpack.c.b16 %v5466, %v5450
      %v6411 = vpack.c.b16 %v5467, %v5451
      %v6412 = vpack.c.b16 %v5468, %v5452
      %v6413 = vpack.c.b16 %v5469, %v5453
      %v6414 = vpack.c.b16 %v5470, %v5454
      %v6415 = vpack.c.b16 %v5471, %v5455
      %v6416 = vpack.c.b16 %v5472, %v5456
      %v6417 = vpack.c.b16 %v5473, %v5457
      %v6418 = vpack.c.b16 %v5490, %v5474
      %v6419 = vpack.c.b16 %v5491, %v5475
      %v6420 = vpack.c.b16 %v5492, %v5476
      %v6421 = vpack.c.b16 %v5493, %v5477
      %v6422 = vpack.c.b16 %v5494, %v5478
      %v6423 = vpack.c.b16 %v5495, %v5479
      %v6424 = vpack.c.b16 %v5496, %v5480
      %v6425 = vpack.c.b16 %v5497, %v5481
      %v6426 = vpack.c.b16 %v5498, %v5482
      %v6427 = vpack.c.b16 %v5499, %v5483
      %v6428 = vpack.c.b16 %v5500, %v5484
      %v6429 = vpack.c.b16 %v5501, %v5485
      %v6430 = vpack.c.b16 %v5502, %v5486
      %v6431 = vpack.c.b16 %v5503, %v5487
      %v6432 = vpack.c.b16 %v5504, %v5488
      %v6433 = vpack.c.b16 %v5505, %v5489
      %v6434 = vpack.c.b16 %v5522, %v5506
      %v6435 = vpack.c.b16 %v5523, %v5507
      %v6436 = vpack.c.b16 %v5524, %v5508
      %v6437 = vpack.c.b16 %v5525, %v5509
      %v6438 = vpack.c.b16 %v5526, %v5510
      %v6439 = vpack.c.b16 %v5527, %v5511
      %v6440 = vpack.c.b16 %v5528, %v5512
      %v6441 = vpack.c.b16 %v5529, %v5513
      %v6442 = vpack.c.b16 %v5530, %v5514
      %v6443 = vpack.c.b16 %v5531, %v5515
      %v6444 = vpack.c.b16 %v5532, %v5516
      %v6445 = vpack.c.b16 %v5533, %v5517
      %v6446 = vpack.c.b16 %v5534, %v5518
      %v6447 = vpack.c.b16 %v5535, %v5519
      %v6448 = vpack.c.b16 %v5536, %v5520
      %v6449 = vpack.c.b16 %v5537, %v5521
      %v6450 = vpack.c.b16 %v5554, %v5538
      %v6451 = vpack.c.b16 %v5555, %v5539
      %v6452 = vpack.c.b16 %v5556, %v5540
      %v6453 = vpack.c.b16 %v5557, %v5541
      %v6454 = vpack.c.b16 %v5558, %v5542
      %v6455 = vpack.c.b16 %v5559, %v5543
      %v6456 = vpack.c.b16 %v5560, %v5544
      %v6457 = vpack.c.b16 %v5561, %v5545
      %v6458 = vpack.c.b16 %v5562, %v5546
      %v6459 = vpack.c.b16 %v5563, %v5547
      %v6460 = vpack.c.b16 %v5564, %v5548
      %v6461 = vpack.c.b16 %v5565, %v5549
      %v6462 = vpack.c.b16 %v5566, %v5550
      %v6463 = vpack.c.b16 %v5567, %v5551
      %v6464 = vpack.c.b16 %v5568, %v5552
      %v6465 = vpack.c.b16 %v5569, %v5553
      %v6466 = vpack.c.b16 %v5586, %v5570
      %v6467 = vpack.c.b16 %v5587, %v5571
      %v6468 = vpack.c.b16 %v5588, %v5572
      %v6469 = vpack.c.b16 %v5589, %v5573
      %v6470 = vpack.c.b16 %v5590, %v5574
      %v6471 = vpack.c.b16 %v5591, %v5575
      %v6472 = vpack.c.b16 %v5592, %v5576
      %v6473 = vpack.c.b16 %v5593, %v5577
      %v6474 = vpack.c.b16 %v5594, %v5578
      %v6475 = vpack.c.b16 %v5595, %v5579
      %v6476 = vpack.c.b16 %v5596, %v5580
      %v6477 = vpack.c.b16 %v5597, %v5581
      %v6478 = vpack.c.b16 %v5598, %v5582
      %v6479 = vpack.c.b16 %v5599, %v5583
      %v6480 = vpack.c.b16 %v5600, %v5584
      %v6481 = vpack.c.b16 %v5601, %v5585
      %v6482 = vpack.c.b16 %v5618, %v5602
      %v6483 = vpack.c.b16 %v5619, %v5603
      %v6484 = vpack.c.b16 %v5620, %v5604
      %v6485 = vpack.c.b16 %v5621, %v5605
      %v6486 = vpack.c.b16 %v5622, %v5606
      %v6487 = vpack.c.b16 %v5623, %v5607
      %v6488 = vpack.c.b16 %v5624, %v5608
      %v6489 = vpack.c.b16 %v5625, %v5609
      %v6490 = vpack.c.b16 %v5626, %v5610
      %v6491 = vpack.c.b16 %v5627, %v5611
      %v6492 = vpack.c.b16 %v5628, %v5612
      %v6493 = vpack.c.b16 %v5629, %v5613
      %v6494 = vpack.c.b16 %v5630, %v5614
      %v6495 = vpack.c.b16 %v5631, %v5615
      %v6496 = vpack.c.b16 %v5632, %v5616
      %v6497 = vpack.c.b16 %v5633, %v5617
      %v6498 = vpack.c.b16 %v5650, %v5634
      %v6499 = vpack.c.b16 %v5651, %v5635
      %v6500 = vpack.c.b16 %v5652, %v5636
      %v6501 = vpack.c.b16 %v5653, %v5637
      %v6502 = vpack.c.b16 %v5654, %v5638
      %v6503 = vpack.c.b16 %v5655, %v5639
      %v6504 = vpack.c.b16 %v5656, %v5640
      %v6505 = vpack.c.b16 %v5657, %v5641
      %v6506 = vpack.c.b16 %v5658, %v5642
      %v6507 = vpack.c.b16 %v5659, %v5643
      %v6508 = vpack.c.b16 %v5660, %v5644
      %v6509 = vpack.c.b16 %v5661, %v5645
      %v6510 = vpack.c.b16 %v5662, %v5646
      %v6511 = vpack.c.b16 %v5663, %v5647
      %v6512 = vpack.c.b16 %v5664, %v5648
      %v6513 = vpack.c.b16 %v5665, %v5649
      %v6514 = vpack.c.b16 %v5682, %v5666
      %v6515 = vpack.c.b16 %v5683, %v5667
      %v6516 = vpack.c.b16 %v5684, %v5668
      %v6517 = vpack.c.b16 %v5685, %v5669
      %v6518 = vpack.c.b16 %v5686, %v5670
      %v6519 = vpack.c.b16 %v5687, %v5671
      %v6520 = vpack.c.b16 %v5688, %v5672
      %v6521 = vpack.c.b16 %v5689, %v5673
      %v6522 = vpack.c.b16 %v5690, %v5674
      %v6523 = vpack.c.b16 %v5691, %v5675
      %v6524 = vpack.c.b16 %v5692, %v5676
      %v6525 = vpack.c.b16 %v5693, %v5677
      %v6526 = vpack.c.b16 %v5694, %v5678
      %v6527 = vpack.c.b16 %v5695, %v5679
      %v6528 = vpack.c.b16 %v5696, %v5680
      %v6529 = vpack.c.b16 %v5697, %v5681
      %v6530 = vpack.c.b16 %v5714, %v5698
      %v6531 = vpack.c.b16 %v5715, %v5699
      %v6532 = vpack.c.b16 %v5716, %v5700
      %v6533 = vpack.c.b16 %v5717, %v5701
      %v6534 = vpack.c.b16 %v5718, %v5702
      %v6535 = vpack.c.b16 %v5719, %v5703
      %v6536 = vpack.c.b16 %v5720, %v5704
      %v6537 = vpack.c.b16 %v5721, %v5705
      %v6538 = vpack.c.b16 %v5722, %v5706
      %v6539 = vpack.c.b16 %v5723, %v5707
      %v6540 = vpack.c.b16 %v5724, %v5708
      %v6541 = vpack.c.b16 %v5725, %v5709
      %v6542 = vpack.c.b16 %v5726, %v5710
      %v6543 = vpack.c.b16 %v5727, %v5711
      %v6544 = vpack.c.b16 %v5728, %v5712
      %v6545 = vpack.c.b16 %v5729, %v5713
      %v6546 = vpack.c.b16 %v5746, %v5730
      %v6547 = vpack.c.b16 %v5747, %v5731
      %v6548 = vpack.c.b16 %v5748, %v5732
      %v6549 = vpack.c.b16 %v5749, %v5733
      %v6550 = vpack.c.b16 %v5750, %v5734
      %v6551 = vpack.c.b16 %v5751, %v5735
      %v6552 = vpack.c.b16 %v5752, %v5736
      %v6553 = vpack.c.b16 %v5753, %v5737
      %v6554 = vpack.c.b16 %v5754, %v5738
      %v6555 = vpack.c.b16 %v5755, %v5739
      %v6556 = vpack.c.b16 %v5756, %v5740
      %v6557 = vpack.c.b16 %v5757, %v5741
      %v6558 = vpack.c.b16 %v5758, %v5742
      %v6559 = vpack.c.b16 %v5759, %v5743
      %v6560 = vpack.c.b16 %v5760, %v5744
      %v6561 = vpack.c.b16 %v5761, %v5745
      %v6562 = vpack.c.b16 %v5778, %v5762
      %v6563 = vpack.c.b16 %v5779, %v5763
      %v6564 = vpack.c.b16 %v5780, %v5764
      %v6565 = vpack.c.b16 %v5781, %v5765
      %v6566 = vpack.c.b16 %v5782, %v5766
      %v6567 = vpack.c.b16 %v5783, %v5767
      %v6568 = vpack.c.b16 %v5784, %v5768
      %v6569 = vpack.c.b16 %v5785, %v5769
      %v6570 = vpack.c.b16 %v5786, %v5770
      %v6571 = vpack.c.b16 %v5787, %v5771
      %v6572 = vpack.c.b16 %v5788, %v5772
      %v6573 = vpack.c.b16 %v5789, %v5773
      %v6574 = vpack.c.b16 %v5790, %v5774
      %v6575 = vpack.c.b16 %v5791, %v5775
      %v6576 = vpack.c.b16 %v5792, %v5776
      %v6577 = vpack.c.b16 %v5793, %v5777
      %v6578 = vpack.c.b16 %v5810, %v5794
      %v6579 = vpack.c.b16 %v5811, %v5795
      %v6580 = vpack.c.b16 %v5812, %v5796
      %v6581 = vpack.c.b16 %v5813, %v5797
      %v6582 = vpack.c.b16 %v5814, %v5798
      %v6583 = vpack.c.b16 %v5815, %v5799
      %v6584 = vpack.c.b16 %v5816, %v5800
      %v6585 = vpack.c.b16 %v5817, %v5801
      %v6586 = vpack.c.b16 %v5818, %v5802
      %v6587 = vpack.c.b16 %v5819, %v5803
      %v6588 = vpack.c.b16 %v5820, %v5804
      %v6589 = vpack.c.b16 %v5821, %v5805
      %v6590 = vpack.c.b16 %v5822, %v5806
      %v6591 = vpack.c.b16 %v5823, %v5807
      %v6592 = vpack.c.b16 %v5824, %v5808
      %v6593 = vpack.c.b16 %v5825, %v5809
      %v6594 = vpack.c.b16 %v5842, %v5826
      %v6595 = vpack.c.b16 %v5843, %v5827
      %v6596 = vpack.c.b16 %v5844, %v5828
      %v6597 = vpack.c.b16 %v5845, %v5829
      %v6598 = vpack.c.b16 %v5846, %v5830
      %v6599 = vpack.c.b16 %v5847, %v5831
      %v6600 = vpack.c.b16 %v5848, %v5832
      %v6601 = vpack.c.b16 %v5849, %v5833
      %v6602 = vpack.c.b16 %v5850, %v5834
      %v6603 = vpack.c.b16 %v5851, %v5835
      %v6604 = vpack.c.b16 %v5852, %v5836
      %v6605 = vpack.c.b16 %v5853, %v5837
      %v6606 = vpack.c.b16 %v5854, %v5838
      %v6607 = vpack.c.b16 %v5855, %v5839
      %v6608 = vpack.c.b16 %v5856, %v5840
      %v6609 = vpack.c.b16 %v5857, %v5841
      %v6610 = vpack.c.b16 %v5874, %v5858
      %v6611 = vpack.c.b16 %v5875, %v5859
      %v6612 = vpack.c.b16 %v5876, %v5860
      %v6613 = vpack.c.b16 %v5877, %v5861
      %v6614 = vpack.c.b16 %v5878, %v5862
      %v6615 = vpack.c.b16 %v5879, %v5863
      %v6616 = vpack.c.b16 %v5880, %v5864
      %v6617 = vpack.c.b16 %v5881, %v5865
      %v6618 = vpack.c.b16 %v5882, %v5866
      %v6619 = vpack.c.b16 %v5883, %v5867
      %v6620 = vpack.c.b16 %v5884, %v5868
      %v6621 = vpack.c.b16 %v5885, %v5869
      %v6622 = vpack.c.b16 %v5886, %v5870
      %v6623 = vpack.c.b16 %v5887, %v5871
      %v6624 = vpack.c.b16 %v5888, %v5872
      %v6625 = vpack.c.b16 %v5889, %v5873
      %v6626 = vpack.c.b16 %v5906, %v5890
      %v6627 = vpack.c.b16 %v5907, %v5891
      %v6628 = vpack.c.b16 %v5908, %v5892
      %v6629 = vpack.c.b16 %v5909, %v5893
      %v6630 = vpack.c.b16 %v5910, %v5894
      %v6631 = vpack.c.b16 %v5911, %v5895
      %v6632 = vpack.c.b16 %v5912, %v5896
      %v6633 = vpack.c.b16 %v5913, %v5897
      %v6634 = vpack.c.b16 %v5914, %v5898
      %v6635 = vpack.c.b16 %v5915, %v5899
      %v6636 = vpack.c.b16 %v5916, %v5900
      %v6637 = vpack.c.b16 %v5917, %v5901
      %v6638 = vpack.c.b16 %v5918, %v5902
      %v6639 = vpack.c.b16 %v5919, %v5903
      %v6640 = vpack.c.b16 %v5920, %v5904
      %v6641 = vpack.c.b16 %v5921, %v5905
      %v6642 = vpack.c.b16 %v5938, %v5922
      %v6643 = vpack.c.b16 %v5939, %v5923
      %v6644 = vpack.c.b16 %v5940, %v5924
      %v6645 = vpack.c.b16 %v5941, %v5925
      %v6646 = vpack.c.b16 %v5942, %v5926
      %v6647 = vpack.c.b16 %v5943, %v5927
      %v6648 = vpack.c.b16 %v5944, %v5928
      %v6649 = vpack.c.b16 %v5945, %v5929
      %v6650 = vpack.c.b16 %v5946, %v5930
      %v6651 = vpack.c.b16 %v5947, %v5931
      %v6652 = vpack.c.b16 %v5948, %v5932
      %v6653 = vpack.c.b16 %v5949, %v5933
      %v6654 = vpack.c.b16 %v5950, %v5934
      %v6655 = vpack.c.b16 %v5951, %v5935
      %v6656 = vpack.c.b16 %v5952, %v5936
      %v6657 = vpack.c.b16 %v5953, %v5937
      %v6658 = vpack.c.b16 %v5970, %v5954
      %v6659 = vpack.c.b16 %v5971, %v5955
      %v6660 = vpack.c.b16 %v5972, %v5956
      %v6661 = vpack.c.b16 %v5973, %v5957
      %v6662 = vpack.c.b16 %v5974, %v5958
      %v6663 = vpack.c.b16 %v5975, %v5959
      %v6664 = vpack.c.b16 %v5976, %v5960
      %v6665 = vpack.c.b16 %v5977, %v5961
      %v6666 = vpack.c.b16 %v5978, %v5962
      %v6667 = vpack.c.b16 %v5979, %v5963
      %v6668 = vpack.c.b16 %v5980, %v5964
      %v6669 = vpack.c.b16 %v5981, %v5965
      %v6670 = vpack.c.b16 %v5982, %v5966
      %v6671 = vpack.c.b16 %v5983, %v5967
      %v6672 = vpack.c.b16 %v5984, %v5968
      %v6673 = vpack.c.b16 %v5985, %v5969
      %v6674 = vpack.c.b16 %v6002, %v5986
      %v6675 = vpack.c.b16 %v6003, %v5987
      %v6676 = vpack.c.b16 %v6004, %v5988
      %v6677 = vpack.c.b16 %v6005, %v5989
      %v6678 = vpack.c.b16 %v6006, %v5990
      %v6679 = vpack.c.b16 %v6007, %v5991
      %v6680 = vpack.c.b16 %v6008, %v5992
      %v6681 = vpack.c.b16 %v6009, %v5993
      %v6682 = vpack.c.b16 %v6010, %v5994
      %v6683 = vpack.c.b16 %v6011, %v5995
      %v6684 = vpack.c.b16 %v6012, %v5996
      %v6685 = vpack.c.b16 %v6013, %v5997
      %v6686 = vpack.c.b16 %v6014, %v5998
      %v6687 = vpack.c.b16 %v6015, %v5999
      %v6688 = vpack.c.b16 %v6016, %v6000
      %v6689 = vpack.c.b16 %v6017, %v6001
      %v6690 = vpack.c.b16 %v6034, %v6018
      %v6691 = vpack.c.b16 %v6035, %v6019
      %v6692 = vpack.c.b16 %v6036, %v6020
      %v6693 = vpack.c.b16 %v6037, %v6021
      %v6694 = vpack.c.b16 %v6038, %v6022
      %v6695 = vpack.c.b16 %v6039, %v6023
      %v6696 = vpack.c.b16 %v6040, %v6024
      %v6697 = vpack.c.b16 %v6041, %v6025
      %v6698 = vpack.c.b16 %v6042, %v6026
      %v6699 = vpack.c.b16 %v6043, %v6027
      %v6700 = vpack.c.b16 %v6044, %v6028
      %v6701 = vpack.c.b16 %v6045, %v6029
      %v6702 = vpack.c.b16 %v6046, %v6030
      %v6703 = vpack.c.b16 %v6047, %v6031
      %v6704 = vpack.c.b16 %v6048, %v6032
      %v6705 = vpack.c.b16 %v6049, %v6033
      %v6706 = vpack.c.b16 %v6066, %v6050
      %v6707 = vpack.c.b16 %v6067, %v6051
      %v6708 = vpack.c.b16 %v6068, %v6052
      %v6709 = vpack.c.b16 %v6069, %v6053
      %v6710 = vpack.c.b16 %v6070, %v6054
      %v6711 = vpack.c.b16 %v6071, %v6055
      %v6712 = vpack.c.b16 %v6072, %v6056
      %v6713 = vpack.c.b16 %v6073, %v6057
      %v6714 = vpack.c.b16 %v6074, %v6058
      %v6715 = vpack.c.b16 %v6075, %v6059
      %v6716 = vpack.c.b16 %v6076, %v6060
      %v6717 = vpack.c.b16 %v6077, %v6061
      %v6718 = vpack.c.b16 %v6078, %v6062
      %v6719 = vpack.c.b16 %v6079, %v6063
      %v6720 = vpack.c.b16 %v6080, %v6064
      %v6721 = vpack.c.b16 %v6081, %v6065
      %v6722 = vpack.c.b16 %v6098, %v6082
      %v6723 = vpack.c.b16 %v6099, %v6083
      %v6724 = vpack.c.b16 %v6100, %v6084
      %v6725 = vpack.c.b16 %v6101, %v6085
      %v6726 = vpack.c.b16 %v6102, %v6086
      %v6727 = vpack.c.b16 %v6103, %v6087
      %v6728 = vpack.c.b16 %v6104, %v6088
      %v6729 = vpack.c.b16 %v6105, %v6089
      %v6730 = vpack.c.b16 %v6106, %v6090
      %v6731 = vpack.c.b16 %v6107, %v6091
      %v6732 = vpack.c.b16 %v6108, %v6092
      %v6733 = vpack.c.b16 %v6109, %v6093
      %v6734 = vpack.c.b16 %v6110, %v6094
      %v6735 = vpack.c.b16 %v6111, %v6095
      %v6736 = vpack.c.b16 %v6112, %v6096
      %v6737 = vpack.c.b16 %v6113, %v6097
      %v6738 = vpack.c.b16 %v6130, %v6114
      %v6739 = vpack.c.b16 %v6131, %v6115
      %v6740 = vpack.c.b16 %v6132, %v6116
      %v6741 = vpack.c.b16 %v6133, %v6117
      %v6742 = vpack.c.b16 %v6134, %v6118
      %v6743 = vpack.c.b16 %v6135, %v6119
      %v6744 = vpack.c.b16 %v6136, %v6120
      %v6745 = vpack.c.b16 %v6137, %v6121
      %v6746 = vpack.c.b16 %v6138, %v6122
      %v6747 = vpack.c.b16 %v6139, %v6123
      %v6748 = vpack.c.b16 %v6140, %v6124
      %v6749 = vpack.c.b16 %v6141, %v6125
      %v6750 = vpack.c.b16 %v6142, %v6126
      %v6751 = vpack.c.b16 %v6143, %v6127
      %v6752 = vpack.c.b16 %v6144, %v6128
      %v6753 = vpack.c.b16 %v6145, %v6129
      %v6754 = vpack.c.b16 %v6162, %v6146
      %v6755 = vpack.c.b16 %v6163, %v6147
      %v6756 = vpack.c.b16 %v6164, %v6148
      %v6757 = vpack.c.b16 %v6165, %v6149
      %v6758 = vpack.c.b16 %v6166, %v6150
      %v6759 = vpack.c.b16 %v6167, %v6151
      %v6760 = vpack.c.b16 %v6168, %v6152
      %v6761 = vpack.c.b16 %v6169, %v6153
      %v6762 = vpack.c.b16 %v6170, %v6154
      %v6763 = vpack.c.b16 %v6171, %v6155
      %v6764 = vpack.c.b16 %v6172, %v6156
      %v6765 = vpack.c.b16 %v6173, %v6157
      %v6766 = vpack.c.b16 %v6174, %v6158
      %v6767 = vpack.c.b16 %v6175, %v6159
      %v6768 = vpack.c.b16 %v6176, %v6160
      %v6769 = vpack.c.b16 %v6177, %v6161
      %v6770 = vpack.c.b16 %v6194, %v6178
      %v6771 = vpack.c.b16 %v6195, %v6179
      %v6772 = vpack.c.b16 %v6196, %v6180
      %v6773 = vpack.c.b16 %v6197, %v6181
      %v6774 = vpack.c.b16 %v6198, %v6182
      %v6775 = vpack.c.b16 %v6199, %v6183
      %v6776 = vpack.c.b16 %v6200, %v6184
      %v6777 = vpack.c.b16 %v6201, %v6185
      %v6778 = vpack.c.b16 %v6202, %v6186
      %v6779 = vpack.c.b16 %v6203, %v6187
      %v6780 = vpack.c.b16 %v6204, %v6188
      %v6781 = vpack.c.b16 %v6205, %v6189
      %v6782 = vpack.c.b16 %v6206, %v6190
      %v6783 = vpack.c.b16 %v6207, %v6191
      %v6784 = vpack.c.b16 %v6208, %v6192
      %v6785 = vpack.c.b16 %v6209, %v6193
      %v6786 = vpack.c.b16 %v6226, %v6210
      %v6787 = vpack.c.b16 %v6227, %v6211
      %v6788 = vpack.c.b16 %v6228, %v6212
      %v6789 = vpack.c.b16 %v6229, %v6213
      %v6790 = vpack.c.b16 %v6230, %v6214
      %v6791 = vpack.c.b16 %v6231, %v6215
      %v6792 = vpack.c.b16 %v6232, %v6216
      %v6793 = vpack.c.b16 %v6233, %v6217
      %v6794 = vpack.c.b16 %v6234, %v6218
      %v6795 = vpack.c.b16 %v6235, %v6219
      %v6796 = vpack.c.b16 %v6236, %v6220
      %v6797 = vpack.c.b16 %v6237, %v6221
      %v6798 = vpack.c.b16 %v6238, %v6222
      %v6799 = vpack.c.b16 %v6239, %v6223
      %v6800 = vpack.c.b16 %v6240, %v6224
      %v6801 = vpack.c.b16 %v6241, %v6225
      %v6802 = vpack.c.b16 %v6258, %v6242
      %v6803 = vpack.c.b16 %v6259, %v6243
      %v6804 = vpack.c.b16 %v6260, %v6244
      %v6805 = vpack.c.b16 %v6261, %v6245
      %v6806 = vpack.c.b16 %v6262, %v6246
      %v6807 = vpack.c.b16 %v6263, %v6247
      %v6808 = vpack.c.b16 %v6264, %v6248
      %v6809 = vpack.c.b16 %v6265, %v6249
      %v6810 = vpack.c.b16 %v6266, %v6250
      %v6811 = vpack.c.b16 %v6267, %v6251
      %v6812 = vpack.c.b16 %v6268, %v6252
      %v6813 = vpack.c.b16 %v6269, %v6253
      %v6814 = vpack.c.b16 %v6270, %v6254
      %v6815 = vpack.c.b16 %v6271, %v6255
      %v6816 = vpack.c.b16 %v6272, %v6256
      %v6817 = vpack.c.b16 %v6273, %v6257
      %v6818 = vpack.c.b16 %v6290, %v6274
      %v6819 = vpack.c.b16 %v6291, %v6275
      %v6820 = vpack.c.b16 %v6292, %v6276
      %v6821 = vpack.c.b16 %v6293, %v6277
      %v6822 = vpack.c.b16 %v6294, %v6278
      %v6823 = vpack.c.b16 %v6295, %v6279
      %v6824 = vpack.c.b16 %v6296, %v6280
      %v6825 = vpack.c.b16 %v6297, %v6281
      %v6826 = vpack.c.b16 %v6298, %v6282
      %v6827 = vpack.c.b16 %v6299, %v6283
      %v6828 = vpack.c.b16 %v6300, %v6284
      %v6829 = vpack.c.b16 %v6301, %v6285
      %v6830 = vpack.c.b16 %v6302, %v6286
      %v6831 = vpack.c.b16 %v6303, %v6287
      %v6832 = vpack.c.b16 %v6304, %v6288
      %v6833 = vpack.c.b16 %v6305, %v6289
      %v6834 = vpack.c.b16 %v6322, %v6306
      %v6835 = vpack.c.b16 %v6323, %v6307
      %v6836 = vpack.c.b16 %v6324, %v6308
      %v6837 = vpack.c.b16 %v6325, %v6309
      %v6838 = vpack.c.b16 %v6326, %v6310
      %v6839 = vpack.c.b16 %v6327, %v6311
      %v6840 = vpack.c.b16 %v6328, %v6312
      %v6841 = vpack.c.b16 %v6329, %v6313
      %v6842 = vpack.c.b16 %v6330, %v6314
      %v6843 = vpack.c.b16 %v6331, %v6315
      %v6844 = vpack.c.b16 %v6332, %v6316
      %v6845 = vpack.c.b16 %v6333, %v6317
      %v6846 = vpack.c.b16 %v6334, %v6318
      %v6847 = vpack.c.b16 %v6335, %v6319
      %v6848 = vpack.c.b16 %v6336, %v6320
      %v6849 = vpack.c.b16 %v6337, %v6321
      %v7364 = vperm.slane %v4800, 0
      %v7365 = vperm.slane %v4800, 1
      %v7366 = vperm.slane %v4800, 2
      %v7367 = vperm.slane %v4800, 3
      %v7368 = vperm.slane %v4800, 4
      %v7369 = vperm.slane %v4800, 5
      %v7370 = vperm.slane %v4800, 6
      %v7371 = vperm.slane %v4800, 7
      %v7372 = vperm.slane %v4801, 0
      %v7373 = vperm.slane %v4801, 1
      %v7374 = vperm.slane %v4801, 2
      %v7375 = vperm.slane %v4801, 3
      %v7376 = vperm.slane %v4801, 4
      %v7377 = vperm.slane %v4801, 5
      %v7378 = vperm.slane %v4801, 6
      %v7379 = vperm.slane %v4801, 7
      %7396 = vmatpush.bf16.msra.mxu0 %v6450
      %7397 = vmatpush.bf16.msra.mxu0 %v6434
      %7398 = vmatpush.bf16.msra.mxu0 %v6418
      %7399 = vmatpush.bf16.msra.mxu0 %v6402
      %7400 = vmatpush.bf16.msra.mxu0 %v6386
      %7401 = vmatpush.bf16.msra.mxu0 %v6370
      %7402 = vmatpush.bf16.msra.mxu0 %v6354
      %7403 = vmatpush.bf16.msra.mxu0 %v6338
      %7404 = vmatmul.bf16.gmra.mxu0 %v4284
      %v7405 = vpop.f32.mrf.mxu0
      %v7406 = vadd.f32 %v7364, %v7405
      %v7407 = vpop.f32.mrf.mxu0
      %7408 = vdwg.mxu0
      %7409 = vmatpush.bf16.msra.mxu0 %v6578
      %7410 = vmatpush.bf16.msra.mxu0 %v6562
      %7411 = vmatpush.bf16.msra.mxu0 %v6546
      %7412 = vmatpush.bf16.msra.mxu0 %v6530
      %7413 = vmatpush.bf16.msra.mxu0 %v6514
      %7414 = vmatpush.bf16.msra.mxu0 %v6498
      %7415 = vmatpush.bf16.msra.mxu0 %v6482
      %7416 = vmatpush.bf16.msra.mxu0 %v6466
      %7417 = vmatmul.bf16.gmra.mxu0 %v4285
      %v7418 = vpop.f32.mrf.mxu0
      %v7419 = vadd.f32 %v7406, %v7418
      %v7420 = vpop.f32.mrf.mxu0
      %7421 = vdwg.mxu0
      %7422 = vmatpush.bf16.msra.mxu0 %v6706
      %7423 = vmatpush.bf16.msra.mxu0 %v6690
      %7424 = vmatpush.bf16.msra.mxu0 %v6674
      %7425 = vmatpush.bf16.msra.mxu0 %v6658
      %7426 = vmatpush.bf16.msra.mxu0 %v6642
      %7427 = vmatpush.bf16.msra.mxu0 %v6626
      %7428 = vmatpush.bf16.msra.mxu0 %v6610
      %7429 = vmatpush.bf16.msra.mxu0 %v6594
      %7430 = vmatmul.bf16.gmra.mxu0 %v4286
      %v7431 = vpop.f32.mrf.mxu0
      %v7432 = vadd.f32 %v7419, %v7431
      %v7433 = vpop.f32.mrf.mxu0
      %7434 = vdwg.mxu0
      %7435 = vmatpush.bf16.msra.mxu0 %v6834
      %7436 = vmatpush.bf16.msra.mxu0 %v6818
      %7437 = vmatpush.bf16.msra.mxu0 %v6802
      %7438 = vmatpush.bf16.msra.mxu0 %v6786
      %7439 = vmatpush.bf16.msra.mxu0 %v6770
      %7440 = vmatpush.bf16.msra.mxu0 %v6754
      %7441 = vmatpush.bf16.msra.mxu0 %v6738
      %7442 = vmatpush.bf16.msra.mxu0 %v6722
      %7443 = vmatmul.bf16.gmra.mxu0 %v4287
      %v7444 = vpop.f32.mrf.mxu0
      %v7445 = vadd.f32 %v7432, %v7444
      %v7446 = vpop.f32.mrf.mxu0
      %7447 = vdwg.mxu0
      %7448 = vmatpush.bf16.msra.mxu0 %v6451
      %7449 = vmatpush.bf16.msra.mxu0 %v6435
      %7450 = vmatpush.bf16.msra.mxu0 %v6419
      %7451 = vmatpush.bf16.msra.mxu0 %v6403
      %7452 = vmatpush.bf16.msra.mxu0 %v6387
      %7453 = vmatpush.bf16.msra.mxu0 %v6371
      %7454 = vmatpush.bf16.msra.mxu0 %v6355
      %7455 = vmatpush.bf16.msra.mxu0 %v6339
      %7456 = vmatmul.bf16.gmra.mxu0 %v4284
      %v7457 = vpop.f32.mrf.mxu0
      %v7458 = vadd.f32 %v7365, %v7457
      %v7459 = vpop.f32.mrf.mxu0
      %7460 = vdwg.mxu0
      %7461 = vmatpush.bf16.msra.mxu0 %v6579
      %7462 = vmatpush.bf16.msra.mxu0 %v6563
      %7463 = vmatpush.bf16.msra.mxu0 %v6547
      %7464 = vmatpush.bf16.msra.mxu0 %v6531
      %7465 = vmatpush.bf16.msra.mxu0 %v6515
      %7466 = vmatpush.bf16.msra.mxu0 %v6499
      %7467 = vmatpush.bf16.msra.mxu0 %v6483
      %7468 = vmatpush.bf16.msra.mxu0 %v6467
      %7469 = vmatmul.bf16.gmra.mxu0 %v4285
      %v7470 = vpop.f32.mrf.mxu0
      %v7471 = vadd.f32 %v7458, %v7470
      %v7472 = vpop.f32.mrf.mxu0
      %7473 = vdwg.mxu0
      %7474 = vmatpush.bf16.msra.mxu0 %v6707
      %7475 = vmatpush.bf16.msra.mxu0 %v6691
      %7476 = vmatpush.bf16.msra.mxu0 %v6675
      %7477 = vmatpush.bf16.msra.mxu0 %v6659
      %7478 = vmatpush.bf16.msra.mxu0 %v6643
      %7479 = vmatpush.bf16.msra.mxu0 %v6627
      %7480 = vmatpush.bf16.msra.mxu0 %v6611
      %7481 = vmatpush.bf16.msra.mxu0 %v6595
      %7482 = vmatmul.bf16.gmra.mxu0 %v4286
      %v7483 = vpop.f32.mrf.mxu0
      %v7484 = vadd.f32 %v7471, %v7483
      %v7485 = vpop.f32.mrf.mxu0
      %7486 = vdwg.mxu0
      %7487 = vmatpush.bf16.msra.mxu0 %v6835
      %7488 = vmatpush.bf16.msra.mxu0 %v6819
      %7489 = vmatpush.bf16.msra.mxu0 %v6803
      %7490 = vmatpush.bf16.msra.mxu0 %v6787
      %7491 = vmatpush.bf16.msra.mxu0 %v6771
      %7492 = vmatpush.bf16.msra.mxu0 %v6755
      %7493 = vmatpush.bf16.msra.mxu0 %v6739
      %7494 = vmatpush.bf16.msra.mxu0 %v6723
      %7495 = vmatmul.bf16.gmra.mxu0 %v4287
      %v7496 = vpop.f32.mrf.mxu0
      %v7497 = vadd.f32 %v7484, %v7496
      %v7498 = vpop.f32.mrf.mxu0
      %7499 = vdwg.mxu0
      %7500 = vmatpush.bf16.msra.mxu0 %v6452
      %7501 = vmatpush.bf16.msra.mxu0 %v6436
      %7502 = vmatpush.bf16.msra.mxu0 %v6420
      %7503 = vmatpush.bf16.msra.mxu0 %v6404
      %7504 = vmatpush.bf16.msra.mxu0 %v6388
      %7505 = vmatpush.bf16.msra.mxu0 %v6372
      %7506 = vmatpush.bf16.msra.mxu0 %v6356
      %7507 = vmatpush.bf16.msra.mxu0 %v6340
      %7508 = vmatmul.bf16.gmra.mxu0 %v4284
      %v7509 = vpop.f32.mrf.mxu0
      %v7510 = vadd.f32 %v7366, %v7509
      %v7511 = vpop.f32.mrf.mxu0
      %7512 = vdwg.mxu0
      %7513 = vmatpush.bf16.msra.mxu0 %v6580
      %7514 = vmatpush.bf16.msra.mxu0 %v6564
      %7515 = vmatpush.bf16.msra.mxu0 %v6548
      %7516 = vmatpush.bf16.msra.mxu0 %v6532
      %7517 = vmatpush.bf16.msra.mxu0 %v6516
      %7518 = vmatpush.bf16.msra.mxu0 %v6500
      %7519 = vmatpush.bf16.msra.mxu0 %v6484
      %7520 = vmatpush.bf16.msra.mxu0 %v6468
      %7521 = vmatmul.bf16.gmra.mxu0 %v4285
      %v7522 = vpop.f32.mrf.mxu0
      %v7523 = vadd.f32 %v7510, %v7522
      %v7524 = vpop.f32.mrf.mxu0
      %7525 = vdwg.mxu0
      %7526 = vmatpush.bf16.msra.mxu0 %v6708
      %7527 = vmatpush.bf16.msra.mxu0 %v6692
      %7528 = vmatpush.bf16.msra.mxu0 %v6676
      %7529 = vmatpush.bf16.msra.mxu0 %v6660
      %7530 = vmatpush.bf16.msra.mxu0 %v6644
      %7531 = vmatpush.bf16.msra.mxu0 %v6628
      %7532 = vmatpush.bf16.msra.mxu0 %v6612
      %7533 = vmatpush.bf16.msra.mxu0 %v6596
      %7534 = vmatmul.bf16.gmra.mxu0 %v4286
      %v7535 = vpop.f32.mrf.mxu0
      %v7536 = vadd.f32 %v7523, %v7535
      %v7537 = vpop.f32.mrf.mxu0
      %7538 = vdwg.mxu0
      %7539 = vmatpush.bf16.msra.mxu0 %v6836
      %7540 = vmatpush.bf16.msra.mxu0 %v6820
      %7541 = vmatpush.bf16.msra.mxu0 %v6804
      %7542 = vmatpush.bf16.msra.mxu0 %v6788
      %7543 = vmatpush.bf16.msra.mxu0 %v6772
      %7544 = vmatpush.bf16.msra.mxu0 %v6756
      %7545 = vmatpush.bf16.msra.mxu0 %v6740
      %7546 = vmatpush.bf16.msra.mxu0 %v6724
      %7547 = vmatmul.bf16.gmra.mxu0 %v4287
      %v7548 = vpop.f32.mrf.mxu0
      %v7549 = vadd.f32 %v7536, %v7548
      %v7550 = vpop.f32.mrf.mxu0
      %7551 = vdwg.mxu0
      %7552 = vmatpush.bf16.msra.mxu0 %v6453
      %7553 = vmatpush.bf16.msra.mxu0 %v6437
      %7554 = vmatpush.bf16.msra.mxu0 %v6421
      %7555 = vmatpush.bf16.msra.mxu0 %v6405
      %7556 = vmatpush.bf16.msra.mxu0 %v6389
      %7557 = vmatpush.bf16.msra.mxu0 %v6373
      %7558 = vmatpush.bf16.msra.mxu0 %v6357
      %7559 = vmatpush.bf16.msra.mxu0 %v6341
      %7560 = vmatmul.bf16.gmra.mxu0 %v4284
      %v7561 = vpop.f32.mrf.mxu0
      %v7562 = vadd.f32 %v7367, %v7561
      %v7563 = vpop.f32.mrf.mxu0
      %7564 = vdwg.mxu0
      %7565 = vmatpush.bf16.msra.mxu0 %v6581
      %7566 = vmatpush.bf16.msra.mxu0 %v6565
      %7567 = vmatpush.bf16.msra.mxu0 %v6549
      %7568 = vmatpush.bf16.msra.mxu0 %v6533
      %7569 = vmatpush.bf16.msra.mxu0 %v6517
      %7570 = vmatpush.bf16.msra.mxu0 %v6501
      %7571 = vmatpush.bf16.msra.mxu0 %v6485
      %7572 = vmatpush.bf16.msra.mxu0 %v6469
      %7573 = vmatmul.bf16.gmra.mxu0 %v4285
      %v7574 = vpop.f32.mrf.mxu0
      %v7575 = vadd.f32 %v7562, %v7574
      %v7576 = vpop.f32.mrf.mxu0
      %7577 = vdwg.mxu0
      %7578 = vmatpush.bf16.msra.mxu0 %v6709
      %7579 = vmatpush.bf16.msra.mxu0 %v6693
      %7580 = vmatpush.bf16.msra.mxu0 %v6677
      %7581 = vmatpush.bf16.msra.mxu0 %v6661
      %7582 = vmatpush.bf16.msra.mxu0 %v6645
      %7583 = vmatpush.bf16.msra.mxu0 %v6629
      %7584 = vmatpush.bf16.msra.mxu0 %v6613
      %7585 = vmatpush.bf16.msra.mxu0 %v6597
      %7586 = vmatmul.bf16.gmra.mxu0 %v4286
      %v7587 = vpop.f32.mrf.mxu0
      %v7588 = vadd.f32 %v7575, %v7587
      %v7589 = vpop.f32.mrf.mxu0
      %7590 = vdwg.mxu0
      %7591 = vmatpush.bf16.msra.mxu0 %v6837
      %7592 = vmatpush.bf16.msra.mxu0 %v6821
      %7593 = vmatpush.bf16.msra.mxu0 %v6805
      %7594 = vmatpush.bf16.msra.mxu0 %v6789
      %7595 = vmatpush.bf16.msra.mxu0 %v6773
      %7596 = vmatpush.bf16.msra.mxu0 %v6757
      %7597 = vmatpush.bf16.msra.mxu0 %v6741
      %7598 = vmatpush.bf16.msra.mxu0 %v6725
      %7599 = vmatmul.bf16.gmra.mxu0 %v4287
      %v7600 = vpop.f32.mrf.mxu0
      %v7601 = vadd.f32 %v7588, %v7600
      %v7602 = vpop.f32.mrf.mxu0
      %7603 = vdwg.mxu0
      %7604 = vmatpush.bf16.msra.mxu0 %v6454
      %7605 = vmatpush.bf16.msra.mxu0 %v6438
      %7606 = vmatpush.bf16.msra.mxu0 %v6422
      %7607 = vmatpush.bf16.msra.mxu0 %v6406
      %7608 = vmatpush.bf16.msra.mxu0 %v6390
      %7609 = vmatpush.bf16.msra.mxu0 %v6374
      %7610 = vmatpush.bf16.msra.mxu0 %v6358
      %7611 = vmatpush.bf16.msra.mxu0 %v6342
      %7612 = vmatmul.bf16.gmra.mxu0 %v4284
      %v7613 = vpop.f32.mrf.mxu0
      %v7614 = vadd.f32 %v7368, %v7613
      %v7615 = vpop.f32.mrf.mxu0
      %7616 = vdwg.mxu0
      %7617 = vmatpush.bf16.msra.mxu0 %v6582
      %7618 = vmatpush.bf16.msra.mxu0 %v6566
      %7619 = vmatpush.bf16.msra.mxu0 %v6550
      %7620 = vmatpush.bf16.msra.mxu0 %v6534
      %7621 = vmatpush.bf16.msra.mxu0 %v6518
      %7622 = vmatpush.bf16.msra.mxu0 %v6502
      %7623 = vmatpush.bf16.msra.mxu0 %v6486
      %7624 = vmatpush.bf16.msra.mxu0 %v6470
      %7625 = vmatmul.bf16.gmra.mxu0 %v4285
      %v7626 = vpop.f32.mrf.mxu0
      %v7627 = vadd.f32 %v7614, %v7626
      %v7628 = vpop.f32.mrf.mxu0
      %7629 = vdwg.mxu0
      %7630 = vmatpush.bf16.msra.mxu0 %v6710
      %7631 = vmatpush.bf16.msra.mxu0 %v6694
      %7632 = vmatpush.bf16.msra.mxu0 %v6678
      %7633 = vmatpush.bf16.msra.mxu0 %v6662
      %7634 = vmatpush.bf16.msra.mxu0 %v6646
      %7635 = vmatpush.bf16.msra.mxu0 %v6630
      %7636 = vmatpush.bf16.msra.mxu0 %v6614
      %7637 = vmatpush.bf16.msra.mxu0 %v6598
      %7638 = vmatmul.bf16.gmra.mxu0 %v4286
      %v7639 = vpop.f32.mrf.mxu0
      %v7640 = vadd.f32 %v7627, %v7639
      %v7641 = vpop.f32.mrf.mxu0
      %7642 = vdwg.mxu0
      %7643 = vmatpush.bf16.msra.mxu0 %v6838
      %7644 = vmatpush.bf16.msra.mxu0 %v6822
      %7645 = vmatpush.bf16.msra.mxu0 %v6806
      %7646 = vmatpush.bf16.msra.mxu0 %v6790
      %7647 = vmatpush.bf16.msra.mxu0 %v6774
      %7648 = vmatpush.bf16.msra.mxu0 %v6758
      %7649 = vmatpush.bf16.msra.mxu0 %v6742
      %7650 = vmatpush.bf16.msra.mxu0 %v6726
      %7651 = vmatmul.bf16.gmra.mxu0 %v4287
      %v7652 = vpop.f32.mrf.mxu0
      %v7653 = vadd.f32 %v7640, %v7652
      %v7654 = vpop.f32.mrf.mxu0
      %7655 = vdwg.mxu0
      %7656 = vmatpush.bf16.msra.mxu0 %v6455
      %7657 = vmatpush.bf16.msra.mxu0 %v6439
      %7658 = vmatpush.bf16.msra.mxu0 %v6423
      %7659 = vmatpush.bf16.msra.mxu0 %v6407
      %7660 = vmatpush.bf16.msra.mxu0 %v6391
      %7661 = vmatpush.bf16.msra.mxu0 %v6375
      %7662 = vmatpush.bf16.msra.mxu0 %v6359
      %7663 = vmatpush.bf16.msra.mxu0 %v6343
      %7664 = vmatmul.bf16.gmra.mxu0 %v4284
      %v7665 = vpop.f32.mrf.mxu0
      %v7666 = vadd.f32 %v7369, %v7665
      %v7667 = vpop.f32.mrf.mxu0
      %7668 = vdwg.mxu0
      %7669 = vmatpush.bf16.msra.mxu0 %v6583
      %7670 = vmatpush.bf16.msra.mxu0 %v6567
      %7671 = vmatpush.bf16.msra.mxu0 %v6551
      %7672 = vmatpush.bf16.msra.mxu0 %v6535
      %7673 = vmatpush.bf16.msra.mxu0 %v6519
      %7674 = vmatpush.bf16.msra.mxu0 %v6503
      %7675 = vmatpush.bf16.msra.mxu0 %v6487
      %7676 = vmatpush.bf16.msra.mxu0 %v6471
      %7677 = vmatmul.bf16.gmra.mxu0 %v4285
      %v7678 = vpop.f32.mrf.mxu0
      %v7679 = vadd.f32 %v7666, %v7678
      %v7680 = vpop.f32.mrf.mxu0
      %7681 = vdwg.mxu0
      %7682 = vmatpush.bf16.msra.mxu0 %v6711
      %7683 = vmatpush.bf16.msra.mxu0 %v6695
      %7684 = vmatpush.bf16.msra.mxu0 %v6679
      %7685 = vmatpush.bf16.msra.mxu0 %v6663
      %7686 = vmatpush.bf16.msra.mxu0 %v6647
      %7687 = vmatpush.bf16.msra.mxu0 %v6631
      %7688 = vmatpush.bf16.msra.mxu0 %v6615
      %7689 = vmatpush.bf16.msra.mxu0 %v6599
      %7690 = vmatmul.bf16.gmra.mxu0 %v4286
      %v7691 = vpop.f32.mrf.mxu0
      %v7692 = vadd.f32 %v7679, %v7691
      %v7693 = vpop.f32.mrf.mxu0
      %7694 = vdwg.mxu0
      %7695 = vmatpush.bf16.msra.mxu0 %v6839
      %7696 = vmatpush.bf16.msra.mxu0 %v6823
      %7697 = vmatpush.bf16.msra.mxu0 %v6807
      %7698 = vmatpush.bf16.msra.mxu0 %v6791
      %7699 = vmatpush.bf16.msra.mxu0 %v6775
      %7700 = vmatpush.bf16.msra.mxu0 %v6759
      %7701 = vmatpush.bf16.msra.mxu0 %v6743
      %7702 = vmatpush.bf16.msra.mxu0 %v6727
      %7703 = vmatmul.bf16.gmra.mxu0 %v4287
      %v7704 = vpop.f32.mrf.mxu0
      %v7705 = vadd.f32 %v7692, %v7704
      %v7706 = vpop.f32.mrf.mxu0
      %7707 = vdwg.mxu0
      %7708 = vmatpush.bf16.msra.mxu0 %v6456
      %7709 = vmatpush.bf16.msra.mxu0 %v6440
      %7710 = vmatpush.bf16.msra.mxu0 %v6424
      %7711 = vmatpush.bf16.msra.mxu0 %v6408
      %7712 = vmatpush.bf16.msra.mxu0 %v6392
      %7713 = vmatpush.bf16.msra.mxu0 %v6376
      %7714 = vmatpush.bf16.msra.mxu0 %v6360
      %7715 = vmatpush.bf16.msra.mxu0 %v6344
      %7716 = vmatmul.bf16.gmra.mxu0 %v4284
      %v7717 = vpop.f32.mrf.mxu0
      %v7718 = vadd.f32 %v7370, %v7717
      %v7719 = vpop.f32.mrf.mxu0
      %7720 = vdwg.mxu0
      %7721 = vmatpush.bf16.msra.mxu0 %v6584
      %7722 = vmatpush.bf16.msra.mxu0 %v6568
      %7723 = vmatpush.bf16.msra.mxu0 %v6552
      %7724 = vmatpush.bf16.msra.mxu0 %v6536
      %7725 = vmatpush.bf16.msra.mxu0 %v6520
      %7726 = vmatpush.bf16.msra.mxu0 %v6504
      %7727 = vmatpush.bf16.msra.mxu0 %v6488
      %7728 = vmatpush.bf16.msra.mxu0 %v6472
      %7729 = vmatmul.bf16.gmra.mxu0 %v4285
      %v7730 = vpop.f32.mrf.mxu0
      %v7731 = vadd.f32 %v7718, %v7730
      %v7732 = vpop.f32.mrf.mxu0
      %7733 = vdwg.mxu0
      %7734 = vmatpush.bf16.msra.mxu0 %v6712
      %7735 = vmatpush.bf16.msra.mxu0 %v6696
      %7736 = vmatpush.bf16.msra.mxu0 %v6680
      %7737 = vmatpush.bf16.msra.mxu0 %v6664
      %7738 = vmatpush.bf16.msra.mxu0 %v6648
      %7739 = vmatpush.bf16.msra.mxu0 %v6632
      %7740 = vmatpush.bf16.msra.mxu0 %v6616
      %7741 = vmatpush.bf16.msra.mxu0 %v6600
      %7742 = vmatmul.bf16.gmra.mxu0 %v4286
      %v7743 = vpop.f32.mrf.mxu0
      %v7744 = vadd.f32 %v7731, %v7743
      %v7745 = vpop.f32.mrf.mxu0
      %7746 = vdwg.mxu0
      %7747 = vmatpush.bf16.msra.mxu0 %v6840
      %7748 = vmatpush.bf16.msra.mxu0 %v6824
      %7749 = vmatpush.bf16.msra.mxu0 %v6808
      %7750 = vmatpush.bf16.msra.mxu0 %v6792
      %7751 = vmatpush.bf16.msra.mxu0 %v6776
      %7752 = vmatpush.bf16.msra.mxu0 %v6760
      %7753 = vmatpush.bf16.msra.mxu0 %v6744
      %7754 = vmatpush.bf16.msra.mxu0 %v6728
      %7755 = vmatmul.bf16.gmra.mxu0 %v4287
      %v7756 = vpop.f32.mrf.mxu0
      %v7757 = vadd.f32 %v7744, %v7756
      %v7758 = vpop.f32.mrf.mxu0
      %7759 = vdwg.mxu0
      %7760 = vmatpush.bf16.msra.mxu0 %v6457
      %7761 = vmatpush.bf16.msra.mxu0 %v6441
      %7762 = vmatpush.bf16.msra.mxu0 %v6425
      %7763 = vmatpush.bf16.msra.mxu0 %v6409
      %7764 = vmatpush.bf16.msra.mxu0 %v6393
      %7765 = vmatpush.bf16.msra.mxu0 %v6377
      %7766 = vmatpush.bf16.msra.mxu0 %v6361
      %7767 = vmatpush.bf16.msra.mxu0 %v6345
      %7768 = vmatmul.bf16.gmra.mxu0 %v4284
      %v7769 = vpop.f32.mrf.mxu0
      %v7770 = vadd.f32 %v7371, %v7769
      %v7771 = vpop.f32.mrf.mxu0
      %7772 = vdwg.mxu0
      %7773 = vmatpush.bf16.msra.mxu0 %v6585
      %7774 = vmatpush.bf16.msra.mxu0 %v6569
      %7775 = vmatpush.bf16.msra.mxu0 %v6553
      %7776 = vmatpush.bf16.msra.mxu0 %v6537
      %7777 = vmatpush.bf16.msra.mxu0 %v6521
      %7778 = vmatpush.bf16.msra.mxu0 %v6505
      %7779 = vmatpush.bf16.msra.mxu0 %v6489
      %7780 = vmatpush.bf16.msra.mxu0 %v6473
      %7781 = vmatmul.bf16.gmra.mxu0 %v4285
      %v7782 = vpop.f32.mrf.mxu0
      %v7783 = vadd.f32 %v7770, %v7782
      %v7784 = vpop.f32.mrf.mxu0
      %7785 = vdwg.mxu0
      %7786 = vmatpush.bf16.msra.mxu0 %v6713
      %7787 = vmatpush.bf16.msra.mxu0 %v6697
      %7788 = vmatpush.bf16.msra.mxu0 %v6681
      %7789 = vmatpush.bf16.msra.mxu0 %v6665
      %7790 = vmatpush.bf16.msra.mxu0 %v6649
      %7791 = vmatpush.bf16.msra.mxu0 %v6633
      %7792 = vmatpush.bf16.msra.mxu0 %v6617
      %7793 = vmatpush.bf16.msra.mxu0 %v6601
      %7794 = vmatmul.bf16.gmra.mxu0 %v4286
      %v7795 = vpop.f32.mrf.mxu0
      %v7796 = vadd.f32 %v7783, %v7795
      %v7797 = vpop.f32.mrf.mxu0
      %7798 = vdwg.mxu0
      %7799 = vmatpush.bf16.msra.mxu0 %v6841
      %7800 = vmatpush.bf16.msra.mxu0 %v6825
      %7801 = vmatpush.bf16.msra.mxu0 %v6809
      %7802 = vmatpush.bf16.msra.mxu0 %v6793
      %7803 = vmatpush.bf16.msra.mxu0 %v6777
      %7804 = vmatpush.bf16.msra.mxu0 %v6761
      %7805 = vmatpush.bf16.msra.mxu0 %v6745
      %7806 = vmatpush.bf16.msra.mxu0 %v6729
      %7807 = vmatmul.bf16.gmra.mxu0 %v4287
      %v7808 = vpop.f32.mrf.mxu0
      %v7809 = vadd.f32 %v7796, %v7808
      %v7810 = vpop.f32.mrf.mxu0
      %7811 = vdwg.mxu0
      %7812 = vmatpush.bf16.msra.mxu0 %v6458
      %7813 = vmatpush.bf16.msra.mxu0 %v6442
      %7814 = vmatpush.bf16.msra.mxu0 %v6426
      %7815 = vmatpush.bf16.msra.mxu0 %v6410
      %7816 = vmatpush.bf16.msra.mxu0 %v6394
      %7817 = vmatpush.bf16.msra.mxu0 %v6378
      %7818 = vmatpush.bf16.msra.mxu0 %v6362
      %7819 = vmatpush.bf16.msra.mxu0 %v6346
      %7820 = vmatmul.bf16.gmra.mxu0 %v4284
      %v7821 = vpop.f32.mrf.mxu0
      %v7822 = vadd.f32 %v7372, %v7821
      %v7823 = vpop.f32.mrf.mxu0
      %7824 = vdwg.mxu0
      %7825 = vmatpush.bf16.msra.mxu0 %v6586
      %7826 = vmatpush.bf16.msra.mxu0 %v6570
      %7827 = vmatpush.bf16.msra.mxu0 %v6554
      %7828 = vmatpush.bf16.msra.mxu0 %v6538
      %7829 = vmatpush.bf16.msra.mxu0 %v6522
      %7830 = vmatpush.bf16.msra.mxu0 %v6506
      %7831 = vmatpush.bf16.msra.mxu0 %v6490
      %7832 = vmatpush.bf16.msra.mxu0 %v6474
      %7833 = vmatmul.bf16.gmra.mxu0 %v4285
      %v7834 = vpop.f32.mrf.mxu0
      %v7835 = vadd.f32 %v7822, %v7834
      %v7836 = vpop.f32.mrf.mxu0
      %7837 = vdwg.mxu0
      %7838 = vmatpush.bf16.msra.mxu0 %v6714
      %7839 = vmatpush.bf16.msra.mxu0 %v6698
      %7840 = vmatpush.bf16.msra.mxu0 %v6682
      %7841 = vmatpush.bf16.msra.mxu0 %v6666
      %7842 = vmatpush.bf16.msra.mxu0 %v6650
      %7843 = vmatpush.bf16.msra.mxu0 %v6634
      %7844 = vmatpush.bf16.msra.mxu0 %v6618
      %7845 = vmatpush.bf16.msra.mxu0 %v6602
      %7846 = vmatmul.bf16.gmra.mxu0 %v4286
      %v7847 = vpop.f32.mrf.mxu0
      %v7848 = vadd.f32 %v7835, %v7847
      %v7849 = vpop.f32.mrf.mxu0
      %7850 = vdwg.mxu0
      %7851 = vmatpush.bf16.msra.mxu0 %v6842
      %7852 = vmatpush.bf16.msra.mxu0 %v6826
      %7853 = vmatpush.bf16.msra.mxu0 %v6810
      %7854 = vmatpush.bf16.msra.mxu0 %v6794
      %7855 = vmatpush.bf16.msra.mxu0 %v6778
      %7856 = vmatpush.bf16.msra.mxu0 %v6762
      %7857 = vmatpush.bf16.msra.mxu0 %v6746
      %7858 = vmatpush.bf16.msra.mxu0 %v6730
      %7859 = vmatmul.bf16.gmra.mxu0 %v4287
      %v7860 = vpop.f32.mrf.mxu0
      %v7861 = vadd.f32 %v7848, %v7860
      %v7862 = vpop.f32.mrf.mxu0
      %7863 = vdwg.mxu0
      %7864 = vmatpush.bf16.msra.mxu0 %v6459
      %7865 = vmatpush.bf16.msra.mxu0 %v6443
      %7866 = vmatpush.bf16.msra.mxu0 %v6427
      %7867 = vmatpush.bf16.msra.mxu0 %v6411
      %7868 = vmatpush.bf16.msra.mxu0 %v6395
      %7869 = vmatpush.bf16.msra.mxu0 %v6379
      %7870 = vmatpush.bf16.msra.mxu0 %v6363
      %7871 = vmatpush.bf16.msra.mxu0 %v6347
      %7872 = vmatmul.bf16.gmra.mxu0 %v4284
      %v7873 = vpop.f32.mrf.mxu0
      %v7874 = vadd.f32 %v7373, %v7873
      %v7875 = vpop.f32.mrf.mxu0
      %7876 = vdwg.mxu0
      %7877 = vmatpush.bf16.msra.mxu0 %v6587
      %7878 = vmatpush.bf16.msra.mxu0 %v6571
      %7879 = vmatpush.bf16.msra.mxu0 %v6555
      %7880 = vmatpush.bf16.msra.mxu0 %v6539
      %7881 = vmatpush.bf16.msra.mxu0 %v6523
      %7882 = vmatpush.bf16.msra.mxu0 %v6507
      %7883 = vmatpush.bf16.msra.mxu0 %v6491
      %7884 = vmatpush.bf16.msra.mxu0 %v6475
      %7885 = vmatmul.bf16.gmra.mxu0 %v4285
      %v7886 = vpop.f32.mrf.mxu0
      %v7887 = vadd.f32 %v7874, %v7886
      %v7888 = vpop.f32.mrf.mxu0
      %7889 = vdwg.mxu0
      %7890 = vmatpush.bf16.msra.mxu0 %v6715
      %7891 = vmatpush.bf16.msra.mxu0 %v6699
      %7892 = vmatpush.bf16.msra.mxu0 %v6683
      %7893 = vmatpush.bf16.msra.mxu0 %v6667
      %7894 = vmatpush.bf16.msra.mxu0 %v6651
      %7895 = vmatpush.bf16.msra.mxu0 %v6635
      %7896 = vmatpush.bf16.msra.mxu0 %v6619
      %7897 = vmatpush.bf16.msra.mxu0 %v6603
      %7898 = vmatmul.bf16.gmra.mxu0 %v4286
      %v7899 = vpop.f32.mrf.mxu0
      %v7900 = vadd.f32 %v7887, %v7899
      %v7901 = vpop.f32.mrf.mxu0
      %7902 = vdwg.mxu0
      %7903 = vmatpush.bf16.msra.mxu0 %v6843
      %7904 = vmatpush.bf16.msra.mxu0 %v6827
      %7905 = vmatpush.bf16.msra.mxu0 %v6811
      %7906 = vmatpush.bf16.msra.mxu0 %v6795
      %7907 = vmatpush.bf16.msra.mxu0 %v6779
      %7908 = vmatpush.bf16.msra.mxu0 %v6763
      %7909 = vmatpush.bf16.msra.mxu0 %v6747
      %7910 = vmatpush.bf16.msra.mxu0 %v6731
      %7911 = vmatmul.bf16.gmra.mxu0 %v4287
      %v7912 = vpop.f32.mrf.mxu0
      %v7913 = vadd.f32 %v7900, %v7912
      %v7914 = vpop.f32.mrf.mxu0
      %7915 = vdwg.mxu0
      %7916 = vmatpush.bf16.msra.mxu0 %v6460
      %7917 = vmatpush.bf16.msra.mxu0 %v6444
      %7918 = vmatpush.bf16.msra.mxu0 %v6428
      %7919 = vmatpush.bf16.msra.mxu0 %v6412
      %7920 = vmatpush.bf16.msra.mxu0 %v6396
      %7921 = vmatpush.bf16.msra.mxu0 %v6380
      %7922 = vmatpush.bf16.msra.mxu0 %v6364
      %7923 = vmatpush.bf16.msra.mxu0 %v6348
      %7924 = vmatmul.bf16.gmra.mxu0 %v4284
      %v7925 = vpop.f32.mrf.mxu0
      %v7926 = vadd.f32 %v7374, %v7925
      %v7927 = vpop.f32.mrf.mxu0
      %7928 = vdwg.mxu0
      %7929 = vmatpush.bf16.msra.mxu0 %v6588
      %7930 = vmatpush.bf16.msra.mxu0 %v6572
      %7931 = vmatpush.bf16.msra.mxu0 %v6556
      %7932 = vmatpush.bf16.msra.mxu0 %v6540
      %7933 = vmatpush.bf16.msra.mxu0 %v6524
      %7934 = vmatpush.bf16.msra.mxu0 %v6508
      %7935 = vmatpush.bf16.msra.mxu0 %v6492
      %7936 = vmatpush.bf16.msra.mxu0 %v6476
      %7937 = vmatmul.bf16.gmra.mxu0 %v4285
      %v7938 = vpop.f32.mrf.mxu0
      %v7939 = vadd.f32 %v7926, %v7938
      %v7940 = vpop.f32.mrf.mxu0
      %7941 = vdwg.mxu0
      %7942 = vmatpush.bf16.msra.mxu0 %v6716
      %7943 = vmatpush.bf16.msra.mxu0 %v6700
      %7944 = vmatpush.bf16.msra.mxu0 %v6684
      %7945 = vmatpush.bf16.msra.mxu0 %v6668
      %7946 = vmatpush.bf16.msra.mxu0 %v6652
      %7947 = vmatpush.bf16.msra.mxu0 %v6636
      %7948 = vmatpush.bf16.msra.mxu0 %v6620
      %7949 = vmatpush.bf16.msra.mxu0 %v6604
      %7950 = vmatmul.bf16.gmra.mxu0 %v4286
      %v7951 = vpop.f32.mrf.mxu0
      %v7952 = vadd.f32 %v7939, %v7951
      %v7953 = vpop.f32.mrf.mxu0
      %7954 = vdwg.mxu0
      %7955 = vmatpush.bf16.msra.mxu0 %v6844
      %7956 = vmatpush.bf16.msra.mxu0 %v6828
      %7957 = vmatpush.bf16.msra.mxu0 %v6812
      %7958 = vmatpush.bf16.msra.mxu0 %v6796
      %7959 = vmatpush.bf16.msra.mxu0 %v6780
      %7960 = vmatpush.bf16.msra.mxu0 %v6764
      %7961 = vmatpush.bf16.msra.mxu0 %v6748
      %7962 = vmatpush.bf16.msra.mxu0 %v6732
      %7963 = vmatmul.bf16.gmra.mxu0 %v4287
      %v7964 = vpop.f32.mrf.mxu0
      %v7965 = vadd.f32 %v7952, %v7964
      %v7966 = vpop.f32.mrf.mxu0
      %7967 = vdwg.mxu0
      %7968 = vmatpush.bf16.msra.mxu0 %v6461
      %7969 = vmatpush.bf16.msra.mxu0 %v6445
      %7970 = vmatpush.bf16.msra.mxu0 %v6429
      %7971 = vmatpush.bf16.msra.mxu0 %v6413
      %7972 = vmatpush.bf16.msra.mxu0 %v6397
      %7973 = vmatpush.bf16.msra.mxu0 %v6381
      %7974 = vmatpush.bf16.msra.mxu0 %v6365
      %7975 = vmatpush.bf16.msra.mxu0 %v6349
      %7976 = vmatmul.bf16.gmra.mxu0 %v4284
      %v7977 = vpop.f32.mrf.mxu0
      %v7978 = vadd.f32 %v7375, %v7977
      %v7979 = vpop.f32.mrf.mxu0
      %7980 = vdwg.mxu0
      %7981 = vmatpush.bf16.msra.mxu0 %v6589
      %7982 = vmatpush.bf16.msra.mxu0 %v6573
      %7983 = vmatpush.bf16.msra.mxu0 %v6557
      %7984 = vmatpush.bf16.msra.mxu0 %v6541
      %7985 = vmatpush.bf16.msra.mxu0 %v6525
      %7986 = vmatpush.bf16.msra.mxu0 %v6509
      %7987 = vmatpush.bf16.msra.mxu0 %v6493
      %7988 = vmatpush.bf16.msra.mxu0 %v6477
      %7989 = vmatmul.bf16.gmra.mxu0 %v4285
      %v7990 = vpop.f32.mrf.mxu0
      %v7991 = vadd.f32 %v7978, %v7990
      %v7992 = vpop.f32.mrf.mxu0
      %7993 = vdwg.mxu0
      %7994 = vmatpush.bf16.msra.mxu0 %v6717
      %7995 = vmatpush.bf16.msra.mxu0 %v6701
      %7996 = vmatpush.bf16.msra.mxu0 %v6685
      %7997 = vmatpush.bf16.msra.mxu0 %v6669
      %7998 = vmatpush.bf16.msra.mxu0 %v6653
      %7999 = vmatpush.bf16.msra.mxu0 %v6637
      %8000 = vmatpush.bf16.msra.mxu0 %v6621
      %8001 = vmatpush.bf16.msra.mxu0 %v6605
      %8002 = vmatmul.bf16.gmra.mxu0 %v4286
      %v8003 = vpop.f32.mrf.mxu0
      %v8004 = vadd.f32 %v7991, %v8003
      %v8005 = vpop.f32.mrf.mxu0
      %8006 = vdwg.mxu0
      %8007 = vmatpush.bf16.msra.mxu0 %v6845
      %8008 = vmatpush.bf16.msra.mxu0 %v6829
      %8009 = vmatpush.bf16.msra.mxu0 %v6813
      %8010 = vmatpush.bf16.msra.mxu0 %v6797
      %8011 = vmatpush.bf16.msra.mxu0 %v6781
      %8012 = vmatpush.bf16.msra.mxu0 %v6765
      %8013 = vmatpush.bf16.msra.mxu0 %v6749
      %8014 = vmatpush.bf16.msra.mxu0 %v6733
      %8015 = vmatmul.bf16.gmra.mxu0 %v4287
      %v8016 = vpop.f32.mrf.mxu0
      %v8017 = vadd.f32 %v8004, %v8016
      %v8018 = vpop.f32.mrf.mxu0
      %8019 = vdwg.mxu0
      %8020 = vmatpush.bf16.msra.mxu0 %v6462
      %8021 = vmatpush.bf16.msra.mxu0 %v6446
      %8022 = vmatpush.bf16.msra.mxu0 %v6430
      %8023 = vmatpush.bf16.msra.mxu0 %v6414
      %8024 = vmatpush.bf16.msra.mxu0 %v6398
      %8025 = vmatpush.bf16.msra.mxu0 %v6382
      %8026 = vmatpush.bf16.msra.mxu0 %v6366
      %8027 = vmatpush.bf16.msra.mxu0 %v6350
      %8028 = vmatmul.bf16.gmra.mxu0 %v4284
      %v8029 = vpop.f32.mrf.mxu0
      %v8030 = vadd.f32 %v7376, %v8029
      %v8031 = vpop.f32.mrf.mxu0
      %8032 = vdwg.mxu0
      %8033 = vmatpush.bf16.msra.mxu0 %v6590
      %8034 = vmatpush.bf16.msra.mxu0 %v6574
      %8035 = vmatpush.bf16.msra.mxu0 %v6558
      %8036 = vmatpush.bf16.msra.mxu0 %v6542
      %8037 = vmatpush.bf16.msra.mxu0 %v6526
      %8038 = vmatpush.bf16.msra.mxu0 %v6510
      %8039 = vmatpush.bf16.msra.mxu0 %v6494
      %8040 = vmatpush.bf16.msra.mxu0 %v6478
      %8041 = vmatmul.bf16.gmra.mxu0 %v4285
      %v8042 = vpop.f32.mrf.mxu0
      %v8043 = vadd.f32 %v8030, %v8042
      %v8044 = vpop.f32.mrf.mxu0
      %8045 = vdwg.mxu0
      %8046 = vmatpush.bf16.msra.mxu0 %v6718
      %8047 = vmatpush.bf16.msra.mxu0 %v6702
      %8048 = vmatpush.bf16.msra.mxu0 %v6686
      %8049 = vmatpush.bf16.msra.mxu0 %v6670
      %8050 = vmatpush.bf16.msra.mxu0 %v6654
      %8051 = vmatpush.bf16.msra.mxu0 %v6638
      %8052 = vmatpush.bf16.msra.mxu0 %v6622
      %8053 = vmatpush.bf16.msra.mxu0 %v6606
      %8054 = vmatmul.bf16.gmra.mxu0 %v4286
      %v8055 = vpop.f32.mrf.mxu0
      %v8056 = vadd.f32 %v8043, %v8055
      %v8057 = vpop.f32.mrf.mxu0
      %8058 = vdwg.mxu0
      %8059 = vmatpush.bf16.msra.mxu0 %v6846
      %8060 = vmatpush.bf16.msra.mxu0 %v6830
      %8061 = vmatpush.bf16.msra.mxu0 %v6814
      %8062 = vmatpush.bf16.msra.mxu0 %v6798
      %8063 = vmatpush.bf16.msra.mxu0 %v6782
      %8064 = vmatpush.bf16.msra.mxu0 %v6766
      %8065 = vmatpush.bf16.msra.mxu0 %v6750
      %8066 = vmatpush.bf16.msra.mxu0 %v6734
      %8067 = vmatmul.bf16.gmra.mxu0 %v4287
      %v8068 = vpop.f32.mrf.mxu0
      %v8069 = vadd.f32 %v8056, %v8068
      %v8070 = vpop.f32.mrf.mxu0
      %8071 = vdwg.mxu0
      %8072 = vmatpush.bf16.msra.mxu0 %v6463
      %8073 = vmatpush.bf16.msra.mxu0 %v6447
      %8074 = vmatpush.bf16.msra.mxu0 %v6431
      %8075 = vmatpush.bf16.msra.mxu0 %v6415
      %8076 = vmatpush.bf16.msra.mxu0 %v6399
      %8077 = vmatpush.bf16.msra.mxu0 %v6383
      %8078 = vmatpush.bf16.msra.mxu0 %v6367
      %8079 = vmatpush.bf16.msra.mxu0 %v6351
      %8080 = vmatmul.bf16.gmra.mxu0 %v4284
      %v8081 = vpop.f32.mrf.mxu0
      %v8082 = vadd.f32 %v7377, %v8081
      %v8083 = vpop.f32.mrf.mxu0
      %8084 = vdwg.mxu0
      %8085 = vmatpush.bf16.msra.mxu0 %v6591
      %8086 = vmatpush.bf16.msra.mxu0 %v6575
      %8087 = vmatpush.bf16.msra.mxu0 %v6559
      %8088 = vmatpush.bf16.msra.mxu0 %v6543
      %8089 = vmatpush.bf16.msra.mxu0 %v6527
      %8090 = vmatpush.bf16.msra.mxu0 %v6511
      %8091 = vmatpush.bf16.msra.mxu0 %v6495
      %8092 = vmatpush.bf16.msra.mxu0 %v6479
      %8093 = vmatmul.bf16.gmra.mxu0 %v4285
      %v8094 = vpop.f32.mrf.mxu0
      %v8095 = vadd.f32 %v8082, %v8094
      %v8096 = vpop.f32.mrf.mxu0
      %8097 = vdwg.mxu0
      %8098 = vmatpush.bf16.msra.mxu0 %v6719
      %8099 = vmatpush.bf16.msra.mxu0 %v6703
      %8100 = vmatpush.bf16.msra.mxu0 %v6687
      %8101 = vmatpush.bf16.msra.mxu0 %v6671
      %8102 = vmatpush.bf16.msra.mxu0 %v6655
      %8103 = vmatpush.bf16.msra.mxu0 %v6639
      %8104 = vmatpush.bf16.msra.mxu0 %v6623
      %8105 = vmatpush.bf16.msra.mxu0 %v6607
      %8106 = vmatmul.bf16.gmra.mxu0 %v4286
      %v8107 = vpop.f32.mrf.mxu0
      %v8108 = vadd.f32 %v8095, %v8107
      %v8109 = vpop.f32.mrf.mxu0
      %8110 = vdwg.mxu0
      %8111 = vmatpush.bf16.msra.mxu0 %v6847
      %8112 = vmatpush.bf16.msra.mxu0 %v6831
      %8113 = vmatpush.bf16.msra.mxu0 %v6815
      %8114 = vmatpush.bf16.msra.mxu0 %v6799
      %8115 = vmatpush.bf16.msra.mxu0 %v6783
      %8116 = vmatpush.bf16.msra.mxu0 %v6767
      %8117 = vmatpush.bf16.msra.mxu0 %v6751
      %8118 = vmatpush.bf16.msra.mxu0 %v6735
      %8119 = vmatmul.bf16.gmra.mxu0 %v4287
      %v8120 = vpop.f32.mrf.mxu0
      %v8121 = vadd.f32 %v8108, %v8120
      %v8122 = vpop.f32.mrf.mxu0
      %8123 = vdwg.mxu0
      %8124 = vmatpush.bf16.msra.mxu0 %v6464
      %8125 = vmatpush.bf16.msra.mxu0 %v6448
      %8126 = vmatpush.bf16.msra.mxu0 %v6432
      %8127 = vmatpush.bf16.msra.mxu0 %v6416
      %8128 = vmatpush.bf16.msra.mxu0 %v6400
      %8129 = vmatpush.bf16.msra.mxu0 %v6384
      %8130 = vmatpush.bf16.msra.mxu0 %v6368
      %8131 = vmatpush.bf16.msra.mxu0 %v6352
      %8132 = vmatmul.bf16.gmra.mxu0 %v4284
      %v8133 = vpop.f32.mrf.mxu0
      %v8134 = vadd.f32 %v7378, %v8133
      %v8135 = vpop.f32.mrf.mxu0
      %8136 = vdwg.mxu0
      %8137 = vmatpush.bf16.msra.mxu0 %v6592
      %8138 = vmatpush.bf16.msra.mxu0 %v6576
      %8139 = vmatpush.bf16.msra.mxu0 %v6560
      %8140 = vmatpush.bf16.msra.mxu0 %v6544
      %8141 = vmatpush.bf16.msra.mxu0 %v6528
      %8142 = vmatpush.bf16.msra.mxu0 %v6512
      %8143 = vmatpush.bf16.msra.mxu0 %v6496
      %8144 = vmatpush.bf16.msra.mxu0 %v6480
      %8145 = vmatmul.bf16.gmra.mxu0 %v4285
      %v8146 = vpop.f32.mrf.mxu0
      %v8147 = vadd.f32 %v8134, %v8146
      %v8148 = vpop.f32.mrf.mxu0
      %8149 = vdwg.mxu0
      %8150 = vmatpush.bf16.msra.mxu0 %v6720
      %8151 = vmatpush.bf16.msra.mxu0 %v6704
      %8152 = vmatpush.bf16.msra.mxu0 %v6688
      %8153 = vmatpush.bf16.msra.mxu0 %v6672
      %8154 = vmatpush.bf16.msra.mxu0 %v6656
      %8155 = vmatpush.bf16.msra.mxu0 %v6640
      %8156 = vmatpush.bf16.msra.mxu0 %v6624
      %8157 = vmatpush.bf16.msra.mxu0 %v6608
      %8158 = vmatmul.bf16.gmra.mxu0 %v4286
      %v8159 = vpop.f32.mrf.mxu0
      %v8160 = vadd.f32 %v8147, %v8159
      %v8161 = vpop.f32.mrf.mxu0
      %8162 = vdwg.mxu0
      %8163 = vmatpush.bf16.msra.mxu0 %v6848
      %8164 = vmatpush.bf16.msra.mxu0 %v6832
      %8165 = vmatpush.bf16.msra.mxu0 %v6816
      %8166 = vmatpush.bf16.msra.mxu0 %v6800
      %8167 = vmatpush.bf16.msra.mxu0 %v6784
      %8168 = vmatpush.bf16.msra.mxu0 %v6768
      %8169 = vmatpush.bf16.msra.mxu0 %v6752
      %8170 = vmatpush.bf16.msra.mxu0 %v6736
      %8171 = vmatmul.bf16.gmra.mxu0 %v4287
      %v8172 = vpop.f32.mrf.mxu0
      %v8173 = vadd.f32 %v8160, %v8172
      %v8174 = vpop.f32.mrf.mxu0
      %8175 = vdwg.mxu0
      %8176 = vmatpush.bf16.msra.mxu0 %v6465
      %8177 = vmatpush.bf16.msra.mxu0 %v6449
      %8178 = vmatpush.bf16.msra.mxu0 %v6433
      %8179 = vmatpush.bf16.msra.mxu0 %v6417
      %8180 = vmatpush.bf16.msra.mxu0 %v6401
      %8181 = vmatpush.bf16.msra.mxu0 %v6385
      %8182 = vmatpush.bf16.msra.mxu0 %v6369
      %8183 = vmatpush.bf16.msra.mxu0 %v6353
      %8184 = vmatmul.bf16.gmra.mxu0 %v4284
      %v8185 = vpop.f32.mrf.mxu0
      %v8186 = vadd.f32 %v7379, %v8185
      %v8187 = vpop.f32.mrf.mxu0
      %8188 = vdwg.mxu0
      %8189 = vmatpush.bf16.msra.mxu0 %v6593
      %8190 = vmatpush.bf16.msra.mxu0 %v6577
      %8191 = vmatpush.bf16.msra.mxu0 %v6561
      %8192 = vmatpush.bf16.msra.mxu0 %v6545
      %8193 = vmatpush.bf16.msra.mxu0 %v6529
      %8194 = vmatpush.bf16.msra.mxu0 %v6513
      %8195 = vmatpush.bf16.msra.mxu0 %v6497
      %8196 = vmatpush.bf16.msra.mxu0 %v6481
      %8197 = vmatmul.bf16.gmra.mxu0 %v4285
      %v8198 = vpop.f32.mrf.mxu0
      %v8199 = vadd.f32 %v8186, %v8198
      %v8200 = vpop.f32.mrf.mxu0
      %8201 = vdwg.mxu0
      %8202 = vmatpush.bf16.msra.mxu0 %v6721
      %8203 = vmatpush.bf16.msra.mxu0 %v6705
      %8204 = vmatpush.bf16.msra.mxu0 %v6689
      %8205 = vmatpush.bf16.msra.mxu0 %v6673
      %8206 = vmatpush.bf16.msra.mxu0 %v6657
      %8207 = vmatpush.bf16.msra.mxu0 %v6641
      %8208 = vmatpush.bf16.msra.mxu0 %v6625
      %8209 = vmatpush.bf16.msra.mxu0 %v6609
      %8210 = vmatmul.bf16.gmra.mxu0 %v4286
      %v8211 = vpop.f32.mrf.mxu0
      %v8212 = vadd.f32 %v8199, %v8211
      %v8213 = vpop.f32.mrf.mxu0
      %8214 = vdwg.mxu0
      %8215 = vmatpush.bf16.msra.mxu0 %v6849
      %8216 = vmatpush.bf16.msra.mxu0 %v6833
      %8217 = vmatpush.bf16.msra.mxu0 %v6817
      %8218 = vmatpush.bf16.msra.mxu0 %v6801
      %8219 = vmatpush.bf16.msra.mxu0 %v6785
      %8220 = vmatpush.bf16.msra.mxu0 %v6769
      %8221 = vmatpush.bf16.msra.mxu0 %v6753
      %8222 = vmatpush.bf16.msra.mxu0 %v6737
      %8223 = vmatmul.bf16.gmra.mxu0 %v4287
      %v8224 = vpop.f32.mrf.mxu0
      %v8225 = vadd.f32 %v8212, %v8224
      %v8226 = vpop.f32.mrf.mxu0
      %8227 = vdwg.mxu0
      %v8228 = vunpack.c.l.bf16 %v328
      %v8229 = vunpack.c.h.bf16 %v328
      %v8230 = vunpack.c.l.bf16 %v329
      %v8231 = vunpack.c.h.bf16 %v329
      %v8236 = vperm.slane %v8228, 0
      %v8237 = vperm.slane %v8228, 2
      %v8238 = vperm.slane %v8228, 4
      %v8239 = vperm.slane %v8228, 6
      %v8240 = vperm.slane %v8229, 0
      %v8241 = vperm.slane %v8229, 2
      %v8242 = vperm.slane %v8229, 4
      %v8243 = vperm.slane %v8229, 6
      %v8244 = vperm.slane %v8230, 0
      %v8245 = vperm.slane %v8230, 2
      %v8246 = vperm.slane %v8230, 4
      %v8247 = vperm.slane %v8230, 6
      %v8248 = vperm.slane %v8231, 0
      %v8249 = vperm.slane %v8231, 2
      %v8250 = vperm.slane %v8231, 4
      %v8251 = vperm.slane %v8231, 6
      %v8268 = vadd.f32 %v7445, %v8236
      %v8269 = vadd.f32 %v7497, %v8237
      %v8270 = vadd.f32 %v7549, %v8238
      %v8271 = vadd.f32 %v7601, %v8239
      %v8272 = vadd.f32 %v7653, %v8240
      %v8273 = vadd.f32 %v7705, %v8241
      %v8274 = vadd.f32 %v7757, %v8242
      %v8275 = vadd.f32 %v7809, %v8243
      %v8276 = vadd.f32 %v7861, %v8244
      %v8277 = vadd.f32 %v7913, %v8245
      %v8278 = vadd.f32 %v7965, %v8246
      %v8279 = vadd.f32 %v8017, %v8247
      %v8280 = vadd.f32 %v8069, %v8248
      %v8281 = vadd.f32 %v8121, %v8249
      %v8282 = vadd.f32 %v8173, %v8250
      %v8283 = vadd.f32 %v8225, %v8251
      %v8284 = vadd.f32 %v8268, 0.0
      %v8285 = vadd.f32 %v8269, 0.0
      %v8286 = vadd.f32 %v8270, 0.0
      %v8287 = vadd.f32 %v8271, 0.0
      %v8288 = vadd.f32 %v8272, 0.0
      %v8289 = vadd.f32 %v8273, 0.0
      %v8290 = vadd.f32 %v8274, 0.0
      %v8291 = vadd.f32 %v8275, 0.0
      %v8292 = vadd.f32 %v8276, 0.0
      %v8293 = vadd.f32 %v8277, 0.0
      %v8294 = vadd.f32 %v8278, 0.0
      %v8295 = vadd.f32 %v8279, 0.0
      %v8296 = vadd.f32 %v8280, 0.0
      %v8297 = vadd.f32 %v8281, 0.0
      %v8298 = vadd.f32 %v8282, 0.0
      %v8299 = vadd.f32 %v8283, 0.0
      %v8300 = vadd.f32 %v8284, %v8292
      %v8301 = vadd.f32 %v8285, %v8293
      %v8302 = vadd.f32 %v8286, %v8294
      %v8303 = vadd.f32 %v8287, %v8295
      %v8304 = vadd.f32 %v8288, %v8296
      %v8305 = vadd.f32 %v8289, %v8297
      %v8306 = vadd.f32 %v8290, %v8298
      %v8307 = vadd.f32 %v8291, %v8299
      %v8308 = vmul.f32 %v8300, 0.5
      %v8309 = vmul.f32 %v8301, 0.5
      %v8310 = vmul.f32 %v8302, 0.5
      %v8311 = vmul.f32 %v8303, 0.5
      %v8312 = vmul.f32 %v8304, 0.5
      %v8313 = vmul.f32 %v8305, 0.5
      %v8314 = vmul.f32 %v8306, 0.5
      %v8315 = vmul.f32 %v8307, 0.5
      %v8316 = vpack.c.bf16 %v8308, %v8308
      %v8317 = vpack.c.bf16 %v8309, %v8309
      %v8318 = vpack.c.bf16 %v8310, %v8310
      %v8319 = vpack.c.bf16 %v8311, %v8311
      %v8320 = vpack.c.bf16 %v8312, %v8312
      %v8321 = vpack.c.bf16 %v8313, %v8313
      %v8322 = vpack.c.bf16 %v8314, %v8314
      %v8323 = vpack.c.bf16 %v8315, %v8315
      %v8324 = vld [vmem:[%s5] sm:$0xff]
      %v8325 = vld [vmem:[%s5 + $0x8] sm:$0xff]
      %v8326 = vld [vmem:[%s5 + $0x10] sm:$0xff]
      %v8327 = vld [vmem:[%s5 + $0x18] sm:$0xff]
      %v8328 = vld [vmem:[%s5 + $0x20] sm:$0xff]
      %v8329 = vld [vmem:[%s5 + $0x28] sm:$0xff]
      %v8330 = vld [vmem:[%s5 + $0x30] sm:$0xff]
      %v8331 = vld [vmem:[%s5 + $0x38] sm:$0xff]
      %v8332 = vld [vmem:[%s5 + $0x40] sm:$0xff]
      %v8333 = vld [vmem:[%s5 + $0x48] sm:$0xff]
      %v8334 = vld [vmem:[%s5 + $0x50] sm:$0xff]
      %v8335 = vld [vmem:[%s5 + $0x58] sm:$0xff]
      %v8336 = vld [vmem:[%s5 + $0x60] sm:$0xff]
      %v8337 = vld [vmem:[%s5 + $0x68] sm:$0xff]
      %v8338 = vld [vmem:[%s5 + $0x70] sm:$0xff]
      %v8339 = vld [vmem:[%s5 + $0x78] sm:$0xff]
      %v8340 = vld [vmem:[%s5 + $0x80] sm:$0xff]
      %v8341 = vld [vmem:[%s5 + $0x88] sm:$0xff]
      %v8342 = vld [vmem:[%s5 + $0x90] sm:$0xff]
      %v8343 = vld [vmem:[%s5 + $0x98] sm:$0xff]
      %v8344 = vld [vmem:[%s5 + $0xa0] sm:$0xff]
      %v8345 = vld [vmem:[%s5 + $0xa8] sm:$0xff]
      %v8346 = vld [vmem:[%s5 + $0xb0] sm:$0xff]
      %v8347 = vld [vmem:[%s5 + $0xb8] sm:$0xff]
      %v8348 = vld [vmem:[%s5 + $0xc0] sm:$0xff]
      %v8349 = vld [vmem:[%s5 + $0xc8] sm:$0xff]
      %v8350 = vld [vmem:[%s5 + $0xd0] sm:$0xff]
      %v8351 = vld [vmem:[%s5 + $0xd8] sm:$0xff]
      %v8352 = vld [vmem:[%s5 + $0xe0] sm:$0xff]
      %v8353 = vld [vmem:[%s5 + $0xe8] sm:$0xff]
      %v8354 = vld [vmem:[%s5 + $0xf0] sm:$0xff]
      %v8355 = vld [vmem:[%s5 + $0xf8] sm:$0xff]
      %v8356 = vld [vmem:[%s5 + $0x100] sm:$0xff]
      %v8357 = vld [vmem:[%s5 + $0x108] sm:$0xff]
      %v8358 = vld [vmem:[%s5 + $0x110] sm:$0xff]
      %v8359 = vld [vmem:[%s5 + $0x118] sm:$0xff]
      %v8360 = vld [vmem:[%s5 + $0x120] sm:$0xff]
      %v8361 = vld [vmem:[%s5 + $0x128] sm:$0xff]
      %v8362 = vld [vmem:[%s5 + $0x130] sm:$0xff]
      %v8363 = vld [vmem:[%s5 + $0x138] sm:$0xff]
      %v8364 = vld [vmem:[%s5 + $0x140] sm:$0xff]
      %v8365 = vld [vmem:[%s5 + $0x148] sm:$0xff]
      %v8366 = vld [vmem:[%s5 + $0x150] sm:$0xff]
      %v8367 = vld [vmem:[%s5 + $0x158] sm:$0xff]
      %v8368 = vld [vmem:[%s5 + $0x160] sm:$0xff]
      %v8369 = vld [vmem:[%s5 + $0x168] sm:$0xff]
      %v8370 = vld [vmem:[%s5 + $0x170] sm:$0xff]
      %v8371 = vld [vmem:[%s5 + $0x178] sm:$0xff]
      %v8372 = vld [vmem:[%s5 + $0x180] sm:$0xff]
      %v8373 = vld [vmem:[%s5 + $0x188] sm:$0xff]
      %v8374 = vld [vmem:[%s5 + $0x190] sm:$0xff]
      %v8375 = vld [vmem:[%s5 + $0x198] sm:$0xff]
      %v8376 = vld [vmem:[%s5 + $0x1a0] sm:$0xff]
      %v8377 = vld [vmem:[%s5 + $0x1a8] sm:$0xff]
      %v8378 = vld [vmem:[%s5 + $0x1b0] sm:$0xff]
      %v8379 = vld [vmem:[%s5 + $0x1b8] sm:$0xff]
      %v8380 = vld [vmem:[%s5 + $0x1c0] sm:$0xff]
      %v8381 = vld [vmem:[%s5 + $0x1c8] sm:$0xff]
      %v8382 = vld [vmem:[%s5 + $0x1d0] sm:$0xff]
      %v8383 = vld [vmem:[%s5 + $0x1d8] sm:$0xff]
      %v8384 = vld [vmem:[%s5 + $0x1e0] sm:$0xff]
      %v8385 = vld [vmem:[%s5 + $0x1e8] sm:$0xff]
      %v8386 = vld [vmem:[%s5 + $0x1f0] sm:$0xff]
      %v8387 = vld [vmem:[%s5 + $0x1f8] sm:$0xff]
      %v8388 = vld [vmem:[%s5 + $0x200] sm:$0xff]
      %v8389 = vld [vmem:[%s5 + $0x208] sm:$0xff]
      %v8390 = vld [vmem:[%s5 + $0x210] sm:$0xff]
      %v8391 = vld [vmem:[%s5 + $0x218] sm:$0xff]
      %v8392 = vld [vmem:[%s5 + $0x220] sm:$0xff]
      %v8393 = vld [vmem:[%s5 + $0x228] sm:$0xff]
      %v8394 = vld [vmem:[%s5 + $0x230] sm:$0xff]
      %v8395 = vld [vmem:[%s5 + $0x238] sm:$0xff]
      %v8396 = vld [vmem:[%s5 + $0x240] sm:$0xff]
      %v8397 = vld [vmem:[%s5 + $0x248] sm:$0xff]
      %v8398 = vld [vmem:[%s5 + $0x250] sm:$0xff]
      %v8399 = vld [vmem:[%s5 + $0x258] sm:$0xff]
      %v8400 = vld [vmem:[%s5 + $0x260] sm:$0xff]
      %v8401 = vld [vmem:[%s5 + $0x268] sm:$0xff]
      %v8402 = vld [vmem:[%s5 + $0x270] sm:$0xff]
      %v8403 = vld [vmem:[%s5 + $0x278] sm:$0xff]
      %v8404 = vld [vmem:[%s5 + $0x280] sm:$0xff]
      %v8405 = vld [vmem:[%s5 + $0x288] sm:$0xff]
      %v8406 = vld [vmem:[%s5 + $0x290] sm:$0xff]
      %v8407 = vld [vmem:[%s5 + $0x298] sm:$0xff]
      %v8408 = vld [vmem:[%s5 + $0x2a0] sm:$0xff]
      %v8409 = vld [vmem:[%s5 + $0x2a8] sm:$0xff]
      %v8410 = vld [vmem:[%s5 + $0x2b0] sm:$0xff]
      %v8411 = vld [vmem:[%s5 + $0x2b8] sm:$0xff]
      %v8412 = vld [vmem:[%s5 + $0x2c0] sm:$0xff]
      %v8413 = vld [vmem:[%s5 + $0x2c8] sm:$0xff]
      %v8414 = vld [vmem:[%s5 + $0x2d0] sm:$0xff]
      %v8415 = vld [vmem:[%s5 + $0x2d8] sm:$0xff]
      %v8416 = vld [vmem:[%s5 + $0x2e0] sm:$0xff]
      %v8417 = vld [vmem:[%s5 + $0x2e8] sm:$0xff]
      %v8418 = vld [vmem:[%s5 + $0x2f0] sm:$0xff]
      %v8419 = vld [vmem:[%s5 + $0x2f8] sm:$0xff]
      %v8420 = vld [vmem:[%s5 + $0x300] sm:$0xff]
      %v8421 = vld [vmem:[%s5 + $0x308] sm:$0xff]
      %v8422 = vld [vmem:[%s5 + $0x310] sm:$0xff]
      %v8423 = vld [vmem:[%s5 + $0x318] sm:$0xff]
      %v8424 = vld [vmem:[%s5 + $0x320] sm:$0xff]
      %v8425 = vld [vmem:[%s5 + $0x328] sm:$0xff]
      %v8426 = vld [vmem:[%s5 + $0x330] sm:$0xff]
      %v8427 = vld [vmem:[%s5 + $0x338] sm:$0xff]
      %v8428 = vld [vmem:[%s5 + $0x340] sm:$0xff]
      %v8429 = vld [vmem:[%s5 + $0x348] sm:$0xff]
      %v8430 = vld [vmem:[%s5 + $0x350] sm:$0xff]
      %v8431 = vld [vmem:[%s5 + $0x358] sm:$0xff]
      %v8432 = vld [vmem:[%s5 + $0x360] sm:$0xff]
      %v8433 = vld [vmem:[%s5 + $0x368] sm:$0xff]
      %v8434 = vld [vmem:[%s5 + $0x370] sm:$0xff]
      %v8435 = vld [vmem:[%s5 + $0x378] sm:$0xff]
      %v8436 = vld [vmem:[%s5 + $0x380] sm:$0xff]
      %v8437 = vld [vmem:[%s5 + $0x388] sm:$0xff]
      %v8438 = vld [vmem:[%s5 + $0x390] sm:$0xff]
      %v8439 = vld [vmem:[%s5 + $0x398] sm:$0xff]
      %v8440 = vld [vmem:[%s5 + $0x3a0] sm:$0xff]
      %v8441 = vld [vmem:[%s5 + $0x3a8] sm:$0xff]
      %v8442 = vld [vmem:[%s5 + $0x3b0] sm:$0xff]
      %v8443 = vld [vmem:[%s5 + $0x3b8] sm:$0xff]
      %v8444 = vld [vmem:[%s5 + $0x3c0] sm:$0xff]
      %v8445 = vld [vmem:[%s5 + $0x3c8] sm:$0xff]
      %v8446 = vld [vmem:[%s5 + $0x3d0] sm:$0xff]
      %v8447 = vld [vmem:[%s5 + $0x3d8] sm:$0xff]
      %v8448 = vld [vmem:[%s5 + $0x3e0] sm:$0xff]
      %v8449 = vld [vmem:[%s5 + $0x3e8] sm:$0xff]
      %v8450 = vld [vmem:[%s5 + $0x3f0] sm:$0xff]
      %v8451 = vld [vmem:[%s5 + $0x3f8] sm:$0xff]
      %v8452 = vld [vmem:[%s6] sm:$0x3]
      %v8581 = vunpack.c.l.b16 %v8324
      %v8582 = vunpack.c.h.b16 %v8324
      %v8583 = vunpack.c.l.b16 %v8325
      %v8584 = vunpack.c.h.b16 %v8325
      %v8585 = vunpack.c.l.b16 %v8326
      %v8586 = vunpack.c.h.b16 %v8326
      %v8587 = vunpack.c.l.b16 %v8327
      %v8588 = vunpack.c.h.b16 %v8327
      %v8589 = vunpack.c.l.b16 %v8328
      %v8590 = vunpack.c.h.b16 %v8328
      %v8591 = vunpack.c.l.b16 %v8329
      %v8592 = vunpack.c.h.b16 %v8329
      %v8593 = vunpack.c.l.b16 %v8330
      %v8594 = vunpack.c.h.b16 %v8330
      %v8595 = vunpack.c.l.b16 %v8331
      %v8596 = vunpack.c.h.b16 %v8331
      %v8597 = vunpack.c.l.b16 %v8332
      %v8598 = vunpack.c.h.b16 %v8332
      %v8599 = vunpack.c.l.b16 %v8333
      %v8600 = vunpack.c.h.b16 %v8333
      %v8601 = vunpack.c.l.b16 %v8334
      %v8602 = vunpack.c.h.b16 %v8334
      %v8603 = vunpack.c.l.b16 %v8335
      %v8604 = vunpack.c.h.b16 %v8335
      %v8605 = vunpack.c.l.b16 %v8336
      %v8606 = vunpack.c.h.b16 %v8336
      %v8607 = vunpack.c.l.b16 %v8337
      %v8608 = vunpack.c.h.b16 %v8337
      %v8609 = vunpack.c.l.b16 %v8338
      %v8610 = vunpack.c.h.b16 %v8338
      %v8611 = vunpack.c.l.b16 %v8339
      %v8612 = vunpack.c.h.b16 %v8339
      %v8613 = vunpack.c.l.b16 %v8340
      %v8614 = vunpack.c.h.b16 %v8340
      %v8615 = vunpack.c.l.b16 %v8341
      %v8616 = vunpack.c.h.b16 %v8341
      %v8617 = vunpack.c.l.b16 %v8342
      %v8618 = vunpack.c.h.b16 %v8342
      %v8619 = vunpack.c.l.b16 %v8343
      %v8620 = vunpack.c.h.b16 %v8343
      %v8621 = vunpack.c.l.b16 %v8344
      %v8622 = vunpack.c.h.b16 %v8344
      %v8623 = vunpack.c.l.b16 %v8345
      %v8624 = vunpack.c.h.b16 %v8345
      %v8625 = vunpack.c.l.b16 %v8346
      %v8626 = vunpack.c.h.b16 %v8346
      %v8627 = vunpack.c.l.b16 %v8347
      %v8628 = vunpack.c.h.b16 %v8347
      %v8629 = vunpack.c.l.b16 %v8348
      %v8630 = vunpack.c.h.b16 %v8348
      %v8631 = vunpack.c.l.b16 %v8349
      %v8632 = vunpack.c.h.b16 %v8349
      %v8633 = vunpack.c.l.b16 %v8350
      %v8634 = vunpack.c.h.b16 %v8350
      %v8635 = vunpack.c.l.b16 %v8351
      %v8636 = vunpack.c.h.b16 %v8351
      %v8637 = vunpack.c.l.b16 %v8352
      %v8638 = vunpack.c.h.b16 %v8352
      %v8639 = vunpack.c.l.b16 %v8353
      %v8640 = vunpack.c.h.b16 %v8353
      %v8641 = vunpack.c.l.b16 %v8354
      %v8642 = vunpack.c.h.b16 %v8354
      %v8643 = vunpack.c.l.b16 %v8355
      %v8644 = vunpack.c.h.b16 %v8355
      %v8645 = vunpack.c.l.b16 %v8356
      %v8646 = vunpack.c.h.b16 %v8356
      %v8647 = vunpack.c.l.b16 %v8357
      %v8648 = vunpack.c.h.b16 %v8357
      %v8649 = vunpack.c.l.b16 %v8358
      %v8650 = vunpack.c.h.b16 %v8358
      %v8651 = vunpack.c.l.b16 %v8359
      %v8652 = vunpack.c.h.b16 %v8359
      %v8653 = vunpack.c.l.b16 %v8360
      %v8654 = vunpack.c.h.b16 %v8360
      %v8655 = vunpack.c.l.b16 %v8361
      %v8656 = vunpack.c.h.b16 %v8361
      %v8657 = vunpack.c.l.b16 %v8362
      %v8658 = vunpack.c.h.b16 %v8362
      %v8659 = vunpack.c.l.b16 %v8363
      %v8660 = vunpack.c.h.b16 %v8363
      %v8661 = vunpack.c.l.b16 %v8364
      %v8662 = vunpack.c.h.b16 %v8364
      %v8663 = vunpack.c.l.b16 %v8365
      %v8664 = vunpack.c.h.b16 %v8365
      %v8665 = vunpack.c.l.b16 %v8366
      %v8666 = vunpack.c.h.b16 %v8366
      %v8667 = vunpack.c.l.b16 %v8367
      %v8668 = vunpack.c.h.b16 %v8367
      %v8669 = vunpack.c.l.b16 %v8368
      %v8670 = vunpack.c.h.b16 %v8368
      %v8671 = vunpack.c.l.b16 %v8369
      %v8672 = vunpack.c.h.b16 %v8369
      %v8673 = vunpack.c.l.b16 %v8370
      %v8674 = vunpack.c.h.b16 %v8370
      %v8675 = vunpack.c.l.b16 %v8371
      %v8676 = vunpack.c.h.b16 %v8371
      %v8677 = vunpack.c.l.b16 %v8372
      %v8678 = vunpack.c.h.b16 %v8372
      %v8679 = vunpack.c.l.b16 %v8373
      %v8680 = vunpack.c.h.b16 %v8373
      %v8681 = vunpack.c.l.b16 %v8374
      %v8682 = vunpack.c.h.b16 %v8374
      %v8683 = vunpack.c.l.b16 %v8375
      %v8684 = vunpack.c.h.b16 %v8375
      %v8685 = vunpack.c.l.b16 %v8376
      %v8686 = vunpack.c.h.b16 %v8376
      %v8687 = vunpack.c.l.b16 %v8377
      %v8688 = vunpack.c.h.b16 %v8377
      %v8689 = vunpack.c.l.b16 %v8378
      %v8690 = vunpack.c.h.b16 %v8378
      %v8691 = vunpack.c.l.b16 %v8379
      %v8692 = vunpack.c.h.b16 %v8379
      %v8693 = vunpack.c.l.b16 %v8380
      %v8694 = vunpack.c.h.b16 %v8380
      %v8695 = vunpack.c.l.b16 %v8381
      %v8696 = vunpack.c.h.b16 %v8381
      %v8697 = vunpack.c.l.b16 %v8382
      %v8698 = vunpack.c.h.b16 %v8382
      %v8699 = vunpack.c.l.b16 %v8383
      %v8700 = vunpack.c.h.b16 %v8383
      %v8701 = vunpack.c.l.b16 %v8384
      %v8702 = vunpack.c.h.b16 %v8384
      %v8703 = vunpack.c.l.b16 %v8385
      %v8704 = vunpack.c.h.b16 %v8385
      %v8705 = vunpack.c.l.b16 %v8386
      %v8706 = vunpack.c.h.b16 %v8386
      %v8707 = vunpack.c.l.b16 %v8387
      %v8708 = vunpack.c.h.b16 %v8387
      %v8709 = vunpack.c.l.b16 %v8388
      %v8710 = vunpack.c.h.b16 %v8388
      %v8711 = vunpack.c.l.b16 %v8389
      %v8712 = vunpack.c.h.b16 %v8389
      %v8713 = vunpack.c.l.b16 %v8390
      %v8714 = vunpack.c.h.b16 %v8390
      %v8715 = vunpack.c.l.b16 %v8391
      %v8716 = vunpack.c.h.b16 %v8391
      %v8717 = vunpack.c.l.b16 %v8392
      %v8718 = vunpack.c.h.b16 %v8392
      %v8719 = vunpack.c.l.b16 %v8393
      %v8720 = vunpack.c.h.b16 %v8393
      %v8721 = vunpack.c.l.b16 %v8394
      %v8722 = vunpack.c.h.b16 %v8394
      %v8723 = vunpack.c.l.b16 %v8395
      %v8724 = vunpack.c.h.b16 %v8395
      %v8725 = vunpack.c.l.b16 %v8396
      %v8726 = vunpack.c.h.b16 %v8396
      %v8727 = vunpack.c.l.b16 %v8397
      %v8728 = vunpack.c.h.b16 %v8397
      %v8729 = vunpack.c.l.b16 %v8398
      %v8730 = vunpack.c.h.b16 %v8398
      %v8731 = vunpack.c.l.b16 %v8399
      %v8732 = vunpack.c.h.b16 %v8399
      %v8733 = vunpack.c.l.b16 %v8400
      %v8734 = vunpack.c.h.b16 %v8400
      %v8735 = vunpack.c.l.b16 %v8401
      %v8736 = vunpack.c.h.b16 %v8401
      %v8737 = vunpack.c.l.b16 %v8402
      %v8738 = vunpack.c.h.b16 %v8402
      %v8739 = vunpack.c.l.b16 %v8403
      %v8740 = vunpack.c.h.b16 %v8403
      %v8741 = vunpack.c.l.b16 %v8404
      %v8742 = vunpack.c.h.b16 %v8404
      %v8743 = vunpack.c.l.b16 %v8405
      %v8744 = vunpack.c.h.b16 %v8405
      %v8745 = vunpack.c.l.b16 %v8406
      %v8746 = vunpack.c.h.b16 %v8406
      %v8747 = vunpack.c.l.b16 %v8407
      %v8748 = vunpack.c.h.b16 %v8407
      %v8749 = vunpack.c.l.b16 %v8408
      %v8750 = vunpack.c.h.b16 %v8408
      %v8751 = vunpack.c.l.b16 %v8409
      %v8752 = vunpack.c.h.b16 %v8409
      %v8753 = vunpack.c.l.b16 %v8410
      %v8754 = vunpack.c.h.b16 %v8410
      %v8755 = vunpack.c.l.b16 %v8411
      %v8756 = vunpack.c.h.b16 %v8411
      %v8757 = vunpack.c.l.b16 %v8412
      %v8758 = vunpack.c.h.b16 %v8412
      %v8759 = vunpack.c.l.b16 %v8413
      %v8760 = vunpack.c.h.b16 %v8413
      %v8761 = vunpack.c.l.b16 %v8414
      %v8762 = vunpack.c.h.b16 %v8414
      %v8763 = vunpack.c.l.b16 %v8415
      %v8764 = vunpack.c.h.b16 %v8415
      %v8765 = vunpack.c.l.b16 %v8416
      %v8766 = vunpack.c.h.b16 %v8416
      %v8767 = vunpack.c.l.b16 %v8417
      %v8768 = vunpack.c.h.b16 %v8417
      %v8769 = vunpack.c.l.b16 %v8418
      %v8770 = vunpack.c.h.b16 %v8418
      %v8771 = vunpack.c.l.b16 %v8419
      %v8772 = vunpack.c.h.b16 %v8419
      %v8773 = vunpack.c.l.b16 %v8420
      %v8774 = vunpack.c.h.b16 %v8420
      %v8775 = vunpack.c.l.b16 %v8421
      %v8776 = vunpack.c.h.b16 %v8421
      %v8777 = vunpack.c.l.b16 %v8422
      %v8778 = vunpack.c.h.b16 %v8422
      %v8779 = vunpack.c.l.b16 %v8423
      %v8780 = vunpack.c.h.b16 %v8423
      %v8781 = vunpack.c.l.b16 %v8424
      %v8782 = vunpack.c.h.b16 %v8424
      %v8783 = vunpack.c.l.b16 %v8425
      %v8784 = vunpack.c.h.b16 %v8425
      %v8785 = vunpack.c.l.b16 %v8426
      %v8786 = vunpack.c.h.b16 %v8426
      %v8787 = vunpack.c.l.b16 %v8427
      %v8788 = vunpack.c.h.b16 %v8427
      %v8789 = vunpack.c.l.b16 %v8428
      %v8790 = vunpack.c.h.b16 %v8428
      %v8791 = vunpack.c.l.b16 %v8429
      %v8792 = vunpack.c.h.b16 %v8429
      %v8793 = vunpack.c.l.b16 %v8430
      %v8794 = vunpack.c.h.b16 %v8430
      %v8795 = vunpack.c.l.b16 %v8431
      %v8796 = vunpack.c.h.b16 %v8431
      %v8797 = vunpack.c.l.b16 %v8432
      %v8798 = vunpack.c.h.b16 %v8432
      %v8799 = vunpack.c.l.b16 %v8433
      %v8800 = vunpack.c.h.b16 %v8433
      %v8801 = vunpack.c.l.b16 %v8434
      %v8802 = vunpack.c.h.b16 %v8434
      %v8803 = vunpack.c.l.b16 %v8435
      %v8804 = vunpack.c.h.b16 %v8435
      %v8805 = vunpack.c.l.b16 %v8436
      %v8806 = vunpack.c.h.b16 %v8436
      %v8807 = vunpack.c.l.b16 %v8437
      %v8808 = vunpack.c.h.b16 %v8437
      %v8809 = vunpack.c.l.b16 %v8438
      %v8810 = vunpack.c.h.b16 %v8438
      %v8811 = vunpack.c.l.b16 %v8439
      %v8812 = vunpack.c.h.b16 %v8439
      %v8813 = vunpack.c.l.b16 %v8440
      %v8814 = vunpack.c.h.b16 %v8440
      %v8815 = vunpack.c.l.b16 %v8441
      %v8816 = vunpack.c.h.b16 %v8441
      %v8817 = vunpack.c.l.b16 %v8442
      %v8818 = vunpack.c.h.b16 %v8442
      %v8819 = vunpack.c.l.b16 %v8443
      %v8820 = vunpack.c.h.b16 %v8443
      %v8821 = vunpack.c.l.b16 %v8444
      %v8822 = vunpack.c.h.b16 %v8444
      %v8823 = vunpack.c.l.b16 %v8445
      %v8824 = vunpack.c.h.b16 %v8445
      %v8825 = vunpack.c.l.b16 %v8446
      %v8826 = vunpack.c.h.b16 %v8446
      %v8827 = vunpack.c.l.b16 %v8447
      %v8828 = vunpack.c.h.b16 %v8447
      %v8829 = vunpack.c.l.b16 %v8448
      %v8830 = vunpack.c.h.b16 %v8448
      %v8831 = vunpack.c.l.b16 %v8449
      %v8832 = vunpack.c.h.b16 %v8449
      %v8833 = vunpack.c.l.b16 %v8450
      %v8834 = vunpack.c.h.b16 %v8450
      %v8835 = vunpack.c.l.b16 %v8451
      %v8836 = vunpack.c.h.b16 %v8451
      %v8837 = vpack.c.b16 %v8583, %v8581
      %v8838 = vpack.c.b16 %v8584, %v8582
      %v8839 = vpack.c.b16 %v8587, %v8585
      %v8840 = vpack.c.b16 %v8588, %v8586
      %v8841 = vpack.c.b16 %v8591, %v8589
      %v8842 = vpack.c.b16 %v8592, %v8590
      %v8843 = vpack.c.b16 %v8595, %v8593
      %v8844 = vpack.c.b16 %v8596, %v8594
      %v8845 = vpack.c.b16 %v8599, %v8597
      %v8846 = vpack.c.b16 %v8600, %v8598
      %v8847 = vpack.c.b16 %v8603, %v8601
      %v8848 = vpack.c.b16 %v8604, %v8602
      %v8849 = vpack.c.b16 %v8607, %v8605
      %v8850 = vpack.c.b16 %v8608, %v8606
      %v8851 = vpack.c.b16 %v8611, %v8609
      %v8852 = vpack.c.b16 %v8612, %v8610
      %v8853 = vpack.c.b16 %v8615, %v8613
      %v8854 = vpack.c.b16 %v8616, %v8614
      %v8855 = vpack.c.b16 %v8619, %v8617
      %v8856 = vpack.c.b16 %v8620, %v8618
      %v8857 = vpack.c.b16 %v8623, %v8621
      %v8858 = vpack.c.b16 %v8624, %v8622
      %v8859 = vpack.c.b16 %v8627, %v8625
      %v8860 = vpack.c.b16 %v8628, %v8626
      %v8861 = vpack.c.b16 %v8631, %v8629
      %v8862 = vpack.c.b16 %v8632, %v8630
      %v8863 = vpack.c.b16 %v8635, %v8633
      %v8864 = vpack.c.b16 %v8636, %v8634
      %v8865 = vpack.c.b16 %v8639, %v8637
      %v8866 = vpack.c.b16 %v8640, %v8638
      %v8867 = vpack.c.b16 %v8643, %v8641
      %v8868 = vpack.c.b16 %v8644, %v8642
      %v8869 = vpack.c.b16 %v8647, %v8645
      %v8870 = vpack.c.b16 %v8648, %v8646
      %v8871 = vpack.c.b16 %v8651, %v8649
      %v8872 = vpack.c.b16 %v8652, %v8650
      %v8873 = vpack.c.b16 %v8655, %v8653
      %v8874 = vpack.c.b16 %v8656, %v8654
      %v8875 = vpack.c.b16 %v8659, %v8657
      %v8876 = vpack.c.b16 %v8660, %v8658
      %v8877 = vpack.c.b16 %v8663, %v8661
      %v8878 = vpack.c.b16 %v8664, %v8662
      %v8879 = vpack.c.b16 %v8667, %v8665
      %v8880 = vpack.c.b16 %v8668, %v8666
      %v8881 = vpack.c.b16 %v8671, %v8669
      %v8882 = vpack.c.b16 %v8672, %v8670
      %v8883 = vpack.c.b16 %v8675, %v8673
      %v8884 = vpack.c.b16 %v8676, %v8674
      %v8885 = vpack.c.b16 %v8679, %v8677
      %v8886 = vpack.c.b16 %v8680, %v8678
      %v8887 = vpack.c.b16 %v8683, %v8681
      %v8888 = vpack.c.b16 %v8684, %v8682
      %v8889 = vpack.c.b16 %v8687, %v8685
      %v8890 = vpack.c.b16 %v8688, %v8686
      %v8891 = vpack.c.b16 %v8691, %v8689
      %v8892 = vpack.c.b16 %v8692, %v8690
      %v8893 = vpack.c.b16 %v8695, %v8693
      %v8894 = vpack.c.b16 %v8696, %v8694
      %v8895 = vpack.c.b16 %v8699, %v8697
      %v8896 = vpack.c.b16 %v8700, %v8698
      %v8897 = vpack.c.b16 %v8703, %v8701
      %v8898 = vpack.c.b16 %v8704, %v8702
      %v8899 = vpack.c.b16 %v8707, %v8705
      %v8900 = vpack.c.b16 %v8708, %v8706
      %v8901 = vpack.c.b16 %v8711, %v8709
      %v8902 = vpack.c.b16 %v8712, %v8710
      %v8903 = vpack.c.b16 %v8715, %v8713
      %v8904 = vpack.c.b16 %v8716, %v8714
      %v8905 = vpack.c.b16 %v8719, %v8717
      %v8906 = vpack.c.b16 %v8720, %v8718
      %v8907 = vpack.c.b16 %v8723, %v8721
      %v8908 = vpack.c.b16 %v8724, %v8722
      %v8909 = vpack.c.b16 %v8727, %v8725
      %v8910 = vpack.c.b16 %v8728, %v8726
      %v8911 = vpack.c.b16 %v8731, %v8729
      %v8912 = vpack.c.b16 %v8732, %v8730
      %v8913 = vpack.c.b16 %v8735, %v8733
      %v8914 = vpack.c.b16 %v8736, %v8734
      %v8915 = vpack.c.b16 %v8739, %v8737
      %v8916 = vpack.c.b16 %v8740, %v8738
      %v8917 = vpack.c.b16 %v8743, %v8741
      %v8918 = vpack.c.b16 %v8744, %v8742
      %v8919 = vpack.c.b16 %v8747, %v8745
      %v8920 = vpack.c.b16 %v8748, %v8746
      %v8921 = vpack.c.b16 %v8751, %v8749
      %v8922 = vpack.c.b16 %v8752, %v8750
      %v8923 = vpack.c.b16 %v8755, %v8753
      %v8924 = vpack.c.b16 %v8756, %v8754
      %v8925 = vpack.c.b16 %v8759, %v8757
      %v8926 = vpack.c.b16 %v8760, %v8758
      %v8927 = vpack.c.b16 %v8763, %v8761
      %v8928 = vpack.c.b16 %v8764, %v8762
      %v8929 = vpack.c.b16 %v8767, %v8765
      %v8930 = vpack.c.b16 %v8768, %v8766
      %v8931 = vpack.c.b16 %v8771, %v8769
      %v8932 = vpack.c.b16 %v8772, %v8770
      %v8933 = vpack.c.b16 %v8775, %v8773
      %v8934 = vpack.c.b16 %v8776, %v8774
      %v8935 = vpack.c.b16 %v8779, %v8777
      %v8936 = vpack.c.b16 %v8780, %v8778
      %v8937 = vpack.c.b16 %v8783, %v8781
      %v8938 = vpack.c.b16 %v8784, %v8782
      %v8939 = vpack.c.b16 %v8787, %v8785
      %v8940 = vpack.c.b16 %v8788, %v8786
      %v8941 = vpack.c.b16 %v8791, %v8789
      %v8942 = vpack.c.b16 %v8792, %v8790
      %v8943 = vpack.c.b16 %v8795, %v8793
      %v8944 = vpack.c.b16 %v8796, %v8794
      %v8945 = vpack.c.b16 %v8799, %v8797
      %v8946 = vpack.c.b16 %v8800, %v8798
      %v8947 = vpack.c.b16 %v8803, %v8801
      %v8948 = vpack.c.b16 %v8804, %v8802
      %v8949 = vpack.c.b16 %v8807, %v8805
      %v8950 = vpack.c.b16 %v8808, %v8806
      %v8951 = vpack.c.b16 %v8811, %v8809
      %v8952 = vpack.c.b16 %v8812, %v8810
      %v8953 = vpack.c.b16 %v8815, %v8813
      %v8954 = vpack.c.b16 %v8816, %v8814
      %v8955 = vpack.c.b16 %v8819, %v8817
      %v8956 = vpack.c.b16 %v8820, %v8818
      %v8957 = vpack.c.b16 %v8823, %v8821
      %v8958 = vpack.c.b16 %v8824, %v8822
      %v8959 = vpack.c.b16 %v8827, %v8825
      %v8960 = vpack.c.b16 %v8828, %v8826
      %v8961 = vpack.c.b16 %v8831, %v8829
      %v8962 = vpack.c.b16 %v8832, %v8830
      %v8963 = vpack.c.b16 %v8835, %v8833
      %v8964 = vpack.c.b16 %v8836, %v8834
      %v9094 = vperm.slane %v8452, 0
      %v9095 = vperm.slane %v8452, 1
      %9098 = vmatpush.bf16.msra.mxu0 %v8851
      %9099 = vmatpush.bf16.msra.mxu0 %v8849
      %9100 = vmatpush.bf16.msra.mxu0 %v8847
      %9101 = vmatpush.bf16.msra.mxu0 %v8845
      %9102 = vmatpush.bf16.msra.mxu0 %v8843
      %9103 = vmatpush.bf16.msra.mxu0 %v8841
      %9104 = vmatpush.bf16.msra.mxu0 %v8839
      %9105 = vmatpush.bf16.msra.mxu0 %v8837
      %9106 = vmatmul.bf16.gmra.mxu0 %v8316
      %v9107 = vpop.f32.mrf.mxu0
      %v9108 = vadd.f32 %v9094, %v9107
      %v9109 = vpop.f32.mrf.mxu0
      %9110 = vdwg.mxu0
      %9111 = vmatpush.bf16.msra.mxu0 %v8867
      %9112 = vmatpush.bf16.msra.mxu0 %v8865
      %9113 = vmatpush.bf16.msra.mxu0 %v8863
      %9114 = vmatpush.bf16.msra.mxu0 %v8861
      %9115 = vmatpush.bf16.msra.mxu0 %v8859
      %9116 = vmatpush.bf16.msra.mxu0 %v8857
      %9117 = vmatpush.bf16.msra.mxu0 %v8855
      %9118 = vmatpush.bf16.msra.mxu0 %v8853
      %9119 = vmatmul.bf16.gmra.mxu0 %v8317
      %v9120 = vpop.f32.mrf.mxu0
      %v9121 = vadd.f32 %v9108, %v9120
      %v9122 = vpop.f32.mrf.mxu0
      %9123 = vdwg.mxu0
      %9124 = vmatpush.bf16.msra.mxu0 %v8883
      %9125 = vmatpush.bf16.msra.mxu0 %v8881
      %9126 = vmatpush.bf16.msra.mxu0 %v8879
      %9127 = vmatpush.bf16.msra.mxu0 %v8877
      %9128 = vmatpush.bf16.msra.mxu0 %v8875
      %9129 = vmatpush.bf16.msra.mxu0 %v8873
      %9130 = vmatpush.bf16.msra.mxu0 %v8871
      %9131 = vmatpush.bf16.msra.mxu0 %v8869
      %9132 = vmatmul.bf16.gmra.mxu0 %v8318
      %v9133 = vpop.f32.mrf.mxu0
      %v9134 = vadd.f32 %v9121, %v9133
      %v9135 = vpop.f32.mrf.mxu0
      %9136 = vdwg.mxu0
      %9137 = vmatpush.bf16.msra.mxu0 %v8899
      %9138 = vmatpush.bf16.msra.mxu0 %v8897
      %9139 = vmatpush.bf16.msra.mxu0 %v8895
      %9140 = vmatpush.bf16.msra.mxu0 %v8893
      %9141 = vmatpush.bf16.msra.mxu0 %v8891
      %9142 = vmatpush.bf16.msra.mxu0 %v8889
      %9143 = vmatpush.bf16.msra.mxu0 %v8887
      %9144 = vmatpush.bf16.msra.mxu0 %v8885
      %9145 = vmatmul.bf16.gmra.mxu0 %v8319
      %v9146 = vpop.f32.mrf.mxu0
      %v9147 = vadd.f32 %v9134, %v9146
      %v9148 = vpop.f32.mrf.mxu0
      %9149 = vdwg.mxu0
      %9150 = vmatpush.bf16.msra.mxu0 %v8915
      %9151 = vmatpush.bf16.msra.mxu0 %v8913
      %9152 = vmatpush.bf16.msra.mxu0 %v8911
      %9153 = vmatpush.bf16.msra.mxu0 %v8909
      %9154 = vmatpush.bf16.msra.mxu0 %v8907
      %9155 = vmatpush.bf16.msra.mxu0 %v8905
      %9156 = vmatpush.bf16.msra.mxu0 %v8903
      %9157 = vmatpush.bf16.msra.mxu0 %v8901
      %9158 = vmatmul.bf16.gmra.mxu0 %v8320
      %v9159 = vpop.f32.mrf.mxu0
      %v9160 = vadd.f32 %v9147, %v9159
      %v9161 = vpop.f32.mrf.mxu0
      %9162 = vdwg.mxu0
      %9163 = vmatpush.bf16.msra.mxu0 %v8931
      %9164 = vmatpush.bf16.msra.mxu0 %v8929
      %9165 = vmatpush.bf16.msra.mxu0 %v8927
      %9166 = vmatpush.bf16.msra.mxu0 %v8925
      %9167 = vmatpush.bf16.msra.mxu0 %v8923
      %9168 = vmatpush.bf16.msra.mxu0 %v8921
      %9169 = vmatpush.bf16.msra.mxu0 %v8919
      %9170 = vmatpush.bf16.msra.mxu0 %v8917
      %9171 = vmatmul.bf16.gmra.mxu0 %v8321
      %v9172 = vpop.f32.mrf.mxu0
      %v9173 = vadd.f32 %v9160, %v9172
      %v9174 = vpop.f32.mrf.mxu0
      %9175 = vdwg.mxu0
      %9176 = vmatpush.bf16.msra.mxu0 %v8947
      %9177 = vmatpush.bf16.msra.mxu0 %v8945
      %9178 = vmatpush.bf16.msra.mxu0 %v8943
      %9179 = vmatpush.bf16.msra.mxu0 %v8941
      %9180 = vmatpush.bf16.msra.mxu0 %v8939
      %9181 = vmatpush.bf16.msra.mxu0 %v8937
      %9182 = vmatpush.bf16.msra.mxu0 %v8935
      %9183 = vmatpush.bf16.msra.mxu0 %v8933
      %9184 = vmatmul.bf16.gmra.mxu0 %v8322
      %v9185 = vpop.f32.mrf.mxu0
      %v9186 = vadd.f32 %v9173, %v9185
      %v9187 = vpop.f32.mrf.mxu0
      %9188 = vdwg.mxu0
      %9189 = vmatpush.bf16.msra.mxu0 %v8963
      %9190 = vmatpush.bf16.msra.mxu0 %v8961
      %9191 = vmatpush.bf16.msra.mxu0 %v8959
      %9192 = vmatpush.bf16.msra.mxu0 %v8957
      %9193 = vmatpush.bf16.msra.mxu0 %v8955
      %9194 = vmatpush.bf16.msra.mxu0 %v8953
      %9195 = vmatpush.bf16.msra.mxu0 %v8951
      %9196 = vmatpush.bf16.msra.mxu0 %v8949
      %9197 = vmatmul.bf16.gmra.mxu0 %v8323
      %v9198 = vpop.f32.mrf.mxu0
      %v9199 = vadd.f32 %v9186, %v9198
      %v9200 = vpop.f32.mrf.mxu0
      %9201 = vdwg.mxu0
      %9202 = vmatpush.bf16.msra.mxu0 %v8852
      %9203 = vmatpush.bf16.msra.mxu0 %v8850
      %9204 = vmatpush.bf16.msra.mxu0 %v8848
      %9205 = vmatpush.bf16.msra.mxu0 %v8846
      %9206 = vmatpush.bf16.msra.mxu0 %v8844
      %9207 = vmatpush.bf16.msra.mxu0 %v8842
      %9208 = vmatpush.bf16.msra.mxu0 %v8840
      %9209 = vmatpush.bf16.msra.mxu0 %v8838
      %9210 = vmatmul.bf16.gmra.mxu0 %v8316
      %v9211 = vpop.f32.mrf.mxu0
      %v9212 = vadd.f32 %v9095, %v9211
      %v9213 = vpop.f32.mrf.mxu0
      %9214 = vdwg.mxu0
      %9215 = vmatpush.bf16.msra.mxu0 %v8868
      %9216 = vmatpush.bf16.msra.mxu0 %v8866
      %9217 = vmatpush.bf16.msra.mxu0 %v8864
      %9218 = vmatpush.bf16.msra.mxu0 %v8862
      %9219 = vmatpush.bf16.msra.mxu0 %v8860
      %9220 = vmatpush.bf16.msra.mxu0 %v8858
      %9221 = vmatpush.bf16.msra.mxu0 %v8856
      %9222 = vmatpush.bf16.msra.mxu0 %v8854
      %9223 = vmatmul.bf16.gmra.mxu0 %v8317
      %v9224 = vpop.f32.mrf.mxu0
      %v9225 = vadd.f32 %v9212, %v9224
      %v9226 = vpop.f32.mrf.mxu0
      %9227 = vdwg.mxu0
      %9228 = vmatpush.bf16.msra.mxu0 %v8884
      %9229 = vmatpush.bf16.msra.mxu0 %v8882
      %9230 = vmatpush.bf16.msra.mxu0 %v8880
      %9231 = vmatpush.bf16.msra.mxu0 %v8878
      %9232 = vmatpush.bf16.msra.mxu0 %v8876
      %9233 = vmatpush.bf16.msra.mxu0 %v8874
      %9234 = vmatpush.bf16.msra.mxu0 %v8872
      %9235 = vmatpush.bf16.msra.mxu0 %v8870
      %9236 = vmatmul.bf16.gmra.mxu0 %v8318
      %v9237 = vpop.f32.mrf.mxu0
      %v9238 = vadd.f32 %v9225, %v9237
      %v9239 = vpop.f32.mrf.mxu0
      %9240 = vdwg.mxu0
      %9241 = vmatpush.bf16.msra.mxu0 %v8900
      %9242 = vmatpush.bf16.msra.mxu0 %v8898
      %9243 = vmatpush.bf16.msra.mxu0 %v8896
      %9244 = vmatpush.bf16.msra.mxu0 %v8894
      %9245 = vmatpush.bf16.msra.mxu0 %v8892
      %9246 = vmatpush.bf16.msra.mxu0 %v8890
      %9247 = vmatpush.bf16.msra.mxu0 %v8888
      %9248 = vmatpush.bf16.msra.mxu0 %v8886
      %9249 = vmatmul.bf16.gmra.mxu0 %v8319
      %v9250 = vpop.f32.mrf.mxu0
      %v9251 = vadd.f32 %v9238, %v9250
      %v9252 = vpop.f32.mrf.mxu0
      %9253 = vdwg.mxu0
      %9254 = vmatpush.bf16.msra.mxu0 %v8916
      %9255 = vmatpush.bf16.msra.mxu0 %v8914
      %9256 = vmatpush.bf16.msra.mxu0 %v8912
      %9257 = vmatpush.bf16.msra.mxu0 %v8910
      %9258 = vmatpush.bf16.msra.mxu0 %v8908
      %9259 = vmatpush.bf16.msra.mxu0 %v8906
      %9260 = vmatpush.bf16.msra.mxu0 %v8904
      %9261 = vmatpush.bf16.msra.mxu0 %v8902
      %9262 = vmatmul.bf16.gmra.mxu0 %v8320
      %v9263 = vpop.f32.mrf.mxu0
      %v9264 = vadd.f32 %v9251, %v9263
      %v9265 = vpop.f32.mrf.mxu0
      %9266 = vdwg.mxu0
      %9267 = vmatpush.bf16.msra.mxu0 %v8932
      %9268 = vmatpush.bf16.msra.mxu0 %v8930
      %9269 = vmatpush.bf16.msra.mxu0 %v8928
      %9270 = vmatpush.bf16.msra.mxu0 %v8926
      %9271 = vmatpush.bf16.msra.mxu0 %v8924
      %9272 = vmatpush.bf16.msra.mxu0 %v8922
      %9273 = vmatpush.bf16.msra.mxu0 %v8920
      %9274 = vmatpush.bf16.msra.mxu0 %v8918
      %9275 = vmatmul.bf16.gmra.mxu0 %v8321
      %v9276 = vpop.f32.mrf.mxu0
      %v9277 = vadd.f32 %v9264, %v9276
      %v9278 = vpop.f32.mrf.mxu0
      %9279 = vdwg.mxu0
      %9280 = vmatpush.bf16.msra.mxu0 %v8948
      %9281 = vmatpush.bf16.msra.mxu0 %v8946
      %9282 = vmatpush.bf16.msra.mxu0 %v8944
      %9283 = vmatpush.bf16.msra.mxu0 %v8942
      %9284 = vmatpush.bf16.msra.mxu0 %v8940
      %9285 = vmatpush.bf16.msra.mxu0 %v8938
      %9286 = vmatpush.bf16.msra.mxu0 %v8936
      %9287 = vmatpush.bf16.msra.mxu0 %v8934
      %9288 = vmatmul.bf16.gmra.mxu0 %v8322
      %v9289 = vpop.f32.mrf.mxu0
      %v9290 = vadd.f32 %v9277, %v9289
      %v9291 = vpop.f32.mrf.mxu0
      %9292 = vdwg.mxu0
      %9293 = vmatpush.bf16.msra.mxu0 %v8964
      %9294 = vmatpush.bf16.msra.mxu0 %v8962
      %9295 = vmatpush.bf16.msra.mxu0 %v8960
      %9296 = vmatpush.bf16.msra.mxu0 %v8958
      %9297 = vmatpush.bf16.msra.mxu0 %v8956
      %9298 = vmatpush.bf16.msra.mxu0 %v8954
      %9299 = vmatpush.bf16.msra.mxu0 %v8952
      %9300 = vmatpush.bf16.msra.mxu0 %v8950
      %9301 = vmatmul.bf16.gmra.mxu0 %v8323
      %v9302 = vpop.f32.mrf.mxu0
      %v9303 = vadd.f32 %v9290, %v9302
      %v9304 = vpop.f32.mrf.mxu0
      %9305 = vdwg.mxu0
      %v9306 = vmax.f32 %v9199, 0.0
      %v9307 = vmax.f32 %v9303, 0.0
      %v9308 = vpack.c.bf16 %v9306, %v9306
      %v9309 = vpack.c.bf16 %v9307, %v9307
      %v9310 = vld [vmem:[%s7] sm:$0xff]
      %v9311 = vld [vmem:[%s7 + $0x8] sm:$0xff]
      %v9312 = vld [vmem:[%s7 + $0x10] sm:$0xff]
      %v9313 = vld [vmem:[%s7 + $0x18] sm:$0xff]
      %v9314 = vld [vmem:[%s7 + $0x20] sm:$0xff]
      %v9315 = vld [vmem:[%s7 + $0x28] sm:$0xff]
      %v9316 = vld [vmem:[%s7 + $0x30] sm:$0xff]
      %v9317 = vld [vmem:[%s7 + $0x38] sm:$0xff]
      %v9318 = vld [vmem:[%s7 + $0x40] sm:$0xff]
      %v9319 = vld [vmem:[%s7 + $0x48] sm:$0xff]
      %v9320 = vld [vmem:[%s7 + $0x50] sm:$0xff]
      %v9321 = vld [vmem:[%s7 + $0x58] sm:$0xff]
      %v9322 = vld [vmem:[%s7 + $0x60] sm:$0xff]
      %v9323 = vld [vmem:[%s7 + $0x68] sm:$0xff]
      %v9324 = vld [vmem:[%s7 + $0x70] sm:$0xff]
      %v9325 = vld [vmem:[%s7 + $0x78] sm:$0xff]
      %v9326 = vld [vmem:[%s7 + $0x80] sm:$0xff]
      %v9327 = vld [vmem:[%s7 + $0x88] sm:$0xff]
      %v9328 = vld [vmem:[%s7 + $0x90] sm:$0xff]
      %v9329 = vld [vmem:[%s7 + $0x98] sm:$0xff]
      %v9330 = vld [vmem:[%s7 + $0xa0] sm:$0xff]
      %v9331 = vld [vmem:[%s7 + $0xa8] sm:$0xff]
      %v9332 = vld [vmem:[%s7 + $0xb0] sm:$0xff]
      %v9333 = vld [vmem:[%s7 + $0xb8] sm:$0xff]
      %v9334 = vld [vmem:[%s7 + $0xc0] sm:$0xff]
      %v9335 = vld [vmem:[%s7 + $0xc8] sm:$0xff]
      %v9336 = vld [vmem:[%s7 + $0xd0] sm:$0xff]
      %v9337 = vld [vmem:[%s7 + $0xd8] sm:$0xff]
      %v9338 = vld [vmem:[%s7 + $0xe0] sm:$0xff]
      %v9339 = vld [vmem:[%s7 + $0xe8] sm:$0xff]
      %v9340 = vld [vmem:[%s7 + $0xf0] sm:$0xff]
      %v9341 = vld [vmem:[%s7 + $0xf8] sm:$0xff]
      %v9342 = vld [vmem:[%s7 + $0x100] sm:$0xff]
      %v9343 = vld [vmem:[%s7 + $0x108] sm:$0xff]
      %v9344 = vld [vmem:[%s7 + $0x110] sm:$0xff]
      %v9345 = vld [vmem:[%s7 + $0x118] sm:$0xff]
      %v9346 = vld [vmem:[%s7 + $0x120] sm:$0xff]
      %v9347 = vld [vmem:[%s7 + $0x128] sm:$0xff]
      %v9348 = vld [vmem:[%s7 + $0x130] sm:$0xff]
      %v9349 = vld [vmem:[%s7 + $0x138] sm:$0xff]
      %v9350 = vld [vmem:[%s7 + $0x140] sm:$0xff]
      %v9351 = vld [vmem:[%s7 + $0x148] sm:$0xff]
      %v9352 = vld [vmem:[%s7 + $0x150] sm:$0xff]
      %v9353 = vld [vmem:[%s7 + $0x158] sm:$0xff]
      %v9354 = vld [vmem:[%s7 + $0x160] sm:$0xff]
      %v9355 = vld [vmem:[%s7 + $0x168] sm:$0xff]
      %v9356 = vld [vmem:[%s7 + $0x170] sm:$0xff]
      %v9357 = vld [vmem:[%s7 + $0x178] sm:$0xff]
      %v9358 = vld [vmem:[%s7 + $0x180] sm:$0xff]
      %v9359 = vld [vmem:[%s7 + $0x188] sm:$0xff]
      %v9360 = vld [vmem:[%s7 + $0x190] sm:$0xff]
      %v9361 = vld [vmem:[%s7 + $0x198] sm:$0xff]
      %v9362 = vld [vmem:[%s7 + $0x1a0] sm:$0xff]
      %v9363 = vld [vmem:[%s7 + $0x1a8] sm:$0xff]
      %v9364 = vld [vmem:[%s7 + $0x1b0] sm:$0xff]
      %v9365 = vld [vmem:[%s7 + $0x1b8] sm:$0xff]
      %v9366 = vld [vmem:[%s7 + $0x1c0] sm:$0xff]
      %v9367 = vld [vmem:[%s7 + $0x1c8] sm:$0xff]
      %v9368 = vld [vmem:[%s7 + $0x1d0] sm:$0xff]
      %v9369 = vld [vmem:[%s7 + $0x1d8] sm:$0xff]
      %v9370 = vld [vmem:[%s7 + $0x1e0] sm:$0xff]
      %v9371 = vld [vmem:[%s7 + $0x1e8] sm:$0xff]
      %v9372 = vld [vmem:[%s7 + $0x1f0] sm:$0xff]
      %v9373 = vld [vmem:[%s7 + $0x1f8] sm:$0xff]
      %v9374 = vld [vmem:[%s7 + $0x200] sm:$0xff]
      %v9375 = vld [vmem:[%s7 + $0x208] sm:$0xff]
      %v9376 = vld [vmem:[%s7 + $0x210] sm:$0xff]
      %v9377 = vld [vmem:[%s7 + $0x218] sm:$0xff]
      %v9378 = vld [vmem:[%s7 + $0x220] sm:$0xff]
      %v9379 = vld [vmem:[%s7 + $0x228] sm:$0xff]
      %v9380 = vld [vmem:[%s7 + $0x230] sm:$0xff]
      %v9381 = vld [vmem:[%s7 + $0x238] sm:$0xff]
      %v9382 = vld [vmem:[%s7 + $0x240] sm:$0xff]
      %v9383 = vld [vmem:[%s7 + $0x248] sm:$0xff]
      %v9384 = vld [vmem:[%s7 + $0x250] sm:$0xff]
      %v9385 = vld [vmem:[%s7 + $0x258] sm:$0xff]
      %v9386 = vld [vmem:[%s7 + $0x260] sm:$0xff]
      %v9387 = vld [vmem:[%s7 + $0x268] sm:$0xff]
      %v9388 = vld [vmem:[%s7 + $0x270] sm:$0xff]
      %v9389 = vld [vmem:[%s7 + $0x278] sm:$0xff]
      %v9390 = vld [vmem:[%s7 + $0x280] sm:$0xff]
      %v9391 = vld [vmem:[%s7 + $0x288] sm:$0xff]
      %v9392 = vld [vmem:[%s7 + $0x290] sm:$0xff]
      %v9393 = vld [vmem:[%s7 + $0x298] sm:$0xff]
      %v9394 = vld [vmem:[%s7 + $0x2a0] sm:$0xff]
      %v9395 = vld [vmem:[%s7 + $0x2a8] sm:$0xff]
      %v9396 = vld [vmem:[%s7 + $0x2b0] sm:$0xff]
      %v9397 = vld [vmem:[%s7 + $0x2b8] sm:$0xff]
      %v9398 = vld [vmem:[%s7 + $0x2c0] sm:$0xff]
      %v9399 = vld [vmem:[%s7 + $0x2c8] sm:$0xff]
      %v9400 = vld [vmem:[%s7 + $0x2d0] sm:$0xff]
      %v9401 = vld [vmem:[%s7 + $0x2d8] sm:$0xff]
      %v9402 = vld [vmem:[%s7 + $0x2e0] sm:$0xff]
      %v9403 = vld [vmem:[%s7 + $0x2e8] sm:$0xff]
      %v9404 = vld [vmem:[%s7 + $0x2f0] sm:$0xff]
      %v9405 = vld [vmem:[%s7 + $0x2f8] sm:$0xff]
      %v9406 = vld [vmem:[%s7 + $0x300] sm:$0xff]
      %v9407 = vld [vmem:[%s7 + $0x308] sm:$0xff]
      %v9408 = vld [vmem:[%s7 + $0x310] sm:$0xff]
      %v9409 = vld [vmem:[%s7 + $0x318] sm:$0xff]
      %v9410 = vld [vmem:[%s7 + $0x320] sm:$0xff]
      %v9411 = vld [vmem:[%s7 + $0x328] sm:$0xff]
      %v9412 = vld [vmem:[%s7 + $0x330] sm:$0xff]
      %v9413 = vld [vmem:[%s7 + $0x338] sm:$0xff]
      %v9414 = vld [vmem:[%s7 + $0x340] sm:$0xff]
      %v9415 = vld [vmem:[%s7 + $0x348] sm:$0xff]
      %v9416 = vld [vmem:[%s7 + $0x350] sm:$0xff]
      %v9417 = vld [vmem:[%s7 + $0x358] sm:$0xff]
      %v9418 = vld [vmem:[%s7 + $0x360] sm:$0xff]
      %v9419 = vld [vmem:[%s7 + $0x368] sm:$0xff]
      %v9420 = vld [vmem:[%s7 + $0x370] sm:$0xff]
      %v9421 = vld [vmem:[%s7 + $0x378] sm:$0xff]
      %v9422 = vld [vmem:[%s7 + $0x380] sm:$0xff]
      %v9423 = vld [vmem:[%s7 + $0x388] sm:$0xff]
      %v9424 = vld [vmem:[%s7 + $0x390] sm:$0xff]
      %v9425 = vld [vmem:[%s7 + $0x398] sm:$0xff]
      %v9426 = vld [vmem:[%s7 + $0x3a0] sm:$0xff]
      %v9427 = vld [vmem:[%s7 + $0x3a8] sm:$0xff]
      %v9428 = vld [vmem:[%s7 + $0x3b0] sm:$0xff]
      %v9429 = vld [vmem:[%s7 + $0x3b8] sm:$0xff]
      %v9430 = vld [vmem:[%s7 + $0x3c0] sm:$0xff]
      %v9431 = vld [vmem:[%s7 + $0x3c8] sm:$0xff]
      %v9432 = vld [vmem:[%s7 + $0x3d0] sm:$0xff]
      %v9433 = vld [vmem:[%s7 + $0x3d8] sm:$0xff]
      %v9434 = vld [vmem:[%s7 + $0x3e0] sm:$0xff]
      %v9435 = vld [vmem:[%s7 + $0x3e8] sm:$0xff]
      %v9436 = vld [vmem:[%s7 + $0x3f0] sm:$0xff]
      %v9437 = vld [vmem:[%s7 + $0x3f8] sm:$0xff]
      %v9438 = vld [vmem:[%s8] sm:$0xff]
      %v9567 = vunpack.c.l.b16 %v9310
      %v9568 = vunpack.c.h.b16 %v9310
      %v9569 = vunpack.c.l.b16 %v9311
      %v9570 = vunpack.c.h.b16 %v9311
      %v9571 = vunpack.c.l.b16 %v9312
      %v9572 = vunpack.c.h.b16 %v9312
      %v9573 = vunpack.c.l.b16 %v9313
      %v9574 = vunpack.c.h.b16 %v9313
      %v9575 = vunpack.c.l.b16 %v9314
      %v9576 = vunpack.c.h.b16 %v9314
      %v9577 = vunpack.c.l.b16 %v9315
      %v9578 = vunpack.c.h.b16 %v9315
      %v9579 = vunpack.c.l.b16 %v9316
      %v9580 = vunpack.c.h.b16 %v9316
      %v9581 = vunpack.c.l.b16 %v9317
      %v9582 = vunpack.c.h.b16 %v9317
      %v9583 = vunpack.c.l.b16 %v9318
      %v9584 = vunpack.c.h.b16 %v9318
      %v9585 = vunpack.c.l.b16 %v9319
      %v9586 = vunpack.c.h.b16 %v9319
      %v9587 = vunpack.c.l.b16 %v9320
      %v9588 = vunpack.c.h.b16 %v9320
      %v9589 = vunpack.c.l.b16 %v9321
      %v9590 = vunpack.c.h.b16 %v9321
      %v9591 = vunpack.c.l.b16 %v9322
      %v9592 = vunpack.c.h.b16 %v9322
      %v9593 = vunpack.c.l.b16 %v9323
      %v9594 = vunpack.c.h.b16 %v9323
      %v9595 = vunpack.c.l.b16 %v9324
      %v9596 = vunpack.c.h.b16 %v9324
      %v9597 = vunpack.c.l.b16 %v9325
      %v9598 = vunpack.c.h.b16 %v9325
      %v9599 = vunpack.c.l.b16 %v9326
      %v9600 = vunpack.c.h.b16 %v9326
      %v9601 = vunpack.c.l.b16 %v9327
      %v9602 = vunpack.c.h.b16 %v9327
      %v9603 = vunpack.c.l.b16 %v9328
      %v9604 = vunpack.c.h.b16 %v9328
      %v9605 = vunpack.c.l.b16 %v9329
      %v9606 = vunpack.c.h.b16 %v9329
      %v9607 = vunpack.c.l.b16 %v9330
      %v9608 = vunpack.c.h.b16 %v9330
      %v9609 = vunpack.c.l.b16 %v9331
      %v9610 = vunpack.c.h.b16 %v9331
      %v9611 = vunpack.c.l.b16 %v9332
      %v9612 = vunpack.c.h.b16 %v9332
      %v9613 = vunpack.c.l.b16 %v9333
      %v9614 = vunpack.c.h.b16 %v9333
      %v9615 = vunpack.c.l.b16 %v9334
      %v9616 = vunpack.c.h.b16 %v9334
      %v9617 = vunpack.c.l.b16 %v9335
      %v9618 = vunpack.c.h.b16 %v9335
      %v9619 = vunpack.c.l.b16 %v9336
      %v9620 = vunpack.c.h.b16 %v9336
      %v9621 = vunpack.c.l.b16 %v9337
      %v9622 = vunpack.c.h.b16 %v9337
      %v9623 = vunpack.c.l.b16 %v9338
      %v9624 = vunpack.c.h.b16 %v9338
      %v9625 = vunpack.c.l.b16 %v9339
      %v9626 = vunpack.c.h.b16 %v9339
      %v9627 = vunpack.c.l.b16 %v9340
      %v9628 = vunpack.c.h.b16 %v9340
      %v9629 = vunpack.c.l.b16 %v9341
      %v9630 = vunpack.c.h.b16 %v9341
      %v9631 = vunpack.c.l.b16 %v9342
      %v9632 = vunpack.c.h.b16 %v9342
      %v9633 = vunpack.c.l.b16 %v9343
      %v9634 = vunpack.c.h.b16 %v9343
      %v9635 = vunpack.c.l.b16 %v9344
      %v9636 = vunpack.c.h.b16 %v9344
      %v9637 = vunpack.c.l.b16 %v9345
      %v9638 = vunpack.c.h.b16 %v9345
      %v9639 = vunpack.c.l.b16 %v9346
      %v9640 = vunpack.c.h.b16 %v9346
      %v9641 = vunpack.c.l.b16 %v9347
      %v9642 = vunpack.c.h.b16 %v9347
      %v9643 = vunpack.c.l.b16 %v9348
      %v9644 = vunpack.c.h.b16 %v9348
      %v9645 = vunpack.c.l.b16 %v9349
      %v9646 = vunpack.c.h.b16 %v9349
      %v9647 = vunpack.c.l.b16 %v9350
      %v9648 = vunpack.c.h.b16 %v9350
      %v9649 = vunpack.c.l.b16 %v9351
      %v9650 = vunpack.c.h.b16 %v9351
      %v9651 = vunpack.c.l.b16 %v9352
      %v9652 = vunpack.c.h.b16 %v9352
      %v9653 = vunpack.c.l.b16 %v9353
      %v9654 = vunpack.c.h.b16 %v9353
      %v9655 = vunpack.c.l.b16 %v9354
      %v9656 = vunpack.c.h.b16 %v9354
      %v9657 = vunpack.c.l.b16 %v9355
      %v9658 = vunpack.c.h.b16 %v9355
      %v9659 = vunpack.c.l.b16 %v9356
      %v9660 = vunpack.c.h.b16 %v9356
      %v9661 = vunpack.c.l.b16 %v9357
      %v9662 = vunpack.c.h.b16 %v9357
      %v9663 = vunpack.c.l.b16 %v9358
      %v9664 = vunpack.c.h.b16 %v9358
      %v9665 = vunpack.c.l.b16 %v9359
      %v9666 = vunpack.c.h.b16 %v9359
      %v9667 = vunpack.c.l.b16 %v9360
      %v9668 = vunpack.c.h.b16 %v9360
      %v9669 = vunpack.c.l.b16 %v9361
      %v9670 = vunpack.c.h.b16 %v9361
      %v9671 = vunpack.c.l.b16 %v9362
      %v9672 = vunpack.c.h.b16 %v9362
      %v9673 = vunpack.c.l.b16 %v9363
      %v9674 = vunpack.c.h.b16 %v9363
      %v9675 = vunpack.c.l.b16 %v9364
      %v9676 = vunpack.c.h.b16 %v9364
      %v9677 = vunpack.c.l.b16 %v9365
      %v9678 = vunpack.c.h.b16 %v9365
      %v9679 = vunpack.c.l.b16 %v9366
      %v9680 = vunpack.c.h.b16 %v9366
      %v9681 = vunpack.c.l.b16 %v9367
      %v9682 = vunpack.c.h.b16 %v9367
      %v9683 = vunpack.c.l.b16 %v9368
      %v9684 = vunpack.c.h.b16 %v9368
      %v9685 = vunpack.c.l.b16 %v9369
      %v9686 = vunpack.c.h.b16 %v9369
      %v9687 = vunpack.c.l.b16 %v9370
      %v9688 = vunpack.c.h.b16 %v9370
      %v9689 = vunpack.c.l.b16 %v9371
      %v9690 = vunpack.c.h.b16 %v9371
      %v9691 = vunpack.c.l.b16 %v9372
      %v9692 = vunpack.c.h.b16 %v9372
      %v9693 = vunpack.c.l.b16 %v9373
      %v9694 = vunpack.c.h.b16 %v9373
      %v9695 = vunpack.c.l.b16 %v9374
      %v9696 = vunpack.c.h.b16 %v9374
      %v9697 = vunpack.c.l.b16 %v9375
      %v9698 = vunpack.c.h.b16 %v9375
      %v9699 = vunpack.c.l.b16 %v9376
      %v9700 = vunpack.c.h.b16 %v9376
      %v9701 = vunpack.c.l.b16 %v9377
      %v9702 = vunpack.c.h.b16 %v9377
      %v9703 = vunpack.c.l.b16 %v9378
      %v9704 = vunpack.c.h.b16 %v9378
      %v9705 = vunpack.c.l.b16 %v9379
      %v9706 = vunpack.c.h.b16 %v9379
      %v9707 = vunpack.c.l.b16 %v9380
      %v9708 = vunpack.c.h.b16 %v9380
      %v9709 = vunpack.c.l.b16 %v9381
      %v9710 = vunpack.c.h.b16 %v9381
      %v9711 = vunpack.c.l.b16 %v9382
      %v9712 = vunpack.c.h.b16 %v9382
      %v9713 = vunpack.c.l.b16 %v9383
      %v9714 = vunpack.c.h.b16 %v9383
      %v9715 = vunpack.c.l.b16 %v9384
      %v9716 = vunpack.c.h.b16 %v9384
      %v9717 = vunpack.c.l.b16 %v9385
      %v9718 = vunpack.c.h.b16 %v9385
      %v9719 = vunpack.c.l.b16 %v9386
      %v9720 = vunpack.c.h.b16 %v9386
      %v9721 = vunpack.c.l.b16 %v9387
      %v9722 = vunpack.c.h.b16 %v9387
      %v9723 = vunpack.c.l.b16 %v9388
      %v9724 = vunpack.c.h.b16 %v9388
      %v9725 = vunpack.c.l.b16 %v9389
      %v9726 = vunpack.c.h.b16 %v9389
      %v9727 = vunpack.c.l.b16 %v9390
      %v9728 = vunpack.c.h.b16 %v9390
      %v9729 = vunpack.c.l.b16 %v9391
      %v9730 = vunpack.c.h.b16 %v9391
      %v9731 = vunpack.c.l.b16 %v9392
      %v9732 = vunpack.c.h.b16 %v9392
      %v9733 = vunpack.c.l.b16 %v9393
      %v9734 = vunpack.c.h.b16 %v9393
      %v9735 = vunpack.c.l.b16 %v9394
      %v9736 = vunpack.c.h.b16 %v9394
      %v9737 = vunpack.c.l.b16 %v9395
      %v9738 = vunpack.c.h.b16 %v9395
      %v9739 = vunpack.c.l.b16 %v9396
      %v9740 = vunpack.c.h.b16 %v9396
      %v9741 = vunpack.c.l.b16 %v9397
      %v9742 = vunpack.c.h.b16 %v9397
      %v9743 = vunpack.c.l.b16 %v9398
      %v9744 = vunpack.c.h.b16 %v9398
      %v9745 = vunpack.c.l.b16 %v9399
      %v9746 = vunpack.c.h.b16 %v9399
      %v9747 = vunpack.c.l.b16 %v9400
      %v9748 = vunpack.c.h.b16 %v9400
      %v9749 = vunpack.c.l.b16 %v9401
      %v9750 = vunpack.c.h.b16 %v9401
      %v9751 = vunpack.c.l.b16 %v9402
      %v9752 = vunpack.c.h.b16 %v9402
      %v9753 = vunpack.c.l.b16 %v9403
      %v9754 = vunpack.c.h.b16 %v9403
      %v9755 = vunpack.c.l.b16 %v9404
      %v9756 = vunpack.c.h.b16 %v9404
      %v9757 = vunpack.c.l.b16 %v9405
      %v9758 = vunpack.c.h.b16 %v9405
      %v9759 = vunpack.c.l.b16 %v9406
      %v9760 = vunpack.c.h.b16 %v9406
      %v9761 = vunpack.c.l.b16 %v9407
      %v9762 = vunpack.c.h.b16 %v9407
      %v9763 = vunpack.c.l.b16 %v9408
      %v9764 = vunpack.c.h.b16 %v9408
      %v9765 = vunpack.c.l.b16 %v9409
      %v9766 = vunpack.c.h.b16 %v9409
      %v9767 = vunpack.c.l.b16 %v9410
      %v9768 = vunpack.c.h.b16 %v9410
      %v9769 = vunpack.c.l.b16 %v9411
      %v9770 = vunpack.c.h.b16 %v9411
      %v9771 = vunpack.c.l.b16 %v9412
      %v9772 = vunpack.c.h.b16 %v9412
      %v9773 = vunpack.c.l.b16 %v9413
      %v9774 = vunpack.c.h.b16 %v9413
      %v9775 = vunpack.c.l.b16 %v9414
      %v9776 = vunpack.c.h.b16 %v9414
      %v9777 = vunpack.c.l.b16 %v9415
      %v9778 = vunpack.c.h.b16 %v9415
      %v9779 = vunpack.c.l.b16 %v9416
      %v9780 = vunpack.c.h.b16 %v9416
      %v9781 = vunpack.c.l.b16 %v9417
      %v9782 = vunpack.c.h.b16 %v9417
      %v9783 = vunpack.c.l.b16 %v9418
      %v9784 = vunpack.c.h.b16 %v9418
      %v9785 = vunpack.c.l.b16 %v9419
      %v9786 = vunpack.c.h.b16 %v9419
      %v9787 = vunpack.c.l.b16 %v9420
      %v9788 = vunpack.c.h.b16 %v9420
      %v9789 = vunpack.c.l.b16 %v9421
      %v9790 = vunpack.c.h.b16 %v9421
      %v9791 = vunpack.c.l.b16 %v9422
      %v9792 = vunpack.c.h.b16 %v9422
      %v9793 = vunpack.c.l.b16 %v9423
      %v9794 = vunpack.c.h.b16 %v9423
      %v9795 = vunpack.c.l.b16 %v9424
      %v9796 = vunpack.c.h.b16 %v9424
      %v9797 = vunpack.c.l.b16 %v9425
      %v9798 = vunpack.c.h.b16 %v9425
      %v9799 = vunpack.c.l.b16 %v9426
      %v9800 = vunpack.c.h.b16 %v9426
      %v9801 = vunpack.c.l.b16 %v9427
      %v9802 = vunpack.c.h.b16 %v9427
      %v9803 = vunpack.c.l.b16 %v9428
      %v9804 = vunpack.c.h.b16 %v9428
      %v9805 = vunpack.c.l.b16 %v9429
      %v9806 = vunpack.c.h.b16 %v9429
      %v9807 = vunpack.c.l.b16 %v9430
      %v9808 = vunpack.c.h.b16 %v9430
      %v9809 = vunpack.c.l.b16 %v9431
      %v9810 = vunpack.c.h.b16 %v9431
      %v9811 = vunpack.c.l.b16 %v9432
      %v9812 = vunpack.c.h.b16 %v9432
      %v9813 = vunpack.c.l.b16 %v9433
      %v9814 = vunpack.c.h.b16 %v9433
      %v9815 = vunpack.c.l.b16 %v9434
      %v9816 = vunpack.c.h.b16 %v9434
      %v9817 = vunpack.c.l.b16 %v9435
      %v9818 = vunpack.c.h.b16 %v9435
      %v9819 = vunpack.c.l.b16 %v9436
      %v9820 = vunpack.c.h.b16 %v9436
      %v9821 = vunpack.c.l.b16 %v9437
      %v9822 = vunpack.c.h.b16 %v9437
      %v9823 = vpack.c.b16 %v9575, %v9567
      %v9824 = vpack.c.b16 %v9576, %v9568
      %v9825 = vpack.c.b16 %v9577, %v9569
      %v9826 = vpack.c.b16 %v9578, %v9570
      %v9827 = vpack.c.b16 %v9579, %v9571
      %v9828 = vpack.c.b16 %v9580, %v9572
      %v9829 = vpack.c.b16 %v9581, %v9573
      %v9830 = vpack.c.b16 %v9582, %v9574
      %v9831 = vpack.c.b16 %v9591, %v9583
      %v9832 = vpack.c.b16 %v9592, %v9584
      %v9833 = vpack.c.b16 %v9593, %v9585
      %v9834 = vpack.c.b16 %v9594, %v9586
      %v9835 = vpack.c.b16 %v9595, %v9587
      %v9836 = vpack.c.b16 %v9596, %v9588
      %v9837 = vpack.c.b16 %v9597, %v9589
      %v9838 = vpack.c.b16 %v9598, %v9590
      %v9839 = vpack.c.b16 %v9607, %v9599
      %v9840 = vpack.c.b16 %v9608, %v9600
      %v9841 = vpack.c.b16 %v9609, %v9601
      %v9842 = vpack.c.b16 %v9610, %v9602
      %v9843 = vpack.c.b16 %v9611, %v9603
      %v9844 = vpack.c.b16 %v9612, %v9604
      %v9845 = vpack.c.b16 %v9613, %v9605
      %v9846 = vpack.c.b16 %v9614, %v9606
      %v9847 = vpack.c.b16 %v9623, %v9615
      %v9848 = vpack.c.b16 %v9624, %v9616
      %v9849 = vpack.c.b16 %v9625, %v9617
      %v9850 = vpack.c.b16 %v9626, %v9618
      %v9851 = vpack.c.b16 %v9627, %v9619
      %v9852 = vpack.c.b16 %v9628, %v9620
      %v9853 = vpack.c.b16 %v9629, %v9621
      %v9854 = vpack.c.b16 %v9630, %v9622
      %v9855 = vpack.c.b16 %v9639, %v9631
      %v9856 = vpack.c.b16 %v9640, %v9632
      %v9857 = vpack.c.b16 %v9641, %v9633
      %v9858 = vpack.c.b16 %v9642, %v9634
      %v9859 = vpack.c.b16 %v9643, %v9635
      %v9860 = vpack.c.b16 %v9644, %v9636
      %v9861 = vpack.c.b16 %v9645, %v9637
      %v9862 = vpack.c.b16 %v9646, %v9638
      %v9863 = vpack.c.b16 %v9655, %v9647
      %v9864 = vpack.c.b16 %v9656, %v9648
      %v9865 = vpack.c.b16 %v9657, %v9649
      %v9866 = vpack.c.b16 %v9658, %v9650
      %v9867 = vpack.c.b16 %v9659, %v9651
      %v9868 = vpack.c.b16 %v9660, %v9652
      %v9869 = vpack.c.b16 %v9661, %v9653
      %v9870 = vpack.c.b16 %v9662, %v9654
      %v9871 = vpack.c.b16 %v9671, %v9663
      %v9872 = vpack.c.b16 %v9672, %v9664
      %v9873 = vpack.c.b16 %v9673, %v9665
      %v9874 = vpack.c.b16 %v9674, %v9666
      %v9875 = vpack.c.b16 %v9675, %v9667
      %v9876 = vpack.c.b16 %v9676, %v9668
      %v9877 = vpack.c.b16 %v9677, %v9669
      %v9878 = vpack.c.b16 %v9678, %v9670
      %v9879 = vpack.c.b16 %v9687, %v9679
      %v9880 = vpack.c.b16 %v9688, %v9680
      %v9881 = vpack.c.b16 %v9689, %v9681
      %v9882 = vpack.c.b16 %v9690, %v9682
      %v9883 = vpack.c.b16 %v9691, %v9683
      %v9884 = vpack.c.b16 %v9692, %v9684
      %v9885 = vpack.c.b16 %v9693, %v9685
      %v9886 = vpack.c.b16 %v9694, %v9686
      %v9887 = vpack.c.b16 %v9703, %v9695
      %v9888 = vpack.c.b16 %v9704, %v9696
      %v9889 = vpack.c.b16 %v9705, %v9697
      %v9890 = vpack.c.b16 %v9706, %v9698
      %v9891 = vpack.c.b16 %v9707, %v9699
      %v9892 = vpack.c.b16 %v9708, %v9700
      %v9893 = vpack.c.b16 %v9709, %v9701
      %v9894 = vpack.c.b16 %v9710, %v9702
      %v9895 = vpack.c.b16 %v9719, %v9711
      %v9896 = vpack.c.b16 %v9720, %v9712
      %v9897 = vpack.c.b16 %v9721, %v9713
      %v9898 = vpack.c.b16 %v9722, %v9714
      %v9899 = vpack.c.b16 %v9723, %v9715
      %v9900 = vpack.c.b16 %v9724, %v9716
      %v9901 = vpack.c.b16 %v9725, %v9717
      %v9902 = vpack.c.b16 %v9726, %v9718
      %v9903 = vpack.c.b16 %v9735, %v9727
      %v9904 = vpack.c.b16 %v9736, %v9728
      %v9905 = vpack.c.b16 %v9737, %v9729
      %v9906 = vpack.c.b16 %v9738, %v9730
      %v9907 = vpack.c.b16 %v9739, %v9731
      %v9908 = vpack.c.b16 %v9740, %v9732
      %v9909 = vpack.c.b16 %v9741, %v9733
      %v9910 = vpack.c.b16 %v9742, %v9734
      %v9911 = vpack.c.b16 %v9751, %v9743
      %v9912 = vpack.c.b16 %v9752, %v9744
      %v9913 = vpack.c.b16 %v9753, %v9745
      %v9914 = vpack.c.b16 %v9754, %v9746
      %v9915 = vpack.c.b16 %v9755, %v9747
      %v9916 = vpack.c.b16 %v9756, %v9748
      %v9917 = vpack.c.b16 %v9757, %v9749
      %v9918 = vpack.c.b16 %v9758, %v9750
      %v9919 = vpack.c.b16 %v9767, %v9759
      %v9920 = vpack.c.b16 %v9768, %v9760
      %v9921 = vpack.c.b16 %v9769, %v9761
      %v9922 = vpack.c.b16 %v9770, %v9762
      %v9923 = vpack.c.b16 %v9771, %v9763
      %v9924 = vpack.c.b16 %v9772, %v9764
      %v9925 = vpack.c.b16 %v9773, %v9765
      %v9926 = vpack.c.b16 %v9774, %v9766
      %v9927 = vpack.c.b16 %v9783, %v9775
      %v9928 = vpack.c.b16 %v9784, %v9776
      %v9929 = vpack.c.b16 %v9785, %v9777
      %v9930 = vpack.c.b16 %v9786, %v9778
      %v9931 = vpack.c.b16 %v9787, %v9779
      %v9932 = vpack.c.b16 %v9788, %v9780
      %v9933 = vpack.c.b16 %v9789, %v9781
      %v9934 = vpack.c.b16 %v9790, %v9782
      %v9935 = vpack.c.b16 %v9799, %v9791
      %v9936 = vpack.c.b16 %v9800, %v9792
      %v9937 = vpack.c.b16 %v9801, %v9793
      %v9938 = vpack.c.b16 %v9802, %v9794
      %v9939 = vpack.c.b16 %v9803, %v9795
      %v9940 = vpack.c.b16 %v9804, %v9796
      %v9941 = vpack.c.b16 %v9805, %v9797
      %v9942 = vpack.c.b16 %v9806, %v9798
      %v9943 = vpack.c.b16 %v9815, %v9807
      %v9944 = vpack.c.b16 %v9816, %v9808
      %v9945 = vpack.c.b16 %v9817, %v9809
      %v9946 = vpack.c.b16 %v9818, %v9810
      %v9947 = vpack.c.b16 %v9819, %v9811
      %v9948 = vpack.c.b16 %v9820, %v9812
      %v9949 = vpack.c.b16 %v9821, %v9813
      %v9950 = vpack.c.b16 %v9822, %v9814
      %v10080 = vperm.slane %v9438, 0
      %v10081 = vperm.slane %v9438, 1
      %v10082 = vperm.slane %v9438, 2
      %v10083 = vperm.slane %v9438, 3
      %v10084 = vperm.slane %v9438, 4
      %v10085 = vperm.slane %v9438, 5
      %v10086 = vperm.slane %v9438, 6
      %v10087 = vperm.slane %v9438, 7
      %10096 = vmatpush.bf16.msra.mxu0 %v9879
      %10097 = vmatpush.bf16.msra.mxu0 %v9871
      %10098 = vmatpush.bf16.msra.mxu0 %v9863
      %10099 = vmatpush.bf16.msra.mxu0 %v9855
      %10100 = vmatpush.bf16.msra.mxu0 %v9847
      %10101 = vmatpush.bf16.msra.mxu0 %v9839
      %10102 = vmatpush.bf16.msra.mxu0 %v9831
      %10103 = vmatpush.bf16.msra.mxu0 %v9823
      %10104 = vmatmul.bf16.gmra.mxu0 %v9308
      %v10105 = vpop.f32.mrf.mxu0
      %v10106 = vadd.f32 %v10080, %v10105
      %v10107 = vpop.f32.mrf.mxu0
      %10108 = vdwg.mxu0
      %10109 = vmatpush.bf16.msra.mxu0 %v9943
      %10110 = vmatpush.bf16.msra.mxu0 %v9935
      %10111 = vmatpush.bf16.msra.mxu0 %v9927
      %10112 = vmatpush.bf16.msra.mxu0 %v9919
      %10113 = vmatpush.bf16.msra.mxu0 %v9911
      %10114 = vmatpush.bf16.msra.mxu0 %v9903
      %10115 = vmatpush.bf16.msra.mxu0 %v9895
      %10116 = vmatpush.bf16.msra.mxu0 %v9887
      %10117 = vmatmul.bf16.gmra.mxu0 %v9309
      %v10118 = vpop.f32.mrf.mxu0
      %v10119 = vadd.f32 %v10106, %v10118
      %v10120 = vpop.f32.mrf.mxu0
      %10121 = vdwg.mxu0
      %10122 = vmatpush.bf16.msra.mxu0 %v9880
      %10123 = vmatpush.bf16.msra.mxu0 %v9872
      %10124 = vmatpush.bf16.msra.mxu0 %v9864
      %10125 = vmatpush.bf16.msra.mxu0 %v9856
      %10126 = vmatpush.bf16.msra.mxu0 %v9848
      %10127 = vmatpush.bf16.msra.mxu0 %v9840
      %10128 = vmatpush.bf16.msra.mxu0 %v9832
      %10129 = vmatpush.bf16.msra.mxu0 %v9824
      %10130 = vmatmul.bf16.gmra.mxu0 %v9308
      %v10131 = vpop.f32.mrf.mxu0
      %v10132 = vadd.f32 %v10081, %v10131
      %v10133 = vpop.f32.mrf.mxu0
      %10134 = vdwg.mxu0
      %10135 = vmatpush.bf16.msra.mxu0 %v9944
      %10136 = vmatpush.bf16.msra.mxu0 %v9936
      %10137 = vmatpush.bf16.msra.mxu0 %v9928
      %10138 = vmatpush.bf16.msra.mxu0 %v9920
      %10139 = vmatpush.bf16.msra.mxu0 %v9912
      %10140 = vmatpush.bf16.msra.mxu0 %v9904
      %10141 = vmatpush.bf16.msra.mxu0 %v9896
      %10142 = vmatpush.bf16.msra.mxu0 %v9888
      %10143 = vmatmul.bf16.gmra.mxu0 %v9309
      %v10144 = vpop.f32.mrf.mxu0
      %v10145 = vadd.f32 %v10132, %v10144
      %v10146 = vpop.f32.mrf.mxu0
      %10147 = vdwg.mxu0
      %10148 = vmatpush.bf16.msra.mxu0 %v9881
      %10149 = vmatpush.bf16.msra.mxu0 %v9873
      %10150 = vmatpush.bf16.msra.mxu0 %v9865
      %10151 = vmatpush.bf16.msra.mxu0 %v9857
      %10152 = vmatpush.bf16.msra.mxu0 %v9849
      %10153 = vmatpush.bf16.msra.mxu0 %v9841
      %10154 = vmatpush.bf16.msra.mxu0 %v9833
      %10155 = vmatpush.bf16.msra.mxu0 %v9825
      %10156 = vmatmul.bf16.gmra.mxu0 %v9308
      %v10157 = vpop.f32.mrf.mxu0
      %v10158 = vadd.f32 %v10082, %v10157
      %v10159 = vpop.f32.mrf.mxu0
      %10160 = vdwg.mxu0
      %10161 = vmatpush.bf16.msra.mxu0 %v9945
      %10162 = vmatpush.bf16.msra.mxu0 %v9937
      %10163 = vmatpush.bf16.msra.mxu0 %v9929
      %10164 = vmatpush.bf16.msra.mxu0 %v9921
      %10165 = vmatpush.bf16.msra.mxu0 %v9913
      %10166 = vmatpush.bf16.msra.mxu0 %v9905
      %10167 = vmatpush.bf16.msra.mxu0 %v9897
      %10168 = vmatpush.bf16.msra.mxu0 %v9889
      %10169 = vmatmul.bf16.gmra.mxu0 %v9309
      %v10170 = vpop.f32.mrf.mxu0
      %v10171 = vadd.f32 %v10158, %v10170
      %v10172 = vpop.f32.mrf.mxu0
      %10173 = vdwg.mxu0
      %10174 = vmatpush.bf16.msra.mxu0 %v9882
      %10175 = vmatpush.bf16.msra.mxu0 %v9874
      %10176 = vmatpush.bf16.msra.mxu0 %v9866
      %10177 = vmatpush.bf16.msra.mxu0 %v9858
      %10178 = vmatpush.bf16.msra.mxu0 %v9850
      %10179 = vmatpush.bf16.msra.mxu0 %v9842
      %10180 = vmatpush.bf16.msra.mxu0 %v9834
      %10181 = vmatpush.bf16.msra.mxu0 %v9826
      %10182 = vmatmul.bf16.gmra.mxu0 %v9308
      %v10183 = vpop.f32.mrf.mxu0
      %v10184 = vadd.f32 %v10083, %v10183
      %v10185 = vpop.f32.mrf.mxu0
      %10186 = vdwg.mxu0
      %10187 = vmatpush.bf16.msra.mxu0 %v9946
      %10188 = vmatpush.bf16.msra.mxu0 %v9938
      %10189 = vmatpush.bf16.msra.mxu0 %v9930
      %10190 = vmatpush.bf16.msra.mxu0 %v9922
      %10191 = vmatpush.bf16.msra.mxu0 %v9914
      %10192 = vmatpush.bf16.msra.mxu0 %v9906
      %10193 = vmatpush.bf16.msra.mxu0 %v9898
      %10194 = vmatpush.bf16.msra.mxu0 %v9890
      %10195 = vmatmul.bf16.gmra.mxu0 %v9309
      %v10196 = vpop.f32.mrf.mxu0
      %v10197 = vadd.f32 %v10184, %v10196
      %v10198 = vpop.f32.mrf.mxu0
      %10199 = vdwg.mxu0
      %10200 = vmatpush.bf16.msra.mxu0 %v9883
      %10201 = vmatpush.bf16.msra.mxu0 %v9875
      %10202 = vmatpush.bf16.msra.mxu0 %v9867
      %10203 = vmatpush.bf16.msra.mxu0 %v9859
      %10204 = vmatpush.bf16.msra.mxu0 %v9851
      %10205 = vmatpush.bf16.msra.mxu0 %v9843
      %10206 = vmatpush.bf16.msra.mxu0 %v9835
      %10207 = vmatpush.bf16.msra.mxu0 %v9827
      %10208 = vmatmul.bf16.gmra.mxu0 %v9308
      %v10209 = vpop.f32.mrf.mxu0
      %v10210 = vadd.f32 %v10084, %v10209
      %v10211 = vpop.f32.mrf.mxu0
      %10212 = vdwg.mxu0
      %10213 = vmatpush.bf16.msra.mxu0 %v9947
      %10214 = vmatpush.bf16.msra.mxu0 %v9939
      %10215 = vmatpush.bf16.msra.mxu0 %v9931
      %10216 = vmatpush.bf16.msra.mxu0 %v9923
      %10217 = vmatpush.bf16.msra.mxu0 %v9915
      %10218 = vmatpush.bf16.msra.mxu0 %v9907
      %10219 = vmatpush.bf16.msra.mxu0 %v9899
      %10220 = vmatpush.bf16.msra.mxu0 %v9891
      %10221 = vmatmul.bf16.gmra.mxu0 %v9309
      %v10222 = vpop.f32.mrf.mxu0
      %v10223 = vadd.f32 %v10210, %v10222
      %v10224 = vpop.f32.mrf.mxu0
      %10225 = vdwg.mxu0
      %10226 = vmatpush.bf16.msra.mxu0 %v9884
      %10227 = vmatpush.bf16.msra.mxu0 %v9876
      %10228 = vmatpush.bf16.msra.mxu0 %v9868
      %10229 = vmatpush.bf16.msra.mxu0 %v9860
      %10230 = vmatpush.bf16.msra.mxu0 %v9852
      %10231 = vmatpush.bf16.msra.mxu0 %v9844
      %10232 = vmatpush.bf16.msra.mxu0 %v9836
      %10233 = vmatpush.bf16.msra.mxu0 %v9828
      %10234 = vmatmul.bf16.gmra.mxu0 %v9308
      %v10235 = vpop.f32.mrf.mxu0
      %v10236 = vadd.f32 %v10085, %v10235
      %v10237 = vpop.f32.mrf.mxu0
      %10238 = vdwg.mxu0
      %10239 = vmatpush.bf16.msra.mxu0 %v9948
      %10240 = vmatpush.bf16.msra.mxu0 %v9940
      %10241 = vmatpush.bf16.msra.mxu0 %v9932
      %10242 = vmatpush.bf16.msra.mxu0 %v9924
      %10243 = vmatpush.bf16.msra.mxu0 %v9916
      %10244 = vmatpush.bf16.msra.mxu0 %v9908
      %10245 = vmatpush.bf16.msra.mxu0 %v9900
      %10246 = vmatpush.bf16.msra.mxu0 %v9892
      %10247 = vmatmul.bf16.gmra.mxu0 %v9309
      %v10248 = vpop.f32.mrf.mxu0
      %v10249 = vadd.f32 %v10236, %v10248
      %v10250 = vpop.f32.mrf.mxu0
      %10251 = vdwg.mxu0
      %10252 = vmatpush.bf16.msra.mxu0 %v9885
      %10253 = vmatpush.bf16.msra.mxu0 %v9877
      %10254 = vmatpush.bf16.msra.mxu0 %v9869
      %10255 = vmatpush.bf16.msra.mxu0 %v9861
      %10256 = vmatpush.bf16.msra.mxu0 %v9853
      %10257 = vmatpush.bf16.msra.mxu0 %v9845
      %10258 = vmatpush.bf16.msra.mxu0 %v9837
      %10259 = vmatpush.bf16.msra.mxu0 %v9829
      %10260 = vmatmul.bf16.gmra.mxu0 %v9308
      %v10261 = vpop.f32.mrf.mxu0
      %v10262 = vadd.f32 %v10086, %v10261
      %v10263 = vpop.f32.mrf.mxu0
      %10264 = vdwg.mxu0
      %10265 = vmatpush.bf16.msra.mxu0 %v9949
      %10266 = vmatpush.bf16.msra.mxu0 %v9941
      %10267 = vmatpush.bf16.msra.mxu0 %v9933
      %10268 = vmatpush.bf16.msra.mxu0 %v9925
      %10269 = vmatpush.bf16.msra.mxu0 %v9917
      %10270 = vmatpush.bf16.msra.mxu0 %v9909
      %10271 = vmatpush.bf16.msra.mxu0 %v9901
      %10272 = vmatpush.bf16.msra.mxu0 %v9893
      %10273 = vmatmul.bf16.gmra.mxu0 %v9309
      %v10274 = vpop.f32.mrf.mxu0
      %v10275 = vadd.f32 %v10262, %v10274
      %v10276 = vpop.f32.mrf.mxu0
      %10277 = vdwg.mxu0
      %10278 = vmatpush.bf16.msra.mxu0 %v9886
      %10279 = vmatpush.bf16.msra.mxu0 %v9878
      %10280 = vmatpush.bf16.msra.mxu0 %v9870
      %10281 = vmatpush.bf16.msra.mxu0 %v9862
      %10282 = vmatpush.bf16.msra.mxu0 %v9854
      %10283 = vmatpush.bf16.msra.mxu0 %v9846
      %10284 = vmatpush.bf16.msra.mxu0 %v9838
      %10285 = vmatpush.bf16.msra.mxu0 %v9830
      %10286 = vmatmul.bf16.gmra.mxu0 %v9308
      %v10287 = vpop.f32.mrf.mxu0
      %v10288 = vadd.f32 %v10087, %v10287
      %v10289 = vpop.f32.mrf.mxu0
      %10290 = vdwg.mxu0
      %10291 = vmatpush.bf16.msra.mxu0 %v9950
      %10292 = vmatpush.bf16.msra.mxu0 %v9942
      %10293 = vmatpush.bf16.msra.mxu0 %v9934
      %10294 = vmatpush.bf16.msra.mxu0 %v9926
      %10295 = vmatpush.bf16.msra.mxu0 %v9918
      %10296 = vmatpush.bf16.msra.mxu0 %v9910
      %10297 = vmatpush.bf16.msra.mxu0 %v9902
      %10298 = vmatpush.bf16.msra.mxu0 %v9894
      %10299 = vmatmul.bf16.gmra.mxu0 %v9309
      %v10300 = vpop.f32.mrf.mxu0
      %v10301 = vadd.f32 %v10288, %v10300
      %v10302 = vpop.f32.mrf.mxu0
      %10303 = vdwg.mxu0
      %v10304 = vadd.f32 %v10119, %v8308
      %v10305 = vadd.f32 %v10145, %v8309
      %v10306 = vadd.f32 %v10171, %v8310
      %v10307 = vadd.f32 %v10197, %v8311
      %v10308 = vadd.f32 %v10223, %v8312
      %v10309 = vadd.f32 %v10249, %v8313
      %v10310 = vadd.f32 %v10275, %v8314
      %v10311 = vadd.f32 %v10301, %v8315
      %v10320 = vrot.slane %v10305, 7
      %v10321 = vrot.slane %v10306, 6
      %v10322 = vrot.slane %v10307, 5
      %v10323 = vrot.slane %v10308, 4
      %v10324 = vrot.slane %v10309, 3
      %v10325 = vrot.slane %v10310, 2
      %v10326 = vrot.slane %v10311, 1
      %vm10327 = vcmask 1040384
      %v10328 = vsel %vm10327, %v10304, %v10320
      %vm10329 = vcmask 1042434
      %v10330 = vsel %vm10329, %v10321, %v10322
      %vm10331 = vcmask 1041408
      %v10332 = vsel %vm10331, %v10328, %v10330
      %vm10333 = vcmask 1044484
      %v10334 = vsel %vm10333, %v10323, %v10324
      %vm10335 = vcmask 1046534
      %v10336 = vsel %vm10335, %v10325, %v10326
      %vm10337 = vcmask 1045508
      %v10338 = vsel %vm10337, %v10334, %v10336
      %vm10339 = vcmask 1043456
      %v10340 = vsel %vm10339, %v10332, %v10338
      %10342 = vst [vmem:[%s327] sm:$0xff] %v10340
      %p10343 = scmp.lt.s32.totalorder %s20, 1
      %s10344 = scalar_select %p10343, %s20, 1
      %s10345 = smul.addr %s10344, 8
      %s10346 = scalar_lea.vmem %s9, %s10345
      // Predicated region
      $region57: #{adapter_clip_rn50_forward.7} parent=55 // pred_check
        %p10347 = pneg %p232
      $region58: #{adapter_clip_rn50_forward.7} parent=55 // pred_check_branch
        %10349 = sbr.rel (%p10347) target = $region60
      $region59: #{adapter_clip_rn50_forward.7} parent=55 // pred_region
        _
      $region60: #{adapter_clip_rn50_forward.7} parent=55 // pred_fallthru
        _
    $region56: #{adapter_clip_rn50_forward.7} parent=5 // pred_fallthru
      _
    %p10350 = scmp.le.s32.totalorder 2, %s15
    // Predicated region
    $region61: #{adapter_clip_rn50_forward.7} parent=5 // pred_check
      %p10351 = pneg %p10350
    $region62: #{adapter_clip_rn50_forward.7} parent=5 // pred_check_branch
      %10353 = sbr.rel (%p10351) target = $region64
    $region63: #{adapter_clip_rn50_forward.7} parent=5 // pred_region
      %s10354 = ssub.s32 %s15, 2
      // Predicated region
      $region65: #{adapter_clip_rn50_forward.7} parent=63 // pred_check
        %p10355 = pneg %p238
      $region66: #{adapter_clip_rn50_forward.7} parent=63 // pred_check_branch
        %10357 = sbr.rel (%p10355) target = $region68
      $region67: #{adapter_clip_rn50_forward.7} parent=63 // pred_region
        %p10358 = scmp.lt.s32.totalorder %s21, 1
        %s10359 = scalar_select %p10358, %s21, 1
        %s10360 = smul.addr %s10359, 8
        %s10361 = scalar_lea.vmem %s9, %s10360
      $region68: #{adapter_clip_rn50_forward.7} parent=63 // pred_fallthru
        _
    $region64: #{adapter_clip_rn50_forward.7} parent=5 // pred_fallthru
      _
  $region6: #{adapter_clip_rn50_forward.7} parent=0 // loop_footer
    %s19 = sadd.s32 1, %s15
  $region7: #{adapter_clip_rn50_forward.7} parent=0 // loop_footer_branch
    %14 = sbr.rel target = $region3
  $region8: #{adapter_clip_rn50_forward.7} parent=0 // loop_exit
    _

</llo_original>
